<compile_context>
chip_gen: v6e
topology: v6e:2x2x1
jax: 0.10.0
libtpu: 0.0.40
codegen_flags: <defaults>
</compile_context>

<pallas_src>
import jax
import jax.numpy as jnp
from jax.experimental import pallas as pl
from jax.experimental.pallas import tpu as pltpu

# Full-precision f32 matmuls inside the kernels and in the reference so the two
# paths agree tightly.
jax.config.update("jax_default_matmul_precision", "highest")


# ---------------------------------------------------------------------------
# VMEM / block-size policy (generation aware).
# ---------------------------------------------------------------------------
def _round_up(a, m):
    return -(-a // m) * m


def _vmem_policy():
    """Return (vmem_limit_bytes, per-block byte target)."""
    cap = 0
    try:
        cap = int(getattr(pltpu.get_tpu_info(), "vmem_capacity_bytes", 0) or 0)
    except Exception:
        cap = 0
    if cap > (96 << 20):          # v5e / v6e: 128 MiB VMEM per core -> big blocks
        return (64 << 20), (20 << 20)
    # v7x (64 MiB per TensorCore) or unknown: leave compiler headroom
    return (48 << 20), (6 << 20)


def _pick_bb(batch, per_row_bytes, target_bytes):
    """Batch block size (multiple of 8) and the padded batch it tiles exactly."""
    bb = max(8, (target_bytes // max(per_row_bytes, 1)) // 8 * 8)
    if batch >= 16:
        # guarantee >= 2 grid steps so v7x's two TensorCores both get work
        bb = min(bb, max(8, (batch // 2) // 8 * 8))
    bb = min(bb, _round_up(batch, 8))
    steps = -(-batch // bb)
    bb = _round_up(-(-batch // steps), 8)     # rebalance: even blocks, minimal pad
    return bb, steps * bb


# ---------------------------------------------------------------------------
# Fused bidirectional LSTM recurrence (shared by both kernels).
# ---------------------------------------------------------------------------
def _bilstm_recurrence(x_ref, wih_ref, whhf_ref, whhb_ref, b_ref,
                       h_ref, gf_ref, gb_ref):
    # x_ref  : (S, Bb, Din)  time-major input block
    # wih_ref: (Din, 8H) = [W_ih_fwd^T | W_ih_bwd^T]   (resident)
    # whh*_ref: (H, 4H)     b_ref: (1, 8H) = [b_fwd | b_bwd]
    # h_ref  : (S, Bb, 2H)  [:, :, :H] = fwd states, [:, :, H:] = bwd states
    # gf_ref / gb_ref: (S, Bb, 4H) f32 scratch (precomputed input projections)
    seq_len, bb, din = x_ref.shape
    hidden = whhf_ref.shape[0]
    fourh = 4 * hidden

    # Hoisted input projection: one big (S*Bb, Din) @ (Din, 8H) MXU matmul for
    # both directions, bias folded in, stored to VMEM scratch.
    x_flat = x_ref[...].astype(jnp.float32).reshape(seq_len * bb, din)
    gates_in = jnp.dot(x_flat, wih_ref[...].astype(jnp.float32),
                       preferred_element_type=jnp.float32) + b_ref[...]
    gf_ref[...] = gates_in[:, :fourh].reshape(seq_len, bb, fourh)
    gb_ref[...] = gates_in[:, fourh:].reshape(seq_len, bb, fourh)

    whh_f = whhf_ref[...].astype(jnp.float32)
    whh_b = whhb_ref[...].astype(jnp.float32)

    # sigmoid(z) = 0.5*tanh(0.5*z)+0.5, so ONE tanh over the whole (Bb, 4H) gate
    # vreg covers the sigmoid gates (i/f/o) and the tanh gate (g).
    col = jax.lax.broadcasted_iota(jnp.int32, (1, fourh), 1)
    is_g = (col >= 2 * hidden) & (col < 3 * hidden)
    pre = jnp.where(is_g, 1.0, 0.5).astype(jnp.float32)    # input & output scale
    post = jnp.where(is_g, 0.0, 0.5).astype(jnp.float32)   # output offset

    def cell(gates, c):
        act = jnp.tanh(gates * pre) * pre + post            # (Bb, 4H)
        i = act[:, 0:hidden]
        f = act[:, hidden:2 * hidden]
        g = act[:, 2 * hidden:3 * hidden]
        o = act[:, 3 * hidden:4 * hidden]
        c_new = f * c + i * g
        return o * jnp.tanh(c_new), c_new

    def step(t, carry):
        h_f, c_f, h_b, c_b = carry
        tb = seq_len - 1 - t
        g_f = gf_ref[t] + jnp.dot(h_f, whh_f, preferred_element_type=jnp.float32)
        g_b = gb_ref[tb] + jnp.dot(h_b, whh_b, preferred_element_type=jnp.float32)
        h_f, c_f = cell(g_f, c_f)
        h_b, c_b = cell(g_b, c_b)
        h_ref[t, :, 0:hidden] = h_f.astype(h_ref.dtype)
        h_ref[tb, :, hidden:2 * hidden] = h_b.astype(h_ref.dtype)
        return h_f, c_f, h_b, c_b

    zeros = jnp.zeros((bb, hidden), jnp.float32)
    jax.lax.fori_loop(0, seq_len, step, (zeros, zeros, zeros, zeros),
                      unroll=True if seq_len <= 16 else 8)


def _atten_epilogue(h_val, w_ref, pooled_ref, alpha_ref):
    # h_val: (S, Bb, 2H)  w_ref: (1, 2H)
    h = h_val.astype(jnp.float32)
    w = w_ref[...].astype(jnp.float32)
    m = jnp.tanh(h)
    scores = jnp.sum(m * w[None, :, :], axis=-1, keepdims=True)   # (S, Bb, 1)
    s_max = jnp.max(scores, axis=0, keepdims=True)                # (1, Bb, 1)
    e = jnp.exp(scores - s_max)
    denom = jnp.sum(e, axis=0, keepdims=True)
    alpha = e * pl.reciprocal(denom, approx=True)                 # (S, Bb, 1)
    pooled = jnp.sum(h * alpha, axis=0)                           # (Bb, 2H)
    pooled_ref[...] = pooled.astype(pooled_ref.dtype)
    alpha_ref[...] = alpha.astype(alpha_ref.dtype)


# ---------------------------------------------------------------------------
# Kernels.
# ---------------------------------------------------------------------------
def _bilstm_layer_kernel(x_ref, wih_ref, whhf_ref, whhb_ref, b_ref,
                         h_ref, gf_ref, gb_ref):
    _bilstm_recurrence(x_ref, wih_ref, whhf_ref, whhb_ref, b_ref,
                       h_ref, gf_ref, gb_ref)


def _bilstm_atten_kernel(x_ref, wih_ref, whhf_ref, whhb_ref, b_ref, w_ref,
                         pooled_ref, alpha_ref, gf_ref, gb_ref, h_ref):
    # Last layer: h lives only in VMEM scratch (never written to HBM); the
    # attention / softmax / pooling epilogue consumes it in the same body.
    _bilstm_recurrence(x_ref, wih_ref, whhf_ref, whhb_ref, b_ref,
                       h_ref, gf_ref, gb_ref)
    _atten_epilogue(h_ref[...], w_ref, pooled_ref, alpha_ref)


# ---------------------------------------------------------------------------
# pallas_call wrappers.
# ---------------------------------------------------------------------------
def _prep_layer(layer):
    wih_f, whh_f, bih_f, bhh_f = layer["fwd"]
    wih_b, whh_b, bih_b, bhh_b = layer["bwd"]
    wih = jnp.concatenate([wih_f.T, wih_b.T], axis=1)              # (Din, 8H)
    bias = jnp.concatenate([bih_f + bhh_f, bih_b + bhh_b]).reshape(1, -1)
    return wih, whh_f.T, whh_b.T, bias                              # whh: (H, 4H)


def _bilstm_layer(x_tm, weights, bb, vmem_limit):
    seq, bpad, din = x_tm.shape
    wih, whh_f, whh_b, bias = weights
    hidden = whh_f.shape[0]
    return pl.pallas_call(
        _bilstm_layer_kernel,
        out_shape=jax.ShapeDtypeStruct((seq, bpad, 2 * hidden), x_tm.dtype),
        grid_spec=pltpu.PrefetchScalarGridSpec(
            num_scalar_prefetch=0,
            grid=(bpad // bb,),
            in_specs=[
                pl.BlockSpec((seq, bb, din), lambda i: (0, i, 0)),
                pl.BlockSpec((din, 8 * hidden), lambda i: (0, 0)),
                pl.BlockSpec((hidden, 4 * hidden), lambda i: (0, 0)),
                pl.BlockSpec((hidden, 4 * hidden), lambda i: (0, 0)),
                pl.BlockSpec((1, 8 * hidden), lambda i: (0, 0)),
            ],
            out_specs=pl.BlockSpec((seq, bb, 2 * hidden), lambda i: (0, i, 0)),
            scratch_shapes=[
                pltpu.VMEM((seq, bb, 4 * hidden), jnp.float32),
                pltpu.VMEM((seq, bb, 4 * hidden), jnp.float32),
            ],
        ),
        compiler_params=pltpu.CompilerParams(
            dimension_semantics=("parallel",),
            vmem_limit_bytes=vmem_limit,
        ),
    )(x_tm, wih, whh_f, whh_b, bias)


def _bilstm_atten_layer(x_tm, weights, w_att, bb, vmem_limit):
    seq, bpad, din = x_tm.shape
    wih, whh_f, whh_b, bias = weights
    hidden = whh_f.shape[0]
    return pl.pallas_call(
        _bilstm_atten_kernel,
        out_shape=(
            jax.ShapeDtypeStruct((bpad, 2 * hidden), jnp.float32),   # pooled
            jax.ShapeDtypeStruct((seq, bpad, 1), jnp.float32),       # alpha (time-major)
        ),
        grid_spec=pltpu.PrefetchScalarGridSpec(
            num_scalar_prefetch=0,
            grid=(bpad // bb,),
            in_specs=[
                pl.BlockSpec((seq, bb, din), lambda i: (0, i, 0)),
                pl.BlockSpec((din, 8 * hidden), lambda i: (0, 0)),
                pl.BlockSpec((hidden, 4 * hidden), lambda i: (0, 0)),
                pl.BlockSpec((hidden, 4 * hidden), lambda i: (0, 0)),
                pl.BlockSpec((1, 8 * hidden), lambda i: (0, 0)),
                pl.BlockSpec((1, 2 * hidden), lambda i: (0, 0)),
            ],
            out_specs=(
                pl.BlockSpec((bb, 2 * hidden), lambda i: (i, 0)),
                pl.BlockSpec((seq, bb, 1), lambda i: (0, i, 0)),
            ),
            scratch_shapes=[
                pltpu.VMEM((seq, bb, 4 * hidden), jnp.float32),
                pltpu.VMEM((seq, bb, 4 * hidden), jnp.float32),
                pltpu.VMEM((seq, bb, 2 * hidden), jnp.float32),      # h (layer 2)
            ],
        ),
        compiler_params=pltpu.CompilerParams(
            dimension_semantics=("parallel",),
            vmem_limit_bytes=vmem_limit,
        ),
    )(x_tm, wih, whh_f, whh_b, bias, w_att.reshape(1, 2 * hidden))


# ---------------------------------------------------------------------------
# Full forward pass.
# ---------------------------------------------------------------------------
def textrnn_atten_forward(x, params):
    """Pallas forward for TextRNNAtten. Returns (logits [B, C], alpha [B, S, 1])."""
    # TODO(synk): nn.Dropout (input / LSTM inter-layer / post-dense) is identity
    # in eval mode; training-mode stochastic masking is not implemented.
    batch, seq, din1 = x.shape
    hidden = params["lstm"][0]["fwd"][1].shape[1]     # whh: (4H, H)
    item = x.dtype.itemsize

    vmem_limit, target_bytes = _vmem_policy()
    dmax = max(din1, 2 * hidden)
    # per-batch-row VMEM footprint: double-buffered in/out blocks + f32 scratch
    per_row = seq * (2 * dmax * item + 4 * hidden * item + 88 * hidden)
    bb, bpad = _pick_bb(batch, per_row, target_bytes)

    # Time-major once for the whole stack; pad the batch to the block multiple
    # (padded rows stay finite and are sliced off at the end).
    h = jnp.swapaxes(x, 0, 1)                                      # (S, B, Din)
    if bpad != batch:
        h = jnp.pad(h, ((0, 0), (0, bpad - batch), (0, 0)))

    layers = params["lstm"]
    for layer in layers[:-1]:
        h = _bilstm_layer(h, _prep_layer(layer), bb, vmem_limit)   # (S, Bpad, 2H)
    pooled, alpha_tm = _bilstm_atten_layer(
        h, _prep_layer(layers[-1]), params["w"], bb, vmem_limit)

    pooled = pooled[:batch]                                        # (B, 2H)
    alpha = jnp.swapaxes(alpha_tm[:, :batch, 0], 0, 1)[..., None]  # (B, S, 1)

    # Tiny tail outside the kernel: exact-erf GELU + two small matmuls fuse into
    # one XLA epilogue (avoids a masked (B, C=4) store inside the kernel).
    z = jax.nn.gelu(pooled, approximate=False)
    z = z @ params["dense_w"].T + params["dense_b"]
    logits = z @ params["fc_w"].T + params["fc_b"]
    return logits, alpha


# ---------------------------------------------------------------------------
# Pure-JAX reference (same math as the PyTorch module in eval mode).
# ---------------------------------------------------------------------------
def _lstm_layer_ref(x, wih, whh, b_ih, b_hh):
    batch = x.shape[0]
    hidden = whh.shape[1]

    def step(carry, xt):
        h, c = carry
        gates = xt @ wih.T + b_ih + h @ whh.T + b_hh
        i, f, g, o = jnp.split(gates, 4, axis=-1)
        i = jax.nn.sigmoid(i)
        f = jax.nn.sigmoid(f)
        g = jnp.tanh(g)
        o = jax.nn.sigmoid(o)
        c = f * c + i * g
        h = o * jnp.tanh(c)
        return (h, c), h

    init = (jnp.zeros((batch, hidden), x.dtype), jnp.zeros((batch, hidden), x.dtype))
    _, hs = jax.lax.scan(step, init, jnp.swapaxes(x, 0, 1))
    return jnp.swapaxes(hs, 0, 1)


def textrnn_atten_reference(x, params):
    h = x
    for layer in params["lstm"]:
        fwd = _lstm_layer_ref(h, *layer["fwd"])
        rev = jnp.flip(_lstm_layer_ref(jnp.flip(h, axis=1), *layer["bwd"]), axis=1)
        h = jnp.concatenate([fwd, rev], axis=-1)
    m = jnp.tanh(h)
    scores = jnp.einsum("bsh,h->bs", m, params["w"])
    alpha = jax.nn.softmax(scores, axis=1)[..., None]
    pooled = jnp.sum(h * alpha, axis=1)
    z = jax.nn.gelu(pooled, approximate=False)
    z = z @ params["dense_w"].T + params["dense_b"]
    logits = z @ params["fc_w"].T + params["fc_b"]
    return logits, alpha


if __name__ == "__main__":
    # config: hidden_size=32, num_labels=4, num_layers=2 (bidirectional LSTM);
    # input x: [batch=2, seq=8, hidden=32].
    batch, seq, hidden, num_labels = 2, 8, 32, 4
    key = jax.random.PRNGKey(0)
    kx, kw, kd, kdb, kf, kfb, klstm = jax.random.split(key, 7)

    def lstm_params(k, din, h):
        k1, k2, k3, k4 = jax.random.split(k, 4)
        bound = 1.0 / (h ** 0.5)  # PyTorch LSTM default init U(-1/sqrt(H), 1/sqrt(H))
        return (
            jax.random.uniform(k1, (4 * h, din), jnp.float32, -bound, bound),
            jax.random.uniform(k2, (4 * h, h), jnp.float32, -bound, bound),
            jax.random.uniform(k3, (4 * h,), jnp.float32, -bound, bound),
            jax.random.uniform(k4, (4 * h,), jnp.float32, -bound, bound),
        )

    kl = jax.random.split(klstm, 4)
    params = {
        "lstm": [
            {"fwd": lstm_params(kl[0], hidden, hidden),
             "bwd": lstm_params(kl[1], hidden, hidden)},
            {"fwd": lstm_params(kl[2], 2 * hidden, hidden),
             "bwd": lstm_params(kl[3], 2 * hidden, hidden)},
        ],
        # nn.Parameter(torch.zeros(2H)) -> zeros gives a uniform softmax; use a
        # small deterministic perturbation so the attention path is exercised.
        "w": 0.1 * jax.random.normal(kw, (2 * hidden,), dtype=jnp.float32),
        "dense_w": jax.random.normal(kd, (hidden, 2 * hidden), jnp.float32)
        / (2.0 * hidden) ** 0.5,
        "dense_b": 0.01 * jax.random.normal(kdb, (hidden,), jnp.float32),
        "fc_w": jax.random.normal(kf, (num_labels, hidden), jnp.float32)
        / (1.0 * hidden) ** 0.5,
        "fc_b": 0.01 * jax.random.normal(kfb, (num_labels,), jnp.float32),
    }

    x = jax.random.normal(kx, (batch, seq, hidden), dtype=jnp.float32)

    logits, alpha = jax.block_until_ready(textrnn_atten_forward(x, params))
    ref_logits, ref_alpha = textrnn_atten_reference(x, params)

    assert logits.shape == (batch, num_labels), logits.shape
    assert alpha.shape == (batch, seq, 1), alpha.shape
    assert jnp.allclose(logits, ref_logits, atol=1e-3, rtol=1e-3), (logits, ref_logits)
    assert jnp.allclose(alpha, ref_alpha, atol=1e-3, rtol=1e-3), (alpha, ref_alpha)

    print("KERNEL_OK")
</pallas_src>

<mosaic_0001>
module attributes {stable_mosaic.version = 11 : i64} {
  func.func @_bilstm_layer_kernel(%arg0: i32, %arg1: memref<8x8x32xf32, #tpu.memory_space<vmem>>, %arg2: memref<32x256xf32, #tpu.memory_space<vmem>>, %arg3: memref<32x128xf32, #tpu.memory_space<vmem>>, %arg4: memref<32x128xf32, #tpu.memory_space<vmem>>, %arg5: memref<1x256xf32, #tpu.memory_space<vmem>>, %arg6: memref<8x8x64xf32, #tpu.memory_space<vmem>>, %arg7: memref<8x8x128xf32, #tpu.memory_space<vmem>>, %arg8: memref<8x8x128xf32, #tpu.memory_space<vmem>>) attributes {dimension_semantics = [#tpu.dimension_semantics<parallel>], iteration_bounds = array<i64: 1>, scalar_prefetch = 0 : i64, scratch_operands = 2 : i64, tpu.core_type = #tpu.core_type<tc>, window_params = [{transform_indices = @transform_0, window_bounds = array<i64: 8, 8, 32>}, {pipeline_mode = #tpu.pipeline_mode<synchronous>, transform_indices = @transform_1, window_bounds = array<i64: 32, 256>}, {pipeline_mode = #tpu.pipeline_mode<synchronous>, transform_indices = @transform_2, window_bounds = array<i64: 32, 128>}, {pipeline_mode = #tpu.pipeline_mode<synchronous>, transform_indices = @transform_3, window_bounds = array<i64: 32, 128>}, {pipeline_mode = #tpu.pipeline_mode<synchronous>, transform_indices = @transform_4, window_bounds = array<i64: 1, 256>}, {transform_indices = @transform_5, window_bounds = array<i64: 8, 8, 64>}]} {
    %c0 = arith.constant 0 : index
    %c0_0 = arith.constant 0 : index
    %c0_1 = arith.constant 0 : index
    %0 = vector.load %arg1[%c0, %c0_0, %c0_1] : memref<8x8x32xf32, #tpu.memory_space<vmem>>, vector<8x8x32xf32>
    %1 = vector.shape_cast %0 : vector<8x8x32xf32> to vector<64x32xf32>
    %c0_2 = arith.constant 0 : index
    %c0_3 = arith.constant 0 : index
    %2 = vector.load %arg2[%c0_2, %c0_3] : memref<32x256xf32, #tpu.memory_space<vmem>>, vector<32x256xf32>
    %cst = arith.constant dense<0.000000e+00> : vector<64x256xf32>
    %3 = tpu.matmul %1, %2, %cst {dimension_numbers = #tpu.dot_dimension_numbers<[1], [0], [0], [1], [0, 0, 1, 1], [], []>, precision = #tpu.contract_precision<fp32>} : vector<64x32xf32>, vector<32x256xf32>, vector<64x256xf32> -> vector<64x256xf32>
    %c0_4 = arith.constant 0 : index
    %c0_5 = arith.constant 0 : index
    %4 = vector.load %arg5[%c0_4, %c0_5] : memref<1x256xf32, #tpu.memory_space<vmem>>, vector<1x256xf32>
    %5 = vector.broadcast %4 : vector<1x256xf32> to vector<64x256xf32>
    %6 = arith.addf %3, %5 : vector<64x256xf32>
    %7 = vector.extract_strided_slice %6 {offsets = [0, 0], sizes = [64, 128], strides = [1, 1]} : vector<64x256xf32> to vector<64x128xf32>
    %8 = vector.shape_cast %7 : vector<64x128xf32> to vector<8x8x128xf32>
    %c0_6 = arith.constant 0 : index
    %c0_7 = arith.constant 0 : index
    %c0_8 = arith.constant 0 : index
    %9 = vector.load %arg7[%c0_6, %c0_7, %c0_8] : memref<8x8x128xf32, #tpu.memory_space<vmem>>, vector<8x8x128xf32>
    tpu.vector_store %arg7[%c0_6, %c0_7, %c0_8], %8 {strides = array<i32>} : memref<8x8x128xf32, #tpu.memory_space<vmem>>, vector<8x8x128xf32>,
    %10 = vector.extract_strided_slice %6 {offsets = [0, 128], sizes = [64, 128], strides = [1, 1]} : vector<64x256xf32> to vector<64x128xf32>
    %11 = vector.shape_cast %10 : vector<64x128xf32> to vector<8x8x128xf32>
    %c0_9 = arith.constant 0 : index
    %c0_10 = arith.constant 0 : index
    %c0_11 = arith.constant 0 : index
    %12 = vector.load %arg8[%c0_9, %c0_10, %c0_11] : memref<8x8x128xf32, #tpu.memory_space<vmem>>, vector<8x8x128xf32>
    tpu.vector_store %arg8[%c0_9, %c0_10, %c0_11], %11 {strides = array<i32>} : memref<8x8x128xf32, #tpu.memory_space<vmem>>, vector<8x8x128xf32>,
    %c0_12 = arith.constant 0 : index
    %c0_13 = arith.constant 0 : index
    %13 = vector.load %arg3[%c0_12, %c0_13] : memref<32x128xf32, #tpu.memory_space<vmem>>, vector<32x128xf32>
    %c0_14 = arith.constant 0 : index
    %c0_15 = arith.constant 0 : index
    %14 = vector.load %arg4[%c0_14, %c0_15] : memref<32x128xf32, #tpu.memory_space<vmem>>, vector<32x128xf32>
    %15 = tpu.iota {dimensions = array<i32: 1>} : vector<1x128xi32>
    %c64_i32 = arith.constant 64 : i32
    %16 = vector.broadcast %c64_i32 : i32 to vector<1x128xi32>
    %17 = arith.cmpi sge, %15, %16 : vector<1x128xi32>
    %c96_i32 = arith.constant 96 : i32
    %18 = vector.broadcast %c96_i32 : i32 to vector<1x128xi32>
    %19 = arith.cmpi slt, %15, %18 : vector<1x128xi32>
    %20 = arith.andi %17, %19 : vector<1x128xi1>
    %cst_16 = arith.constant 1.000000e+00 : f32
    %cst_17 = arith.constant 5.000000e-01 : f32
    %21 = vector.broadcast %cst_16 : f32 to vector<1x128xf32>
    %22 = vector.broadcast %cst_17 : f32 to vector<1x128xf32>
    %23 = arith.select %20, %21, %22 : vector<1x128xi1>, vector<1x128xf32>
    %cst_18 = arith.constant 0.000000e+00 : f32
    %cst_19 = arith.constant 5.000000e-01 : f32
    %24 = vector.broadcast %cst_18 : f32 to vector<1x128xf32>
    %25 = vector.broadcast %cst_19 : f32 to vector<1x128xf32>
    %26 = arith.select %20, %24, %25 : vector<1x128xi1>, vector<1x128xf32>
    %cst_20 = arith.constant 0.000000e+00 : f32
    %27 = vector.broadcast %cst_20 : f32 to vector<8x32xf32>
    %c0_i32 = arith.constant 0 : i32
    %c7_i32 = arith.constant 7 : i32
    %28 = arith.subi %c7_i32, %c0_i32 : i32
    %29 = arith.index_cast %c0_i32 : i32 to index
    %c0_21 = arith.constant 0 : index
    %c0_22 = arith.constant 0 : index
    %30 = vector.load %arg7[%29, %c0_21, %c0_22] : memref<8x8x128xf32, #tpu.memory_space<vmem>>, vector<1x8x128xf32>
    %31 = vector.shape_cast %30 : vector<1x8x128xf32> to vector<8x128xf32>
    %cst_23 = arith.constant dense<0.000000e+00> : vector<8x128xf32>
    %32 = tpu.matmul %27, %13, %cst_23 {dimension_numbers = #tpu.dot_dimension_numbers<[1], [0], [0], [1], [0, 0, 1, 1], [], []>, precision = #tpu.contract_precision<fp32>} : vector<8x32xf32>, vector<32x128xf32>, vector<8x128xf32> -> vector<8x128xf32>
    %33 = arith.addf %31, %32 : vector<8x128xf32>
    %34 = arith.index_cast %28 : i32 to index
    %c0_24 = arith.constant 0 : index
    %c0_25 = arith.constant 0 : index
    %35 = vector.load %arg8[%34, %c0_24, %c0_25] : memref<8x8x128xf32, #tpu.memory_space<vmem>>, vector<1x8x128xf32>
    %36 = vector.shape_cast %35 : vector<1x8x128xf32> to vector<8x128xf32>
    %cst_26 = arith.constant dense<0.000000e+00> : vector<8x128xf32>
    %37 = tpu.matmul %27, %14, %cst_26 {dimension_numbers = #tpu.dot_dimension_numbers<[1], [0], [0], [1], [0, 0, 1, 1], [], []>, precision = #tpu.contract_precision<fp32>} : vector<8x32xf32>, vector<32x128xf32>, vector<8x128xf32> -> vector<8x128xf32>
    %38 = arith.addf %36, %37 : vector<8x128xf32>
    %39 = vector.broadcast %23 : vector<1x128xf32> to vector<8x128xf32>
    %40 = arith.mulf %33, %39 : vector<8x128xf32>
    %41 = math.tanh %40 : vector<8x128xf32>
    %42 = vector.broadcast %23 : vector<1x128xf32> to vector<8x128xf32>
    %43 = arith.mulf %41, %42 : vector<8x128xf32>
    %44 = vector.broadcast %26 : vector<1x128xf32> to vector<8x128xf32>
    %45 = arith.addf %43, %44 : vector<8x128xf32>
    %46 = vector.extract_strided_slice %45 {offsets = [0, 0], sizes = [8, 32], strides = [1, 1]} : vector<8x128xf32> to vector<8x32xf32>
    %47 = vector.extract_strided_slice %45 {offsets = [0, 32], sizes = [8, 32], strides = [1, 1]} : vector<8x128xf32> to vector<8x32xf32>
    %48 = vector.extract_strided_slice %45 {offsets = [0, 64], sizes = [8, 32], strides = [1, 1]} : vector<8x128xf32> to vector<8x32xf32>
    %49 = vector.extract_strided_slice %45 {offsets = [0, 96], sizes = [8, 32], strides = [1, 1]} : vector<8x128xf32> to vector<8x32xf32>
    %50 = arith.mulf %47, %27 : vector<8x32xf32>
    %51 = arith.mulf %46, %48 : vector<8x32xf32>
    %52 = arith.addf %50, %51 : vector<8x32xf32>
    %53 = math.tanh %52 : vector<8x32xf32>
    %54 = arith.mulf %49, %53 : vector<8x32xf32>
    %55 = vector.broadcast %23 : vector<1x128xf32> to vector<8x128xf32>
    %56 = arith.mulf %38, %55 : vector<8x128xf32>
    %57 = math.tanh %56 : vector<8x128xf32>
    %58 = vector.broadcast %23 : vector<1x128xf32> to vector<8x128xf32>
    %59 = arith.mulf %57, %58 : vector<8x128xf32>
    %60 = vector.broadcast %26 : vector<1x128xf32> to vector<8x128xf32>
    %61 = arith.addf %59, %60 : vector<8x128xf32>
    %62 = vector.extract_strided_slice %61 {offsets = [0, 0], sizes = [8, 32], strides = [1, 1]} : vector<8x128xf32> to vector<8x32xf32>
    %63 = vector.extract_strided_slice %61 {offsets = [0, 32], sizes = [8, 32], strides = [1, 1]} : vector<8x128xf32> to vector<8x32xf32>
    %64 = vector.extract_strided_slice %61 {offsets = [0, 64], sizes = [8, 32], strides = [1, 1]} : vector<8x128xf32> to vector<8x32xf32>
    %65 = vector.extract_strided_slice %61 {offsets = [0, 96], sizes = [8, 32], strides = [1, 1]} : vector<8x128xf32> to vector<8x32xf32>
    %66 = arith.mulf %63, %27 : vector<8x32xf32>
    %67 = arith.mulf %62, %64 : vector<8x32xf32>
    %68 = arith.addf %66, %67 : vector<8x32xf32>
    %69 = math.tanh %68 : vector<8x32xf32>
    %70 = arith.mulf %65, %69 : vector<8x32xf32>
    %71 = arith.index_cast %c0_i32 : i32 to index
    %c0_27 = arith.constant 0 : index
    %c0_28 = arith.constant 0 : index
    %72 = vector.load %arg6[%71, %c0_27, %c0_28] : memref<8x8x64xf32, #tpu.memory_space<vmem>>, vector<1x8x32xf32>
    %73 = vector.shape_cast %72 : vector<1x8x32xf32> to vector<8x32xf32>
    %74 = vector.shape_cast %54 : vector<8x32xf32> to vector<1x8x32xf32>
    tpu.vector_store %arg6[%71, %c0_27, %c0_28], %74 {strides = array<i32>} : memref<8x8x64xf32, #tpu.memory_space<vmem>>, vector<1x8x32xf32>,
    %75 = arith.index_cast %28 : i32 to index
    %c0_29 = arith.constant 0 : index
    %c32 = arith.constant 32 : index
    %76 = vector.load %arg6[%75, %c0_29, %c32] : memref<8x8x64xf32, #tpu.memory_space<vmem>>, vector<1x8x32xf32>
    %77 = vector.shape_cast %76 : vector<1x8x32xf32> to vector<8x32xf32>
    %78 = vector.shape_cast %70 : vector<8x32xf32> to vector<1x8x32xf32>
    tpu.vector_store %arg6[%75, %c0_29, %c32], %78 {strides = array<i32>} : memref<8x8x64xf32, #tpu.memory_space<vmem>>, vector<1x8x32xf32>,
    %c1_i32 = arith.constant 1 : i32
    %c7_i32_30 = arith.constant 7 : i32
    %79 = arith.subi %c7_i32_30, %c1_i32 : i32
    %80 = arith.index_cast %c1_i32 : i32 to index
    %c0_31 = arith.constant 0 : index
    %c0_32 = arith.constant 0 : index
    %81 = vector.load %arg7[%80, %c0_31, %c0_32] : memref<8x8x128xf32, #tpu.memory_space<vmem>>, vector<1x8x128xf32>
    %82 = vector.shape_cast %81 : vector<1x8x128xf32> to vector<8x128xf32>
    %cst_33 = arith.constant dense<0.000000e+00> : vector<8x128xf32>
    %83 = tpu.matmul %54, %13, %cst_33 {dimension_numbers = #tpu.dot_dimension_numbers<[1], [0], [0], [1], [0, 0, 1, 1], [], []>, precision = #tpu.contract_precision<fp32>} : vector<8x32xf32>, vector<32x128xf32>, vector<8x128xf32> -> vector<8x128xf32>
    %84 = arith.addf %82, %83 : vector<8x128xf32>
    %85 = arith.index_cast %79 : i32 to index
    %c0_34 = arith.constant 0 : index
    %c0_35 = arith.constant 0 : index
    %86 = vector.load %arg8[%85, %c0_34, %c0_35] : memref<8x8x128xf32, #tpu.memory_space<vmem>>, vector<1x8x128xf32>
    %87 = vector.shape_cast %86 : vector<1x8x128xf32> to vector<8x128xf32>
    %cst_36 = arith.constant dense<0.000000e+00> : vector<8x128xf32>
    %88 = tpu.matmul %70, %14, %cst_36 {dimension_numbers = #tpu.dot_dimension_numbers<[1], [0], [0], [1], [0, 0, 1, 1], [], []>, precision = #tpu.contract_precision<fp32>} : vector<8x32xf32>, vector<32x128xf32>, vector<8x128xf32> -> vector<8x128xf32>
    %89 = arith.addf %87, %88 : vector<8x128xf32>
    %90 = vector.broadcast %23 : vector<1x128xf32> to vector<8x128xf32>
    %91 = arith.mulf %84, %90 : vector<8x128xf32>
    %92 = math.tanh %91 : vector<8x128xf32>
    %93 = vector.broadcast %23 : vector<1x128xf32> to vector<8x128xf32>
    %94 = arith.mulf %92, %93 : vector<8x128xf32>
    %95 = vector.broadcast %26 : vector<1x128xf32> to vector<8x128xf32>
    %96 = arith.addf %94, %95 : vector<8x128xf32>
    %97 = vector.extract_strided_slice %96 {offsets = [0, 0], sizes = [8, 32], strides = [1, 1]} : vector<8x128xf32> to vector<8x32xf32>
    %98 = vector.extract_strided_slice %96 {offsets = [0, 32], sizes = [8, 32], strides = [1, 1]} : vector<8x128xf32> to vector<8x32xf32>
    %99 = vector.extract_strided_slice %96 {offsets = [0, 64], sizes = [8, 32], strides = [1, 1]} : vector<8x128xf32> to vector<8x32xf32>
    %100 = vector.extract_strided_slice %96 {offsets = [0, 96], sizes = [8, 32], strides = [1, 1]} : vector<8x128xf32> to vector<8x32xf32>
    %101 = arith.mulf %98, %52 : vector<8x32xf32>
    %102 = arith.mulf %97, %99 : vector<8x32xf32>
    %103 = arith.addf %101, %102 : vector<8x32xf32>
    %104 = math.tanh %103 : vector<8x32xf32>
    %105 = arith.mulf %100, %104 : vector<8x32xf32>
    %106 = vector.broadcast %23 : vector<1x128xf32> to vector<8x128xf32>
    %107 = arith.mulf %89, %106 : vector<8x128xf32>
    %108 = math.tanh %107 : vector<8x128xf32>
    %109 = vector.broadcast %23 : vector<1x128xf32> to vector<8x128xf32>
    %110 = arith.mulf %108, %109 : vector<8x128xf32>
    %111 = vector.broadcast %26 : vector<1x128xf32> to vector<8x128xf32>
    %112 = arith.addf %110, %111 : vector<8x128xf32>
    %113 = vector.extract_strided_slice %112 {offsets = [0, 0], sizes = [8, 32], strides = [1, 1]} : vector<8x128xf32> to vector<8x32xf32>
    %114 = vector.extract_strided_slice %112 {offsets = [0, 32], sizes = [8, 32], strides = [1, 1]} : vector<8x128xf32> to vector<8x32xf32>
    %115 = vector.extract_strided_slice %112 {offsets = [0, 64], sizes = [8, 32], strides = [1, 1]} : vector<8x128xf32> to vector<8x32xf32>
    %116 = vector.extract_strided_slice %112 {offsets = [0, 96], sizes = [8, 32], strides = [1, 1]} : vector<8x128xf32> to vector<8x32xf32>
    %117 = arith.mulf %114, %68 : vector<8x32xf32>
    %118 = arith.mulf %113, %115 : vector<8x32xf32>
    %119 = arith.addf %117, %118 : vector<8x32xf32>
    %120 = math.tanh %119 : vector<8x32xf32>
    %121 = arith.mulf %116, %120 : vector<8x32xf32>
    %122 = arith.index_cast %c1_i32 : i32 to index
    %c0_37 = arith.constant 0 : index
    %c0_38 = arith.constant 0 : index
    %123 = vector.load %arg6[%122, %c0_37, %c0_38] : memref<8x8x64xf32, #tpu.memory_space<vmem>>, vector<1x8x32xf32>
    %124 = vector.shape_cast %123 : vector<1x8x32xf32> to vector<8x32xf32>
    %125 = vector.shape_cast %105 : vector<8x32xf32> to vector<1x8x32xf32>
    tpu.vector_store %arg6[%122, %c0_37, %c0_38], %125 {strides = array<i32>} : memref<8x8x64xf32, #tpu.memory_space<vmem>>, vector<1x8x32xf32>,
    %126 = arith.index_cast %79 : i32 to index
    %c0_39 = arith.constant 0 : index
    %c32_40 = arith.constant 32 : index
    %127 = vector.load %arg6[%126, %c0_39, %c32_40] : memref<8x8x64xf32, #tpu.memory_space<vmem>>, vector<1x8x32xf32>
    %128 = vector.shape_cast %127 : vector<1x8x32xf32> to vector<8x32xf32>
    %129 = vector.shape_cast %121 : vector<8x32xf32> to vector<1x8x32xf32>
    tpu.vector_store %arg6[%126, %c0_39, %c32_40], %129 {strides = array<i32>} : memref<8x8x64xf32, #tpu.memory_space<vmem>>, vector<1x8x32xf32>,
    %c2_i32 = arith.constant 2 : i32
    %c7_i32_41 = arith.constant 7 : i32
    %130 = arith.subi %c7_i32_41, %c2_i32 : i32
    %131 = arith.index_cast %c2_i32 : i32 to index
    %c0_42 = arith.constant 0 : index
    %c0_43 = arith.constant 0 : index
    %132 = vector.load %arg7[%131, %c0_42, %c0_43] : memref<8x8x128xf32, #tpu.memory_space<vmem>>, vector<1x8x128xf32>
    %133 = vector.shape_cast %132 : vector<1x8x128xf32> to vector<8x128xf32>
    %cst_44 = arith.constant dense<0.000000e+00> : vector<8x128xf32>
    %134 = tpu.matmul %105, %13, %cst_44 {dimension_numbers = #tpu.dot_dimension_numbers<[1], [0], [0], [1], [0, 0, 1, 1], [], []>, precision = #tpu.contract_precision<fp32>} : vector<8x32xf32>, vector<32x128xf32>, vector<8x128xf32> -> vector<8x128xf32>
    %135 = arith.addf %133, %134 : vector<8x128xf32>
    %136 = arith.index_cast %130 : i32 to index
    %c0_45 = arith.constant 0 : index
    %c0_46 = arith.constant 0 : index
    %137 = vector.load %arg8[%136, %c0_45, %c0_46] : memref<8x8x128xf32, #tpu.memory_space<vmem>>, vector<1x8x128xf32>
    %138 = vector.shape_cast %137 : vector<1x8x128xf32> to vector<8x128xf32>
    %cst_47 = arith.constant dense<0.000000e+00> : vector<8x128xf32>
    %139 = tpu.matmul %121, %14, %cst_47 {dimension_numbers = #tpu.dot_dimension_numbers<[1], [0], [0], [1], [0, 0, 1, 1], [], []>, precision = #tpu.contract_precision<fp32>} : vector<8x32xf32>, vector<32x128xf32>, vector<8x128xf32> -> vector<8x128xf32>
    %140 = arith.addf %138, %139 : vector<8x128xf32>
    %141 = vector.broadcast %23 : vector<1x128xf32> to vector<8x128xf32>
    %142 = arith.mulf %135, %141 : vector<8x128xf32>
    %143 = math.tanh %142 : vector<8x128xf32>
    %144 = vector.broadcast %23 : vector<1x128xf32> to vector<8x128xf32>
    %145 = arith.mulf %143, %144 : vector<8x128xf32>
    %146 = vector.broadcast %26 : vector<1x128xf32> to vector<8x128xf32>
    %147 = arith.addf %145, %146 : vector<8x128xf32>
    %148 = vector.extract_strided_slice %147 {offsets = [0, 0], sizes = [8, 32], strides = [1, 1]} : vector<8x128xf32> to vector<8x32xf32>
    %149 = vector.extract_strided_slice %147 {offsets = [0, 32], sizes = [8, 32], strides = [1, 1]} : vector<8x128xf32> to vector<8x32xf32>
    %150 = vector.extract_strided_slice %147 {offsets = [0, 64], sizes = [8, 32], strides = [1, 1]} : vector<8x128xf32> to vector<8x32xf32>
    %151 = vector.extract_strided_slice %147 {offsets = [0, 96], sizes = [8, 32], strides = [1, 1]} : vector<8x128xf32> to vector<8x32xf32>
    %152 = arith.mulf %149, %103 : vector<8x32xf32>
    %153 = arith.mulf %148, %150 : vector<8x32xf32>
    %154 = arith.addf %152, %153 : vector<8x32xf32>
    %155 = math.tanh %154 : vector<8x32xf32>
    %156 = arith.mulf %151, %155 : vector<8x32xf32>
    %157 = vector.broadcast %23 : vector<1x128xf32> to vector<8x128xf32>
    %158 = arith.mulf %140, %157 : vector<8x128xf32>
    %159 = math.tanh %158 : vector<8x128xf32>
    %160 = vector.broadcast %23 : vector<1x128xf32> to vector<8x128xf32>
    %161 = arith.mulf %159, %160 : vector<8x128xf32>
    %162 = vector.broadcast %26 : vector<1x128xf32> to vector<8x128xf32>
    %163 = arith.addf %161, %162 : vector<8x128xf32>
    %164 = vector.extract_strided_slice %163 {offsets = [0, 0], sizes = [8, 32], strides = [1, 1]} : vector<8x128xf32> to vector<8x32xf32>
    %165 = vector.extract_strided_slice %163 {offsets = [0, 32], sizes = [8, 32], strides = [1, 1]} : vector<8x128xf32> to vector<8x32xf32>
    %166 = vector.extract_strided_slice %163 {offsets = [0, 64], sizes = [8, 32], strides = [1, 1]} : vector<8x128xf32> to vector<8x32xf32>
    %167 = vector.extract_strided_slice %163 {offsets = [0, 96], sizes = [8, 32], strides = [1, 1]} : vector<8x128xf32> to vector<8x32xf32>
    %168 = arith.mulf %165, %119 : vector<8x32xf32>
    %169 = arith.mulf %164, %166 : vector<8x32xf32>
    %170 = arith.addf %168, %169 : vector<8x32xf32>
    %171 = math.tanh %170 : vector<8x32xf32>
    %172 = arith.mulf %167, %171 : vector<8x32xf32>
    %173 = arith.index_cast %c2_i32 : i32 to index
    %c0_48 = arith.constant 0 : index
    %c0_49 = arith.constant 0 : index
    %174 = vector.load %arg6[%173, %c0_48, %c0_49] : memref<8x8x64xf32, #tpu.memory_space<vmem>>, vector<1x8x32xf32>
    %175 = vector.shape_cast %174 : vector<1x8x32xf32> to vector<8x32xf32>
    %176 = vector.shape_cast %156 : vector<8x32xf32> to vector<1x8x32xf32>
    tpu.vector_store %arg6[%173, %c0_48, %c0_49], %176 {strides = array<i32>} : memref<8x8x64xf32, #tpu.memory_space<vmem>>, vector<1x8x32xf32>,
    %177 = arith.index_cast %130 : i32 to index
    %c0_50 = arith.constant 0 : index
    %c32_51 = arith.constant 32 : index
    %178 = vector.load %arg6[%177, %c0_50, %c32_51] : memref<8x8x64xf32, #tpu.memory_space<vmem>>, vector<1x8x32xf32>
    %179 = vector.shape_cast %178 : vector<1x8x32xf32> to vector<8x32xf32>
    %180 = vector.shape_cast %172 : vector<8x32xf32> to vector<1x8x32xf32>
    tpu.vector_store %arg6[%177, %c0_50, %c32_51], %180 {strides = array<i32>} : memref<8x8x64xf32, #tpu.memory_space<vmem>>, vector<1x8x32xf32>,
    %c3_i32 = arith.constant 3 : i32
    %c7_i32_52 = arith.constant 7 : i32
    %181 = arith.subi %c7_i32_52, %c3_i32 : i32
    %182 = arith.index_cast %c3_i32 : i32 to index
    %c0_53 = arith.constant 0 : index
    %c0_54 = arith.constant 0 : index
    %183 = vector.load %arg7[%182, %c0_53, %c0_54] : memref<8x8x128xf32, #tpu.memory_space<vmem>>, vector<1x8x128xf32>
    %184 = vector.shape_cast %183 : vector<1x8x128xf32> to vector<8x128xf32>
    %cst_55 = arith.constant dense<0.000000e+00> : vector<8x128xf32>
    %185 = tpu.matmul %156, %13, %cst_55 {dimension_numbers = #tpu.dot_dimension_numbers<[1], [0], [0], [1], [0, 0, 1, 1], [], []>, precision = #tpu.contract_precision<fp32>} : vector<8x32xf32>, vector<32x128xf32>, vector<8x128xf32> -> vector<8x128xf32>
    %186 = arith.addf %184, %185 : vector<8x128xf32>
    %187 = arith.index_cast %181 : i32 to index
    %c0_56 = arith.constant 0 : index
    %c0_57 = arith.constant 0 : index
    %188 = vector.load %arg8[%187, %c0_56, %c0_57] : memref<8x8x128xf32, #tpu.memory_space<vmem>>, vector<1x8x128xf32>
    %189 = vector.shape_cast %188 : vector<1x8x128xf32> to vector<8x128xf32>
    %cst_58 = arith.constant dense<0.000000e+00> : vector<8x128xf32>
    %190 = tpu.matmul %172, %14, %cst_58 {dimension_numbers = #tpu.dot_dimension_numbers<[1], [0], [0], [1], [0, 0, 1, 1], [], []>, precision = #tpu.contract_precision<fp32>} : vector<8x32xf32>, vector<32x128xf32>, vector<8x128xf32> -> vector<8x128xf32>
    %191 = arith.addf %189, %190 : vector<8x128xf32>
    %192 = vector.broadcast %23 : vector<1x128xf32> to vector<8x128xf32>
    %193 = arith.mulf %186, %192 : vector<8x128xf32>
    %194 = math.tanh %193 : vector<8x128xf32>
    %195 = vector.broadcast %23 : vector<1x128xf32> to vector<8x128xf32>
    %196 = arith.mulf %194, %195 : vector<8x128xf32>
    %197 = vector.broadcast %26 : vector<1x128xf32> to vector<8x128xf32>
    %198 = arith.addf %196, %197 : vector<8x128xf32>
    %199 = vector.extract_strided_slice %198 {offsets = [0, 0], sizes = [8, 32], strides = [1, 1]} : vector<8x128xf32> to vector<8x32xf32>
    %200 = vector.extract_strided_slice %198 {offsets = [0, 32], sizes = [8, 32], strides = [1, 1]} : vector<8x128xf32> to vector<8x32xf32>
    %201 = vector.extract_strided_slice %198 {offsets = [0, 64], sizes = [8, 32], strides = [1, 1]} : vector<8x128xf32> to vector<8x32xf32>
    %202 = vector.extract_strided_slice %198 {offsets = [0, 96], sizes = [8, 32], strides = [1, 1]} : vector<8x128xf32> to vector<8x32xf32>
    %203 = arith.mulf %200, %154 : vector<8x32xf32>
    %204 = arith.mulf %199, %201 : vector<8x32xf32>
    %205 = arith.addf %203, %204 : vector<8x32xf32>
    %206 = math.tanh %205 : vector<8x32xf32>
    %207 = arith.mulf %202, %206 : vector<8x32xf32>
    %208 = vector.broadcast %23 : vector<1x128xf32> to vector<8x128xf32>
    %209 = arith.mulf %191, %208 : vector<8x128xf32>
    %210 = math.tanh %209 : vector<8x128xf32>
    %211 = vector.broadcast %23 : vector<1x128xf32> to vector<8x128xf32>
    %212 = arith.mulf %210, %211 : vector<8x128xf32>
    %213 = vector.broadcast %26 : vector<1x128xf32> to vector<8x128xf32>
    %214 = arith.addf %212, %213 : vector<8x128xf32>
    %215 = vector.extract_strided_slice %214 {offsets = [0, 0], sizes = [8, 32], strides = [1, 1]} : vector<8x128xf32> to vector<8x32xf32>
    %216 = vector.extract_strided_slice %214 {offsets = [0, 32], sizes = [8, 32], strides = [1, 1]} : vector<8x128xf32> to vector<8x32xf32>
    %217 = vector.extract_strided_slice %214 {offsets = [0, 64], sizes = [8, 32], strides = [1, 1]} : vector<8x128xf32> to vector<8x32xf32>
    %218 = vector.extract_strided_slice %214 {offsets = [0, 96], sizes = [8, 32], strides = [1, 1]} : vector<8x128xf32> to vector<8x32xf32>
    %219 = arith.mulf %216, %170 : vector<8x32xf32>
    %220 = arith.mulf %215, %217 : vector<8x32xf32>
    %221 = arith.addf %219, %220 : vector<8x32xf32>
    %222 = math.tanh %221 : vector<8x32xf32>
    %223 = arith.mulf %218, %222 : vector<8x32xf32>
    %224 = arith.index_cast %c3_i32 : i32 to index
    %c0_59 = arith.constant 0 : index
    %c0_60 = arith.constant 0 : index
    %225 = vector.load %arg6[%224, %c0_59, %c0_60] : memref<8x8x64xf32, #tpu.memory_space<vmem>>, vector<1x8x32xf32>
    %226 = vector.shape_cast %225 : vector<1x8x32xf32> to vector<8x32xf32>
    %227 = vector.shape_cast %207 : vector<8x32xf32> to vector<1x8x32xf32>
    tpu.vector_store %arg6[%224, %c0_59, %c0_60], %227 {strides = array<i32>} : memref<8x8x64xf32, #tpu.memory_space<vmem>>, vector<1x8x32xf32>,
    %228 = arith.index_cast %181 : i32 to index
    %c0_61 = arith.constant 0 : index
    %c32_62 = arith.constant 32 : index
    %229 = vector.load %arg6[%228, %c0_61, %c32_62] : memref<8x8x64xf32, #tpu.memory_space<vmem>>, vector<1x8x32xf32>
    %230 = vector.shape_cast %229 : vector<1x8x32xf32> to vector<8x32xf32>
    %231 = vector.shape_cast %223 : vector<8x32xf32> to vector<1x8x32xf32>
    tpu.vector_store %arg6[%228, %c0_61, %c32_62], %231 {strides = array<i32>} : memref<8x8x64xf32, #tpu.memory_space<vmem>>, vector<1x8x32xf32>,
    %c4_i32 = arith.constant 4 : i32
    %c7_i32_63 = arith.constant 7 : i32
    %232 = arith.subi %c7_i32_63, %c4_i32 : i32
    %233 = arith.index_cast %c4_i32 : i32 to index
    %c0_64 = arith.constant 0 : index
    %c0_65 = arith.constant 0 : index
    %234 = vector.load %arg7[%233, %c0_64, %c0_65] : memref<8x8x128xf32, #tpu.memory_space<vmem>>, vector<1x8x128xf32>
    %235 = vector.shape_cast %234 : vector<1x8x128xf32> to vector<8x128xf32>
    %cst_66 = arith.constant dense<0.000000e+00> : vector<8x128xf32>
    %236 = tpu.matmul %207, %13, %cst_66 {dimension_numbers = #tpu.dot_dimension_numbers<[1], [0], [0], [1], [0, 0, 1, 1], [], []>, precision = #tpu.contract_precision<fp32>} : vector<8x32xf32>, vector<32x128xf32>, vector<8x128xf32> -> vector<8x128xf32>
    %237 = arith.addf %235, %236 : vector<8x128xf32>
    %238 = arith.index_cast %232 : i32 to index
    %c0_67 = arith.constant 0 : index
    %c0_68 = arith.constant 0 : index
    %239 = vector.load %arg8[%238, %c0_67, %c0_68] : memref<8x8x128xf32, #tpu.memory_space<vmem>>, vector<1x8x128xf32>
    %240 = vector.shape_cast %239 : vector<1x8x128xf32> to vector<8x128xf32>
    %cst_69 = arith.constant dense<0.000000e+00> : vector<8x128xf32>
    %241 = tpu.matmul %223, %14, %cst_69 {dimension_numbers = #tpu.dot_dimension_numbers<[1], [0], [0], [1], [0, 0, 1, 1], [], []>, precision = #tpu.contract_precision<fp32>} : vector<8x32xf32>, vector<32x128xf32>, vector<8x128xf32> -> vector<8x128xf32>
    %242 = arith.addf %240, %241 : vector<8x128xf32>
    %243 = vector.broadcast %23 : vector<1x128xf32> to vector<8x128xf32>
    %244 = arith.mulf %237, %243 : vector<8x128xf32>
    %245 = math.tanh %244 : vector<8x128xf32>
    %246 = vector.broadcast %23 : vector<1x128xf32> to vector<8x128xf32>
    %247 = arith.mulf %245, %246 : vector<8x128xf32>
    %248 = vector.broadcast %26 : vector<1x128xf32> to vector<8x128xf32>
    %249 = arith.addf %247, %248 : vector<8x128xf32>
    %250 = vector.extract_strided_slice %249 {offsets = [0, 0], sizes = [8, 32], strides = [1, 1]} : vector<8x128xf32> to vector<8x32xf32>
    %251 = vector.extract_strided_slice %249 {offsets = [0, 32], sizes = [8, 32], strides = [1, 1]} : vector<8x128xf32> to vector<8x32xf32>
    %252 = vector.extract_strided_slice %249 {offsets = [0, 64], sizes = [8, 32], strides = [1, 1]} : vector<8x128xf32> to vector<8x32xf32>
    %253 = vector.extract_strided_slice %249 {offsets = [0, 96], sizes = [8, 32], strides = [1, 1]} : vector<8x128xf32> to vector<8x32xf32>
    %254 = arith.mulf %251, %205 : vector<8x32xf32>
    %255 = arith.mulf %250, %252 : vector<8x32xf32>
    %256 = arith.addf %254, %255 : vector<8x32xf32>
    %257 = math.tanh %256 : vector<8x32xf32>
    %258 = arith.mulf %253, %257 : vector<8x32xf32>
    %259 = vector.broadcast %23 : vector<1x128xf32> to vector<8x128xf32>
    %260 = arith.mulf %242, %259 : vector<8x128xf32>
    %261 = math.tanh %260 : vector<8x128xf32>
    %262 = vector.broadcast %23 : vector<1x128xf32> to vector<8x128xf32>
    %263 = arith.mulf %261, %262 : vector<8x128xf32>
    %264 = vector.broadcast %26 : vector<1x128xf32> to vector<8x128xf32>
    %265 = arith.addf %263, %264 : vector<8x128xf32>
    %266 = vector.extract_strided_slice %265 {offsets = [0, 0], sizes = [8, 32], strides = [1, 1]} : vector<8x128xf32> to vector<8x32xf32>
    %267 = vector.extract_strided_slice %265 {offsets = [0, 32], sizes = [8, 32], strides = [1, 1]} : vector<8x128xf32> to vector<8x32xf32>
    %268 = vector.extract_strided_slice %265 {offsets = [0, 64], sizes = [8, 32], strides = [1, 1]} : vector<8x128xf32> to vector<8x32xf32>
    %269 = vector.extract_strided_slice %265 {offsets = [0, 96], sizes = [8, 32], strides = [1, 1]} : vector<8x128xf32> to vector<8x32xf32>
    %270 = arith.mulf %267, %221 : vector<8x32xf32>
    %271 = arith.mulf %266, %268 : vector<8x32xf32>
    %272 = arith.addf %270, %271 : vector<8x32xf32>
    %273 = math.tanh %272 : vector<8x32xf32>
    %274 = arith.mulf %269, %273 : vector<8x32xf32>
    %275 = arith.index_cast %c4_i32 : i32 to index
    %c0_70 = arith.constant 0 : index
    %c0_71 = arith.constant 0 : index
    %276 = vector.load %arg6[%275, %c0_70, %c0_71] : memref<8x8x64xf32, #tpu.memory_space<vmem>>, vector<1x8x32xf32>
    %277 = vector.shape_cast %276 : vector<1x8x32xf32> to vector<8x32xf32>
    %278 = vector.shape_cast %258 : vector<8x32xf32> to vector<1x8x32xf32>
    tpu.vector_store %arg6[%275, %c0_70, %c0_71], %278 {strides = array<i32>} : memref<8x8x64xf32, #tpu.memory_space<vmem>>, vector<1x8x32xf32>,
    %279 = arith.index_cast %232 : i32 to index
    %c0_72 = arith.constant 0 : index
    %c32_73 = arith.constant 32 : index
    %280 = vector.load %arg6[%279, %c0_72, %c32_73] : memref<8x8x64xf32, #tpu.memory_space<vmem>>, vector<1x8x32xf32>
    %281 = vector.shape_cast %280 : vector<1x8x32xf32> to vector<8x32xf32>
    %282 = vector.shape_cast %274 : vector<8x32xf32> to vector<1x8x32xf32>
    tpu.vector_store %arg6[%279, %c0_72, %c32_73], %282 {strides = array<i32>} : memref<8x8x64xf32, #tpu.memory_space<vmem>>, vector<1x8x32xf32>,
    %c5_i32 = arith.constant 5 : i32
    %c7_i32_74 = arith.constant 7 : i32
    %283 = arith.subi %c7_i32_74, %c5_i32 : i32
    %284 = arith.index_cast %c5_i32 : i32 to index
    %c0_75 = arith.constant 0 : index
    %c0_76 = arith.constant 0 : index
    %285 = vector.load %arg7[%284, %c0_75, %c0_76] : memref<8x8x128xf32, #tpu.memory_space<vmem>>, vector<1x8x128xf32>
    %286 = vector.shape_cast %285 : vector<1x8x128xf32> to vector<8x128xf32>
    %cst_77 = arith.constant dense<0.000000e+00> : vector<8x128xf32>
    %287 = tpu.matmul %258, %13, %cst_77 {dimension_numbers = #tpu.dot_dimension_numbers<[1], [0], [0], [1], [0, 0, 1, 1], [], []>, precision = #tpu.contract_precision<fp32>} : vector<8x32xf32>, vector<32x128xf32>, vector<8x128xf32> -> vector<8x128xf32>
    %288 = arith.addf %286, %287 : vector<8x128xf32>
    %289 = arith.index_cast %283 : i32 to index
    %c0_78 = arith.constant 0 : index
    %c0_79 = arith.constant 0 : index
    %290 = vector.load %arg8[%289, %c0_78, %c0_79] : memref<8x8x128xf32, #tpu.memory_space<vmem>>, vector<1x8x128xf32>
    %291 = vector.shape_cast %290 : vector<1x8x128xf32> to vector<8x128xf32>
    %cst_80 = arith.constant dense<0.000000e+00> : vector<8x128xf32>
    %292 = tpu.matmul %274, %14, %cst_80 {dimension_numbers = #tpu.dot_dimension_numbers<[1], [0], [0], [1], [0, 0, 1, 1], [], []>, precision = #tpu.contract_precision<fp32>} : vector<8x32xf32>, vector<32x128xf32>, vector<8x128xf32> -> vector<8x128xf32>
    %293 = arith.addf %291, %292 : vector<8x128xf32>
    %294 = vector.broadcast %23 : vector<1x128xf32> to vector<8x128xf32>
    %295 = arith.mulf %288, %294 : vector<8x128xf32>
    %296 = math.tanh %295 : vector<8x128xf32>
    %297 = vector.broadcast %23 : vector<1x128xf32> to vector<8x128xf32>
    %298 = arith.mulf %296, %297 : vector<8x128xf32>
    %299 = vector.broadcast %26 : vector<1x128xf32> to vector<8x128xf32>
    %300 = arith.addf %298, %299 : vector<8x128xf32>
    %301 = vector.extract_strided_slice %300 {offsets = [0, 0], sizes = [8, 32], strides = [1, 1]} : vector<8x128xf32> to vector<8x32xf32>
    %302 = vector.extract_strided_slice %300 {offsets = [0, 32], sizes = [8, 32], strides = [1, 1]} : vector<8x128xf32> to vector<8x32xf32>
    %303 = vector.extract_strided_slice %300 {offsets = [0, 64], sizes = [8, 32], strides = [1, 1]} : vector<8x128xf32> to vector<8x32xf32>
    %304 = vector.extract_strided_slice %300 {offsets = [0, 96], sizes = [8, 32], strides = [1, 1]} : vector<8x128xf32> to vector<8x32xf32>
    %305 = arith.mulf %302, %256 : vector<8x32xf32>
    %306 = arith.mulf %301, %303 : vector<8x32xf32>
    %307 = arith.addf %305, %306 : vector<8x32xf32>
    %308 = math.tanh %307 : vector<8x32xf32>
    %309 = arith.mulf %304, %308 : vector<8x32xf32>
    %310 = vector.broadcast %23 : vector<1x128xf32> to vector<8x128xf32>
    %311 = arith.mulf %293, %310 : vector<8x128xf32>
    %312 = math.tanh %311 : vector<8x128xf32>
    %313 = vector.broadcast %23 : vector<1x128xf32> to vector<8x128xf32>
    %314 = arith.mulf %312, %313 : vector<8x128xf32>
    %315 = vector.broadcast %26 : vector<1x128xf32> to vector<8x128xf32>
    %316 = arith.addf %314, %315 : vector<8x128xf32>
    %317 = vector.extract_strided_slice %316 {offsets = [0, 0], sizes = [8, 32], strides = [1, 1]} : vector<8x128xf32> to vector<8x32xf32>
    %318 = vector.extract_strided_slice %316 {offsets = [0, 32], sizes = [8, 32], strides = [1, 1]} : vector<8x128xf32> to vector<8x32xf32>
    %319 = vector.extract_strided_slice %316 {offsets = [0, 64], sizes = [8, 32], strides = [1, 1]} : vector<8x128xf32> to vector<8x32xf32>
    %320 = vector.extract_strided_slice %316 {offsets = [0, 96], sizes = [8, 32], strides = [1, 1]} : vector<8x128xf32> to vector<8x32xf32>
    %321 = arith.mulf %318, %272 : vector<8x32xf32>
    %322 = arith.mulf %317, %319 : vector<8x32xf32>
    %323 = arith.addf %321, %322 : vector<8x32xf32>
    %324 = math.tanh %323 : vector<8x32xf32>
    %325 = arith.mulf %320, %324 : vector<8x32xf32>
    %326 = arith.index_cast %c5_i32 : i32 to index
    %c0_81 = arith.constant 0 : index
    %c0_82 = arith.constant 0 : index
    %327 = vector.load %arg6[%326, %c0_81, %c0_82] : memref<8x8x64xf32, #tpu.memory_space<vmem>>, vector<1x8x32xf32>
    %328 = vector.shape_cast %327 : vector<1x8x32xf32> to vector<8x32xf32>
    %329 = vector.shape_cast %309 : vector<8x32xf32> to vector<1x8x32xf32>
    tpu.vector_store %arg6[%326, %c0_81, %c0_82], %329 {strides = array<i32>} : memref<8x8x64xf32, #tpu.memory_space<vmem>>, vector<1x8x32xf32>,
    %330 = arith.index_cast %283 : i32 to index
    %c0_83 = arith.constant 0 : index
    %c32_84 = arith.constant 32 : index
    %331 = vector.load %arg6[%330, %c0_83, %c32_84] : memref<8x8x64xf32, #tpu.memory_space<vmem>>, vector<1x8x32xf32>
    %332 = vector.shape_cast %331 : vector<1x8x32xf32> to vector<8x32xf32>
    %333 = vector.shape_cast %325 : vector<8x32xf32> to vector<1x8x32xf32>
    tpu.vector_store %arg6[%330, %c0_83, %c32_84], %333 {strides = array<i32>} : memref<8x8x64xf32, #tpu.memory_space<vmem>>, vector<1x8x32xf32>,
    %c6_i32 = arith.constant 6 : i32
    %c7_i32_85 = arith.constant 7 : i32
    %334 = arith.subi %c7_i32_85, %c6_i32 : i32
    %335 = arith.index_cast %c6_i32 : i32 to index
    %c0_86 = arith.constant 0 : index
    %c0_87 = arith.constant 0 : index
    %336 = vector.load %arg7[%335, %c0_86, %c0_87] : memref<8x8x128xf32, #tpu.memory_space<vmem>>, vector<1x8x128xf32>
    %337 = vector.shape_cast %336 : vector<1x8x128xf32> to vector<8x128xf32>
    %cst_88 = arith.constant dense<0.000000e+00> : vector<8x128xf32>
    %338 = tpu.matmul %309, %13, %cst_88 {dimension_numbers = #tpu.dot_dimension_numbers<[1], [0], [0], [1], [0, 0, 1, 1], [], []>, precision = #tpu.contract_precision<fp32>} : vector<8x32xf32>, vector<32x128xf32>, vector<8x128xf32> -> vector<8x128xf32>
    %339 = arith.addf %337, %338 : vector<8x128xf32>
    %340 = arith.index_cast %334 : i32 to index
    %c0_89 = arith.constant 0 : index
    %c0_90 = arith.constant 0 : index
    %341 = vector.load %arg8[%340, %c0_89, %c0_90] : memref<8x8x128xf32, #tpu.memory_space<vmem>>, vector<1x8x128xf32>
    %342 = vector.shape_cast %341 : vector<1x8x128xf32> to vector<8x128xf32>
    %cst_91 = arith.constant dense<0.000000e+00> : vector<8x128xf32>
    %343 = tpu.matmul %325, %14, %cst_91 {dimension_numbers = #tpu.dot_dimension_numbers<[1], [0], [0], [1], [0, 0, 1, 1], [], []>, precision = #tpu.contract_precision<fp32>} : vector<8x32xf32>, vector<32x128xf32>, vector<8x128xf32> -> vector<8x128xf32>
    %344 = arith.addf %342, %343 : vector<8x128xf32>
    %345 = vector.broadcast %23 : vector<1x128xf32> to vector<8x128xf32>
    %346 = arith.mulf %339, %345 : vector<8x128xf32>
    %347 = math.tanh %346 : vector<8x128xf32>
    %348 = vector.broadcast %23 : vector<1x128xf32> to vector<8x128xf32>
    %349 = arith.mulf %347, %348 : vector<8x128xf32>
    %350 = vector.broadcast %26 : vector<1x128xf32> to vector<8x128xf32>
    %351 = arith.addf %349, %350 : vector<8x128xf32>
    %352 = vector.extract_strided_slice %351 {offsets = [0, 0], sizes = [8, 32], strides = [1, 1]} : vector<8x128xf32> to vector<8x32xf32>
    %353 = vector.extract_strided_slice %351 {offsets = [0, 32], sizes = [8, 32], strides = [1, 1]} : vector<8x128xf32> to vector<8x32xf32>
    %354 = vector.extract_strided_slice %351 {offsets = [0, 64], sizes = [8, 32], strides = [1, 1]} : vector<8x128xf32> to vector<8x32xf32>
    %355 = vector.extract_strided_slice %351 {offsets = [0, 96], sizes = [8, 32], strides = [1, 1]} : vector<8x128xf32> to vector<8x32xf32>
    %356 = arith.mulf %353, %307 : vector<8x32xf32>
    %357 = arith.mulf %352, %354 : vector<8x32xf32>
    %358 = arith.addf %356, %357 : vector<8x32xf32>
    %359 = math.tanh %358 : vector<8x32xf32>
    %360 = arith.mulf %355, %359 : vector<8x32xf32>
    %361 = vector.broadcast %23 : vector<1x128xf32> to vector<8x128xf32>
    %362 = arith.mulf %344, %361 : vector<8x128xf32>
    %363 = math.tanh %362 : vector<8x128xf32>
    %364 = vector.broadcast %23 : vector<1x128xf32> to vector<8x128xf32>
    %365 = arith.mulf %363, %364 : vector<8x128xf32>
    %366 = vector.broadcast %26 : vector<1x128xf32> to vector<8x128xf32>
    %367 = arith.addf %365, %366 : vector<8x128xf32>
    %368 = vector.extract_strided_slice %367 {offsets = [0, 0], sizes = [8, 32], strides = [1, 1]} : vector<8x128xf32> to vector<8x32xf32>
    %369 = vector.extract_strided_slice %367 {offsets = [0, 32], sizes = [8, 32], strides = [1, 1]} : vector<8x128xf32> to vector<8x32xf32>
    %370 = vector.extract_strided_slice %367 {offsets = [0, 64], sizes = [8, 32], strides = [1, 1]} : vector<8x128xf32> to vector<8x32xf32>
    %371 = vector.extract_strided_slice %367 {offsets = [0, 96], sizes = [8, 32], strides = [1, 1]} : vector<8x128xf32> to vector<8x32xf32>
    %372 = arith.mulf %369, %323 : vector<8x32xf32>
    %373 = arith.mulf %368, %370 : vector<8x32xf32>
    %374 = arith.addf %372, %373 : vector<8x32xf32>
    %375 = math.tanh %374 : vector<8x32xf32>
    %376 = arith.mulf %371, %375 : vector<8x32xf32>
    %377 = arith.index_cast %c6_i32 : i32 to index
    %c0_92 = arith.constant 0 : index
    %c0_93 = arith.constant 0 : index
    %378 = vector.load %arg6[%377, %c0_92, %c0_93] : memref<8x8x64xf32, #tpu.memory_space<vmem>>, vector<1x8x32xf32>
    %379 = vector.shape_cast %378 : vector<1x8x32xf32> to vector<8x32xf32>
    %380 = vector.shape_cast %360 : vector<8x32xf32> to vector<1x8x32xf32>
    tpu.vector_store %arg6[%377, %c0_92, %c0_93], %380 {strides = array<i32>} : memref<8x8x64xf32, #tpu.memory_space<vmem>>, vector<1x8x32xf32>,
    %381 = arith.index_cast %334 : i32 to index
    %c0_94 = arith.constant 0 : index
    %c32_95 = arith.constant 32 : index
    %382 = vector.load %arg6[%381, %c0_94, %c32_95] : memref<8x8x64xf32, #tpu.memory_space<vmem>>, vector<1x8x32xf32>
    %383 = vector.shape_cast %382 : vector<1x8x32xf32> to vector<8x32xf32>
    %384 = vector.shape_cast %376 : vector<8x32xf32> to vector<1x8x32xf32>
    tpu.vector_store %arg6[%381, %c0_94, %c32_95], %384 {strides = array<i32>} : memref<8x8x64xf32, #tpu.memory_space<vmem>>, vector<1x8x32xf32>,
    %c7_i32_96 = arith.constant 7 : i32
    %c7_i32_97 = arith.constant 7 : i32
    %385 = arith.subi %c7_i32_97, %c7_i32_96 : i32
    %386 = arith.index_cast %c7_i32_96 : i32 to index
    %c0_98 = arith.constant 0 : index
    %c0_99 = arith.constant 0 : index
    %387 = vector.load %arg7[%386, %c0_98, %c0_99] : memref<8x8x128xf32, #tpu.memory_space<vmem>>, vector<1x8x128xf32>
    %388 = vector.shape_cast %387 : vector<1x8x128xf32> to vector<8x128xf32>
    %cst_100 = arith.constant dense<0.000000e+00> : vector<8x128xf32>
    %389 = tpu.matmul %360, %13, %cst_100 {dimension_numbers = #tpu.dot_dimension_numbers<[1], [0], [0], [1], [0, 0, 1, 1], [], []>, precision = #tpu.contract_precision<fp32>} : vector<8x32xf32>, vector<32x128xf32>, vector<8x128xf32> -> vector<8x128xf32>
    %390 = arith.addf %388, %389 : vector<8x128xf32>
    %391 = arith.index_cast %385 : i32 to index
    %c0_101 = arith.constant 0 : index
    %c0_102 = arith.constant 0 : index
    %392 = vector.load %arg8[%391, %c0_101, %c0_102] : memref<8x8x128xf32, #tpu.memory_space<vmem>>, vector<1x8x128xf32>
    %393 = vector.shape_cast %392 : vector<1x8x128xf32> to vector<8x128xf32>
    %cst_103 = arith.constant dense<0.000000e+00> : vector<8x128xf32>
    %394 = tpu.matmul %376, %14, %cst_103 {dimension_numbers = #tpu.dot_dimension_numbers<[1], [0], [0], [1], [0, 0, 1, 1], [], []>, precision = #tpu.contract_precision<fp32>} : vector<8x32xf32>, vector<32x128xf32>, vector<8x128xf32> -> vector<8x128xf32>
    %395 = arith.addf %393, %394 : vector<8x128xf32>
    %396 = vector.broadcast %23 : vector<1x128xf32> to vector<8x128xf32>
    %397 = arith.mulf %390, %396 : vector<8x128xf32>
    %398 = math.tanh %397 : vector<8x128xf32>
    %399 = vector.broadcast %23 : vector<1x128xf32> to vector<8x128xf32>
    %400 = arith.mulf %398, %399 : vector<8x128xf32>
    %401 = vector.broadcast %26 : vector<1x128xf32> to vector<8x128xf32>
    %402 = arith.addf %400, %401 : vector<8x128xf32>
    %403 = vector.extract_strided_slice %402 {offsets = [0, 0], sizes = [8, 32], strides = [1, 1]} : vector<8x128xf32> to vector<8x32xf32>
    %404 = vector.extract_strided_slice %402 {offsets = [0, 32], sizes = [8, 32], strides = [1, 1]} : vector<8x128xf32> to vector<8x32xf32>
    %405 = vector.extract_strided_slice %402 {offsets = [0, 64], sizes = [8, 32], strides = [1, 1]} : vector<8x128xf32> to vector<8x32xf32>
    %406 = vector.extract_strided_slice %402 {offsets = [0, 96], sizes = [8, 32], strides = [1, 1]} : vector<8x128xf32> to vector<8x32xf32>
    %407 = arith.mulf %404, %358 : vector<8x32xf32>
    %408 = arith.mulf %403, %405 : vector<8x32xf32>
    %409 = arith.addf %407, %408 : vector<8x32xf32>
    %410 = math.tanh %409 : vector<8x32xf32>
    %411 = arith.mulf %406, %410 : vector<8x32xf32>
    %412 = vector.broadcast %23 : vector<1x128xf32> to vector<8x128xf32>
    %413 = arith.mulf %395, %412 : vector<8x128xf32>
    %414 = math.tanh %413 : vector<8x128xf32>
    %415 = vector.broadcast %23 : vector<1x128xf32> to vector<8x128xf32>
    %416 = arith.mulf %414, %415 : vector<8x128xf32>
    %417 = vector.broadcast %26 : vector<1x128xf32> to vector<8x128xf32>
    %418 = arith.addf %416, %417 : vector<8x128xf32>
    %419 = vector.extract_strided_slice %418 {offsets = [0, 0], sizes = [8, 32], strides = [1, 1]} : vector<8x128xf32> to vector<8x32xf32>
    %420 = vector.extract_strided_slice %418 {offsets = [0, 32], sizes = [8, 32], strides = [1, 1]} : vector<8x128xf32> to vector<8x32xf32>
    %421 = vector.extract_strided_slice %418 {offsets = [0, 64], sizes = [8, 32], strides = [1, 1]} : vector<8x128xf32> to vector<8x32xf32>
    %422 = vector.extract_strided_slice %418 {offsets = [0, 96], sizes = [8, 32], strides = [1, 1]} : vector<8x128xf32> to vector<8x32xf32>
    %423 = arith.mulf %420, %374 : vector<8x32xf32>
    %424 = arith.mulf %419, %421 : vector<8x32xf32>
    %425 = arith.addf %423, %424 : vector<8x32xf32>
    %426 = math.tanh %425 : vector<8x32xf32>
    %427 = arith.mulf %422, %426 : vector<8x32xf32>
    %428 = arith.index_cast %c7_i32_96 : i32 to index
    %c0_104 = arith.constant 0 : index
    %c0_105 = arith.constant 0 : index
    %429 = vector.load %arg6[%428, %c0_104, %c0_105] : memref<8x8x64xf32, #tpu.memory_space<vmem>>, vector<1x8x32xf32>
    %430 = vector.shape_cast %429 : vector<1x8x32xf32> to vector<8x32xf32>
    %431 = vector.shape_cast %411 : vector<8x32xf32> to vector<1x8x32xf32>
    tpu.vector_store %arg6[%428, %c0_104, %c0_105], %431 {strides = array<i32>} : memref<8x8x64xf32, #tpu.memory_space<vmem>>, vector<1x8x32xf32>,
    %432 = arith.index_cast %385 : i32 to index
    %c0_106 = arith.constant 0 : index
    %c32_107 = arith.constant 32 : index
    %433 = vector.load %arg6[%432, %c0_106, %c32_107] : memref<8x8x64xf32, #tpu.memory_space<vmem>>, vector<1x8x32xf32>
    %434 = vector.shape_cast %433 : vector<1x8x32xf32> to vector<8x32xf32>
    %435 = vector.shape_cast %427 : vector<8x32xf32> to vector<1x8x32xf32>
    tpu.vector_store %arg6[%432, %c0_106, %c32_107], %435 {strides = array<i32>} : memref<8x8x64xf32, #tpu.memory_space<vmem>>, vector<1x8x32xf32>,
    %c8_i32 = arith.constant 8 : i32
    return
  }
  func.func @transform_0(%arg0: i32) -> (i32, i32, i32) {
    %c0_i32 = arith.constant 0 : i32
    %c0_i32_0 = arith.constant 0 : i32
    %c0_i32_1 = arith.constant 0 : i32
    return %c0_i32, %arg0, %c0_i32_0 : i32, i32, i32
  }
  func.func @transform_1(%arg0: i32) -> (i32, i32) {
    %c0_i32 = arith.constant 0 : i32
    %c0_i32_0 = arith.constant 0 : i32
    %c0_i32_1 = arith.constant 0 : i32
    return %c0_i32, %c0_i32_0 : i32, i32
  }
  func.func @transform_2(%arg0: i32) -> (i32, i32) {
    %c0_i32 = arith.constant 0 : i32
    %c0_i32_0 = arith.constant 0 : i32
    %c0_i32_1 = arith.constant 0 : i32
    return %c0_i32, %c0_i32_0 : i32, i32
  }
  func.func @transform_3(%arg0: i32) -> (i32, i32) {
    %c0_i32 = arith.constant 0 : i32
    %c0_i32_0 = arith.constant 0 : i32
    %c0_i32_1 = arith.constant 0 : i32
    return %c0_i32, %c0_i32_0 : i32, i32
  }
  func.func @transform_4(%arg0: i32) -> (i32, i32) {
    %c0_i32 = arith.constant 0 : i32
    %c0_i32_0 = arith.constant 0 : i32
    %c0_i32_1 = arith.constant 0 : i32
    return %c0_i32, %c0_i32_0 : i32, i32
  }
  func.func @transform_5(%arg0: i32) -> (i32, i32, i32) {
    %c0_i32 = arith.constant 0 : i32
    %c0_i32_0 = arith.constant 0 : i32
    %c0_i32_1 = arith.constant 0 : i32
    return %c0_i32, %arg0, %c0_i32_0 : i32, i32, i32
  }
}

</mosaic_0001>

<llo_original>
// kernel: tpu_custom_call.1
$region0: #{tpu_custom_call.1}
  #allocation0 [shape = 'u32[]', space=smem, size = 0x4, offset = 0x4, fixed_abs, tag = 'smem constant byte address 0x4 - core index']
  #allocation1 [shape = 'u32[144,128]{1,0:T(1,128)}', space=vmem, size = 0x12000, scoped, tag = 'internal scratch']
  #allocation2 [shape = 'f32[8,8,128]{2,1,0:T(8,128)}', space=vmem, size = 0x8000, scoped, tag = 'scratch operand']
  #allocation3 [shape = 'f32[8,8,128]{2,1,0:T(8,128)}', space=vmem, size = 0x8000, scoped, tag = 'scratch operand']
  %s0 = inlined_call_operand.hbm [shape: f32[8,8,32], index: 0, kind: input, shape index: {}]
  %s1 = inlined_call_operand.hbm [shape: f32[32,256], index: 1, kind: input, shape index: {}]
  %s2 = inlined_call_operand.hbm [shape: f32[32,128], index: 2, kind: input, shape index: {}]
  %s3 = inlined_call_operand.hbm [shape: f32[32,128], index: 3, kind: input, shape index: {}]
  %s4 = inlined_call_operand.vmem [shape: f32[1,256], index: 4, kind: input, shape index: {}]
  %s5 = inlined_call_operand.hbm [shape: f32[8,8,64], index: 5, kind: output, shape index: {}]
  %s6 = sld [smem:[#allocation0]]
  $region46: #{tpu_custom_call.1} parent=0
    _
  %s8 = ssub.s32 1, %s6
  %s9 = scalar_select 0, %s8, %s6
  $region1: #{tpu_custom_call.1} parent=0
    #allocation4 [shape = 'u8[32768]{0}', space=vmem, size = 0x8000, scoped, tag = 'input window, operand 0, single buffered']
    #allocation5 [shape = 's32[1]{0}', space=sflag, size = 0x4, scoped, tag = 'scoped memory for tpu_custom_call.1']
    #allocation6 [shape = 's32[1]{0}', space=sflag, size = 0x4, scoped, tag = 'scoped memory for tpu_custom_call.1']
    #allocation7 [shape = 'u8[32768]{0}', space=vmem, size = 0x8000, scoped, tag = 'input window, operand 1, single buffered']
    #allocation8 [shape = 's32[1]{0}', space=sflag, size = 0x4, scoped, tag = 'scoped memory for tpu_custom_call.1']
    #allocation9 [shape = 'u8[16384]{0}', space=vmem, size = 0x4000, scoped, tag = 'input window, operand 2, single buffered']
    #allocation10 [shape = 'u8[16384]{0}', space=vmem, size = 0x4000, scoped, tag = 'input window, operand 3, single buffered']
    #allocation11 [shape = 's32[1]{0}', space=sflag, size = 0x4, scoped, tag = 'scoped memory for tpu_custom_call.1']
    #allocation12 [shape = 'u8[32768]{0}', space=vmem, size = 0x8000, scoped, tag = 'output window, operand 0, single buffered']
    %10 = vsyncpa [#allocation5], 0
    %11 = vsyncpa [#allocation8], 0
    %12 = vsyncpa [#allocation11], 0
    %13 = vsyncpa [#allocation6], 0
    // Predicated region
    $region2: #{tpu_custom_call.1} parent=1 // pred_check
      _
    $region3: #{tpu_custom_call.1} parent=1 // pred_check_branch
      %15 = sbr.rel (0) target = $region5
    $region4: #{tpu_custom_call.1} parent=1 // pred_region
      %s17 = ssub.s32 1024, 1024
      %18 = vsyncadd [#allocation5], %s17
      %s19 = sshll.u32 [#allocation4], 4
      %s20 = int_to_ptr.vmem [resolvable:$true] %s19
      %25 = dma.hbm_to_vmem [thread:$0]  %s0, 1024, %s20, [#allocation5], 128, 128, 8
    $region5: #{tpu_custom_call.1} parent=1 // pred_fallthru
      _
    // Predicated region
    $region6: #{tpu_custom_call.1} parent=1 // pred_check
      _
    $region7: #{tpu_custom_call.1} parent=1 // pred_check_branch
      %27 = sbr.rel (0) target = $region9
    $region8: #{tpu_custom_call.1} parent=1 // pred_region
      %s29 = ssub.s32 1024, 1024
      %30 = vsyncadd [#allocation8], %s29
      %s31 = sshll.u32 [#allocation7], 4
      %s32 = int_to_ptr.vmem [resolvable:$true] %s31
      %37 = dma.hbm_to_vmem [thread:$0]  %s1, 1024, %s32, [#allocation8], 256, 256, 16
    $region9: #{tpu_custom_call.1} parent=1 // pred_fallthru
      _
    // Predicated region
    $region10: #{tpu_custom_call.1} parent=1 // pred_check
      _
    $region11: #{tpu_custom_call.1} parent=1 // pred_check_branch
      %39 = sbr.rel (0) target = $region13
    $region12: #{tpu_custom_call.1} parent=1 // pred_region
      %s41 = ssub.s32 512, 512
      %42 = vsyncadd [#allocation8], %s41
      %s43 = sshll.u32 [#allocation9], 4
      %s44 = int_to_ptr.vmem [resolvable:$true] %s43
      %49 = dma.hbm_to_vmem [thread:$0]  %s2, 512, %s44, [#allocation8], 128, 128, 8
    $region13: #{tpu_custom_call.1} parent=1 // pred_fallthru
      _
    // Predicated region
    $region14: #{tpu_custom_call.1} parent=1 // pred_check
      _
    $region15: #{tpu_custom_call.1} parent=1 // pred_check_branch
      %51 = sbr.rel (0) target = $region17
    $region16: #{tpu_custom_call.1} parent=1 // pred_region
      %s53 = ssub.s32 512, 512
      %54 = vsyncadd [#allocation11], %s53
      %s55 = sshll.u32 [#allocation10], 4
      %s56 = int_to_ptr.vmem [resolvable:$true] %s55
      %61 = dma.hbm_to_vmem [thread:$0]  %s3, 512, %s56, [#allocation11], 128, 128, 8
    $region17: #{tpu_custom_call.1} parent=1 // pred_fallthru
      _
    // Predicated region
    $region18: #{tpu_custom_call.1} parent=1 // pred_check
      _
    $region19: #{tpu_custom_call.1} parent=1 // pred_check_branch
      %63 = sbr.rel (0) target = $region21
    $region20: #{tpu_custom_call.1} parent=1 // pred_region
      _
    $region21: #{tpu_custom_call.1} parent=1 // pred_fallthru
      _
    // Predicated region
    $region22: #{tpu_custom_call.1} parent=1 // pred_check
      _
    $region23: #{tpu_custom_call.1} parent=1 // pred_check_branch
      %65 = sbr.rel (0) target = $region25
    $region24: #{tpu_custom_call.1} parent=1 // pred_region
      %66 = dma.done [#allocation5], 1024
    $region25: #{tpu_custom_call.1} parent=1 // pred_fallthru
      _
    // Predicated region
    $region26: #{tpu_custom_call.1} parent=1 // pred_check
      _
    $region27: #{tpu_custom_call.1} parent=1 // pred_check_branch
      %68 = sbr.rel (0) target = $region29
    $region28: #{tpu_custom_call.1} parent=1 // pred_region
      %69 = dma.done [#allocation8], 1024
    $region29: #{tpu_custom_call.1} parent=1 // pred_fallthru
      _
    // Predicated region
    $region30: #{tpu_custom_call.1} parent=1 // pred_check
      _
    $region31: #{tpu_custom_call.1} parent=1 // pred_check_branch
      %71 = sbr.rel (0) target = $region33
    $region32: #{tpu_custom_call.1} parent=1 // pred_region
      %72 = dma.done [#allocation8], 512
    $region33: #{tpu_custom_call.1} parent=1 // pred_fallthru
      _
    // Predicated region
    $region34: #{tpu_custom_call.1} parent=1 // pred_check
      _
    $region35: #{tpu_custom_call.1} parent=1 // pred_check_branch
      %74 = sbr.rel (0) target = $region37
    $region36: #{tpu_custom_call.1} parent=1 // pred_region
      %75 = dma.done [#allocation11], 512
    $region37: #{tpu_custom_call.1} parent=1 // pred_fallthru
      _
    %v76 = vld [vmem:[#allocation4] sm:$0xff]
    %v77 = vld [vmem:[#allocation4 + $0x8] sm:$0xff]
    %v78 = vld [vmem:[#allocation4 + $0x10] sm:$0xff]
    %v79 = vld [vmem:[#allocation4 + $0x18] sm:$0xff]
    %v80 = vld [vmem:[#allocation4 + $0x20] sm:$0xff]
    %v81 = vld [vmem:[#allocation4 + $0x28] sm:$0xff]
    %v82 = vld [vmem:[#allocation4 + $0x30] sm:$0xff]
    %v83 = vld [vmem:[#allocation4 + $0x38] sm:$0xff]
    %v84 = vld [vmem:[#allocation7] sm:$0xff]
    %v85 = vld [vmem:[#allocation7 + $0x8] sm:$0xff]
    %v86 = vld [vmem:[#allocation7 + $0x10] sm:$0xff]
    %v87 = vld [vmem:[#allocation7 + $0x18] sm:$0xff]
    %v88 = vld [vmem:[#allocation7 + $0x20] sm:$0xff]
    %v89 = vld [vmem:[#allocation7 + $0x28] sm:$0xff]
    %v90 = vld [vmem:[#allocation7 + $0x30] sm:$0xff]
    %v91 = vld [vmem:[#allocation7 + $0x38] sm:$0xff]
    %v92 = vld [vmem:[%s4] sm:$0x3]
    %v94 = vlaneseq
    %v95 = vshrl.u32 %v94, 7
    %v96 = vsub.s32 0, %v95
    %v97 = vrot.slane %v92, %v96
    %v98 = vlaneseq
    %v99 = vshrl.u32 %v98, 7
    %v100 = vsub.s32 1, %v99
    %v101 = vrot.slane %v92, %v100
    %vm104 = vcmask 261120
    %v106 = vsel %vm104, %v76, 0
    %v109 = vsel %vm104, %v77, 0
    %v112 = vsel %vm104, %v78, 0
    %v115 = vsel %vm104, %v79, 0
    %v118 = vsel %vm104, %v80, 0
    %v121 = vsel %vm104, %v81, 0
    %v124 = vsel %vm104, %v82, 0
    %v127 = vsel %vm104, %v83, 0
    %129 = vmatprep.subr.mxu0 0.0
    %130 = vmatpush1.msra.mxu0 0.0
    %131 = vmatprep.subr.mxu0 0.0
    %132 = vmatpush1.msra.mxu0 0.0
    %133 = vmatprep.subr.mxu0 0.0
    %134 = vmatpush1.msra.mxu0 0.0
    %135 = vmatprep.subr.mxu0 0.0
    %136 = vmatpush1.msra.mxu0 0.0
    %137 = vmatprep.subr.mxu0 0.0
    %138 = vmatpush1.msra.mxu0 0.0
    %139 = vmatprep.subr.mxu0 0.0
    %140 = vmatpush1.msra.mxu0 0.0
    %141 = vmatprep.subr.mxu0 0.0
    %142 = vmatpush1.msra.mxu0 0.0
    %143 = vmatprep.subr.mxu0 0.0
    %144 = vmatpush1.msra.mxu0 0.0
    %145 = vmatprep.subr.mxu0 0.0
    %146 = vmatpush1.msra.mxu0 0.0
    %147 = vmatprep.subr.mxu0 0.0
    %148 = vmatpush1.msra.mxu0 0.0
    %149 = vmatprep.subr.mxu0 0.0
    %150 = vmatpush1.msra.mxu0 0.0
    %151 = vmatprep.subr.mxu0 0.0
    %152 = vmatpush1.msra.mxu0 0.0
    %v153 = vand.u32 %v91, 4294901760
    %154 = vmatprep.subr.mxu0 %v153
    %v155 = vand.u32 %v90, 4294901760
    %156 = vmatpush1.msra.mxu0 %v155
    %v157 = vand.u32 %v89, 4294901760
    %158 = vmatprep.subr.mxu0 %v157
    %v159 = vand.u32 %v88, 4294901760
    %160 = vmatpush1.msra.mxu0 %v159
    %v161 = vand.u32 %v87, 4294901760
    %162 = vmatprep.subr.mxu0 %v161
    %v163 = vand.u32 %v86, 4294901760
    %164 = vmatpush1.msra.mxu0 %v163
    %v165 = vand.u32 %v85, 4294901760
    %166 = vmatprep.subr.mxu0 %v165
    %v167 = vand.u32 %v84, 4294901760
    %168 = vmatpush1.msra.mxu0 %v167
    %169 = vmatprep.subr.mxu0 0.0
    %170 = vmatpush2.msra.mxu0 0.0
    %171 = vmatprep.subr.mxu0 0.0
    %172 = vmatpush2.msra.mxu0 0.0
    %173 = vmatprep.subr.mxu0 0.0
    %174 = vmatpush2.msra.mxu0 0.0
    %175 = vmatprep.subr.mxu0 0.0
    %176 = vmatpush2.msra.mxu0 0.0
    %177 = vmatprep.subr.mxu0 0.0
    %178 = vmatpush2.msra.mxu0 0.0
    %179 = vmatprep.subr.mxu0 0.0
    %180 = vmatpush2.msra.mxu0 0.0
    %181 = vmatprep.subr.mxu0 0.0
    %182 = vmatpush2.msra.mxu0 0.0
    %183 = vmatprep.subr.mxu0 0.0
    %184 = vmatpush2.msra.mxu0 0.0
    %185 = vmatprep.subr.mxu0 0.0
    %186 = vmatpush2.msra.mxu0 0.0
    %187 = vmatprep.subr.mxu0 0.0
    %188 = vmatpush2.msra.mxu0 0.0
    %189 = vmatprep.subr.mxu0 0.0
    %190 = vmatpush2.msra.mxu0 0.0
    %191 = vmatprep.subr.mxu0 0.0
    %192 = vmatpush2.msra.mxu0 0.0
    %193 = vmatprep.subr.mxu0 0.0
    %194 = vmatpush2.msra.mxu0 0.0
    %195 = vmatprep.subr.mxu0 0.0
    %196 = vmatpush2.msra.mxu0 0.0
    %197 = vmatprep.subr.mxu0 0.0
    %198 = vmatpush2.msra.mxu0 0.0
    %199 = vmatprep.subr.mxu0 0.0
    %200 = vmatpush2.msra.mxu0 0.0
    %201 = vmatprep.mubr.f32.mxu0 0.0
    %v202 = vand.u32 %v106, 4294901760
    %v203 = vsub.f32 %v106, %v202
    %v204 = vand.u32 %v203, 4294901760
    %v205 = vsub.f32 %v203, %v204
    %v206 = vand.u32 %v205, 4294901760
    %207 = vmatmul.mubr.f32.gmra.mxu0 %v206
    %v208 = vpop.f32.mrf.mxu0
    %v209 = vadd.f32 %v97, %v208
    %v210 = vpop.f32.mrf.mxu0
    %v211 = vadd.f32 %v101, %v210
    %212 = vmatprep.mubr.f32.mxu0 0.0
    %v213 = vand.u32 %v109, 4294901760
    %v214 = vsub.f32 %v109, %v213
    %v215 = vand.u32 %v214, 4294901760
    %v216 = vsub.f32 %v214, %v215
    %v217 = vand.u32 %v216, 4294901760
    %218 = vmatmul.mubr.f32.gmra.mxu0 %v217
    %v219 = vpop.f32.mrf.mxu0
    %v220 = vadd.f32 %v97, %v219
    %v221 = vpop.f32.mrf.mxu0
    %v222 = vadd.f32 %v101, %v221
    %223 = vmatprep.mubr.f32.mxu0 0.0
    %v224 = vand.u32 %v112, 4294901760
    %v225 = vsub.f32 %v112, %v224
    %v226 = vand.u32 %v225, 4294901760
    %v227 = vsub.f32 %v225, %v226
    %v228 = vand.u32 %v227, 4294901760
    %229 = vmatmul.mubr.f32.gmra.mxu0 %v228
    %v230 = vpop.f32.mrf.mxu0
    %v231 = vadd.f32 %v97, %v230
    %v232 = vpop.f32.mrf.mxu0
    %v233 = vadd.f32 %v101, %v232
    %234 = vmatprep.mubr.f32.mxu0 0.0
    %v235 = vand.u32 %v115, 4294901760
    %v236 = vsub.f32 %v115, %v235
    %v237 = vand.u32 %v236, 4294901760
    %v238 = vsub.f32 %v236, %v237
    %v239 = vand.u32 %v238, 4294901760
    %240 = vmatmul.mubr.f32.gmra.mxu0 %v239
    %v241 = vpop.f32.mrf.mxu0
    %v242 = vadd.f32 %v97, %v241
    %v243 = vpop.f32.mrf.mxu0
    %v244 = vadd.f32 %v101, %v243
    %245 = vmatprep.mubr.f32.mxu0 0.0
    %v246 = vand.u32 %v118, 4294901760
    %v247 = vsub.f32 %v118, %v246
    %v248 = vand.u32 %v247, 4294901760
    %v249 = vsub.f32 %v247, %v248
    %v250 = vand.u32 %v249, 4294901760
    %251 = vmatmul.mubr.f32.gmra.mxu0 %v250
    %v252 = vpop.f32.mrf.mxu0
    %v253 = vadd.f32 %v97, %v252
    %v254 = vpop.f32.mrf.mxu0
    %v255 = vadd.f32 %v101, %v254
    %256 = vmatprep.mubr.f32.mxu0 0.0
    %v257 = vand.u32 %v121, 4294901760
    %v258 = vsub.f32 %v121, %v257
    %v259 = vand.u32 %v258, 4294901760
    %v260 = vsub.f32 %v258, %v259
    %v261 = vand.u32 %v260, 4294901760
    %262 = vmatmul.mubr.f32.gmra.mxu0 %v261
    %v263 = vpop.f32.mrf.mxu0
    %v264 = vadd.f32 %v97, %v263
    %v265 = vpop.f32.mrf.mxu0
    %v266 = vadd.f32 %v101, %v265
    %267 = vmatprep.mubr.f32.mxu0 0.0
    %v268 = vand.u32 %v124, 4294901760
    %v269 = vsub.f32 %v124, %v268
    %v270 = vand.u32 %v269, 4294901760
    %v271 = vsub.f32 %v269, %v270
    %v272 = vand.u32 %v271, 4294901760
    %273 = vmatmul.mubr.f32.gmra.mxu0 %v272
    %v274 = vpop.f32.mrf.mxu0
    %v275 = vadd.f32 %v97, %v274
    %v276 = vpop.f32.mrf.mxu0
    %v277 = vadd.f32 %v101, %v276
    %278 = vmatprep.mubr.f32.mxu0 0.0
    %v279 = vand.u32 %v127, 4294901760
    %v280 = vsub.f32 %v127, %v279
    %v281 = vand.u32 %v280, 4294901760
    %v282 = vsub.f32 %v280, %v281
    %v283 = vand.u32 %v282, 4294901760
    %284 = vmatmul.mubr.f32.gmra.mxu0 %v283
    %v285 = vpop.f32.mrf.mxu0
    %v286 = vadd.f32 %v97, %v285
    %v287 = vpop.f32.mrf.mxu0
    %v288 = vadd.f32 %v101, %v287
    %289 = vdwg.mxu0
    %290 = vmatprep.subr.mxu0 0.0
    %291 = vmatpush1.msra.mxu0 0.0
    %292 = vmatprep.subr.mxu0 0.0
    %293 = vmatpush1.msra.mxu0 0.0
    %294 = vmatprep.subr.mxu0 0.0
    %295 = vmatpush1.msra.mxu0 0.0
    %296 = vmatprep.subr.mxu0 0.0
    %297 = vmatpush1.msra.mxu0 0.0
    %298 = vmatprep.subr.mxu0 0.0
    %299 = vmatpush1.msra.mxu0 0.0
    %300 = vmatprep.subr.mxu0 0.0
    %301 = vmatpush1.msra.mxu0 0.0
    %302 = vmatprep.subr.mxu0 0.0
    %303 = vmatpush1.msra.mxu0 0.0
    %304 = vmatprep.subr.mxu0 0.0
    %305 = vmatpush1.msra.mxu0 0.0
    %306 = vmatprep.subr.mxu0 0.0
    %307 = vmatpush1.msra.mxu0 0.0
    %308 = vmatprep.subr.mxu0 0.0
    %309 = vmatpush1.msra.mxu0 0.0
    %310 = vmatprep.subr.mxu0 0.0
    %311 = vmatpush1.msra.mxu0 0.0
    %312 = vmatprep.subr.mxu0 0.0
    %313 = vmatpush1.msra.mxu0 0.0
    %v314 = vand.u32 %v91, 4294901760
    %v315 = vsub.f32 %v91, %v314
    %v316 = vand.u32 %v315, 4294901760
    %v317 = vsub.f32 %v315, %v316
    %v318 = vand.u32 %v317, 4294901760
    %319 = vmatprep.subr.mxu0 %v318
    %v320 = vand.u32 %v90, 4294901760
    %v321 = vsub.f32 %v90, %v320
    %v322 = vand.u32 %v321, 4294901760
    %v323 = vsub.f32 %v321, %v322
    %v324 = vand.u32 %v323, 4294901760
    %325 = vmatpush1.msra.mxu0 %v324
    %v326 = vand.u32 %v89, 4294901760
    %v327 = vsub.f32 %v89, %v326
    %v328 = vand.u32 %v327, 4294901760
    %v329 = vsub.f32 %v327, %v328
    %v330 = vand.u32 %v329, 4294901760
    %331 = vmatprep.subr.mxu0 %v330
    %v332 = vand.u32 %v88, 4294901760
    %v333 = vsub.f32 %v88, %v332
    %v334 = vand.u32 %v333, 4294901760
    %v335 = vsub.f32 %v333, %v334
    %v336 = vand.u32 %v335, 4294901760
    %337 = vmatpush1.msra.mxu0 %v336
    %v338 = vand.u32 %v87, 4294901760
    %v339 = vsub.f32 %v87, %v338
    %v340 = vand.u32 %v339, 4294901760
    %v341 = vsub.f32 %v339, %v340
    %v342 = vand.u32 %v341, 4294901760
    %343 = vmatprep.subr.mxu0 %v342
    %v344 = vand.u32 %v86, 4294901760
    %v345 = vsub.f32 %v86, %v344
    %v346 = vand.u32 %v345, 4294901760
    %v347 = vsub.f32 %v345, %v346
    %v348 = vand.u32 %v347, 4294901760
    %349 = vmatpush1.msra.mxu0 %v348
    %v350 = vand.u32 %v85, 4294901760
    %v351 = vsub.f32 %v85, %v350
    %v352 = vand.u32 %v351, 4294901760
    %v353 = vsub.f32 %v351, %v352
    %v354 = vand.u32 %v353, 4294901760
    %355 = vmatprep.subr.mxu0 %v354
    %v356 = vand.u32 %v84, 4294901760
    %v357 = vsub.f32 %v84, %v356
    %v358 = vand.u32 %v357, 4294901760
    %v359 = vsub.f32 %v357, %v358
    %v360 = vand.u32 %v359, 4294901760
    %361 = vmatpush1.msra.mxu0 %v360
    %362 = vmatprep.subr.mxu0 0.0
    %363 = vmatpush2.msra.mxu0 0.0
    %364 = vmatprep.subr.mxu0 0.0
    %365 = vmatpush2.msra.mxu0 0.0
    %366 = vmatprep.subr.mxu0 0.0
    %367 = vmatpush2.msra.mxu0 0.0
    %368 = vmatprep.subr.mxu0 0.0
    %369 = vmatpush2.msra.mxu0 0.0
    %370 = vmatprep.subr.mxu0 0.0
    %371 = vmatpush2.msra.mxu0 0.0
    %372 = vmatprep.subr.mxu0 0.0
    %373 = vmatpush2.msra.mxu0 0.0
    %374 = vmatprep.subr.mxu0 0.0
    %375 = vmatpush2.msra.mxu0 0.0
    %376 = vmatprep.subr.mxu0 0.0
    %377 = vmatpush2.msra.mxu0 0.0
    %378 = vmatprep.subr.mxu0 0.0
    %379 = vmatpush2.msra.mxu0 0.0
    %380 = vmatprep.subr.mxu0 0.0
    %381 = vmatpush2.msra.mxu0 0.0
    %382 = vmatprep.subr.mxu0 0.0
    %383 = vmatpush2.msra.mxu0 0.0
    %384 = vmatprep.subr.mxu0 0.0
    %385 = vmatpush2.msra.mxu0 0.0
    %386 = vmatprep.subr.mxu0 0.0
    %387 = vmatpush2.msra.mxu0 0.0
    %388 = vmatprep.subr.mxu0 0.0
    %389 = vmatpush2.msra.mxu0 0.0
    %390 = vmatprep.subr.mxu0 0.0
    %391 = vmatpush2.msra.mxu0 0.0
    %392 = vmatprep.subr.mxu0 0.0
    %393 = vmatpush2.msra.mxu0 0.0
    %394 = vmatprep.mubr.f32.mxu0 0.0
    %v395 = vand.u32 %v106, 4294901760
    %396 = vmatmul.mubr.f32.gmra.mxu0 %v395
    %v397 = vpop.f32.mrf.mxu0
    %v398 = vadd.f32 %v209, %v397
    %v399 = vpop.f32.mrf.mxu0
    %v400 = vadd.f32 %v211, %v399
    %401 = vmatprep.mubr.f32.mxu0 0.0
    %v402 = vand.u32 %v109, 4294901760
    %403 = vmatmul.mubr.f32.gmra.mxu0 %v402
    %v404 = vpop.f32.mrf.mxu0
    %v405 = vadd.f32 %v220, %v404
    %v406 = vpop.f32.mrf.mxu0
    %v407 = vadd.f32 %v222, %v406
    %408 = vmatprep.mubr.f32.mxu0 0.0
    %v409 = vand.u32 %v112, 4294901760
    %410 = vmatmul.mubr.f32.gmra.mxu0 %v409
    %v411 = vpop.f32.mrf.mxu0
    %v412 = vadd.f32 %v231, %v411
    %v413 = vpop.f32.mrf.mxu0
    %v414 = vadd.f32 %v233, %v413
    %415 = vmatprep.mubr.f32.mxu0 0.0
    %v416 = vand.u32 %v115, 4294901760
    %417 = vmatmul.mubr.f32.gmra.mxu0 %v416
    %v418 = vpop.f32.mrf.mxu0
    %v419 = vadd.f32 %v242, %v418
    %v420 = vpop.f32.mrf.mxu0
    %v421 = vadd.f32 %v244, %v420
    %422 = vmatprep.mubr.f32.mxu0 0.0
    %v423 = vand.u32 %v118, 4294901760
    %424 = vmatmul.mubr.f32.gmra.mxu0 %v423
    %v425 = vpop.f32.mrf.mxu0
    %v426 = vadd.f32 %v253, %v425
    %v427 = vpop.f32.mrf.mxu0
    %v428 = vadd.f32 %v255, %v427
    %429 = vmatprep.mubr.f32.mxu0 0.0
    %v430 = vand.u32 %v121, 4294901760
    %431 = vmatmul.mubr.f32.gmra.mxu0 %v430
    %v432 = vpop.f32.mrf.mxu0
    %v433 = vadd.f32 %v264, %v432
    %v434 = vpop.f32.mrf.mxu0
    %v435 = vadd.f32 %v266, %v434
    %436 = vmatprep.mubr.f32.mxu0 0.0
    %v437 = vand.u32 %v124, 4294901760
    %438 = vmatmul.mubr.f32.gmra.mxu0 %v437
    %v439 = vpop.f32.mrf.mxu0
    %v440 = vadd.f32 %v275, %v439
    %v441 = vpop.f32.mrf.mxu0
    %v442 = vadd.f32 %v277, %v441
    %443 = vmatprep.mubr.f32.mxu0 0.0
    %v444 = vand.u32 %v127, 4294901760
    %445 = vmatmul.mubr.f32.gmra.mxu0 %v444
    %v446 = vpop.f32.mrf.mxu0
    %v447 = vadd.f32 %v286, %v446
    %v448 = vpop.f32.mrf.mxu0
    %v449 = vadd.f32 %v288, %v448
    %450 = vdwg.mxu0
    %451 = vmatprep.subr.mxu0 0.0
    %452 = vmatpush1.msra.mxu0 0.0
    %453 = vmatprep.subr.mxu0 0.0
    %454 = vmatpush1.msra.mxu0 0.0
    %455 = vmatprep.subr.mxu0 0.0
    %456 = vmatpush1.msra.mxu0 0.0
    %457 = vmatprep.subr.mxu0 0.0
    %458 = vmatpush1.msra.mxu0 0.0
    %459 = vmatprep.subr.mxu0 0.0
    %460 = vmatpush1.msra.mxu0 0.0
    %461 = vmatprep.subr.mxu0 0.0
    %462 = vmatpush1.msra.mxu0 0.0
    %463 = vmatprep.subr.mxu0 0.0
    %464 = vmatpush1.msra.mxu0 0.0
    %465 = vmatprep.subr.mxu0 0.0
    %466 = vmatpush1.msra.mxu0 0.0
    %467 = vmatprep.subr.mxu0 0.0
    %468 = vmatpush1.msra.mxu0 0.0
    %469 = vmatprep.subr.mxu0 0.0
    %470 = vmatpush1.msra.mxu0 0.0
    %471 = vmatprep.subr.mxu0 0.0
    %472 = vmatpush1.msra.mxu0 0.0
    %473 = vmatprep.subr.mxu0 0.0
    %474 = vmatpush1.msra.mxu0 0.0
    %v475 = vand.u32 %v91, 4294901760
    %v476 = vsub.f32 %v91, %v475
    %477 = vmatprep.subr.mxu0 %v476
    %v478 = vand.u32 %v90, 4294901760
    %v479 = vsub.f32 %v90, %v478
    %480 = vmatpush1.msra.mxu0 %v479
    %v481 = vand.u32 %v89, 4294901760
    %v482 = vsub.f32 %v89, %v481
    %483 = vmatprep.subr.mxu0 %v482
    %v484 = vand.u32 %v88, 4294901760
    %v485 = vsub.f32 %v88, %v484
    %486 = vmatpush1.msra.mxu0 %v485
    %v487 = vand.u32 %v87, 4294901760
    %v488 = vsub.f32 %v87, %v487
    %489 = vmatprep.subr.mxu0 %v488
    %v490 = vand.u32 %v86, 4294901760
    %v491 = vsub.f32 %v86, %v490
    %492 = vmatpush1.msra.mxu0 %v491
    %v493 = vand.u32 %v85, 4294901760
    %v494 = vsub.f32 %v85, %v493
    %495 = vmatprep.subr.mxu0 %v494
    %v496 = vand.u32 %v84, 4294901760
    %v497 = vsub.f32 %v84, %v496
    %498 = vmatpush1.msra.mxu0 %v497
    %499 = vmatprep.subr.mxu0 0.0
    %500 = vmatpush2.msra.mxu0 0.0
    %501 = vmatprep.subr.mxu0 0.0
    %502 = vmatpush2.msra.mxu0 0.0
    %503 = vmatprep.subr.mxu0 0.0
    %504 = vmatpush2.msra.mxu0 0.0
    %505 = vmatprep.subr.mxu0 0.0
    %506 = vmatpush2.msra.mxu0 0.0
    %507 = vmatprep.subr.mxu0 0.0
    %508 = vmatpush2.msra.mxu0 0.0
    %509 = vmatprep.subr.mxu0 0.0
    %510 = vmatpush2.msra.mxu0 0.0
    %511 = vmatprep.subr.mxu0 0.0
    %512 = vmatpush2.msra.mxu0 0.0
    %513 = vmatprep.subr.mxu0 0.0
    %514 = vmatpush2.msra.mxu0 0.0
    %515 = vmatprep.subr.mxu0 0.0
    %516 = vmatpush2.msra.mxu0 0.0
    %517 = vmatprep.subr.mxu0 0.0
    %518 = vmatpush2.msra.mxu0 0.0
    %519 = vmatprep.subr.mxu0 0.0
    %520 = vmatpush2.msra.mxu0 0.0
    %521 = vmatprep.subr.mxu0 0.0
    %522 = vmatpush2.msra.mxu0 0.0
    %523 = vmatprep.subr.mxu0 0.0
    %524 = vmatpush2.msra.mxu0 0.0
    %525 = vmatprep.subr.mxu0 0.0
    %526 = vmatpush2.msra.mxu0 0.0
    %527 = vmatprep.subr.mxu0 0.0
    %528 = vmatpush2.msra.mxu0 0.0
    %529 = vmatprep.subr.mxu0 0.0
    %530 = vmatpush2.msra.mxu0 0.0
    %531 = vmatprep.mubr.f32.mxu0 0.0
    %v532 = vand.u32 %v106, 4294901760
    %v533 = vsub.f32 %v106, %v532
    %534 = vmatmul.mubr.f32.gmra.mxu0 %v533
    %v535 = vpop.f32.mrf.mxu0
    %v536 = vadd.f32 %v398, %v535
    %v537 = vpop.f32.mrf.mxu0
    %v538 = vadd.f32 %v400, %v537
    %539 = vmatprep.mubr.f32.mxu0 0.0
    %v540 = vand.u32 %v109, 4294901760
    %v541 = vsub.f32 %v109, %v540
    %542 = vmatmul.mubr.f32.gmra.mxu0 %v541
    %v543 = vpop.f32.mrf.mxu0
    %v544 = vadd.f32 %v405, %v543
    %v545 = vpop.f32.mrf.mxu0
    %v546 = vadd.f32 %v407, %v545
    %547 = vmatprep.mubr.f32.mxu0 0.0
    %v548 = vand.u32 %v112, 4294901760
    %v549 = vsub.f32 %v112, %v548
    %550 = vmatmul.mubr.f32.gmra.mxu0 %v549
    %v551 = vpop.f32.mrf.mxu0
    %v552 = vadd.f32 %v412, %v551
    %v553 = vpop.f32.mrf.mxu0
    %v554 = vadd.f32 %v414, %v553
    %555 = vmatprep.mubr.f32.mxu0 0.0
    %v556 = vand.u32 %v115, 4294901760
    %v557 = vsub.f32 %v115, %v556
    %558 = vmatmul.mubr.f32.gmra.mxu0 %v557
    %v559 = vpop.f32.mrf.mxu0
    %v560 = vadd.f32 %v419, %v559
    %v561 = vpop.f32.mrf.mxu0
    %v562 = vadd.f32 %v421, %v561
    %563 = vmatprep.mubr.f32.mxu0 0.0
    %v564 = vand.u32 %v118, 4294901760
    %v565 = vsub.f32 %v118, %v564
    %566 = vmatmul.mubr.f32.gmra.mxu0 %v565
    %v567 = vpop.f32.mrf.mxu0
    %v568 = vadd.f32 %v426, %v567
    %v569 = vpop.f32.mrf.mxu0
    %v570 = vadd.f32 %v428, %v569
    %571 = vmatprep.mubr.f32.mxu0 0.0
    %v572 = vand.u32 %v121, 4294901760
    %v573 = vsub.f32 %v121, %v572
    %574 = vmatmul.mubr.f32.gmra.mxu0 %v573
    %v575 = vpop.f32.mrf.mxu0
    %v576 = vadd.f32 %v433, %v575
    %v577 = vpop.f32.mrf.mxu0
    %v578 = vadd.f32 %v435, %v577
    %579 = vmatprep.mubr.f32.mxu0 0.0
    %v580 = vand.u32 %v124, 4294901760
    %v581 = vsub.f32 %v124, %v580
    %582 = vmatmul.mubr.f32.gmra.mxu0 %v581
    %v583 = vpop.f32.mrf.mxu0
    %v584 = vadd.f32 %v440, %v583
    %v585 = vpop.f32.mrf.mxu0
    %v586 = vadd.f32 %v442, %v585
    %587 = vmatprep.mubr.f32.mxu0 0.0
    %v588 = vand.u32 %v127, 4294901760
    %v589 = vsub.f32 %v127, %v588
    %590 = vmatmul.mubr.f32.gmra.mxu0 %v589
    %v591 = vpop.f32.mrf.mxu0
    %v592 = vadd.f32 %v447, %v591
    %v593 = vpop.f32.mrf.mxu0
    %v594 = vadd.f32 %v449, %v593
    %595 = vdwg.mxu0
    %596 = vmatprep.subr.mxu0 0.0
    %597 = vmatpush1.msra.mxu0 0.0
    %598 = vmatprep.subr.mxu0 0.0
    %599 = vmatpush1.msra.mxu0 0.0
    %600 = vmatprep.subr.mxu0 0.0
    %601 = vmatpush1.msra.mxu0 0.0
    %602 = vmatprep.subr.mxu0 0.0
    %603 = vmatpush1.msra.mxu0 0.0
    %604 = vmatprep.subr.mxu0 0.0
    %605 = vmatpush1.msra.mxu0 0.0
    %606 = vmatprep.subr.mxu0 0.0
    %607 = vmatpush1.msra.mxu0 0.0
    %608 = vmatprep.subr.mxu0 0.0
    %609 = vmatpush1.msra.mxu0 0.0
    %610 = vmatprep.subr.mxu0 0.0
    %611 = vmatpush1.msra.mxu0 0.0
    %612 = vmatprep.subr.mxu0 0.0
    %613 = vmatpush1.msra.mxu0 0.0
    %614 = vmatprep.subr.mxu0 0.0
    %615 = vmatpush1.msra.mxu0 0.0
    %616 = vmatprep.subr.mxu0 0.0
    %617 = vmatpush1.msra.mxu0 0.0
    %618 = vmatprep.subr.mxu0 0.0
    %619 = vmatpush1.msra.mxu0 0.0
    %v620 = vand.u32 %v91, 4294901760
    %621 = vmatprep.subr.mxu0 %v620
    %v622 = vand.u32 %v90, 4294901760
    %623 = vmatpush1.msra.mxu0 %v622
    %v624 = vand.u32 %v89, 4294901760
    %625 = vmatprep.subr.mxu0 %v624
    %v626 = vand.u32 %v88, 4294901760
    %627 = vmatpush1.msra.mxu0 %v626
    %v628 = vand.u32 %v87, 4294901760
    %629 = vmatprep.subr.mxu0 %v628
    %v630 = vand.u32 %v86, 4294901760
    %631 = vmatpush1.msra.mxu0 %v630
    %v632 = vand.u32 %v85, 4294901760
    %633 = vmatprep.subr.mxu0 %v632
    %v634 = vand.u32 %v84, 4294901760
    %635 = vmatpush1.msra.mxu0 %v634
    %636 = vmatprep.subr.mxu0 0.0
    %637 = vmatpush2.msra.mxu0 0.0
    %638 = vmatprep.subr.mxu0 0.0
    %639 = vmatpush2.msra.mxu0 0.0
    %640 = vmatprep.subr.mxu0 0.0
    %641 = vmatpush2.msra.mxu0 0.0
    %642 = vmatprep.subr.mxu0 0.0
    %643 = vmatpush2.msra.mxu0 0.0
    %644 = vmatprep.subr.mxu0 0.0
    %645 = vmatpush2.msra.mxu0 0.0
    %646 = vmatprep.subr.mxu0 0.0
    %647 = vmatpush2.msra.mxu0 0.0
    %648 = vmatprep.subr.mxu0 0.0
    %649 = vmatpush2.msra.mxu0 0.0
    %650 = vmatprep.subr.mxu0 0.0
    %651 = vmatpush2.msra.mxu0 0.0
    %652 = vmatprep.subr.mxu0 0.0
    %653 = vmatpush2.msra.mxu0 0.0
    %654 = vmatprep.subr.mxu0 0.0
    %655 = vmatpush2.msra.mxu0 0.0
    %656 = vmatprep.subr.mxu0 0.0
    %657 = vmatpush2.msra.mxu0 0.0
    %658 = vmatprep.subr.mxu0 0.0
    %659 = vmatpush2.msra.mxu0 0.0
    %660 = vmatprep.subr.mxu0 0.0
    %661 = vmatpush2.msra.mxu0 0.0
    %662 = vmatprep.subr.mxu0 0.0
    %663 = vmatpush2.msra.mxu0 0.0
    %664 = vmatprep.subr.mxu0 0.0
    %665 = vmatpush2.msra.mxu0 0.0
    %666 = vmatprep.subr.mxu0 0.0
    %667 = vmatpush2.msra.mxu0 0.0
    %668 = vmatprep.mubr.f32.mxu0 0.0
    %v669 = vand.u32 %v106, 4294901760
    %v670 = vsub.f32 %v106, %v669
    %v671 = vand.u32 %v670, 4294901760
    %672 = vmatmul.mubr.f32.gmra.mxu0 %v671
    %v673 = vpop.f32.mrf.mxu0
    %v674 = vadd.f32 %v536, %v673
    %v675 = vpop.f32.mrf.mxu0
    %v676 = vadd.f32 %v538, %v675
    %677 = vmatprep.mubr.f32.mxu0 0.0
    %v678 = vand.u32 %v109, 4294901760
    %v679 = vsub.f32 %v109, %v678
    %v680 = vand.u32 %v679, 4294901760
    %681 = vmatmul.mubr.f32.gmra.mxu0 %v680
    %v682 = vpop.f32.mrf.mxu0
    %v683 = vadd.f32 %v544, %v682
    %v684 = vpop.f32.mrf.mxu0
    %v685 = vadd.f32 %v546, %v684
    %686 = vmatprep.mubr.f32.mxu0 0.0
    %v687 = vand.u32 %v112, 4294901760
    %v688 = vsub.f32 %v112, %v687
    %v689 = vand.u32 %v688, 4294901760
    %690 = vmatmul.mubr.f32.gmra.mxu0 %v689
    %v691 = vpop.f32.mrf.mxu0
    %v692 = vadd.f32 %v552, %v691
    %v693 = vpop.f32.mrf.mxu0
    %v694 = vadd.f32 %v554, %v693
    %695 = vmatprep.mubr.f32.mxu0 0.0
    %v696 = vand.u32 %v115, 4294901760
    %v697 = vsub.f32 %v115, %v696
    %v698 = vand.u32 %v697, 4294901760
    %699 = vmatmul.mubr.f32.gmra.mxu0 %v698
    %v700 = vpop.f32.mrf.mxu0
    %v701 = vadd.f32 %v560, %v700
    %v702 = vpop.f32.mrf.mxu0
    %v703 = vadd.f32 %v562, %v702
    %704 = vmatprep.mubr.f32.mxu0 0.0
    %v705 = vand.u32 %v118, 4294901760
    %v706 = vsub.f32 %v118, %v705
    %v707 = vand.u32 %v706, 4294901760
    %708 = vmatmul.mubr.f32.gmra.mxu0 %v707
    %v709 = vpop.f32.mrf.mxu0
    %v710 = vadd.f32 %v568, %v709
    %v711 = vpop.f32.mrf.mxu0
    %v712 = vadd.f32 %v570, %v711
    %713 = vmatprep.mubr.f32.mxu0 0.0
    %v714 = vand.u32 %v121, 4294901760
    %v715 = vsub.f32 %v121, %v714
    %v716 = vand.u32 %v715, 4294901760
    %717 = vmatmul.mubr.f32.gmra.mxu0 %v716
    %v718 = vpop.f32.mrf.mxu0
    %v719 = vadd.f32 %v576, %v718
    %v720 = vpop.f32.mrf.mxu0
    %v721 = vadd.f32 %v578, %v720
    %722 = vmatprep.mubr.f32.mxu0 0.0
    %v723 = vand.u32 %v124, 4294901760
    %v724 = vsub.f32 %v124, %v723
    %v725 = vand.u32 %v724, 4294901760
    %726 = vmatmul.mubr.f32.gmra.mxu0 %v725
    %v727 = vpop.f32.mrf.mxu0
    %v728 = vadd.f32 %v584, %v727
    %v729 = vpop.f32.mrf.mxu0
    %v730 = vadd.f32 %v586, %v729
    %731 = vmatprep.mubr.f32.mxu0 0.0
    %v732 = vand.u32 %v127, 4294901760
    %v733 = vsub.f32 %v127, %v732
    %v734 = vand.u32 %v733, 4294901760
    %735 = vmatmul.mubr.f32.gmra.mxu0 %v734
    %v736 = vpop.f32.mrf.mxu0
    %v737 = vadd.f32 %v592, %v736
    %v738 = vpop.f32.mrf.mxu0
    %v739 = vadd.f32 %v594, %v738
    %740 = vdwg.mxu0
    %741 = vmatprep.subr.mxu0 0.0
    %742 = vmatpush1.msra.mxu0 0.0
    %743 = vmatprep.subr.mxu0 0.0
    %744 = vmatpush1.msra.mxu0 0.0
    %745 = vmatprep.subr.mxu0 0.0
    %746 = vmatpush1.msra.mxu0 0.0
    %747 = vmatprep.subr.mxu0 0.0
    %748 = vmatpush1.msra.mxu0 0.0
    %749 = vmatprep.subr.mxu0 0.0
    %750 = vmatpush1.msra.mxu0 0.0
    %751 = vmatprep.subr.mxu0 0.0
    %752 = vmatpush1.msra.mxu0 0.0
    %753 = vmatprep.subr.mxu0 0.0
    %754 = vmatpush1.msra.mxu0 0.0
    %755 = vmatprep.subr.mxu0 0.0
    %756 = vmatpush1.msra.mxu0 0.0
    %757 = vmatprep.subr.mxu0 0.0
    %758 = vmatpush1.msra.mxu0 0.0
    %759 = vmatprep.subr.mxu0 0.0
    %760 = vmatpush1.msra.mxu0 0.0
    %761 = vmatprep.subr.mxu0 0.0
    %762 = vmatpush1.msra.mxu0 0.0
    %763 = vmatprep.subr.mxu0 0.0
    %764 = vmatpush1.msra.mxu0 0.0
    %v765 = vand.u32 %v91, 4294901760
    %v766 = vsub.f32 %v91, %v765
    %v767 = vand.u32 %v766, 4294901760
    %768 = vmatprep.subr.mxu0 %v767
    %v769 = vand.u32 %v90, 4294901760
    %v770 = vsub.f32 %v90, %v769
    %v771 = vand.u32 %v770, 4294901760
    %772 = vmatpush1.msra.mxu0 %v771
    %v773 = vand.u32 %v89, 4294901760
    %v774 = vsub.f32 %v89, %v773
    %v775 = vand.u32 %v774, 4294901760
    %776 = vmatprep.subr.mxu0 %v775
    %v777 = vand.u32 %v88, 4294901760
    %v778 = vsub.f32 %v88, %v777
    %v779 = vand.u32 %v778, 4294901760
    %780 = vmatpush1.msra.mxu0 %v779
    %v781 = vand.u32 %v87, 4294901760
    %v782 = vsub.f32 %v87, %v781
    %v783 = vand.u32 %v782, 4294901760
    %784 = vmatprep.subr.mxu0 %v783
    %v785 = vand.u32 %v86, 4294901760
    %v786 = vsub.f32 %v86, %v785
    %v787 = vand.u32 %v786, 4294901760
    %788 = vmatpush1.msra.mxu0 %v787
    %v789 = vand.u32 %v85, 4294901760
    %v790 = vsub.f32 %v85, %v789
    %v791 = vand.u32 %v790, 4294901760
    %792 = vmatprep.subr.mxu0 %v791
    %v793 = vand.u32 %v84, 4294901760
    %v794 = vsub.f32 %v84, %v793
    %v795 = vand.u32 %v794, 4294901760
    %796 = vmatpush1.msra.mxu0 %v795
    %797 = vmatprep.subr.mxu0 0.0
    %798 = vmatpush2.msra.mxu0 0.0
    %799 = vmatprep.subr.mxu0 0.0
    %800 = vmatpush2.msra.mxu0 0.0
    %801 = vmatprep.subr.mxu0 0.0
    %802 = vmatpush2.msra.mxu0 0.0
    %803 = vmatprep.subr.mxu0 0.0
    %804 = vmatpush2.msra.mxu0 0.0
    %805 = vmatprep.subr.mxu0 0.0
    %806 = vmatpush2.msra.mxu0 0.0
    %807 = vmatprep.subr.mxu0 0.0
    %808 = vmatpush2.msra.mxu0 0.0
    %809 = vmatprep.subr.mxu0 0.0
    %810 = vmatpush2.msra.mxu0 0.0
    %811 = vmatprep.subr.mxu0 0.0
    %812 = vmatpush2.msra.mxu0 0.0
    %813 = vmatprep.subr.mxu0 0.0
    %814 = vmatpush2.msra.mxu0 0.0
    %815 = vmatprep.subr.mxu0 0.0
    %816 = vmatpush2.msra.mxu0 0.0
    %817 = vmatprep.subr.mxu0 0.0
    %818 = vmatpush2.msra.mxu0 0.0
    %819 = vmatprep.subr.mxu0 0.0
    %820 = vmatpush2.msra.mxu0 0.0
    %821 = vmatprep.subr.mxu0 0.0
    %822 = vmatpush2.msra.mxu0 0.0
    %823 = vmatprep.subr.mxu0 0.0
    %824 = vmatpush2.msra.mxu0 0.0
    %825 = vmatprep.subr.mxu0 0.0
    %826 = vmatpush2.msra.mxu0 0.0
    %827 = vmatprep.subr.mxu0 0.0
    %828 = vmatpush2.msra.mxu0 0.0
    %829 = vmatprep.mubr.f32.mxu0 0.0
    %v830 = vand.u32 %v106, 4294901760
    %831 = vmatmul.mubr.f32.gmra.mxu0 %v830
    %v832 = vpop.f32.mrf.mxu0
    %v833 = vadd.f32 %v674, %v832
    %v834 = vpop.f32.mrf.mxu0
    %v835 = vadd.f32 %v676, %v834
    %836 = vmatprep.mubr.f32.mxu0 0.0
    %v837 = vand.u32 %v109, 4294901760
    %838 = vmatmul.mubr.f32.gmra.mxu0 %v837
    %v839 = vpop.f32.mrf.mxu0
    %v840 = vadd.f32 %v683, %v839
    %v841 = vpop.f32.mrf.mxu0
    %v842 = vadd.f32 %v685, %v841
    %843 = vmatprep.mubr.f32.mxu0 0.0
    %v844 = vand.u32 %v112, 4294901760
    %845 = vmatmul.mubr.f32.gmra.mxu0 %v844
    %v846 = vpop.f32.mrf.mxu0
    %v847 = vadd.f32 %v692, %v846
    %v848 = vpop.f32.mrf.mxu0
    %v849 = vadd.f32 %v694, %v848
    %850 = vmatprep.mubr.f32.mxu0 0.0
    %v851 = vand.u32 %v115, 4294901760
    %852 = vmatmul.mubr.f32.gmra.mxu0 %v851
    %v853 = vpop.f32.mrf.mxu0
    %v854 = vadd.f32 %v701, %v853
    %v855 = vpop.f32.mrf.mxu0
    %v856 = vadd.f32 %v703, %v855
    %857 = vmatprep.mubr.f32.mxu0 0.0
    %v858 = vand.u32 %v118, 4294901760
    %859 = vmatmul.mubr.f32.gmra.mxu0 %v858
    %v860 = vpop.f32.mrf.mxu0
    %v861 = vadd.f32 %v710, %v860
    %v862 = vpop.f32.mrf.mxu0
    %v863 = vadd.f32 %v712, %v862
    %864 = vmatprep.mubr.f32.mxu0 0.0
    %v865 = vand.u32 %v121, 4294901760
    %866 = vmatmul.mubr.f32.gmra.mxu0 %v865
    %v867 = vpop.f32.mrf.mxu0
    %v868 = vadd.f32 %v719, %v867
    %v869 = vpop.f32.mrf.mxu0
    %v870 = vadd.f32 %v721, %v869
    %871 = vmatprep.mubr.f32.mxu0 0.0
    %v872 = vand.u32 %v124, 4294901760
    %873 = vmatmul.mubr.f32.gmra.mxu0 %v872
    %v874 = vpop.f32.mrf.mxu0
    %v875 = vadd.f32 %v728, %v874
    %v876 = vpop.f32.mrf.mxu0
    %v877 = vadd.f32 %v730, %v876
    %878 = vmatprep.mubr.f32.mxu0 0.0
    %v879 = vand.u32 %v127, 4294901760
    %880 = vmatmul.mubr.f32.gmra.mxu0 %v879
    %v881 = vpop.f32.mrf.mxu0
    %v882 = vadd.f32 %v737, %v881
    %v883 = vpop.f32.mrf.mxu0
    %v884 = vadd.f32 %v739, %v883
    %885 = vdwg.mxu0
    %886 = vmatprep.subr.mxu0 0.0
    %887 = vmatpush1.msra.mxu0 0.0
    %888 = vmatprep.subr.mxu0 0.0
    %889 = vmatpush1.msra.mxu0 0.0
    %890 = vmatprep.subr.mxu0 0.0
    %891 = vmatpush1.msra.mxu0 0.0
    %892 = vmatprep.subr.mxu0 0.0
    %893 = vmatpush1.msra.mxu0 0.0
    %894 = vmatprep.subr.mxu0 0.0
    %895 = vmatpush1.msra.mxu0 0.0
    %896 = vmatprep.subr.mxu0 0.0
    %897 = vmatpush1.msra.mxu0 0.0
    %898 = vmatprep.subr.mxu0 0.0
    %899 = vmatpush1.msra.mxu0 0.0
    %900 = vmatprep.subr.mxu0 0.0
    %901 = vmatpush1.msra.mxu0 0.0
    %902 = vmatprep.subr.mxu0 0.0
    %903 = vmatpush1.msra.mxu0 0.0
    %904 = vmatprep.subr.mxu0 0.0
    %905 = vmatpush1.msra.mxu0 0.0
    %906 = vmatprep.subr.mxu0 0.0
    %907 = vmatpush1.msra.mxu0 0.0
    %908 = vmatprep.subr.mxu0 0.0
    %909 = vmatpush1.msra.mxu0 0.0
    %v910 = vand.u32 %v91, 4294901760
    %911 = vmatprep.subr.mxu0 %v910
    %v912 = vand.u32 %v90, 4294901760
    %913 = vmatpush1.msra.mxu0 %v912
    %v914 = vand.u32 %v89, 4294901760
    %915 = vmatprep.subr.mxu0 %v914
    %v916 = vand.u32 %v88, 4294901760
    %917 = vmatpush1.msra.mxu0 %v916
    %v918 = vand.u32 %v87, 4294901760
    %919 = vmatprep.subr.mxu0 %v918
    %v920 = vand.u32 %v86, 4294901760
    %921 = vmatpush1.msra.mxu0 %v920
    %v922 = vand.u32 %v85, 4294901760
    %923 = vmatprep.subr.mxu0 %v922
    %v924 = vand.u32 %v84, 4294901760
    %925 = vmatpush1.msra.mxu0 %v924
    %926 = vmatprep.subr.mxu0 0.0
    %927 = vmatpush2.msra.mxu0 0.0
    %928 = vmatprep.subr.mxu0 0.0
    %929 = vmatpush2.msra.mxu0 0.0
    %930 = vmatprep.subr.mxu0 0.0
    %931 = vmatpush2.msra.mxu0 0.0
    %932 = vmatprep.subr.mxu0 0.0
    %933 = vmatpush2.msra.mxu0 0.0
    %934 = vmatprep.subr.mxu0 0.0
    %935 = vmatpush2.msra.mxu0 0.0
    %936 = vmatprep.subr.mxu0 0.0
    %937 = vmatpush2.msra.mxu0 0.0
    %938 = vmatprep.subr.mxu0 0.0
    %939 = vmatpush2.msra.mxu0 0.0
    %940 = vmatprep.subr.mxu0 0.0
    %941 = vmatpush2.msra.mxu0 0.0
    %942 = vmatprep.subr.mxu0 0.0
    %943 = vmatpush2.msra.mxu0 0.0
    %944 = vmatprep.subr.mxu0 0.0
    %945 = vmatpush2.msra.mxu0 0.0
    %946 = vmatprep.subr.mxu0 0.0
    %947 = vmatpush2.msra.mxu0 0.0
    %948 = vmatprep.subr.mxu0 0.0
    %949 = vmatpush2.msra.mxu0 0.0
    %950 = vmatprep.subr.mxu0 0.0
    %951 = vmatpush2.msra.mxu0 0.0
    %952 = vmatprep.subr.mxu0 0.0
    %953 = vmatpush2.msra.mxu0 0.0
    %954 = vmatprep.subr.mxu0 0.0
    %955 = vmatpush2.msra.mxu0 0.0
    %956 = vmatprep.subr.mxu0 0.0
    %957 = vmatpush2.msra.mxu0 0.0
    %958 = vmatprep.mubr.f32.mxu0 0.0
    %v959 = vand.u32 %v106, 4294901760
    %960 = vmatmul.mubr.f32.gmra.mxu0 %v959
    %v961 = vpop.f32.mrf.mxu0
    %v962 = vadd.f32 %v833, %v961
    %v963 = vpop.f32.mrf.mxu0
    %v964 = vadd.f32 %v835, %v963
    %965 = vmatprep.mubr.f32.mxu0 0.0
    %v966 = vand.u32 %v109, 4294901760
    %967 = vmatmul.mubr.f32.gmra.mxu0 %v966
    %v968 = vpop.f32.mrf.mxu0
    %v969 = vadd.f32 %v840, %v968
    %v970 = vpop.f32.mrf.mxu0
    %v971 = vadd.f32 %v842, %v970
    %972 = vmatprep.mubr.f32.mxu0 0.0
    %v973 = vand.u32 %v112, 4294901760
    %974 = vmatmul.mubr.f32.gmra.mxu0 %v973
    %v975 = vpop.f32.mrf.mxu0
    %v976 = vadd.f32 %v847, %v975
    %v977 = vpop.f32.mrf.mxu0
    %v978 = vadd.f32 %v849, %v977
    %979 = vmatprep.mubr.f32.mxu0 0.0
    %v980 = vand.u32 %v115, 4294901760
    %981 = vmatmul.mubr.f32.gmra.mxu0 %v980
    %v982 = vpop.f32.mrf.mxu0
    %v983 = vadd.f32 %v854, %v982
    %v984 = vpop.f32.mrf.mxu0
    %v985 = vadd.f32 %v856, %v984
    %986 = vmatprep.mubr.f32.mxu0 0.0
    %v987 = vand.u32 %v118, 4294901760
    %988 = vmatmul.mubr.f32.gmra.mxu0 %v987
    %v989 = vpop.f32.mrf.mxu0
    %v990 = vadd.f32 %v861, %v989
    %v991 = vpop.f32.mrf.mxu0
    %v992 = vadd.f32 %v863, %v991
    %993 = vmatprep.mubr.f32.mxu0 0.0
    %v994 = vand.u32 %v121, 4294901760
    %995 = vmatmul.mubr.f32.gmra.mxu0 %v994
    %v996 = vpop.f32.mrf.mxu0
    %v997 = vadd.f32 %v868, %v996
    %v998 = vpop.f32.mrf.mxu0
    %v999 = vadd.f32 %v870, %v998
    %1000 = vmatprep.mubr.f32.mxu0 0.0
    %v1001 = vand.u32 %v124, 4294901760
    %1002 = vmatmul.mubr.f32.gmra.mxu0 %v1001
    %v1003 = vpop.f32.mrf.mxu0
    %v1004 = vadd.f32 %v875, %v1003
    %v1005 = vpop.f32.mrf.mxu0
    %v1006 = vadd.f32 %v877, %v1005
    %1007 = vmatprep.mubr.f32.mxu0 0.0
    %v1008 = vand.u32 %v127, 4294901760
    %1009 = vmatmul.mubr.f32.gmra.mxu0 %v1008
    %v1010 = vpop.f32.mrf.mxu0
    %v1011 = vadd.f32 %v882, %v1010
    %v1012 = vpop.f32.mrf.mxu0
    %v1013 = vadd.f32 %v884, %v1012
    %1014 = vdwg.mxu0
    %1015 = vst [vmem:[#allocation2] sm:$0xff] %v962
    %1016 = vst [vmem:[#allocation2 + $0x8] sm:$0xff] %v969
    %1017 = vst [vmem:[#allocation2 + $0x10] sm:$0xff] %v976
    %1018 = vst [vmem:[#allocation2 + $0x18] sm:$0xff] %v983
    %1019 = vst [vmem:[#allocation2 + $0x20] sm:$0xff] %v990
    %1020 = vst [vmem:[#allocation2 + $0x28] sm:$0xff] %v997
    %1021 = vst [vmem:[#allocation2 + $0x30] sm:$0xff] %v1004
    %1022 = vst [vmem:[#allocation2 + $0x38] sm:$0xff] %v1011
    %1023 = vst [vmem:[#allocation3] sm:$0xff] %v964
    %1024 = vst [vmem:[#allocation3 + $0x8] sm:$0xff] %v971
    %1025 = vst [vmem:[#allocation3 + $0x10] sm:$0xff] %v978
    %1026 = vst [vmem:[#allocation3 + $0x18] sm:$0xff] %v985
    %1027 = vst [vmem:[#allocation3 + $0x20] sm:$0xff] %v992
    %1028 = vst [vmem:[#allocation3 + $0x28] sm:$0xff] %v999
    %1029 = vst [vmem:[#allocation3 + $0x30] sm:$0xff] %v1006
    %1030 = vst [vmem:[#allocation3 + $0x38] sm:$0xff] %v1013
    %v1031 = vld [vmem:[#allocation9] sm:$0xff]
    %v1032 = vld [vmem:[#allocation9 + $0x8] sm:$0xff]
    %v1033 = vld [vmem:[#allocation9 + $0x10] sm:$0xff]
    %v1034 = vld [vmem:[#allocation9 + $0x18] sm:$0xff]
    %v1035 = vld [vmem:[#allocation10] sm:$0xff]
    %v1036 = vld [vmem:[#allocation10 + $0x8] sm:$0xff]
    %v1037 = vld [vmem:[#allocation10 + $0x10] sm:$0xff]
    %v1038 = vld [vmem:[#allocation10 + $0x18] sm:$0xff]
    %v1039 = vlaneseq
    %v1040 = vand.u32 %v1039, 127
    %vm1041 = vcmp.ge.s32.totalorder %v1040, 64
    %vm1042 = vcmp.lt.s32.totalorder %v1040, 96
    %vm1043 = vmand %vm1041, %vm1042
    %v1044 = vsel %vm1043, 1.0, 0.5
    %v1045 = vsel %vm1043, 0.0, 0.5
    %v1046 = vld [vmem:[#allocation2] sm:$0xff]
    %v1048 = vsel %vm104, 0.0, 0
    %1050 = vmatprep.subr.mxu0 0.0
    %1051 = vmatpush1.msra.mxu0 0.0
    %1052 = vmatprep.subr.mxu0 0.0
    %1053 = vmatpush1.msra.mxu0 0.0
    %1054 = vmatprep.subr.mxu0 0.0
    %1055 = vmatpush1.msra.mxu0 0.0
    %1056 = vmatprep.subr.mxu0 0.0
    %1057 = vmatpush1.msra.mxu0 0.0
    %1058 = vmatprep.subr.mxu0 0.0
    %1059 = vmatpush1.msra.mxu0 0.0
    %1060 = vmatprep.subr.mxu0 0.0
    %1061 = vmatpush1.msra.mxu0 0.0
    %1062 = vmatprep.subr.mxu0 0.0
    %1063 = vmatpush1.msra.mxu0 0.0
    %1064 = vmatprep.subr.mxu0 0.0
    %1065 = vmatpush1.msra.mxu0 0.0
    %1066 = vmatprep.subr.mxu0 0.0
    %1067 = vmatpush1.msra.mxu0 0.0
    %1068 = vmatprep.subr.mxu0 0.0
    %1069 = vmatpush1.msra.mxu0 0.0
    %1070 = vmatprep.subr.mxu0 0.0
    %1071 = vmatpush1.msra.mxu0 0.0
    %1072 = vmatprep.subr.mxu0 0.0
    %1073 = vmatpush1.msra.mxu0 0.0
    %1074 = vmatprep.subr.mxu0 0.0
    %v1075 = vand.u32 %v1034, 4294901760
    %1076 = vmatpush1.msra.mxu0 %v1075
    %1077 = vmatprep.subr.mxu0 0.0
    %v1078 = vand.u32 %v1033, 4294901760
    %1079 = vmatpush1.msra.mxu0 %v1078
    %1080 = vmatprep.subr.mxu0 0.0
    %v1081 = vand.u32 %v1032, 4294901760
    %1082 = vmatpush1.msra.mxu0 %v1081
    %1083 = vmatprep.subr.mxu0 0.0
    %v1084 = vand.u32 %v1031, 4294901760
    %1085 = vmatpush1.msra.mxu0 %v1084
    %1086 = vmatprep.subr.mxu0 0.0
    %1087 = vmatpush2.msra.mxu0 0.0
    %1088 = vmatprep.subr.mxu0 0.0
    %1089 = vmatpush2.msra.mxu0 0.0
    %1090 = vmatprep.subr.mxu0 0.0
    %1091 = vmatpush2.msra.mxu0 0.0
    %1092 = vmatprep.subr.mxu0 0.0
    %1093 = vmatpush2.msra.mxu0 0.0
    %1094 = vmatprep.subr.mxu0 0.0
    %1095 = vmatpush2.msra.mxu0 0.0
    %1096 = vmatprep.subr.mxu0 0.0
    %1097 = vmatpush2.msra.mxu0 0.0
    %1098 = vmatprep.subr.mxu0 0.0
    %1099 = vmatpush2.msra.mxu0 0.0
    %1100 = vmatprep.subr.mxu0 0.0
    %1101 = vmatpush2.msra.mxu0 0.0
    %1102 = vmatprep.subr.mxu0 0.0
    %1103 = vmatpush2.msra.mxu0 0.0
    %1104 = vmatprep.subr.mxu0 0.0
    %1105 = vmatpush2.msra.mxu0 0.0
    %1106 = vmatprep.subr.mxu0 0.0
    %1107 = vmatpush2.msra.mxu0 0.0
    %1108 = vmatprep.subr.mxu0 0.0
    %1109 = vmatpush2.msra.mxu0 0.0
    %1110 = vmatprep.subr.mxu0 0.0
    %1111 = vmatpush2.msra.mxu0 0.0
    %1112 = vmatprep.subr.mxu0 0.0
    %1113 = vmatpush2.msra.mxu0 0.0
    %1114 = vmatprep.subr.mxu0 0.0
    %1115 = vmatpush2.msra.mxu0 0.0
    %1116 = vmatprep.subr.mxu0 0.0
    %1117 = vmatpush2.msra.mxu0 0.0
    %1118 = vmatprep.mubr.f32.mxu0 0.0
    %v1119 = vand.u32 %v1048, 4294901760
    %v1120 = vsub.f32 %v1048, %v1119
    %v1121 = vand.u32 %v1120, 4294901760
    %v1122 = vsub.f32 %v1120, %v1121
    %v1123 = vand.u32 %v1122, 4294901760
    %1124 = vmatmul.mubr.f32.gmra.mxu0 %v1123
    %v1125 = vpop.f32.mrf.mxu0
    %v1126 = vadd.f32 0.0, %v1125
    %v1127 = vpop.f32.mrf.mxu0
    %1128 = vdwg.mxu0
    %1129 = vmatprep.subr.mxu0 0.0
    %1130 = vmatpush1.msra.mxu0 0.0
    %1131 = vmatprep.subr.mxu0 0.0
    %1132 = vmatpush1.msra.mxu0 0.0
    %1133 = vmatprep.subr.mxu0 0.0
    %1134 = vmatpush1.msra.mxu0 0.0
    %1135 = vmatprep.subr.mxu0 0.0
    %1136 = vmatpush1.msra.mxu0 0.0
    %1137 = vmatprep.subr.mxu0 0.0
    %1138 = vmatpush1.msra.mxu0 0.0
    %1139 = vmatprep.subr.mxu0 0.0
    %1140 = vmatpush1.msra.mxu0 0.0
    %1141 = vmatprep.subr.mxu0 0.0
    %1142 = vmatpush1.msra.mxu0 0.0
    %1143 = vmatprep.subr.mxu0 0.0
    %1144 = vmatpush1.msra.mxu0 0.0
    %1145 = vmatprep.subr.mxu0 0.0
    %1146 = vmatpush1.msra.mxu0 0.0
    %1147 = vmatprep.subr.mxu0 0.0
    %1148 = vmatpush1.msra.mxu0 0.0
    %1149 = vmatprep.subr.mxu0 0.0
    %1150 = vmatpush1.msra.mxu0 0.0
    %1151 = vmatprep.subr.mxu0 0.0
    %1152 = vmatpush1.msra.mxu0 0.0
    %1153 = vmatprep.subr.mxu0 0.0
    %v1154 = vand.u32 %v1034, 4294901760
    %v1155 = vsub.f32 %v1034, %v1154
    %v1156 = vand.u32 %v1155, 4294901760
    %v1157 = vsub.f32 %v1155, %v1156
    %v1158 = vand.u32 %v1157, 4294901760
    %1159 = vmatpush1.msra.mxu0 %v1158
    %1160 = vmatprep.subr.mxu0 0.0
    %v1161 = vand.u32 %v1033, 4294901760
    %v1162 = vsub.f32 %v1033, %v1161
    %v1163 = vand.u32 %v1162, 4294901760
    %v1164 = vsub.f32 %v1162, %v1163
    %v1165 = vand.u32 %v1164, 4294901760
    %1166 = vmatpush1.msra.mxu0 %v1165
    %1167 = vmatprep.subr.mxu0 0.0
    %v1168 = vand.u32 %v1032, 4294901760
    %v1169 = vsub.f32 %v1032, %v1168
    %v1170 = vand.u32 %v1169, 4294901760
    %v1171 = vsub.f32 %v1169, %v1170
    %v1172 = vand.u32 %v1171, 4294901760
    %1173 = vmatpush1.msra.mxu0 %v1172
    %1174 = vmatprep.subr.mxu0 0.0
    %v1175 = vand.u32 %v1031, 4294901760
    %v1176 = vsub.f32 %v1031, %v1175
    %v1177 = vand.u32 %v1176, 4294901760
    %v1178 = vsub.f32 %v1176, %v1177
    %v1179 = vand.u32 %v1178, 4294901760
    %1180 = vmatpush1.msra.mxu0 %v1179
    %1181 = vmatprep.subr.mxu0 0.0
    %1182 = vmatpush2.msra.mxu0 0.0
    %1183 = vmatprep.subr.mxu0 0.0
    %1184 = vmatpush2.msra.mxu0 0.0
    %1185 = vmatprep.subr.mxu0 0.0
    %1186 = vmatpush2.msra.mxu0 0.0
    %1187 = vmatprep.subr.mxu0 0.0
    %1188 = vmatpush2.msra.mxu0 0.0
    %1189 = vmatprep.subr.mxu0 0.0
    %1190 = vmatpush2.msra.mxu0 0.0
    %1191 = vmatprep.subr.mxu0 0.0
    %1192 = vmatpush2.msra.mxu0 0.0
    %1193 = vmatprep.subr.mxu0 0.0
    %1194 = vmatpush2.msra.mxu0 0.0
    %1195 = vmatprep.subr.mxu0 0.0
    %1196 = vmatpush2.msra.mxu0 0.0
    %1197 = vmatprep.subr.mxu0 0.0
    %1198 = vmatpush2.msra.mxu0 0.0
    %1199 = vmatprep.subr.mxu0 0.0
    %1200 = vmatpush2.msra.mxu0 0.0
    %1201 = vmatprep.subr.mxu0 0.0
    %1202 = vmatpush2.msra.mxu0 0.0
    %1203 = vmatprep.subr.mxu0 0.0
    %1204 = vmatpush2.msra.mxu0 0.0
    %1205 = vmatprep.subr.mxu0 0.0
    %1206 = vmatpush2.msra.mxu0 0.0
    %1207 = vmatprep.subr.mxu0 0.0
    %1208 = vmatpush2.msra.mxu0 0.0
    %1209 = vmatprep.subr.mxu0 0.0
    %1210 = vmatpush2.msra.mxu0 0.0
    %1211 = vmatprep.subr.mxu0 0.0
    %1212 = vmatpush2.msra.mxu0 0.0
    %1213 = vmatprep.mubr.f32.mxu0 0.0
    %v1214 = vand.u32 %v1048, 4294901760
    %1215 = vmatmul.mubr.f32.gmra.mxu0 %v1214
    %v1216 = vpop.f32.mrf.mxu0
    %v1217 = vadd.f32 %v1126, %v1216
    %v1218 = vpop.f32.mrf.mxu0
    %1219 = vdwg.mxu0
    %1220 = vmatprep.subr.mxu0 0.0
    %1221 = vmatpush1.msra.mxu0 0.0
    %1222 = vmatprep.subr.mxu0 0.0
    %1223 = vmatpush1.msra.mxu0 0.0
    %1224 = vmatprep.subr.mxu0 0.0
    %1225 = vmatpush1.msra.mxu0 0.0
    %1226 = vmatprep.subr.mxu0 0.0
    %1227 = vmatpush1.msra.mxu0 0.0
    %1228 = vmatprep.subr.mxu0 0.0
    %1229 = vmatpush1.msra.mxu0 0.0
    %1230 = vmatprep.subr.mxu0 0.0
    %1231 = vmatpush1.msra.mxu0 0.0
    %1232 = vmatprep.subr.mxu0 0.0
    %1233 = vmatpush1.msra.mxu0 0.0
    %1234 = vmatprep.subr.mxu0 0.0
    %1235 = vmatpush1.msra.mxu0 0.0
    %1236 = vmatprep.subr.mxu0 0.0
    %1237 = vmatpush1.msra.mxu0 0.0
    %1238 = vmatprep.subr.mxu0 0.0
    %1239 = vmatpush1.msra.mxu0 0.0
    %1240 = vmatprep.subr.mxu0 0.0
    %1241 = vmatpush1.msra.mxu0 0.0
    %1242 = vmatprep.subr.mxu0 0.0
    %1243 = vmatpush1.msra.mxu0 0.0
    %1244 = vmatprep.subr.mxu0 0.0
    %v1245 = vand.u32 %v1034, 4294901760
    %v1246 = vsub.f32 %v1034, %v1245
    %1247 = vmatpush1.msra.mxu0 %v1246
    %1248 = vmatprep.subr.mxu0 0.0
    %v1249 = vand.u32 %v1033, 4294901760
    %v1250 = vsub.f32 %v1033, %v1249
    %1251 = vmatpush1.msra.mxu0 %v1250
    %1252 = vmatprep.subr.mxu0 0.0
    %v1253 = vand.u32 %v1032, 4294901760
    %v1254 = vsub.f32 %v1032, %v1253
    %1255 = vmatpush1.msra.mxu0 %v1254
    %1256 = vmatprep.subr.mxu0 0.0
    %v1257 = vand.u32 %v1031, 4294901760
    %v1258 = vsub.f32 %v1031, %v1257
    %1259 = vmatpush1.msra.mxu0 %v1258
    %1260 = vmatprep.subr.mxu0 0.0
    %1261 = vmatpush2.msra.mxu0 0.0
    %1262 = vmatprep.subr.mxu0 0.0
    %1263 = vmatpush2.msra.mxu0 0.0
    %1264 = vmatprep.subr.mxu0 0.0
    %1265 = vmatpush2.msra.mxu0 0.0
    %1266 = vmatprep.subr.mxu0 0.0
    %1267 = vmatpush2.msra.mxu0 0.0
    %1268 = vmatprep.subr.mxu0 0.0
    %1269 = vmatpush2.msra.mxu0 0.0
    %1270 = vmatprep.subr.mxu0 0.0
    %1271 = vmatpush2.msra.mxu0 0.0
    %1272 = vmatprep.subr.mxu0 0.0
    %1273 = vmatpush2.msra.mxu0 0.0
    %1274 = vmatprep.subr.mxu0 0.0
    %1275 = vmatpush2.msra.mxu0 0.0
    %1276 = vmatprep.subr.mxu0 0.0
    %1277 = vmatpush2.msra.mxu0 0.0
    %1278 = vmatprep.subr.mxu0 0.0
    %1279 = vmatpush2.msra.mxu0 0.0
    %1280 = vmatprep.subr.mxu0 0.0
    %1281 = vmatpush2.msra.mxu0 0.0
    %1282 = vmatprep.subr.mxu0 0.0
    %1283 = vmatpush2.msra.mxu0 0.0
    %1284 = vmatprep.subr.mxu0 0.0
    %1285 = vmatpush2.msra.mxu0 0.0
    %1286 = vmatprep.subr.mxu0 0.0
    %1287 = vmatpush2.msra.mxu0 0.0
    %1288 = vmatprep.subr.mxu0 0.0
    %1289 = vmatpush2.msra.mxu0 0.0
    %1290 = vmatprep.subr.mxu0 0.0
    %1291 = vmatpush2.msra.mxu0 0.0
    %1292 = vmatprep.mubr.f32.mxu0 0.0
    %v1293 = vand.u32 %v1048, 4294901760
    %v1294 = vsub.f32 %v1048, %v1293
    %1295 = vmatmul.mubr.f32.gmra.mxu0 %v1294
    %v1296 = vpop.f32.mrf.mxu0
    %v1297 = vadd.f32 %v1217, %v1296
    %v1298 = vpop.f32.mrf.mxu0
    %1299 = vdwg.mxu0
    %1300 = vmatprep.subr.mxu0 0.0
    %1301 = vmatpush1.msra.mxu0 0.0
    %1302 = vmatprep.subr.mxu0 0.0
    %1303 = vmatpush1.msra.mxu0 0.0
    %1304 = vmatprep.subr.mxu0 0.0
    %1305 = vmatpush1.msra.mxu0 0.0
    %1306 = vmatprep.subr.mxu0 0.0
    %1307 = vmatpush1.msra.mxu0 0.0
    %1308 = vmatprep.subr.mxu0 0.0
    %1309 = vmatpush1.msra.mxu0 0.0
    %1310 = vmatprep.subr.mxu0 0.0
    %1311 = vmatpush1.msra.mxu0 0.0
    %1312 = vmatprep.subr.mxu0 0.0
    %1313 = vmatpush1.msra.mxu0 0.0
    %1314 = vmatprep.subr.mxu0 0.0
    %1315 = vmatpush1.msra.mxu0 0.0
    %1316 = vmatprep.subr.mxu0 0.0
    %1317 = vmatpush1.msra.mxu0 0.0
    %1318 = vmatprep.subr.mxu0 0.0
    %1319 = vmatpush1.msra.mxu0 0.0
    %1320 = vmatprep.subr.mxu0 0.0
    %1321 = vmatpush1.msra.mxu0 0.0
    %1322 = vmatprep.subr.mxu0 0.0
    %1323 = vmatpush1.msra.mxu0 0.0
    %1324 = vmatprep.subr.mxu0 0.0
    %v1325 = vand.u32 %v1034, 4294901760
    %1326 = vmatpush1.msra.mxu0 %v1325
    %1327 = vmatprep.subr.mxu0 0.0
    %v1328 = vand.u32 %v1033, 4294901760
    %1329 = vmatpush1.msra.mxu0 %v1328
    %1330 = vmatprep.subr.mxu0 0.0
    %v1331 = vand.u32 %v1032, 4294901760
    %1332 = vmatpush1.msra.mxu0 %v1331
    %1333 = vmatprep.subr.mxu0 0.0
    %v1334 = vand.u32 %v1031, 4294901760
    %1335 = vmatpush1.msra.mxu0 %v1334
    %1336 = vmatprep.subr.mxu0 0.0
    %1337 = vmatpush2.msra.mxu0 0.0
    %1338 = vmatprep.subr.mxu0 0.0
    %1339 = vmatpush2.msra.mxu0 0.0
    %1340 = vmatprep.subr.mxu0 0.0
    %1341 = vmatpush2.msra.mxu0 0.0
    %1342 = vmatprep.subr.mxu0 0.0
    %1343 = vmatpush2.msra.mxu0 0.0
    %1344 = vmatprep.subr.mxu0 0.0
    %1345 = vmatpush2.msra.mxu0 0.0
    %1346 = vmatprep.subr.mxu0 0.0
    %1347 = vmatpush2.msra.mxu0 0.0
    %1348 = vmatprep.subr.mxu0 0.0
    %1349 = vmatpush2.msra.mxu0 0.0
    %1350 = vmatprep.subr.mxu0 0.0
    %1351 = vmatpush2.msra.mxu0 0.0
    %1352 = vmatprep.subr.mxu0 0.0
    %1353 = vmatpush2.msra.mxu0 0.0
    %1354 = vmatprep.subr.mxu0 0.0
    %1355 = vmatpush2.msra.mxu0 0.0
    %1356 = vmatprep.subr.mxu0 0.0
    %1357 = vmatpush2.msra.mxu0 0.0
    %1358 = vmatprep.subr.mxu0 0.0
    %1359 = vmatpush2.msra.mxu0 0.0
    %1360 = vmatprep.subr.mxu0 0.0
    %1361 = vmatpush2.msra.mxu0 0.0
    %1362 = vmatprep.subr.mxu0 0.0
    %1363 = vmatpush2.msra.mxu0 0.0
    %1364 = vmatprep.subr.mxu0 0.0
    %1365 = vmatpush2.msra.mxu0 0.0
    %1366 = vmatprep.subr.mxu0 0.0
    %1367 = vmatpush2.msra.mxu0 0.0
    %1368 = vmatprep.mubr.f32.mxu0 0.0
    %v1369 = vand.u32 %v1048, 4294901760
    %v1370 = vsub.f32 %v1048, %v1369
    %v1371 = vand.u32 %v1370, 4294901760
    %1372 = vmatmul.mubr.f32.gmra.mxu0 %v1371
    %v1373 = vpop.f32.mrf.mxu0
    %v1374 = vadd.f32 %v1297, %v1373
    %v1375 = vpop.f32.mrf.mxu0
    %1376 = vdwg.mxu0
    %1377 = vmatprep.subr.mxu0 0.0
    %1378 = vmatpush1.msra.mxu0 0.0
    %1379 = vmatprep.subr.mxu0 0.0
    %1380 = vmatpush1.msra.mxu0 0.0
    %1381 = vmatprep.subr.mxu0 0.0
    %1382 = vmatpush1.msra.mxu0 0.0
    %1383 = vmatprep.subr.mxu0 0.0
    %1384 = vmatpush1.msra.mxu0 0.0
    %1385 = vmatprep.subr.mxu0 0.0
    %1386 = vmatpush1.msra.mxu0 0.0
    %1387 = vmatprep.subr.mxu0 0.0
    %1388 = vmatpush1.msra.mxu0 0.0
    %1389 = vmatprep.subr.mxu0 0.0
    %1390 = vmatpush1.msra.mxu0 0.0
    %1391 = vmatprep.subr.mxu0 0.0
    %1392 = vmatpush1.msra.mxu0 0.0
    %1393 = vmatprep.subr.mxu0 0.0
    %1394 = vmatpush1.msra.mxu0 0.0
    %1395 = vmatprep.subr.mxu0 0.0
    %1396 = vmatpush1.msra.mxu0 0.0
    %1397 = vmatprep.subr.mxu0 0.0
    %1398 = vmatpush1.msra.mxu0 0.0
    %1399 = vmatprep.subr.mxu0 0.0
    %1400 = vmatpush1.msra.mxu0 0.0
    %1401 = vmatprep.subr.mxu0 0.0
    %v1402 = vand.u32 %v1034, 4294901760
    %v1403 = vsub.f32 %v1034, %v1402
    %v1404 = vand.u32 %v1403, 4294901760
    %1405 = vmatpush1.msra.mxu0 %v1404
    %1406 = vmatprep.subr.mxu0 0.0
    %v1407 = vand.u32 %v1033, 4294901760
    %v1408 = vsub.f32 %v1033, %v1407
    %v1409 = vand.u32 %v1408, 4294901760
    %1410 = vmatpush1.msra.mxu0 %v1409
    %1411 = vmatprep.subr.mxu0 0.0
    %v1412 = vand.u32 %v1032, 4294901760
    %v1413 = vsub.f32 %v1032, %v1412
    %v1414 = vand.u32 %v1413, 4294901760
    %1415 = vmatpush1.msra.mxu0 %v1414
    %1416 = vmatprep.subr.mxu0 0.0
    %v1417 = vand.u32 %v1031, 4294901760
    %v1418 = vsub.f32 %v1031, %v1417
    %v1419 = vand.u32 %v1418, 4294901760
    %1420 = vmatpush1.msra.mxu0 %v1419
    %1421 = vmatprep.subr.mxu0 0.0
    %1422 = vmatpush2.msra.mxu0 0.0
    %1423 = vmatprep.subr.mxu0 0.0
    %1424 = vmatpush2.msra.mxu0 0.0
    %1425 = vmatprep.subr.mxu0 0.0
    %1426 = vmatpush2.msra.mxu0 0.0
    %1427 = vmatprep.subr.mxu0 0.0
    %1428 = vmatpush2.msra.mxu0 0.0
    %1429 = vmatprep.subr.mxu0 0.0
    %1430 = vmatpush2.msra.mxu0 0.0
    %1431 = vmatprep.subr.mxu0 0.0
    %1432 = vmatpush2.msra.mxu0 0.0
    %1433 = vmatprep.subr.mxu0 0.0
    %1434 = vmatpush2.msra.mxu0 0.0
    %1435 = vmatprep.subr.mxu0 0.0
    %1436 = vmatpush2.msra.mxu0 0.0
    %1437 = vmatprep.subr.mxu0 0.0
    %1438 = vmatpush2.msra.mxu0 0.0
    %1439 = vmatprep.subr.mxu0 0.0
    %1440 = vmatpush2.msra.mxu0 0.0
    %1441 = vmatprep.subr.mxu0 0.0
    %1442 = vmatpush2.msra.mxu0 0.0
    %1443 = vmatprep.subr.mxu0 0.0
    %1444 = vmatpush2.msra.mxu0 0.0
    %1445 = vmatprep.subr.mxu0 0.0
    %1446 = vmatpush2.msra.mxu0 0.0
    %1447 = vmatprep.subr.mxu0 0.0
    %1448 = vmatpush2.msra.mxu0 0.0
    %1449 = vmatprep.subr.mxu0 0.0
    %1450 = vmatpush2.msra.mxu0 0.0
    %1451 = vmatprep.subr.mxu0 0.0
    %1452 = vmatpush2.msra.mxu0 0.0
    %1453 = vmatprep.mubr.f32.mxu0 0.0
    %v1454 = vand.u32 %v1048, 4294901760
    %1455 = vmatmul.mubr.f32.gmra.mxu0 %v1454
    %v1456 = vpop.f32.mrf.mxu0
    %v1457 = vadd.f32 %v1374, %v1456
    %v1458 = vpop.f32.mrf.mxu0
    %1459 = vdwg.mxu0
    %1460 = vmatprep.subr.mxu0 0.0
    %1461 = vmatpush1.msra.mxu0 0.0
    %1462 = vmatprep.subr.mxu0 0.0
    %1463 = vmatpush1.msra.mxu0 0.0
    %1464 = vmatprep.subr.mxu0 0.0
    %1465 = vmatpush1.msra.mxu0 0.0
    %1466 = vmatprep.subr.mxu0 0.0
    %1467 = vmatpush1.msra.mxu0 0.0
    %1468 = vmatprep.subr.mxu0 0.0
    %1469 = vmatpush1.msra.mxu0 0.0
    %1470 = vmatprep.subr.mxu0 0.0
    %1471 = vmatpush1.msra.mxu0 0.0
    %1472 = vmatprep.subr.mxu0 0.0
    %1473 = vmatpush1.msra.mxu0 0.0
    %1474 = vmatprep.subr.mxu0 0.0
    %1475 = vmatpush1.msra.mxu0 0.0
    %1476 = vmatprep.subr.mxu0 0.0
    %1477 = vmatpush1.msra.mxu0 0.0
    %1478 = vmatprep.subr.mxu0 0.0
    %1479 = vmatpush1.msra.mxu0 0.0
    %1480 = vmatprep.subr.mxu0 0.0
    %1481 = vmatpush1.msra.mxu0 0.0
    %1482 = vmatprep.subr.mxu0 0.0
    %1483 = vmatpush1.msra.mxu0 0.0
    %1484 = vmatprep.subr.mxu0 0.0
    %v1485 = vand.u32 %v1034, 4294901760
    %1486 = vmatpush1.msra.mxu0 %v1485
    %1487 = vmatprep.subr.mxu0 0.0
    %v1488 = vand.u32 %v1033, 4294901760
    %1489 = vmatpush1.msra.mxu0 %v1488
    %1490 = vmatprep.subr.mxu0 0.0
    %v1491 = vand.u32 %v1032, 4294901760
    %1492 = vmatpush1.msra.mxu0 %v1491
    %1493 = vmatprep.subr.mxu0 0.0
    %v1494 = vand.u32 %v1031, 4294901760
    %1495 = vmatpush1.msra.mxu0 %v1494
    %1496 = vmatprep.subr.mxu0 0.0
    %1497 = vmatpush2.msra.mxu0 0.0
    %1498 = vmatprep.subr.mxu0 0.0
    %1499 = vmatpush2.msra.mxu0 0.0
    %1500 = vmatprep.subr.mxu0 0.0
    %1501 = vmatpush2.msra.mxu0 0.0
    %1502 = vmatprep.subr.mxu0 0.0
    %1503 = vmatpush2.msra.mxu0 0.0
    %1504 = vmatprep.subr.mxu0 0.0
    %1505 = vmatpush2.msra.mxu0 0.0
    %1506 = vmatprep.subr.mxu0 0.0
    %1507 = vmatpush2.msra.mxu0 0.0
    %1508 = vmatprep.subr.mxu0 0.0
    %1509 = vmatpush2.msra.mxu0 0.0
    %1510 = vmatprep.subr.mxu0 0.0
    %1511 = vmatpush2.msra.mxu0 0.0
    %1512 = vmatprep.subr.mxu0 0.0
    %1513 = vmatpush2.msra.mxu0 0.0
    %1514 = vmatprep.subr.mxu0 0.0
    %1515 = vmatpush2.msra.mxu0 0.0
    %1516 = vmatprep.subr.mxu0 0.0
    %1517 = vmatpush2.msra.mxu0 0.0
    %1518 = vmatprep.subr.mxu0 0.0
    %1519 = vmatpush2.msra.mxu0 0.0
    %1520 = vmatprep.subr.mxu0 0.0
    %1521 = vmatpush2.msra.mxu0 0.0
    %1522 = vmatprep.subr.mxu0 0.0
    %1523 = vmatpush2.msra.mxu0 0.0
    %1524 = vmatprep.subr.mxu0 0.0
    %1525 = vmatpush2.msra.mxu0 0.0
    %1526 = vmatprep.subr.mxu0 0.0
    %1527 = vmatpush2.msra.mxu0 0.0
    %1528 = vmatprep.mubr.f32.mxu0 0.0
    %v1529 = vand.u32 %v1048, 4294901760
    %1530 = vmatmul.mubr.f32.gmra.mxu0 %v1529
    %v1531 = vpop.f32.mrf.mxu0
    %v1532 = vadd.f32 %v1457, %v1531
    %v1533 = vpop.f32.mrf.mxu0
    %1534 = vdwg.mxu0
    %v1535 = vadd.f32 %v1046, %v1532
    %s1536 = scalar_lea.vmem [#allocation3], 56
    %v1537 = vld [vmem:[%s1536] sm:$0xff]
    %1538 = vmatprep.subr.mxu0 0.0
    %1539 = vmatpush1.msra.mxu0 0.0
    %1540 = vmatprep.subr.mxu0 0.0
    %1541 = vmatpush1.msra.mxu0 0.0
    %1542 = vmatprep.subr.mxu0 0.0
    %1543 = vmatpush1.msra.mxu0 0.0
    %1544 = vmatprep.subr.mxu0 0.0
    %1545 = vmatpush1.msra.mxu0 0.0
    %1546 = vmatprep.subr.mxu0 0.0
    %1547 = vmatpush1.msra.mxu0 0.0
    %1548 = vmatprep.subr.mxu0 0.0
    %1549 = vmatpush1.msra.mxu0 0.0
    %1550 = vmatprep.subr.mxu0 0.0
    %1551 = vmatpush1.msra.mxu0 0.0
    %1552 = vmatprep.subr.mxu0 0.0
    %1553 = vmatpush1.msra.mxu0 0.0
    %1554 = vmatprep.subr.mxu0 0.0
    %1555 = vmatpush1.msra.mxu0 0.0
    %1556 = vmatprep.subr.mxu0 0.0
    %1557 = vmatpush1.msra.mxu0 0.0
    %1558 = vmatprep.subr.mxu0 0.0
    %1559 = vmatpush1.msra.mxu0 0.0
    %1560 = vmatprep.subr.mxu0 0.0
    %1561 = vmatpush1.msra.mxu0 0.0
    %1562 = vmatprep.subr.mxu0 0.0
    %v1563 = vand.u32 %v1038, 4294901760
    %1564 = vmatpush1.msra.mxu0 %v1563
    %1565 = vmatprep.subr.mxu0 0.0
    %v1566 = vand.u32 %v1037, 4294901760
    %1567 = vmatpush1.msra.mxu0 %v1566
    %1568 = vmatprep.subr.mxu0 0.0
    %v1569 = vand.u32 %v1036, 4294901760
    %1570 = vmatpush1.msra.mxu0 %v1569
    %1571 = vmatprep.subr.mxu0 0.0
    %v1572 = vand.u32 %v1035, 4294901760
    %1573 = vmatpush1.msra.mxu0 %v1572
    %1574 = vmatprep.subr.mxu0 0.0
    %1575 = vmatpush2.msra.mxu0 0.0
    %1576 = vmatprep.subr.mxu0 0.0
    %1577 = vmatpush2.msra.mxu0 0.0
    %1578 = vmatprep.subr.mxu0 0.0
    %1579 = vmatpush2.msra.mxu0 0.0
    %1580 = vmatprep.subr.mxu0 0.0
    %1581 = vmatpush2.msra.mxu0 0.0
    %1582 = vmatprep.subr.mxu0 0.0
    %1583 = vmatpush2.msra.mxu0 0.0
    %1584 = vmatprep.subr.mxu0 0.0
    %1585 = vmatpush2.msra.mxu0 0.0
    %1586 = vmatprep.subr.mxu0 0.0
    %1587 = vmatpush2.msra.mxu0 0.0
    %1588 = vmatprep.subr.mxu0 0.0
    %1589 = vmatpush2.msra.mxu0 0.0
    %1590 = vmatprep.subr.mxu0 0.0
    %1591 = vmatpush2.msra.mxu0 0.0
    %1592 = vmatprep.subr.mxu0 0.0
    %1593 = vmatpush2.msra.mxu0 0.0
    %1594 = vmatprep.subr.mxu0 0.0
    %1595 = vmatpush2.msra.mxu0 0.0
    %1596 = vmatprep.subr.mxu0 0.0
    %1597 = vmatpush2.msra.mxu0 0.0
    %1598 = vmatprep.subr.mxu0 0.0
    %1599 = vmatpush2.msra.mxu0 0.0
    %1600 = vmatprep.subr.mxu0 0.0
    %1601 = vmatpush2.msra.mxu0 0.0
    %1602 = vmatprep.subr.mxu0 0.0
    %1603 = vmatpush2.msra.mxu0 0.0
    %1604 = vmatprep.subr.mxu0 0.0
    %1605 = vmatpush2.msra.mxu0 0.0
    %1606 = vmatprep.mubr.f32.mxu0 0.0
    %v1607 = vand.u32 %v1048, 4294901760
    %v1608 = vsub.f32 %v1048, %v1607
    %v1609 = vand.u32 %v1608, 4294901760
    %v1610 = vsub.f32 %v1608, %v1609
    %v1611 = vand.u32 %v1610, 4294901760
    %1612 = vmatmul.mubr.f32.gmra.mxu0 %v1611
    %v1613 = vpop.f32.mrf.mxu0
    %v1614 = vadd.f32 0.0, %v1613
    %v1615 = vpop.f32.mrf.mxu0
    %1616 = vdwg.mxu0
    %1617 = vmatprep.subr.mxu0 0.0
    %1618 = vmatpush1.msra.mxu0 0.0
    %1619 = vmatprep.subr.mxu0 0.0
    %1620 = vmatpush1.msra.mxu0 0.0
    %1621 = vmatprep.subr.mxu0 0.0
    %1622 = vmatpush1.msra.mxu0 0.0
    %1623 = vmatprep.subr.mxu0 0.0
    %1624 = vmatpush1.msra.mxu0 0.0
    %1625 = vmatprep.subr.mxu0 0.0
    %1626 = vmatpush1.msra.mxu0 0.0
    %1627 = vmatprep.subr.mxu0 0.0
    %1628 = vmatpush1.msra.mxu0 0.0
    %1629 = vmatprep.subr.mxu0 0.0
    %1630 = vmatpush1.msra.mxu0 0.0
    %1631 = vmatprep.subr.mxu0 0.0
    %1632 = vmatpush1.msra.mxu0 0.0
    %1633 = vmatprep.subr.mxu0 0.0
    %1634 = vmatpush1.msra.mxu0 0.0
    %1635 = vmatprep.subr.mxu0 0.0
    %1636 = vmatpush1.msra.mxu0 0.0
    %1637 = vmatprep.subr.mxu0 0.0
    %1638 = vmatpush1.msra.mxu0 0.0
    %1639 = vmatprep.subr.mxu0 0.0
    %1640 = vmatpush1.msra.mxu0 0.0
    %1641 = vmatprep.subr.mxu0 0.0
    %v1642 = vand.u32 %v1038, 4294901760
    %v1643 = vsub.f32 %v1038, %v1642
    %v1644 = vand.u32 %v1643, 4294901760
    %v1645 = vsub.f32 %v1643, %v1644
    %v1646 = vand.u32 %v1645, 4294901760
    %1647 = vmatpush1.msra.mxu0 %v1646
    %1648 = vmatprep.subr.mxu0 0.0
    %v1649 = vand.u32 %v1037, 4294901760
    %v1650 = vsub.f32 %v1037, %v1649
    %v1651 = vand.u32 %v1650, 4294901760
    %v1652 = vsub.f32 %v1650, %v1651
    %v1653 = vand.u32 %v1652, 4294901760
    %1654 = vmatpush1.msra.mxu0 %v1653
    %1655 = vmatprep.subr.mxu0 0.0
    %v1656 = vand.u32 %v1036, 4294901760
    %v1657 = vsub.f32 %v1036, %v1656
    %v1658 = vand.u32 %v1657, 4294901760
    %v1659 = vsub.f32 %v1657, %v1658
    %v1660 = vand.u32 %v1659, 4294901760
    %1661 = vmatpush1.msra.mxu0 %v1660
    %1662 = vmatprep.subr.mxu0 0.0
    %v1663 = vand.u32 %v1035, 4294901760
    %v1664 = vsub.f32 %v1035, %v1663
    %v1665 = vand.u32 %v1664, 4294901760
    %v1666 = vsub.f32 %v1664, %v1665
    %v1667 = vand.u32 %v1666, 4294901760
    %1668 = vmatpush1.msra.mxu0 %v1667
    %1669 = vmatprep.subr.mxu0 0.0
    %1670 = vmatpush2.msra.mxu0 0.0
    %1671 = vmatprep.subr.mxu0 0.0
    %1672 = vmatpush2.msra.mxu0 0.0
    %1673 = vmatprep.subr.mxu0 0.0
    %1674 = vmatpush2.msra.mxu0 0.0
    %1675 = vmatprep.subr.mxu0 0.0
    %1676 = vmatpush2.msra.mxu0 0.0
    %1677 = vmatprep.subr.mxu0 0.0
    %1678 = vmatpush2.msra.mxu0 0.0
    %1679 = vmatprep.subr.mxu0 0.0
    %1680 = vmatpush2.msra.mxu0 0.0
    %1681 = vmatprep.subr.mxu0 0.0
    %1682 = vmatpush2.msra.mxu0 0.0
    %1683 = vmatprep.subr.mxu0 0.0
    %1684 = vmatpush2.msra.mxu0 0.0
    %1685 = vmatprep.subr.mxu0 0.0
    %1686 = vmatpush2.msra.mxu0 0.0
    %1687 = vmatprep.subr.mxu0 0.0
    %1688 = vmatpush2.msra.mxu0 0.0
    %1689 = vmatprep.subr.mxu0 0.0
    %1690 = vmatpush2.msra.mxu0 0.0
    %1691 = vmatprep.subr.mxu0 0.0
    %1692 = vmatpush2.msra.mxu0 0.0
    %1693 = vmatprep.subr.mxu0 0.0
    %1694 = vmatpush2.msra.mxu0 0.0
    %1695 = vmatprep.subr.mxu0 0.0
    %1696 = vmatpush2.msra.mxu0 0.0
    %1697 = vmatprep.subr.mxu0 0.0
    %1698 = vmatpush2.msra.mxu0 0.0
    %1699 = vmatprep.subr.mxu0 0.0
    %1700 = vmatpush2.msra.mxu0 0.0
    %1701 = vmatprep.mubr.f32.mxu0 0.0
    %v1702 = vand.u32 %v1048, 4294901760
    %1703 = vmatmul.mubr.f32.gmra.mxu0 %v1702
    %v1704 = vpop.f32.mrf.mxu0
    %v1705 = vadd.f32 %v1614, %v1704
    %v1706 = vpop.f32.mrf.mxu0
    %1707 = vdwg.mxu0
    %1708 = vmatprep.subr.mxu0 0.0
    %1709 = vmatpush1.msra.mxu0 0.0
    %1710 = vmatprep.subr.mxu0 0.0
    %1711 = vmatpush1.msra.mxu0 0.0
    %1712 = vmatprep.subr.mxu0 0.0
    %1713 = vmatpush1.msra.mxu0 0.0
    %1714 = vmatprep.subr.mxu0 0.0
    %1715 = vmatpush1.msra.mxu0 0.0
    %1716 = vmatprep.subr.mxu0 0.0
    %1717 = vmatpush1.msra.mxu0 0.0
    %1718 = vmatprep.subr.mxu0 0.0
    %1719 = vmatpush1.msra.mxu0 0.0
    %1720 = vmatprep.subr.mxu0 0.0
    %1721 = vmatpush1.msra.mxu0 0.0
    %1722 = vmatprep.subr.mxu0 0.0
    %1723 = vmatpush1.msra.mxu0 0.0
    %1724 = vmatprep.subr.mxu0 0.0
    %1725 = vmatpush1.msra.mxu0 0.0
    %1726 = vmatprep.subr.mxu0 0.0
    %1727 = vmatpush1.msra.mxu0 0.0
    %1728 = vmatprep.subr.mxu0 0.0
    %1729 = vmatpush1.msra.mxu0 0.0
    %1730 = vmatprep.subr.mxu0 0.0
    %1731 = vmatpush1.msra.mxu0 0.0
    %1732 = vmatprep.subr.mxu0 0.0
    %v1733 = vand.u32 %v1038, 4294901760
    %v1734 = vsub.f32 %v1038, %v1733
    %1735 = vmatpush1.msra.mxu0 %v1734
    %1736 = vmatprep.subr.mxu0 0.0
    %v1737 = vand.u32 %v1037, 4294901760
    %v1738 = vsub.f32 %v1037, %v1737
    %1739 = vmatpush1.msra.mxu0 %v1738
    %1740 = vmatprep.subr.mxu0 0.0
    %v1741 = vand.u32 %v1036, 4294901760
    %v1742 = vsub.f32 %v1036, %v1741
    %1743 = vmatpush1.msra.mxu0 %v1742
    %1744 = vmatprep.subr.mxu0 0.0
    %v1745 = vand.u32 %v1035, 4294901760
    %v1746 = vsub.f32 %v1035, %v1745
    %1747 = vmatpush1.msra.mxu0 %v1746
    %1748 = vmatprep.subr.mxu0 0.0
    %1749 = vmatpush2.msra.mxu0 0.0
    %1750 = vmatprep.subr.mxu0 0.0
    %1751 = vmatpush2.msra.mxu0 0.0
    %1752 = vmatprep.subr.mxu0 0.0
    %1753 = vmatpush2.msra.mxu0 0.0
    %1754 = vmatprep.subr.mxu0 0.0
    %1755 = vmatpush2.msra.mxu0 0.0
    %1756 = vmatprep.subr.mxu0 0.0
    %1757 = vmatpush2.msra.mxu0 0.0
    %1758 = vmatprep.subr.mxu0 0.0
    %1759 = vmatpush2.msra.mxu0 0.0
    %1760 = vmatprep.subr.mxu0 0.0
    %1761 = vmatpush2.msra.mxu0 0.0
    %1762 = vmatprep.subr.mxu0 0.0
    %1763 = vmatpush2.msra.mxu0 0.0
    %1764 = vmatprep.subr.mxu0 0.0
    %1765 = vmatpush2.msra.mxu0 0.0
    %1766 = vmatprep.subr.mxu0 0.0
    %1767 = vmatpush2.msra.mxu0 0.0
    %1768 = vmatprep.subr.mxu0 0.0
    %1769 = vmatpush2.msra.mxu0 0.0
    %1770 = vmatprep.subr.mxu0 0.0
    %1771 = vmatpush2.msra.mxu0 0.0
    %1772 = vmatprep.subr.mxu0 0.0
    %1773 = vmatpush2.msra.mxu0 0.0
    %1774 = vmatprep.subr.mxu0 0.0
    %1775 = vmatpush2.msra.mxu0 0.0
    %1776 = vmatprep.subr.mxu0 0.0
    %1777 = vmatpush2.msra.mxu0 0.0
    %1778 = vmatprep.subr.mxu0 0.0
    %1779 = vmatpush2.msra.mxu0 0.0
    %1780 = vmatprep.mubr.f32.mxu0 0.0
    %v1781 = vand.u32 %v1048, 4294901760
    %v1782 = vsub.f32 %v1048, %v1781
    %1783 = vmatmul.mubr.f32.gmra.mxu0 %v1782
    %v1784 = vpop.f32.mrf.mxu0
    %v1785 = vadd.f32 %v1705, %v1784
    %v1786 = vpop.f32.mrf.mxu0
    %1787 = vdwg.mxu0
    %1788 = vmatprep.subr.mxu0 0.0
    %1789 = vmatpush1.msra.mxu0 0.0
    %1790 = vmatprep.subr.mxu0 0.0
    %1791 = vmatpush1.msra.mxu0 0.0
    %1792 = vmatprep.subr.mxu0 0.0
    %1793 = vmatpush1.msra.mxu0 0.0
    %1794 = vmatprep.subr.mxu0 0.0
    %1795 = vmatpush1.msra.mxu0 0.0
    %1796 = vmatprep.subr.mxu0 0.0
    %1797 = vmatpush1.msra.mxu0 0.0
    %1798 = vmatprep.subr.mxu0 0.0
    %1799 = vmatpush1.msra.mxu0 0.0
    %1800 = vmatprep.subr.mxu0 0.0
    %1801 = vmatpush1.msra.mxu0 0.0
    %1802 = vmatprep.subr.mxu0 0.0
    %1803 = vmatpush1.msra.mxu0 0.0
    %1804 = vmatprep.subr.mxu0 0.0
    %1805 = vmatpush1.msra.mxu0 0.0
    %1806 = vmatprep.subr.mxu0 0.0
    %1807 = vmatpush1.msra.mxu0 0.0
    %1808 = vmatprep.subr.mxu0 0.0
    %1809 = vmatpush1.msra.mxu0 0.0
    %1810 = vmatprep.subr.mxu0 0.0
    %1811 = vmatpush1.msra.mxu0 0.0
    %1812 = vmatprep.subr.mxu0 0.0
    %v1813 = vand.u32 %v1038, 4294901760
    %1814 = vmatpush1.msra.mxu0 %v1813
    %1815 = vmatprep.subr.mxu0 0.0
    %v1816 = vand.u32 %v1037, 4294901760
    %1817 = vmatpush1.msra.mxu0 %v1816
    %1818 = vmatprep.subr.mxu0 0.0
    %v1819 = vand.u32 %v1036, 4294901760
    %1820 = vmatpush1.msra.mxu0 %v1819
    %1821 = vmatprep.subr.mxu0 0.0
    %v1822 = vand.u32 %v1035, 4294901760
    %1823 = vmatpush1.msra.mxu0 %v1822
    %1824 = vmatprep.subr.mxu0 0.0
    %1825 = vmatpush2.msra.mxu0 0.0
    %1826 = vmatprep.subr.mxu0 0.0
    %1827 = vmatpush2.msra.mxu0 0.0
    %1828 = vmatprep.subr.mxu0 0.0
    %1829 = vmatpush2.msra.mxu0 0.0
    %1830 = vmatprep.subr.mxu0 0.0
    %1831 = vmatpush2.msra.mxu0 0.0
    %1832 = vmatprep.subr.mxu0 0.0
    %1833 = vmatpush2.msra.mxu0 0.0
    %1834 = vmatprep.subr.mxu0 0.0
    %1835 = vmatpush2.msra.mxu0 0.0
    %1836 = vmatprep.subr.mxu0 0.0
    %1837 = vmatpush2.msra.mxu0 0.0
    %1838 = vmatprep.subr.mxu0 0.0
    %1839 = vmatpush2.msra.mxu0 0.0
    %1840 = vmatprep.subr.mxu0 0.0
    %1841 = vmatpush2.msra.mxu0 0.0
    %1842 = vmatprep.subr.mxu0 0.0
    %1843 = vmatpush2.msra.mxu0 0.0
    %1844 = vmatprep.subr.mxu0 0.0
    %1845 = vmatpush2.msra.mxu0 0.0
    %1846 = vmatprep.subr.mxu0 0.0
    %1847 = vmatpush2.msra.mxu0 0.0
    %1848 = vmatprep.subr.mxu0 0.0
    %1849 = vmatpush2.msra.mxu0 0.0
    %1850 = vmatprep.subr.mxu0 0.0
    %1851 = vmatpush2.msra.mxu0 0.0
    %1852 = vmatprep.subr.mxu0 0.0
    %1853 = vmatpush2.msra.mxu0 0.0
    %1854 = vmatprep.subr.mxu0 0.0
    %1855 = vmatpush2.msra.mxu0 0.0
    %1856 = vmatprep.mubr.f32.mxu0 0.0
    %v1857 = vand.u32 %v1048, 4294901760
    %v1858 = vsub.f32 %v1048, %v1857
    %v1859 = vand.u32 %v1858, 4294901760
    %1860 = vmatmul.mubr.f32.gmra.mxu0 %v1859
    %v1861 = vpop.f32.mrf.mxu0
    %v1862 = vadd.f32 %v1785, %v1861
    %v1863 = vpop.f32.mrf.mxu0
    %1864 = vdwg.mxu0
    %1865 = vmatprep.subr.mxu0 0.0
    %1866 = vmatpush1.msra.mxu0 0.0
    %1867 = vmatprep.subr.mxu0 0.0
    %1868 = vmatpush1.msra.mxu0 0.0
    %1869 = vmatprep.subr.mxu0 0.0
    %1870 = vmatpush1.msra.mxu0 0.0
    %1871 = vmatprep.subr.mxu0 0.0
    %1872 = vmatpush1.msra.mxu0 0.0
    %1873 = vmatprep.subr.mxu0 0.0
    %1874 = vmatpush1.msra.mxu0 0.0
    %1875 = vmatprep.subr.mxu0 0.0
    %1876 = vmatpush1.msra.mxu0 0.0
    %1877 = vmatprep.subr.mxu0 0.0
    %1878 = vmatpush1.msra.mxu0 0.0
    %1879 = vmatprep.subr.mxu0 0.0
    %1880 = vmatpush1.msra.mxu0 0.0
    %1881 = vmatprep.subr.mxu0 0.0
    %1882 = vmatpush1.msra.mxu0 0.0
    %1883 = vmatprep.subr.mxu0 0.0
    %1884 = vmatpush1.msra.mxu0 0.0
    %1885 = vmatprep.subr.mxu0 0.0
    %1886 = vmatpush1.msra.mxu0 0.0
    %1887 = vmatprep.subr.mxu0 0.0
    %1888 = vmatpush1.msra.mxu0 0.0
    %1889 = vmatprep.subr.mxu0 0.0
    %v1890 = vand.u32 %v1038, 4294901760
    %v1891 = vsub.f32 %v1038, %v1890
    %v1892 = vand.u32 %v1891, 4294901760
    %1893 = vmatpush1.msra.mxu0 %v1892
    %1894 = vmatprep.subr.mxu0 0.0
    %v1895 = vand.u32 %v1037, 4294901760
    %v1896 = vsub.f32 %v1037, %v1895
    %v1897 = vand.u32 %v1896, 4294901760
    %1898 = vmatpush1.msra.mxu0 %v1897
    %1899 = vmatprep.subr.mxu0 0.0
    %v1900 = vand.u32 %v1036, 4294901760
    %v1901 = vsub.f32 %v1036, %v1900
    %v1902 = vand.u32 %v1901, 4294901760
    %1903 = vmatpush1.msra.mxu0 %v1902
    %1904 = vmatprep.subr.mxu0 0.0
    %v1905 = vand.u32 %v1035, 4294901760
    %v1906 = vsub.f32 %v1035, %v1905
    %v1907 = vand.u32 %v1906, 4294901760
    %1908 = vmatpush1.msra.mxu0 %v1907
    %1909 = vmatprep.subr.mxu0 0.0
    %1910 = vmatpush2.msra.mxu0 0.0
    %1911 = vmatprep.subr.mxu0 0.0
    %1912 = vmatpush2.msra.mxu0 0.0
    %1913 = vmatprep.subr.mxu0 0.0
    %1914 = vmatpush2.msra.mxu0 0.0
    %1915 = vmatprep.subr.mxu0 0.0
    %1916 = vmatpush2.msra.mxu0 0.0
    %1917 = vmatprep.subr.mxu0 0.0
    %1918 = vmatpush2.msra.mxu0 0.0
    %1919 = vmatprep.subr.mxu0 0.0
    %1920 = vmatpush2.msra.mxu0 0.0
    %1921 = vmatprep.subr.mxu0 0.0
    %1922 = vmatpush2.msra.mxu0 0.0
    %1923 = vmatprep.subr.mxu0 0.0
    %1924 = vmatpush2.msra.mxu0 0.0
    %1925 = vmatprep.subr.mxu0 0.0
    %1926 = vmatpush2.msra.mxu0 0.0
    %1927 = vmatprep.subr.mxu0 0.0
    %1928 = vmatpush2.msra.mxu0 0.0
    %1929 = vmatprep.subr.mxu0 0.0
    %1930 = vmatpush2.msra.mxu0 0.0
    %1931 = vmatprep.subr.mxu0 0.0
    %1932 = vmatpush2.msra.mxu0 0.0
    %1933 = vmatprep.subr.mxu0 0.0
    %1934 = vmatpush2.msra.mxu0 0.0
    %1935 = vmatprep.subr.mxu0 0.0
    %1936 = vmatpush2.msra.mxu0 0.0
    %1937 = vmatprep.subr.mxu0 0.0
    %1938 = vmatpush2.msra.mxu0 0.0
    %1939 = vmatprep.subr.mxu0 0.0
    %1940 = vmatpush2.msra.mxu0 0.0
    %1941 = vmatprep.mubr.f32.mxu0 0.0
    %v1942 = vand.u32 %v1048, 4294901760
    %1943 = vmatmul.mubr.f32.gmra.mxu0 %v1942
    %v1944 = vpop.f32.mrf.mxu0
    %v1945 = vadd.f32 %v1862, %v1944
    %v1946 = vpop.f32.mrf.mxu0
    %1947 = vdwg.mxu0
    %1948 = vmatprep.subr.mxu0 0.0
    %1949 = vmatpush1.msra.mxu0 0.0
    %1950 = vmatprep.subr.mxu0 0.0
    %1951 = vmatpush1.msra.mxu0 0.0
    %1952 = vmatprep.subr.mxu0 0.0
    %1953 = vmatpush1.msra.mxu0 0.0
    %1954 = vmatprep.subr.mxu0 0.0
    %1955 = vmatpush1.msra.mxu0 0.0
    %1956 = vmatprep.subr.mxu0 0.0
    %1957 = vmatpush1.msra.mxu0 0.0
    %1958 = vmatprep.subr.mxu0 0.0
    %1959 = vmatpush1.msra.mxu0 0.0
    %1960 = vmatprep.subr.mxu0 0.0
    %1961 = vmatpush1.msra.mxu0 0.0
    %1962 = vmatprep.subr.mxu0 0.0
    %1963 = vmatpush1.msra.mxu0 0.0
    %1964 = vmatprep.subr.mxu0 0.0
    %1965 = vmatpush1.msra.mxu0 0.0
    %1966 = vmatprep.subr.mxu0 0.0
    %1967 = vmatpush1.msra.mxu0 0.0
    %1968 = vmatprep.subr.mxu0 0.0
    %1969 = vmatpush1.msra.mxu0 0.0
    %1970 = vmatprep.subr.mxu0 0.0
    %1971 = vmatpush1.msra.mxu0 0.0
    %1972 = vmatprep.subr.mxu0 0.0
    %v1973 = vand.u32 %v1038, 4294901760
    %1974 = vmatpush1.msra.mxu0 %v1973
    %1975 = vmatprep.subr.mxu0 0.0
    %v1976 = vand.u32 %v1037, 4294901760
    %1977 = vmatpush1.msra.mxu0 %v1976
    %1978 = vmatprep.subr.mxu0 0.0
    %v1979 = vand.u32 %v1036, 4294901760
    %1980 = vmatpush1.msra.mxu0 %v1979
    %1981 = vmatprep.subr.mxu0 0.0
    %v1982 = vand.u32 %v1035, 4294901760
    %1983 = vmatpush1.msra.mxu0 %v1982
    %1984 = vmatprep.subr.mxu0 0.0
    %1985 = vmatpush2.msra.mxu0 0.0
    %1986 = vmatprep.subr.mxu0 0.0
    %1987 = vmatpush2.msra.mxu0 0.0
    %1988 = vmatprep.subr.mxu0 0.0
    %1989 = vmatpush2.msra.mxu0 0.0
    %1990 = vmatprep.subr.mxu0 0.0
    %1991 = vmatpush2.msra.mxu0 0.0
    %1992 = vmatprep.subr.mxu0 0.0
    %1993 = vmatpush2.msra.mxu0 0.0
    %1994 = vmatprep.subr.mxu0 0.0
    %1995 = vmatpush2.msra.mxu0 0.0
    %1996 = vmatprep.subr.mxu0 0.0
    %1997 = vmatpush2.msra.mxu0 0.0
    %1998 = vmatprep.subr.mxu0 0.0
    %1999 = vmatpush2.msra.mxu0 0.0
    %2000 = vmatprep.subr.mxu0 0.0
    %2001 = vmatpush2.msra.mxu0 0.0
    %2002 = vmatprep.subr.mxu0 0.0
    %2003 = vmatpush2.msra.mxu0 0.0
    %2004 = vmatprep.subr.mxu0 0.0
    %2005 = vmatpush2.msra.mxu0 0.0
    %2006 = vmatprep.subr.mxu0 0.0
    %2007 = vmatpush2.msra.mxu0 0.0
    %2008 = vmatprep.subr.mxu0 0.0
    %2009 = vmatpush2.msra.mxu0 0.0
    %2010 = vmatprep.subr.mxu0 0.0
    %2011 = vmatpush2.msra.mxu0 0.0
    %2012 = vmatprep.subr.mxu0 0.0
    %2013 = vmatpush2.msra.mxu0 0.0
    %2014 = vmatprep.subr.mxu0 0.0
    %2015 = vmatpush2.msra.mxu0 0.0
    %2016 = vmatprep.mubr.f32.mxu0 0.0
    %v2017 = vand.u32 %v1048, 4294901760
    %2018 = vmatmul.mubr.f32.gmra.mxu0 %v2017
    %v2019 = vpop.f32.mrf.mxu0
    %v2020 = vadd.f32 %v1945, %v2019
    %v2021 = vpop.f32.mrf.mxu0
    %2022 = vdwg.mxu0
    %v2023 = vadd.f32 %v1537, %v2020
    %v2024 = vmul.f32 %v1535, %v1044
    %v2025 = vtanh.pop %v2024
    %v2026 = vmul.f32 %v2025, %v1044
    %v2027 = vadd.f32 %v2026, %v1045
    %v2028 = vmul.f32 %v2027, 0.0
    %2030 = vrot.lane.b32.xlu0 %v2027, 64
    %v2031 = vpop.permute.xlu0 %2030
    %v2033 = vmul.f32 %v2027, %v2031
    %2035 = vrot.lane.b32.xlu0 %v2033, 32
    %v2036 = vpop.permute.xlu0 %2035
    %v2038 = vadd.f32 %v2028, %v2036
    %v2039 = vtanh.pop %v2038
    %2041 = vrot.lane.b32.xlu0 %v2039, 64
    %v2042 = vpop.permute.xlu0 %2041
    %v2044 = vmul.f32 %v2027, %v2042
    %v2045 = vmul.f32 %v2023, %v1044
    %v2046 = vtanh.pop %v2045
    %v2047 = vmul.f32 %v2046, %v1044
    %v2048 = vadd.f32 %v2047, %v1045
    %v2049 = vmul.f32 %v2048, 0.0
    %2051 = vrot.lane.b32.xlu0 %v2048, 64
    %v2052 = vpop.permute.xlu0 %2051
    %v2054 = vmul.f32 %v2048, %v2052
    %2056 = vrot.lane.b32.xlu0 %v2054, 32
    %v2057 = vpop.permute.xlu0 %2056
    %v2059 = vadd.f32 %v2049, %v2057
    %v2060 = vtanh.pop %v2059
    %2062 = vrot.lane.b32.xlu0 %v2060, 64
    %v2063 = vpop.permute.xlu0 %2062
    %v2065 = vmul.f32 %v2048, %v2063
    %2067 = vrot.lane.b32.xlu0 %v2044, 32
    %v2068 = vpop.permute.xlu0 %2067
    %2070 = vst.msk [vmem:[#allocation12] sm:$0xff] %vm104, %v2068
    %2072 = vrot.lane.b32.xlu0 %v2065, 64
    %v2073 = vpop.permute.xlu0 %2072
    %s2075 = scalar_lea.vmem [#allocation12], 56
    %vm2076 = vcmask 523520
    %2077 = vst.msk [vmem:[%s2075] sm:$0xff] %vm2076, %v2073
    %s2078 = scalar_lea.vmem [#allocation2], 8
    %v2079 = vld [vmem:[%s2078] sm:$0xff]
    %v2080 = vsel %vm104, %v2068, 0
    %2082 = vmatprep.subr.mxu0 0.0
    %2083 = vmatpush1.msra.mxu0 0.0
    %2084 = vmatprep.subr.mxu0 0.0
    %2085 = vmatpush1.msra.mxu0 0.0
    %2086 = vmatprep.subr.mxu0 0.0
    %2087 = vmatpush1.msra.mxu0 0.0
    %2088 = vmatprep.subr.mxu0 0.0
    %2089 = vmatpush1.msra.mxu0 0.0
    %2090 = vmatprep.subr.mxu0 0.0
    %2091 = vmatpush1.msra.mxu0 0.0
    %2092 = vmatprep.subr.mxu0 0.0
    %2093 = vmatpush1.msra.mxu0 0.0
    %2094 = vmatprep.subr.mxu0 0.0
    %2095 = vmatpush1.msra.mxu0 0.0
    %2096 = vmatprep.subr.mxu0 0.0
    %2097 = vmatpush1.msra.mxu0 0.0
    %2098 = vmatprep.subr.mxu0 0.0
    %2099 = vmatpush1.msra.mxu0 0.0
    %2100 = vmatprep.subr.mxu0 0.0
    %2101 = vmatpush1.msra.mxu0 0.0
    %2102 = vmatprep.subr.mxu0 0.0
    %2103 = vmatpush1.msra.mxu0 0.0
    %2104 = vmatprep.subr.mxu0 0.0
    %2105 = vmatpush1.msra.mxu0 0.0
    %2106 = vmatprep.subr.mxu0 0.0
    %v2107 = vand.u32 %v1034, 4294901760
    %2108 = vmatpush1.msra.mxu0 %v2107
    %2109 = vmatprep.subr.mxu0 0.0
    %v2110 = vand.u32 %v1033, 4294901760
    %2111 = vmatpush1.msra.mxu0 %v2110
    %2112 = vmatprep.subr.mxu0 0.0
    %v2113 = vand.u32 %v1032, 4294901760
    %2114 = vmatpush1.msra.mxu0 %v2113
    %2115 = vmatprep.subr.mxu0 0.0
    %v2116 = vand.u32 %v1031, 4294901760
    %2117 = vmatpush1.msra.mxu0 %v2116
    %2118 = vmatprep.subr.mxu0 0.0
    %2119 = vmatpush2.msra.mxu0 0.0
    %2120 = vmatprep.subr.mxu0 0.0
    %2121 = vmatpush2.msra.mxu0 0.0
    %2122 = vmatprep.subr.mxu0 0.0
    %2123 = vmatpush2.msra.mxu0 0.0
    %2124 = vmatprep.subr.mxu0 0.0
    %2125 = vmatpush2.msra.mxu0 0.0
    %2126 = vmatprep.subr.mxu0 0.0
    %2127 = vmatpush2.msra.mxu0 0.0
    %2128 = vmatprep.subr.mxu0 0.0
    %2129 = vmatpush2.msra.mxu0 0.0
    %2130 = vmatprep.subr.mxu0 0.0
    %2131 = vmatpush2.msra.mxu0 0.0
    %2132 = vmatprep.subr.mxu0 0.0
    %2133 = vmatpush2.msra.mxu0 0.0
    %2134 = vmatprep.subr.mxu0 0.0
    %2135 = vmatpush2.msra.mxu0 0.0
    %2136 = vmatprep.subr.mxu0 0.0
    %2137 = vmatpush2.msra.mxu0 0.0
    %2138 = vmatprep.subr.mxu0 0.0
    %2139 = vmatpush2.msra.mxu0 0.0
    %2140 = vmatprep.subr.mxu0 0.0
    %2141 = vmatpush2.msra.mxu0 0.0
    %2142 = vmatprep.subr.mxu0 0.0
    %2143 = vmatpush2.msra.mxu0 0.0
    %2144 = vmatprep.subr.mxu0 0.0
    %2145 = vmatpush2.msra.mxu0 0.0
    %2146 = vmatprep.subr.mxu0 0.0
    %2147 = vmatpush2.msra.mxu0 0.0
    %2148 = vmatprep.subr.mxu0 0.0
    %2149 = vmatpush2.msra.mxu0 0.0
    %2150 = vmatprep.mubr.f32.mxu0 0.0
    %v2151 = vand.u32 %v2080, 4294901760
    %v2152 = vsub.f32 %v2080, %v2151
    %v2153 = vand.u32 %v2152, 4294901760
    %v2154 = vsub.f32 %v2152, %v2153
    %v2155 = vand.u32 %v2154, 4294901760
    %2156 = vmatmul.mubr.f32.gmra.mxu0 %v2155
    %v2157 = vpop.f32.mrf.mxu0
    %v2158 = vadd.f32 0.0, %v2157
    %v2159 = vpop.f32.mrf.mxu0
    %2160 = vdwg.mxu0
    %2161 = vmatprep.subr.mxu0 0.0
    %2162 = vmatpush1.msra.mxu0 0.0
    %2163 = vmatprep.subr.mxu0 0.0
    %2164 = vmatpush1.msra.mxu0 0.0
    %2165 = vmatprep.subr.mxu0 0.0
    %2166 = vmatpush1.msra.mxu0 0.0
    %2167 = vmatprep.subr.mxu0 0.0
    %2168 = vmatpush1.msra.mxu0 0.0
    %2169 = vmatprep.subr.mxu0 0.0
    %2170 = vmatpush1.msra.mxu0 0.0
    %2171 = vmatprep.subr.mxu0 0.0
    %2172 = vmatpush1.msra.mxu0 0.0
    %2173 = vmatprep.subr.mxu0 0.0
    %2174 = vmatpush1.msra.mxu0 0.0
    %2175 = vmatprep.subr.mxu0 0.0
    %2176 = vmatpush1.msra.mxu0 0.0
    %2177 = vmatprep.subr.mxu0 0.0
    %2178 = vmatpush1.msra.mxu0 0.0
    %2179 = vmatprep.subr.mxu0 0.0
    %2180 = vmatpush1.msra.mxu0 0.0
    %2181 = vmatprep.subr.mxu0 0.0
    %2182 = vmatpush1.msra.mxu0 0.0
    %2183 = vmatprep.subr.mxu0 0.0
    %2184 = vmatpush1.msra.mxu0 0.0
    %2185 = vmatprep.subr.mxu0 0.0
    %v2186 = vand.u32 %v1034, 4294901760
    %v2187 = vsub.f32 %v1034, %v2186
    %v2188 = vand.u32 %v2187, 4294901760
    %v2189 = vsub.f32 %v2187, %v2188
    %v2190 = vand.u32 %v2189, 4294901760
    %2191 = vmatpush1.msra.mxu0 %v2190
    %2192 = vmatprep.subr.mxu0 0.0
    %v2193 = vand.u32 %v1033, 4294901760
    %v2194 = vsub.f32 %v1033, %v2193
    %v2195 = vand.u32 %v2194, 4294901760
    %v2196 = vsub.f32 %v2194, %v2195
    %v2197 = vand.u32 %v2196, 4294901760
    %2198 = vmatpush1.msra.mxu0 %v2197
    %2199 = vmatprep.subr.mxu0 0.0
    %v2200 = vand.u32 %v1032, 4294901760
    %v2201 = vsub.f32 %v1032, %v2200
    %v2202 = vand.u32 %v2201, 4294901760
    %v2203 = vsub.f32 %v2201, %v2202
    %v2204 = vand.u32 %v2203, 4294901760
    %2205 = vmatpush1.msra.mxu0 %v2204
    %2206 = vmatprep.subr.mxu0 0.0
    %v2207 = vand.u32 %v1031, 4294901760
    %v2208 = vsub.f32 %v1031, %v2207
    %v2209 = vand.u32 %v2208, 4294901760
    %v2210 = vsub.f32 %v2208, %v2209
    %v2211 = vand.u32 %v2210, 4294901760
    %2212 = vmatpush1.msra.mxu0 %v2211
    %2213 = vmatprep.subr.mxu0 0.0
    %2214 = vmatpush2.msra.mxu0 0.0
    %2215 = vmatprep.subr.mxu0 0.0
    %2216 = vmatpush2.msra.mxu0 0.0
    %2217 = vmatprep.subr.mxu0 0.0
    %2218 = vmatpush2.msra.mxu0 0.0
    %2219 = vmatprep.subr.mxu0 0.0
    %2220 = vmatpush2.msra.mxu0 0.0
    %2221 = vmatprep.subr.mxu0 0.0
    %2222 = vmatpush2.msra.mxu0 0.0
    %2223 = vmatprep.subr.mxu0 0.0
    %2224 = vmatpush2.msra.mxu0 0.0
    %2225 = vmatprep.subr.mxu0 0.0
    %2226 = vmatpush2.msra.mxu0 0.0
    %2227 = vmatprep.subr.mxu0 0.0
    %2228 = vmatpush2.msra.mxu0 0.0
    %2229 = vmatprep.subr.mxu0 0.0
    %2230 = vmatpush2.msra.mxu0 0.0
    %2231 = vmatprep.subr.mxu0 0.0
    %2232 = vmatpush2.msra.mxu0 0.0
    %2233 = vmatprep.subr.mxu0 0.0
    %2234 = vmatpush2.msra.mxu0 0.0
    %2235 = vmatprep.subr.mxu0 0.0
    %2236 = vmatpush2.msra.mxu0 0.0
    %2237 = vmatprep.subr.mxu0 0.0
    %2238 = vmatpush2.msra.mxu0 0.0
    %2239 = vmatprep.subr.mxu0 0.0
    %2240 = vmatpush2.msra.mxu0 0.0
    %2241 = vmatprep.subr.mxu0 0.0
    %2242 = vmatpush2.msra.mxu0 0.0
    %2243 = vmatprep.subr.mxu0 0.0
    %2244 = vmatpush2.msra.mxu0 0.0
    %2245 = vmatprep.mubr.f32.mxu0 0.0
    %v2246 = vand.u32 %v2080, 4294901760
    %2247 = vmatmul.mubr.f32.gmra.mxu0 %v2246
    %v2248 = vpop.f32.mrf.mxu0
    %v2249 = vadd.f32 %v2158, %v2248
    %v2250 = vpop.f32.mrf.mxu0
    %2251 = vdwg.mxu0
    %2252 = vmatprep.subr.mxu0 0.0
    %2253 = vmatpush1.msra.mxu0 0.0
    %2254 = vmatprep.subr.mxu0 0.0
    %2255 = vmatpush1.msra.mxu0 0.0
    %2256 = vmatprep.subr.mxu0 0.0
    %2257 = vmatpush1.msra.mxu0 0.0
    %2258 = vmatprep.subr.mxu0 0.0
    %2259 = vmatpush1.msra.mxu0 0.0
    %2260 = vmatprep.subr.mxu0 0.0
    %2261 = vmatpush1.msra.mxu0 0.0
    %2262 = vmatprep.subr.mxu0 0.0
    %2263 = vmatpush1.msra.mxu0 0.0
    %2264 = vmatprep.subr.mxu0 0.0
    %2265 = vmatpush1.msra.mxu0 0.0
    %2266 = vmatprep.subr.mxu0 0.0
    %2267 = vmatpush1.msra.mxu0 0.0
    %2268 = vmatprep.subr.mxu0 0.0
    %2269 = vmatpush1.msra.mxu0 0.0
    %2270 = vmatprep.subr.mxu0 0.0
    %2271 = vmatpush1.msra.mxu0 0.0
    %2272 = vmatprep.subr.mxu0 0.0
    %2273 = vmatpush1.msra.mxu0 0.0
    %2274 = vmatprep.subr.mxu0 0.0
    %2275 = vmatpush1.msra.mxu0 0.0
    %2276 = vmatprep.subr.mxu0 0.0
    %v2277 = vand.u32 %v1034, 4294901760
    %v2278 = vsub.f32 %v1034, %v2277
    %2279 = vmatpush1.msra.mxu0 %v2278
    %2280 = vmatprep.subr.mxu0 0.0
    %v2281 = vand.u32 %v1033, 4294901760
    %v2282 = vsub.f32 %v1033, %v2281
    %2283 = vmatpush1.msra.mxu0 %v2282
    %2284 = vmatprep.subr.mxu0 0.0
    %v2285 = vand.u32 %v1032, 4294901760
    %v2286 = vsub.f32 %v1032, %v2285
    %2287 = vmatpush1.msra.mxu0 %v2286
    %2288 = vmatprep.subr.mxu0 0.0
    %v2289 = vand.u32 %v1031, 4294901760
    %v2290 = vsub.f32 %v1031, %v2289
    %2291 = vmatpush1.msra.mxu0 %v2290
    %2292 = vmatprep.subr.mxu0 0.0
    %2293 = vmatpush2.msra.mxu0 0.0
    %2294 = vmatprep.subr.mxu0 0.0
    %2295 = vmatpush2.msra.mxu0 0.0
    %2296 = vmatprep.subr.mxu0 0.0
    %2297 = vmatpush2.msra.mxu0 0.0
    %2298 = vmatprep.subr.mxu0 0.0
    %2299 = vmatpush2.msra.mxu0 0.0
    %2300 = vmatprep.subr.mxu0 0.0
    %2301 = vmatpush2.msra.mxu0 0.0
    %2302 = vmatprep.subr.mxu0 0.0
    %2303 = vmatpush2.msra.mxu0 0.0
    %2304 = vmatprep.subr.mxu0 0.0
    %2305 = vmatpush2.msra.mxu0 0.0
    %2306 = vmatprep.subr.mxu0 0.0
    %2307 = vmatpush2.msra.mxu0 0.0
    %2308 = vmatprep.subr.mxu0 0.0
    %2309 = vmatpush2.msra.mxu0 0.0
    %2310 = vmatprep.subr.mxu0 0.0
    %2311 = vmatpush2.msra.mxu0 0.0
    %2312 = vmatprep.subr.mxu0 0.0
    %2313 = vmatpush2.msra.mxu0 0.0
    %2314 = vmatprep.subr.mxu0 0.0
    %2315 = vmatpush2.msra.mxu0 0.0
    %2316 = vmatprep.subr.mxu0 0.0
    %2317 = vmatpush2.msra.mxu0 0.0
    %2318 = vmatprep.subr.mxu0 0.0
    %2319 = vmatpush2.msra.mxu0 0.0
    %2320 = vmatprep.subr.mxu0 0.0
    %2321 = vmatpush2.msra.mxu0 0.0
    %2322 = vmatprep.subr.mxu0 0.0
    %2323 = vmatpush2.msra.mxu0 0.0
    %2324 = vmatprep.mubr.f32.mxu0 0.0
    %v2325 = vand.u32 %v2080, 4294901760
    %v2326 = vsub.f32 %v2080, %v2325
    %2327 = vmatmul.mubr.f32.gmra.mxu0 %v2326
    %v2328 = vpop.f32.mrf.mxu0
    %v2329 = vadd.f32 %v2249, %v2328
    %v2330 = vpop.f32.mrf.mxu0
    %2331 = vdwg.mxu0
    %2332 = vmatprep.subr.mxu0 0.0
    %2333 = vmatpush1.msra.mxu0 0.0
    %2334 = vmatprep.subr.mxu0 0.0
    %2335 = vmatpush1.msra.mxu0 0.0
    %2336 = vmatprep.subr.mxu0 0.0
    %2337 = vmatpush1.msra.mxu0 0.0
    %2338 = vmatprep.subr.mxu0 0.0
    %2339 = vmatpush1.msra.mxu0 0.0
    %2340 = vmatprep.subr.mxu0 0.0
    %2341 = vmatpush1.msra.mxu0 0.0
    %2342 = vmatprep.subr.mxu0 0.0
    %2343 = vmatpush1.msra.mxu0 0.0
    %2344 = vmatprep.subr.mxu0 0.0
    %2345 = vmatpush1.msra.mxu0 0.0
    %2346 = vmatprep.subr.mxu0 0.0
    %2347 = vmatpush1.msra.mxu0 0.0
    %2348 = vmatprep.subr.mxu0 0.0
    %2349 = vmatpush1.msra.mxu0 0.0
    %2350 = vmatprep.subr.mxu0 0.0
    %2351 = vmatpush1.msra.mxu0 0.0
    %2352 = vmatprep.subr.mxu0 0.0
    %2353 = vmatpush1.msra.mxu0 0.0
    %2354 = vmatprep.subr.mxu0 0.0
    %2355 = vmatpush1.msra.mxu0 0.0
    %2356 = vmatprep.subr.mxu0 0.0
    %v2357 = vand.u32 %v1034, 4294901760
    %2358 = vmatpush1.msra.mxu0 %v2357
    %2359 = vmatprep.subr.mxu0 0.0
    %v2360 = vand.u32 %v1033, 4294901760
    %2361 = vmatpush1.msra.mxu0 %v2360
    %2362 = vmatprep.subr.mxu0 0.0
    %v2363 = vand.u32 %v1032, 4294901760
    %2364 = vmatpush1.msra.mxu0 %v2363
    %2365 = vmatprep.subr.mxu0 0.0
    %v2366 = vand.u32 %v1031, 4294901760
    %2367 = vmatpush1.msra.mxu0 %v2366
    %2368 = vmatprep.subr.mxu0 0.0
    %2369 = vmatpush2.msra.mxu0 0.0
    %2370 = vmatprep.subr.mxu0 0.0
    %2371 = vmatpush2.msra.mxu0 0.0
    %2372 = vmatprep.subr.mxu0 0.0
    %2373 = vmatpush2.msra.mxu0 0.0
    %2374 = vmatprep.subr.mxu0 0.0
    %2375 = vmatpush2.msra.mxu0 0.0
    %2376 = vmatprep.subr.mxu0 0.0
    %2377 = vmatpush2.msra.mxu0 0.0
    %2378 = vmatprep.subr.mxu0 0.0
    %2379 = vmatpush2.msra.mxu0 0.0
    %2380 = vmatprep.subr.mxu0 0.0
    %2381 = vmatpush2.msra.mxu0 0.0
    %2382 = vmatprep.subr.mxu0 0.0
    %2383 = vmatpush2.msra.mxu0 0.0
    %2384 = vmatprep.subr.mxu0 0.0
    %2385 = vmatpush2.msra.mxu0 0.0
    %2386 = vmatprep.subr.mxu0 0.0
    %2387 = vmatpush2.msra.mxu0 0.0
    %2388 = vmatprep.subr.mxu0 0.0
    %2389 = vmatpush2.msra.mxu0 0.0
    %2390 = vmatprep.subr.mxu0 0.0
    %2391 = vmatpush2.msra.mxu0 0.0
    %2392 = vmatprep.subr.mxu0 0.0
    %2393 = vmatpush2.msra.mxu0 0.0
    %2394 = vmatprep.subr.mxu0 0.0
    %2395 = vmatpush2.msra.mxu0 0.0
    %2396 = vmatprep.subr.mxu0 0.0
    %2397 = vmatpush2.msra.mxu0 0.0
    %2398 = vmatprep.subr.mxu0 0.0
    %2399 = vmatpush2.msra.mxu0 0.0
    %2400 = vmatprep.mubr.f32.mxu0 0.0
    %v2401 = vand.u32 %v2080, 4294901760
    %v2402 = vsub.f32 %v2080, %v2401
    %v2403 = vand.u32 %v2402, 4294901760
    %2404 = vmatmul.mubr.f32.gmra.mxu0 %v2403
    %v2405 = vpop.f32.mrf.mxu0
    %v2406 = vadd.f32 %v2329, %v2405
    %v2407 = vpop.f32.mrf.mxu0
    %2408 = vdwg.mxu0
    %2409 = vmatprep.subr.mxu0 0.0
    %2410 = vmatpush1.msra.mxu0 0.0
    %2411 = vmatprep.subr.mxu0 0.0
    %2412 = vmatpush1.msra.mxu0 0.0
    %2413 = vmatprep.subr.mxu0 0.0
    %2414 = vmatpush1.msra.mxu0 0.0
    %2415 = vmatprep.subr.mxu0 0.0
    %2416 = vmatpush1.msra.mxu0 0.0
    %2417 = vmatprep.subr.mxu0 0.0
    %2418 = vmatpush1.msra.mxu0 0.0
    %2419 = vmatprep.subr.mxu0 0.0
    %2420 = vmatpush1.msra.mxu0 0.0
    %2421 = vmatprep.subr.mxu0 0.0
    %2422 = vmatpush1.msra.mxu0 0.0
    %2423 = vmatprep.subr.mxu0 0.0
    %2424 = vmatpush1.msra.mxu0 0.0
    %2425 = vmatprep.subr.mxu0 0.0
    %2426 = vmatpush1.msra.mxu0 0.0
    %2427 = vmatprep.subr.mxu0 0.0
    %2428 = vmatpush1.msra.mxu0 0.0
    %2429 = vmatprep.subr.mxu0 0.0
    %2430 = vmatpush1.msra.mxu0 0.0
    %2431 = vmatprep.subr.mxu0 0.0
    %2432 = vmatpush1.msra.mxu0 0.0
    %2433 = vmatprep.subr.mxu0 0.0
    %v2434 = vand.u32 %v1034, 4294901760
    %v2435 = vsub.f32 %v1034, %v2434
    %v2436 = vand.u32 %v2435, 4294901760
    %2437 = vmatpush1.msra.mxu0 %v2436
    %2438 = vmatprep.subr.mxu0 0.0
    %v2439 = vand.u32 %v1033, 4294901760
    %v2440 = vsub.f32 %v1033, %v2439
    %v2441 = vand.u32 %v2440, 4294901760
    %2442 = vmatpush1.msra.mxu0 %v2441
    %2443 = vmatprep.subr.mxu0 0.0
    %v2444 = vand.u32 %v1032, 4294901760
    %v2445 = vsub.f32 %v1032, %v2444
    %v2446 = vand.u32 %v2445, 4294901760
    %2447 = vmatpush1.msra.mxu0 %v2446
    %2448 = vmatprep.subr.mxu0 0.0
    %v2449 = vand.u32 %v1031, 4294901760
    %v2450 = vsub.f32 %v1031, %v2449
    %v2451 = vand.u32 %v2450, 4294901760
    %2452 = vmatpush1.msra.mxu0 %v2451
    %2453 = vmatprep.subr.mxu0 0.0
    %2454 = vmatpush2.msra.mxu0 0.0
    %2455 = vmatprep.subr.mxu0 0.0
    %2456 = vmatpush2.msra.mxu0 0.0
    %2457 = vmatprep.subr.mxu0 0.0
    %2458 = vmatpush2.msra.mxu0 0.0
    %2459 = vmatprep.subr.mxu0 0.0
    %2460 = vmatpush2.msra.mxu0 0.0
    %2461 = vmatprep.subr.mxu0 0.0
    %2462 = vmatpush2.msra.mxu0 0.0
    %2463 = vmatprep.subr.mxu0 0.0
    %2464 = vmatpush2.msra.mxu0 0.0
    %2465 = vmatprep.subr.mxu0 0.0
    %2466 = vmatpush2.msra.mxu0 0.0
    %2467 = vmatprep.subr.mxu0 0.0
    %2468 = vmatpush2.msra.mxu0 0.0
    %2469 = vmatprep.subr.mxu0 0.0
    %2470 = vmatpush2.msra.mxu0 0.0
    %2471 = vmatprep.subr.mxu0 0.0
    %2472 = vmatpush2.msra.mxu0 0.0
    %2473 = vmatprep.subr.mxu0 0.0
    %2474 = vmatpush2.msra.mxu0 0.0
    %2475 = vmatprep.subr.mxu0 0.0
    %2476 = vmatpush2.msra.mxu0 0.0
    %2477 = vmatprep.subr.mxu0 0.0
    %2478 = vmatpush2.msra.mxu0 0.0
    %2479 = vmatprep.subr.mxu0 0.0
    %2480 = vmatpush2.msra.mxu0 0.0
    %2481 = vmatprep.subr.mxu0 0.0
    %2482 = vmatpush2.msra.mxu0 0.0
    %2483 = vmatprep.subr.mxu0 0.0
    %2484 = vmatpush2.msra.mxu0 0.0
    %2485 = vmatprep.mubr.f32.mxu0 0.0
    %v2486 = vand.u32 %v2080, 4294901760
    %2487 = vmatmul.mubr.f32.gmra.mxu0 %v2486
    %v2488 = vpop.f32.mrf.mxu0
    %v2489 = vadd.f32 %v2406, %v2488
    %v2490 = vpop.f32.mrf.mxu0
    %2491 = vdwg.mxu0
    %2492 = vmatprep.subr.mxu0 0.0
    %2493 = vmatpush1.msra.mxu0 0.0
    %2494 = vmatprep.subr.mxu0 0.0
    %2495 = vmatpush1.msra.mxu0 0.0
    %2496 = vmatprep.subr.mxu0 0.0
    %2497 = vmatpush1.msra.mxu0 0.0
    %2498 = vmatprep.subr.mxu0 0.0
    %2499 = vmatpush1.msra.mxu0 0.0
    %2500 = vmatprep.subr.mxu0 0.0
    %2501 = vmatpush1.msra.mxu0 0.0
    %2502 = vmatprep.subr.mxu0 0.0
    %2503 = vmatpush1.msra.mxu0 0.0
    %2504 = vmatprep.subr.mxu0 0.0
    %2505 = vmatpush1.msra.mxu0 0.0
    %2506 = vmatprep.subr.mxu0 0.0
    %2507 = vmatpush1.msra.mxu0 0.0
    %2508 = vmatprep.subr.mxu0 0.0
    %2509 = vmatpush1.msra.mxu0 0.0
    %2510 = vmatprep.subr.mxu0 0.0
    %2511 = vmatpush1.msra.mxu0 0.0
    %2512 = vmatprep.subr.mxu0 0.0
    %2513 = vmatpush1.msra.mxu0 0.0
    %2514 = vmatprep.subr.mxu0 0.0
    %2515 = vmatpush1.msra.mxu0 0.0
    %2516 = vmatprep.subr.mxu0 0.0
    %v2517 = vand.u32 %v1034, 4294901760
    %2518 = vmatpush1.msra.mxu0 %v2517
    %2519 = vmatprep.subr.mxu0 0.0
    %v2520 = vand.u32 %v1033, 4294901760
    %2521 = vmatpush1.msra.mxu0 %v2520
    %2522 = vmatprep.subr.mxu0 0.0
    %v2523 = vand.u32 %v1032, 4294901760
    %2524 = vmatpush1.msra.mxu0 %v2523
    %2525 = vmatprep.subr.mxu0 0.0
    %v2526 = vand.u32 %v1031, 4294901760
    %2527 = vmatpush1.msra.mxu0 %v2526
    %2528 = vmatprep.subr.mxu0 0.0
    %2529 = vmatpush2.msra.mxu0 0.0
    %2530 = vmatprep.subr.mxu0 0.0
    %2531 = vmatpush2.msra.mxu0 0.0
    %2532 = vmatprep.subr.mxu0 0.0
    %2533 = vmatpush2.msra.mxu0 0.0
    %2534 = vmatprep.subr.mxu0 0.0
    %2535 = vmatpush2.msra.mxu0 0.0
    %2536 = vmatprep.subr.mxu0 0.0
    %2537 = vmatpush2.msra.mxu0 0.0
    %2538 = vmatprep.subr.mxu0 0.0
    %2539 = vmatpush2.msra.mxu0 0.0
    %2540 = vmatprep.subr.mxu0 0.0
    %2541 = vmatpush2.msra.mxu0 0.0
    %2542 = vmatprep.subr.mxu0 0.0
    %2543 = vmatpush2.msra.mxu0 0.0
    %2544 = vmatprep.subr.mxu0 0.0
    %2545 = vmatpush2.msra.mxu0 0.0
    %2546 = vmatprep.subr.mxu0 0.0
    %2547 = vmatpush2.msra.mxu0 0.0
    %2548 = vmatprep.subr.mxu0 0.0
    %2549 = vmatpush2.msra.mxu0 0.0
    %2550 = vmatprep.subr.mxu0 0.0
    %2551 = vmatpush2.msra.mxu0 0.0
    %2552 = vmatprep.subr.mxu0 0.0
    %2553 = vmatpush2.msra.mxu0 0.0
    %2554 = vmatprep.subr.mxu0 0.0
    %2555 = vmatpush2.msra.mxu0 0.0
    %2556 = vmatprep.subr.mxu0 0.0
    %2557 = vmatpush2.msra.mxu0 0.0
    %2558 = vmatprep.subr.mxu0 0.0
    %2559 = vmatpush2.msra.mxu0 0.0
    %2560 = vmatprep.mubr.f32.mxu0 0.0
    %v2561 = vand.u32 %v2080, 4294901760
    %2562 = vmatmul.mubr.f32.gmra.mxu0 %v2561
    %v2563 = vpop.f32.mrf.mxu0
    %v2564 = vadd.f32 %v2489, %v2563
    %v2565 = vpop.f32.mrf.mxu0
    %2566 = vdwg.mxu0
    %v2567 = vadd.f32 %v2079, %v2564
    %s2568 = scalar_lea.vmem [#allocation3], 48
    %v2569 = vld [vmem:[%s2568] sm:$0xff]
    %2570 = vrot.lane.b32.xlu0 %v2065, 32
    %v2571 = vpop.permute.xlu0 %2570
    %v2572 = vsel %vm104, %v2571, 0
    %2574 = vmatprep.subr.mxu0 0.0
    %2575 = vmatpush1.msra.mxu0 0.0
    %2576 = vmatprep.subr.mxu0 0.0
    %2577 = vmatpush1.msra.mxu0 0.0
    %2578 = vmatprep.subr.mxu0 0.0
    %2579 = vmatpush1.msra.mxu0 0.0
    %2580 = vmatprep.subr.mxu0 0.0
    %2581 = vmatpush1.msra.mxu0 0.0
    %2582 = vmatprep.subr.mxu0 0.0
    %2583 = vmatpush1.msra.mxu0 0.0
    %2584 = vmatprep.subr.mxu0 0.0
    %2585 = vmatpush1.msra.mxu0 0.0
    %2586 = vmatprep.subr.mxu0 0.0
    %2587 = vmatpush1.msra.mxu0 0.0
    %2588 = vmatprep.subr.mxu0 0.0
    %2589 = vmatpush1.msra.mxu0 0.0
    %2590 = vmatprep.subr.mxu0 0.0
    %2591 = vmatpush1.msra.mxu0 0.0
    %2592 = vmatprep.subr.mxu0 0.0
    %2593 = vmatpush1.msra.mxu0 0.0
    %2594 = vmatprep.subr.mxu0 0.0
    %2595 = vmatpush1.msra.mxu0 0.0
    %2596 = vmatprep.subr.mxu0 0.0
    %2597 = vmatpush1.msra.mxu0 0.0
    %2598 = vmatprep.subr.mxu0 0.0
    %v2599 = vand.u32 %v1038, 4294901760
    %2600 = vmatpush1.msra.mxu0 %v2599
    %2601 = vmatprep.subr.mxu0 0.0
    %v2602 = vand.u32 %v1037, 4294901760
    %2603 = vmatpush1.msra.mxu0 %v2602
    %2604 = vmatprep.subr.mxu0 0.0
    %v2605 = vand.u32 %v1036, 4294901760
    %2606 = vmatpush1.msra.mxu0 %v2605
    %2607 = vmatprep.subr.mxu0 0.0
    %v2608 = vand.u32 %v1035, 4294901760
    %2609 = vmatpush1.msra.mxu0 %v2608
    %2610 = vmatprep.subr.mxu0 0.0
    %2611 = vmatpush2.msra.mxu0 0.0
    %2612 = vmatprep.subr.mxu0 0.0
    %2613 = vmatpush2.msra.mxu0 0.0
    %2614 = vmatprep.subr.mxu0 0.0
    %2615 = vmatpush2.msra.mxu0 0.0
    %2616 = vmatprep.subr.mxu0 0.0
    %2617 = vmatpush2.msra.mxu0 0.0
    %2618 = vmatprep.subr.mxu0 0.0
    %2619 = vmatpush2.msra.mxu0 0.0
    %2620 = vmatprep.subr.mxu0 0.0
    %2621 = vmatpush2.msra.mxu0 0.0
    %2622 = vmatprep.subr.mxu0 0.0
    %2623 = vmatpush2.msra.mxu0 0.0
    %2624 = vmatprep.subr.mxu0 0.0
    %2625 = vmatpush2.msra.mxu0 0.0
    %2626 = vmatprep.subr.mxu0 0.0
    %2627 = vmatpush2.msra.mxu0 0.0
    %2628 = vmatprep.subr.mxu0 0.0
    %2629 = vmatpush2.msra.mxu0 0.0
    %2630 = vmatprep.subr.mxu0 0.0
    %2631 = vmatpush2.msra.mxu0 0.0
    %2632 = vmatprep.subr.mxu0 0.0
    %2633 = vmatpush2.msra.mxu0 0.0
    %2634 = vmatprep.subr.mxu0 0.0
    %2635 = vmatpush2.msra.mxu0 0.0
    %2636 = vmatprep.subr.mxu0 0.0
    %2637 = vmatpush2.msra.mxu0 0.0
    %2638 = vmatprep.subr.mxu0 0.0
    %2639 = vmatpush2.msra.mxu0 0.0
    %2640 = vmatprep.subr.mxu0 0.0
    %2641 = vmatpush2.msra.mxu0 0.0
    %2642 = vmatprep.mubr.f32.mxu0 0.0
    %v2643 = vand.u32 %v2572, 4294901760
    %v2644 = vsub.f32 %v2572, %v2643
    %v2645 = vand.u32 %v2644, 4294901760
    %v2646 = vsub.f32 %v2644, %v2645
    %v2647 = vand.u32 %v2646, 4294901760
    %2648 = vmatmul.mubr.f32.gmra.mxu0 %v2647
    %v2649 = vpop.f32.mrf.mxu0
    %v2650 = vadd.f32 0.0, %v2649
    %v2651 = vpop.f32.mrf.mxu0
    %2652 = vdwg.mxu0
    %2653 = vmatprep.subr.mxu0 0.0
    %2654 = vmatpush1.msra.mxu0 0.0
    %2655 = vmatprep.subr.mxu0 0.0
    %2656 = vmatpush1.msra.mxu0 0.0
    %2657 = vmatprep.subr.mxu0 0.0
    %2658 = vmatpush1.msra.mxu0 0.0
    %2659 = vmatprep.subr.mxu0 0.0
    %2660 = vmatpush1.msra.mxu0 0.0
    %2661 = vmatprep.subr.mxu0 0.0
    %2662 = vmatpush1.msra.mxu0 0.0
    %2663 = vmatprep.subr.mxu0 0.0
    %2664 = vmatpush1.msra.mxu0 0.0
    %2665 = vmatprep.subr.mxu0 0.0
    %2666 = vmatpush1.msra.mxu0 0.0
    %2667 = vmatprep.subr.mxu0 0.0
    %2668 = vmatpush1.msra.mxu0 0.0
    %2669 = vmatprep.subr.mxu0 0.0
    %2670 = vmatpush1.msra.mxu0 0.0
    %2671 = vmatprep.subr.mxu0 0.0
    %2672 = vmatpush1.msra.mxu0 0.0
    %2673 = vmatprep.subr.mxu0 0.0
    %2674 = vmatpush1.msra.mxu0 0.0
    %2675 = vmatprep.subr.mxu0 0.0
    %2676 = vmatpush1.msra.mxu0 0.0
    %2677 = vmatprep.subr.mxu0 0.0
    %v2678 = vand.u32 %v1038, 4294901760
    %v2679 = vsub.f32 %v1038, %v2678
    %v2680 = vand.u32 %v2679, 4294901760
    %v2681 = vsub.f32 %v2679, %v2680
    %v2682 = vand.u32 %v2681, 4294901760
    %2683 = vmatpush1.msra.mxu0 %v2682
    %2684 = vmatprep.subr.mxu0 0.0
    %v2685 = vand.u32 %v1037, 4294901760
    %v2686 = vsub.f32 %v1037, %v2685
    %v2687 = vand.u32 %v2686, 4294901760
    %v2688 = vsub.f32 %v2686, %v2687
    %v2689 = vand.u32 %v2688, 4294901760
    %2690 = vmatpush1.msra.mxu0 %v2689
    %2691 = vmatprep.subr.mxu0 0.0
    %v2692 = vand.u32 %v1036, 4294901760
    %v2693 = vsub.f32 %v1036, %v2692
    %v2694 = vand.u32 %v2693, 4294901760
    %v2695 = vsub.f32 %v2693, %v2694
    %v2696 = vand.u32 %v2695, 4294901760
    %2697 = vmatpush1.msra.mxu0 %v2696
    %2698 = vmatprep.subr.mxu0 0.0
    %v2699 = vand.u32 %v1035, 4294901760
    %v2700 = vsub.f32 %v1035, %v2699
    %v2701 = vand.u32 %v2700, 4294901760
    %v2702 = vsub.f32 %v2700, %v2701
    %v2703 = vand.u32 %v2702, 4294901760
    %2704 = vmatpush1.msra.mxu0 %v2703
    %2705 = vmatprep.subr.mxu0 0.0
    %2706 = vmatpush2.msra.mxu0 0.0
    %2707 = vmatprep.subr.mxu0 0.0
    %2708 = vmatpush2.msra.mxu0 0.0
    %2709 = vmatprep.subr.mxu0 0.0
    %2710 = vmatpush2.msra.mxu0 0.0
    %2711 = vmatprep.subr.mxu0 0.0
    %2712 = vmatpush2.msra.mxu0 0.0
    %2713 = vmatprep.subr.mxu0 0.0
    %2714 = vmatpush2.msra.mxu0 0.0
    %2715 = vmatprep.subr.mxu0 0.0
    %2716 = vmatpush2.msra.mxu0 0.0
    %2717 = vmatprep.subr.mxu0 0.0
    %2718 = vmatpush2.msra.mxu0 0.0
    %2719 = vmatprep.subr.mxu0 0.0
    %2720 = vmatpush2.msra.mxu0 0.0
    %2721 = vmatprep.subr.mxu0 0.0
    %2722 = vmatpush2.msra.mxu0 0.0
    %2723 = vmatprep.subr.mxu0 0.0
    %2724 = vmatpush2.msra.mxu0 0.0
    %2725 = vmatprep.subr.mxu0 0.0
    %2726 = vmatpush2.msra.mxu0 0.0
    %2727 = vmatprep.subr.mxu0 0.0
    %2728 = vmatpush2.msra.mxu0 0.0
    %2729 = vmatprep.subr.mxu0 0.0
    %2730 = vmatpush2.msra.mxu0 0.0
    %2731 = vmatprep.subr.mxu0 0.0
    %2732 = vmatpush2.msra.mxu0 0.0
    %2733 = vmatprep.subr.mxu0 0.0
    %2734 = vmatpush2.msra.mxu0 0.0
    %2735 = vmatprep.subr.mxu0 0.0
    %2736 = vmatpush2.msra.mxu0 0.0
    %2737 = vmatprep.mubr.f32.mxu0 0.0
    %v2738 = vand.u32 %v2572, 4294901760
    %2739 = vmatmul.mubr.f32.gmra.mxu0 %v2738
    %v2740 = vpop.f32.mrf.mxu0
    %v2741 = vadd.f32 %v2650, %v2740
    %v2742 = vpop.f32.mrf.mxu0
    %2743 = vdwg.mxu0
    %2744 = vmatprep.subr.mxu0 0.0
    %2745 = vmatpush1.msra.mxu0 0.0
    %2746 = vmatprep.subr.mxu0 0.0
    %2747 = vmatpush1.msra.mxu0 0.0
    %2748 = vmatprep.subr.mxu0 0.0
    %2749 = vmatpush1.msra.mxu0 0.0
    %2750 = vmatprep.subr.mxu0 0.0
    %2751 = vmatpush1.msra.mxu0 0.0
    %2752 = vmatprep.subr.mxu0 0.0
    %2753 = vmatpush1.msra.mxu0 0.0
    %2754 = vmatprep.subr.mxu0 0.0
    %2755 = vmatpush1.msra.mxu0 0.0
    %2756 = vmatprep.subr.mxu0 0.0
    %2757 = vmatpush1.msra.mxu0 0.0
    %2758 = vmatprep.subr.mxu0 0.0
    %2759 = vmatpush1.msra.mxu0 0.0
    %2760 = vmatprep.subr.mxu0 0.0
    %2761 = vmatpush1.msra.mxu0 0.0
    %2762 = vmatprep.subr.mxu0 0.0
    %2763 = vmatpush1.msra.mxu0 0.0
    %2764 = vmatprep.subr.mxu0 0.0
    %2765 = vmatpush1.msra.mxu0 0.0
    %2766 = vmatprep.subr.mxu0 0.0
    %2767 = vmatpush1.msra.mxu0 0.0
    %2768 = vmatprep.subr.mxu0 0.0
    %v2769 = vand.u32 %v1038, 4294901760
    %v2770 = vsub.f32 %v1038, %v2769
    %2771 = vmatpush1.msra.mxu0 %v2770
    %2772 = vmatprep.subr.mxu0 0.0
    %v2773 = vand.u32 %v1037, 4294901760
    %v2774 = vsub.f32 %v1037, %v2773
    %2775 = vmatpush1.msra.mxu0 %v2774
    %2776 = vmatprep.subr.mxu0 0.0
    %v2777 = vand.u32 %v1036, 4294901760
    %v2778 = vsub.f32 %v1036, %v2777
    %2779 = vmatpush1.msra.mxu0 %v2778
    %2780 = vmatprep.subr.mxu0 0.0
    %v2781 = vand.u32 %v1035, 4294901760
    %v2782 = vsub.f32 %v1035, %v2781
    %2783 = vmatpush1.msra.mxu0 %v2782
    %2784 = vmatprep.subr.mxu0 0.0
    %2785 = vmatpush2.msra.mxu0 0.0
    %2786 = vmatprep.subr.mxu0 0.0
    %2787 = vmatpush2.msra.mxu0 0.0
    %2788 = vmatprep.subr.mxu0 0.0
    %2789 = vmatpush2.msra.mxu0 0.0
    %2790 = vmatprep.subr.mxu0 0.0
    %2791 = vmatpush2.msra.mxu0 0.0
    %2792 = vmatprep.subr.mxu0 0.0
    %2793 = vmatpush2.msra.mxu0 0.0
    %2794 = vmatprep.subr.mxu0 0.0
    %2795 = vmatpush2.msra.mxu0 0.0
    %2796 = vmatprep.subr.mxu0 0.0
    %2797 = vmatpush2.msra.mxu0 0.0
    %2798 = vmatprep.subr.mxu0 0.0
    %2799 = vmatpush2.msra.mxu0 0.0
    %2800 = vmatprep.subr.mxu0 0.0
    %2801 = vmatpush2.msra.mxu0 0.0
    %2802 = vmatprep.subr.mxu0 0.0
    %2803 = vmatpush2.msra.mxu0 0.0
    %2804 = vmatprep.subr.mxu0 0.0
    %2805 = vmatpush2.msra.mxu0 0.0
    %2806 = vmatprep.subr.mxu0 0.0
    %2807 = vmatpush2.msra.mxu0 0.0
    %2808 = vmatprep.subr.mxu0 0.0
    %2809 = vmatpush2.msra.mxu0 0.0
    %2810 = vmatprep.subr.mxu0 0.0
    %2811 = vmatpush2.msra.mxu0 0.0
    %2812 = vmatprep.subr.mxu0 0.0
    %2813 = vmatpush2.msra.mxu0 0.0
    %2814 = vmatprep.subr.mxu0 0.0
    %2815 = vmatpush2.msra.mxu0 0.0
    %2816 = vmatprep.mubr.f32.mxu0 0.0
    %v2817 = vand.u32 %v2572, 4294901760
    %v2818 = vsub.f32 %v2572, %v2817
    %2819 = vmatmul.mubr.f32.gmra.mxu0 %v2818
    %v2820 = vpop.f32.mrf.mxu0
    %v2821 = vadd.f32 %v2741, %v2820
    %v2822 = vpop.f32.mrf.mxu0
    %2823 = vdwg.mxu0
    %2824 = vmatprep.subr.mxu0 0.0
    %2825 = vmatpush1.msra.mxu0 0.0
    %2826 = vmatprep.subr.mxu0 0.0
    %2827 = vmatpush1.msra.mxu0 0.0
    %2828 = vmatprep.subr.mxu0 0.0
    %2829 = vmatpush1.msra.mxu0 0.0
    %2830 = vmatprep.subr.mxu0 0.0
    %2831 = vmatpush1.msra.mxu0 0.0
    %2832 = vmatprep.subr.mxu0 0.0
    %2833 = vmatpush1.msra.mxu0 0.0
    %2834 = vmatprep.subr.mxu0 0.0
    %2835 = vmatpush1.msra.mxu0 0.0
    %2836 = vmatprep.subr.mxu0 0.0
    %2837 = vmatpush1.msra.mxu0 0.0
    %2838 = vmatprep.subr.mxu0 0.0
    %2839 = vmatpush1.msra.mxu0 0.0
    %2840 = vmatprep.subr.mxu0 0.0
    %2841 = vmatpush1.msra.mxu0 0.0
    %2842 = vmatprep.subr.mxu0 0.0
    %2843 = vmatpush1.msra.mxu0 0.0
    %2844 = vmatprep.subr.mxu0 0.0
    %2845 = vmatpush1.msra.mxu0 0.0
    %2846 = vmatprep.subr.mxu0 0.0
    %2847 = vmatpush1.msra.mxu0 0.0
    %2848 = vmatprep.subr.mxu0 0.0
    %v2849 = vand.u32 %v1038, 4294901760
    %2850 = vmatpush1.msra.mxu0 %v2849
    %2851 = vmatprep.subr.mxu0 0.0
    %v2852 = vand.u32 %v1037, 4294901760
    %2853 = vmatpush1.msra.mxu0 %v2852
    %2854 = vmatprep.subr.mxu0 0.0
    %v2855 = vand.u32 %v1036, 4294901760
    %2856 = vmatpush1.msra.mxu0 %v2855
    %2857 = vmatprep.subr.mxu0 0.0
    %v2858 = vand.u32 %v1035, 4294901760
    %2859 = vmatpush1.msra.mxu0 %v2858
    %2860 = vmatprep.subr.mxu0 0.0
    %2861 = vmatpush2.msra.mxu0 0.0
    %2862 = vmatprep.subr.mxu0 0.0
    %2863 = vmatpush2.msra.mxu0 0.0
    %2864 = vmatprep.subr.mxu0 0.0
    %2865 = vmatpush2.msra.mxu0 0.0
    %2866 = vmatprep.subr.mxu0 0.0
    %2867 = vmatpush2.msra.mxu0 0.0
    %2868 = vmatprep.subr.mxu0 0.0
    %2869 = vmatpush2.msra.mxu0 0.0
    %2870 = vmatprep.subr.mxu0 0.0
    %2871 = vmatpush2.msra.mxu0 0.0
    %2872 = vmatprep.subr.mxu0 0.0
    %2873 = vmatpush2.msra.mxu0 0.0
    %2874 = vmatprep.subr.mxu0 0.0
    %2875 = vmatpush2.msra.mxu0 0.0
    %2876 = vmatprep.subr.mxu0 0.0
    %2877 = vmatpush2.msra.mxu0 0.0
    %2878 = vmatprep.subr.mxu0 0.0
    %2879 = vmatpush2.msra.mxu0 0.0
    %2880 = vmatprep.subr.mxu0 0.0
    %2881 = vmatpush2.msra.mxu0 0.0
    %2882 = vmatprep.subr.mxu0 0.0
    %2883 = vmatpush2.msra.mxu0 0.0
    %2884 = vmatprep.subr.mxu0 0.0
    %2885 = vmatpush2.msra.mxu0 0.0
    %2886 = vmatprep.subr.mxu0 0.0
    %2887 = vmatpush2.msra.mxu0 0.0
    %2888 = vmatprep.subr.mxu0 0.0
    %2889 = vmatpush2.msra.mxu0 0.0
    %2890 = vmatprep.subr.mxu0 0.0
    %2891 = vmatpush2.msra.mxu0 0.0
    %2892 = vmatprep.mubr.f32.mxu0 0.0
    %v2893 = vand.u32 %v2572, 4294901760
    %v2894 = vsub.f32 %v2572, %v2893
    %v2895 = vand.u32 %v2894, 4294901760
    %2896 = vmatmul.mubr.f32.gmra.mxu0 %v2895
    %v2897 = vpop.f32.mrf.mxu0
    %v2898 = vadd.f32 %v2821, %v2897
    %v2899 = vpop.f32.mrf.mxu0
    %2900 = vdwg.mxu0
    %2901 = vmatprep.subr.mxu0 0.0
    %2902 = vmatpush1.msra.mxu0 0.0
    %2903 = vmatprep.subr.mxu0 0.0
    %2904 = vmatpush1.msra.mxu0 0.0
    %2905 = vmatprep.subr.mxu0 0.0
    %2906 = vmatpush1.msra.mxu0 0.0
    %2907 = vmatprep.subr.mxu0 0.0
    %2908 = vmatpush1.msra.mxu0 0.0
    %2909 = vmatprep.subr.mxu0 0.0
    %2910 = vmatpush1.msra.mxu0 0.0
    %2911 = vmatprep.subr.mxu0 0.0
    %2912 = vmatpush1.msra.mxu0 0.0
    %2913 = vmatprep.subr.mxu0 0.0
    %2914 = vmatpush1.msra.mxu0 0.0
    %2915 = vmatprep.subr.mxu0 0.0
    %2916 = vmatpush1.msra.mxu0 0.0
    %2917 = vmatprep.subr.mxu0 0.0
    %2918 = vmatpush1.msra.mxu0 0.0
    %2919 = vmatprep.subr.mxu0 0.0
    %2920 = vmatpush1.msra.mxu0 0.0
    %2921 = vmatprep.subr.mxu0 0.0
    %2922 = vmatpush1.msra.mxu0 0.0
    %2923 = vmatprep.subr.mxu0 0.0
    %2924 = vmatpush1.msra.mxu0 0.0
    %2925 = vmatprep.subr.mxu0 0.0
    %v2926 = vand.u32 %v1038, 4294901760
    %v2927 = vsub.f32 %v1038, %v2926
    %v2928 = vand.u32 %v2927, 4294901760
    %2929 = vmatpush1.msra.mxu0 %v2928
    %2930 = vmatprep.subr.mxu0 0.0
    %v2931 = vand.u32 %v1037, 4294901760
    %v2932 = vsub.f32 %v1037, %v2931
    %v2933 = vand.u32 %v2932, 4294901760
    %2934 = vmatpush1.msra.mxu0 %v2933
    %2935 = vmatprep.subr.mxu0 0.0
    %v2936 = vand.u32 %v1036, 4294901760
    %v2937 = vsub.f32 %v1036, %v2936
    %v2938 = vand.u32 %v2937, 4294901760
    %2939 = vmatpush1.msra.mxu0 %v2938
    %2940 = vmatprep.subr.mxu0 0.0
    %v2941 = vand.u32 %v1035, 4294901760
    %v2942 = vsub.f32 %v1035, %v2941
    %v2943 = vand.u32 %v2942, 4294901760
    %2944 = vmatpush1.msra.mxu0 %v2943
    %2945 = vmatprep.subr.mxu0 0.0
    %2946 = vmatpush2.msra.mxu0 0.0
    %2947 = vmatprep.subr.mxu0 0.0
    %2948 = vmatpush2.msra.mxu0 0.0
    %2949 = vmatprep.subr.mxu0 0.0
    %2950 = vmatpush2.msra.mxu0 0.0
    %2951 = vmatprep.subr.mxu0 0.0
    %2952 = vmatpush2.msra.mxu0 0.0
    %2953 = vmatprep.subr.mxu0 0.0
    %2954 = vmatpush2.msra.mxu0 0.0
    %2955 = vmatprep.subr.mxu0 0.0
    %2956 = vmatpush2.msra.mxu0 0.0
    %2957 = vmatprep.subr.mxu0 0.0
    %2958 = vmatpush2.msra.mxu0 0.0
    %2959 = vmatprep.subr.mxu0 0.0
    %2960 = vmatpush2.msra.mxu0 0.0
    %2961 = vmatprep.subr.mxu0 0.0
    %2962 = vmatpush2.msra.mxu0 0.0
    %2963 = vmatprep.subr.mxu0 0.0
    %2964 = vmatpush2.msra.mxu0 0.0
    %2965 = vmatprep.subr.mxu0 0.0
    %2966 = vmatpush2.msra.mxu0 0.0
    %2967 = vmatprep.subr.mxu0 0.0
    %2968 = vmatpush2.msra.mxu0 0.0
    %2969 = vmatprep.subr.mxu0 0.0
    %2970 = vmatpush2.msra.mxu0 0.0
    %2971 = vmatprep.subr.mxu0 0.0
    %2972 = vmatpush2.msra.mxu0 0.0
    %2973 = vmatprep.subr.mxu0 0.0
    %2974 = vmatpush2.msra.mxu0 0.0
    %2975 = vmatprep.subr.mxu0 0.0
    %2976 = vmatpush2.msra.mxu0 0.0
    %2977 = vmatprep.mubr.f32.mxu0 0.0
    %v2978 = vand.u32 %v2572, 4294901760
    %2979 = vmatmul.mubr.f32.gmra.mxu0 %v2978
    %v2980 = vpop.f32.mrf.mxu0
    %v2981 = vadd.f32 %v2898, %v2980
    %v2982 = vpop.f32.mrf.mxu0
    %2983 = vdwg.mxu0
    %2984 = vmatprep.subr.mxu0 0.0
    %2985 = vmatpush1.msra.mxu0 0.0
    %2986 = vmatprep.subr.mxu0 0.0
    %2987 = vmatpush1.msra.mxu0 0.0
    %2988 = vmatprep.subr.mxu0 0.0
    %2989 = vmatpush1.msra.mxu0 0.0
    %2990 = vmatprep.subr.mxu0 0.0
    %2991 = vmatpush1.msra.mxu0 0.0
    %2992 = vmatprep.subr.mxu0 0.0
    %2993 = vmatpush1.msra.mxu0 0.0
    %2994 = vmatprep.subr.mxu0 0.0
    %2995 = vmatpush1.msra.mxu0 0.0
    %2996 = vmatprep.subr.mxu0 0.0
    %2997 = vmatpush1.msra.mxu0 0.0
    %2998 = vmatprep.subr.mxu0 0.0
    %2999 = vmatpush1.msra.mxu0 0.0
    %3000 = vmatprep.subr.mxu0 0.0
    %3001 = vmatpush1.msra.mxu0 0.0
    %3002 = vmatprep.subr.mxu0 0.0
    %3003 = vmatpush1.msra.mxu0 0.0
    %3004 = vmatprep.subr.mxu0 0.0
    %3005 = vmatpush1.msra.mxu0 0.0
    %3006 = vmatprep.subr.mxu0 0.0
    %3007 = vmatpush1.msra.mxu0 0.0
    %3008 = vmatprep.subr.mxu0 0.0
    %v3009 = vand.u32 %v1038, 4294901760
    %3010 = vmatpush1.msra.mxu0 %v3009
    %3011 = vmatprep.subr.mxu0 0.0
    %v3012 = vand.u32 %v1037, 4294901760
    %3013 = vmatpush1.msra.mxu0 %v3012
    %3014 = vmatprep.subr.mxu0 0.0
    %v3015 = vand.u32 %v1036, 4294901760
    %3016 = vmatpush1.msra.mxu0 %v3015
    %3017 = vmatprep.subr.mxu0 0.0
    %v3018 = vand.u32 %v1035, 4294901760
    %3019 = vmatpush1.msra.mxu0 %v3018
    %3020 = vmatprep.subr.mxu0 0.0
    %3021 = vmatpush2.msra.mxu0 0.0
    %3022 = vmatprep.subr.mxu0 0.0
    %3023 = vmatpush2.msra.mxu0 0.0
    %3024 = vmatprep.subr.mxu0 0.0
    %3025 = vmatpush2.msra.mxu0 0.0
    %3026 = vmatprep.subr.mxu0 0.0
    %3027 = vmatpush2.msra.mxu0 0.0
    %3028 = vmatprep.subr.mxu0 0.0
    %3029 = vmatpush2.msra.mxu0 0.0
    %3030 = vmatprep.subr.mxu0 0.0
    %3031 = vmatpush2.msra.mxu0 0.0
    %3032 = vmatprep.subr.mxu0 0.0
    %3033 = vmatpush2.msra.mxu0 0.0
    %3034 = vmatprep.subr.mxu0 0.0
    %3035 = vmatpush2.msra.mxu0 0.0
    %3036 = vmatprep.subr.mxu0 0.0
    %3037 = vmatpush2.msra.mxu0 0.0
    %3038 = vmatprep.subr.mxu0 0.0
    %3039 = vmatpush2.msra.mxu0 0.0
    %3040 = vmatprep.subr.mxu0 0.0
    %3041 = vmatpush2.msra.mxu0 0.0
    %3042 = vmatprep.subr.mxu0 0.0
    %3043 = vmatpush2.msra.mxu0 0.0
    %3044 = vmatprep.subr.mxu0 0.0
    %3045 = vmatpush2.msra.mxu0 0.0
    %3046 = vmatprep.subr.mxu0 0.0
    %3047 = vmatpush2.msra.mxu0 0.0
    %3048 = vmatprep.subr.mxu0 0.0
    %3049 = vmatpush2.msra.mxu0 0.0
    %3050 = vmatprep.subr.mxu0 0.0
    %3051 = vmatpush2.msra.mxu0 0.0
    %3052 = vmatprep.mubr.f32.mxu0 0.0
    %v3053 = vand.u32 %v2572, 4294901760
    %3054 = vmatmul.mubr.f32.gmra.mxu0 %v3053
    %v3055 = vpop.f32.mrf.mxu0
    %v3056 = vadd.f32 %v2981, %v3055
    %v3057 = vpop.f32.mrf.mxu0
    %3058 = vdwg.mxu0
    %v3059 = vadd.f32 %v2569, %v3056
    %v3060 = vmul.f32 %v2567, %v1044
    %v3061 = vtanh.pop %v3060
    %v3062 = vmul.f32 %v3061, %v1044
    %v3063 = vadd.f32 %v3062, %v1045
    %v3064 = vmul.f32 %v3063, %v2038
    %3066 = vrot.lane.b32.xlu0 %v3063, 64
    %v3067 = vpop.permute.xlu0 %3066
    %v3069 = vmul.f32 %v3063, %v3067
    %3071 = vrot.lane.b32.xlu0 %v3069, 32
    %v3072 = vpop.permute.xlu0 %3071
    %v3074 = vadd.f32 %v3064, %v3072
    %v3075 = vtanh.pop %v3074
    %3077 = vrot.lane.b32.xlu0 %v3075, 64
    %v3078 = vpop.permute.xlu0 %3077
    %v3080 = vmul.f32 %v3063, %v3078
    %v3081 = vmul.f32 %v3059, %v1044
    %v3082 = vtanh.pop %v3081
    %v3083 = vmul.f32 %v3082, %v1044
    %v3084 = vadd.f32 %v3083, %v1045
    %v3085 = vmul.f32 %v3084, %v2059
    %3087 = vrot.lane.b32.xlu0 %v3084, 64
    %v3088 = vpop.permute.xlu0 %3087
    %v3090 = vmul.f32 %v3084, %v3088
    %3092 = vrot.lane.b32.xlu0 %v3090, 32
    %v3093 = vpop.permute.xlu0 %3092
    %v3095 = vadd.f32 %v3085, %v3093
    %v3096 = vtanh.pop %v3095
    %3098 = vrot.lane.b32.xlu0 %v3096, 64
    %v3099 = vpop.permute.xlu0 %3098
    %v3101 = vmul.f32 %v3084, %v3099
    %3103 = vrot.lane.b32.xlu0 %v3080, 32
    %v3104 = vpop.permute.xlu0 %3103
    %s3106 = scalar_lea.vmem [#allocation12], 8
    %3107 = vst.msk [vmem:[%s3106] sm:$0xff] %vm104, %v3104
    %3109 = vrot.lane.b32.xlu0 %v3101, 64
    %v3110 = vpop.permute.xlu0 %3109
    %s3112 = scalar_lea.vmem [#allocation12], 48
    %3113 = vst.msk [vmem:[%s3112] sm:$0xff] %vm2076, %v3110
    %s3114 = scalar_lea.vmem [#allocation2], 16
    %v3115 = vld [vmem:[%s3114] sm:$0xff]
    %v3116 = vsel %vm104, %v3104, 0
    %3118 = vmatprep.subr.mxu0 0.0
    %3119 = vmatpush1.msra.mxu0 0.0
    %3120 = vmatprep.subr.mxu0 0.0
    %3121 = vmatpush1.msra.mxu0 0.0
    %3122 = vmatprep.subr.mxu0 0.0
    %3123 = vmatpush1.msra.mxu0 0.0
    %3124 = vmatprep.subr.mxu0 0.0
    %3125 = vmatpush1.msra.mxu0 0.0
    %3126 = vmatprep.subr.mxu0 0.0
    %3127 = vmatpush1.msra.mxu0 0.0
    %3128 = vmatprep.subr.mxu0 0.0
    %3129 = vmatpush1.msra.mxu0 0.0
    %3130 = vmatprep.subr.mxu0 0.0
    %3131 = vmatpush1.msra.mxu0 0.0
    %3132 = vmatprep.subr.mxu0 0.0
    %3133 = vmatpush1.msra.mxu0 0.0
    %3134 = vmatprep.subr.mxu0 0.0
    %3135 = vmatpush1.msra.mxu0 0.0
    %3136 = vmatprep.subr.mxu0 0.0
    %3137 = vmatpush1.msra.mxu0 0.0
    %3138 = vmatprep.subr.mxu0 0.0
    %3139 = vmatpush1.msra.mxu0 0.0
    %3140 = vmatprep.subr.mxu0 0.0
    %3141 = vmatpush1.msra.mxu0 0.0
    %3142 = vmatprep.subr.mxu0 0.0
    %v3143 = vand.u32 %v1034, 4294901760
    %3144 = vmatpush1.msra.mxu0 %v3143
    %3145 = vmatprep.subr.mxu0 0.0
    %v3146 = vand.u32 %v1033, 4294901760
    %3147 = vmatpush1.msra.mxu0 %v3146
    %3148 = vmatprep.subr.mxu0 0.0
    %v3149 = vand.u32 %v1032, 4294901760
    %3150 = vmatpush1.msra.mxu0 %v3149
    %3151 = vmatprep.subr.mxu0 0.0
    %v3152 = vand.u32 %v1031, 4294901760
    %3153 = vmatpush1.msra.mxu0 %v3152
    %3154 = vmatprep.subr.mxu0 0.0
    %3155 = vmatpush2.msra.mxu0 0.0
    %3156 = vmatprep.subr.mxu0 0.0
    %3157 = vmatpush2.msra.mxu0 0.0
    %3158 = vmatprep.subr.mxu0 0.0
    %3159 = vmatpush2.msra.mxu0 0.0
    %3160 = vmatprep.subr.mxu0 0.0
    %3161 = vmatpush2.msra.mxu0 0.0
    %3162 = vmatprep.subr.mxu0 0.0
    %3163 = vmatpush2.msra.mxu0 0.0
    %3164 = vmatprep.subr.mxu0 0.0
    %3165 = vmatpush2.msra.mxu0 0.0
    %3166 = vmatprep.subr.mxu0 0.0
    %3167 = vmatpush2.msra.mxu0 0.0
    %3168 = vmatprep.subr.mxu0 0.0
    %3169 = vmatpush2.msra.mxu0 0.0
    %3170 = vmatprep.subr.mxu0 0.0
    %3171 = vmatpush2.msra.mxu0 0.0
    %3172 = vmatprep.subr.mxu0 0.0
    %3173 = vmatpush2.msra.mxu0 0.0
    %3174 = vmatprep.subr.mxu0 0.0
    %3175 = vmatpush2.msra.mxu0 0.0
    %3176 = vmatprep.subr.mxu0 0.0
    %3177 = vmatpush2.msra.mxu0 0.0
    %3178 = vmatprep.subr.mxu0 0.0
    %3179 = vmatpush2.msra.mxu0 0.0
    %3180 = vmatprep.subr.mxu0 0.0
    %3181 = vmatpush2.msra.mxu0 0.0
    %3182 = vmatprep.subr.mxu0 0.0
    %3183 = vmatpush2.msra.mxu0 0.0
    %3184 = vmatprep.subr.mxu0 0.0
    %3185 = vmatpush2.msra.mxu0 0.0
    %3186 = vmatprep.mubr.f32.mxu0 0.0
    %v3187 = vand.u32 %v3116, 4294901760
    %v3188 = vsub.f32 %v3116, %v3187
    %v3189 = vand.u32 %v3188, 4294901760
    %v3190 = vsub.f32 %v3188, %v3189
    %v3191 = vand.u32 %v3190, 4294901760
    %3192 = vmatmul.mubr.f32.gmra.mxu0 %v3191
    %v3193 = vpop.f32.mrf.mxu0
    %v3194 = vadd.f32 0.0, %v3193
    %v3195 = vpop.f32.mrf.mxu0
    %3196 = vdwg.mxu0
    %3197 = vmatprep.subr.mxu0 0.0
    %3198 = vmatpush1.msra.mxu0 0.0
    %3199 = vmatprep.subr.mxu0 0.0
    %3200 = vmatpush1.msra.mxu0 0.0
    %3201 = vmatprep.subr.mxu0 0.0
    %3202 = vmatpush1.msra.mxu0 0.0
    %3203 = vmatprep.subr.mxu0 0.0
    %3204 = vmatpush1.msra.mxu0 0.0
    %3205 = vmatprep.subr.mxu0 0.0
    %3206 = vmatpush1.msra.mxu0 0.0
    %3207 = vmatprep.subr.mxu0 0.0
    %3208 = vmatpush1.msra.mxu0 0.0
    %3209 = vmatprep.subr.mxu0 0.0
    %3210 = vmatpush1.msra.mxu0 0.0
    %3211 = vmatprep.subr.mxu0 0.0
    %3212 = vmatpush1.msra.mxu0 0.0
    %3213 = vmatprep.subr.mxu0 0.0
    %3214 = vmatpush1.msra.mxu0 0.0
    %3215 = vmatprep.subr.mxu0 0.0
    %3216 = vmatpush1.msra.mxu0 0.0
    %3217 = vmatprep.subr.mxu0 0.0
    %3218 = vmatpush1.msra.mxu0 0.0
    %3219 = vmatprep.subr.mxu0 0.0
    %3220 = vmatpush1.msra.mxu0 0.0
    %3221 = vmatprep.subr.mxu0 0.0
    %v3222 = vand.u32 %v1034, 4294901760
    %v3223 = vsub.f32 %v1034, %v3222
    %v3224 = vand.u32 %v3223, 4294901760
    %v3225 = vsub.f32 %v3223, %v3224
    %v3226 = vand.u32 %v3225, 4294901760
    %3227 = vmatpush1.msra.mxu0 %v3226
    %3228 = vmatprep.subr.mxu0 0.0
    %v3229 = vand.u32 %v1033, 4294901760
    %v3230 = vsub.f32 %v1033, %v3229
    %v3231 = vand.u32 %v3230, 4294901760
    %v3232 = vsub.f32 %v3230, %v3231
    %v3233 = vand.u32 %v3232, 4294901760
    %3234 = vmatpush1.msra.mxu0 %v3233
    %3235 = vmatprep.subr.mxu0 0.0
    %v3236 = vand.u32 %v1032, 4294901760
    %v3237 = vsub.f32 %v1032, %v3236
    %v3238 = vand.u32 %v3237, 4294901760
    %v3239 = vsub.f32 %v3237, %v3238
    %v3240 = vand.u32 %v3239, 4294901760
    %3241 = vmatpush1.msra.mxu0 %v3240
    %3242 = vmatprep.subr.mxu0 0.0
    %v3243 = vand.u32 %v1031, 4294901760
    %v3244 = vsub.f32 %v1031, %v3243
    %v3245 = vand.u32 %v3244, 4294901760
    %v3246 = vsub.f32 %v3244, %v3245
    %v3247 = vand.u32 %v3246, 4294901760
    %3248 = vmatpush1.msra.mxu0 %v3247
    %3249 = vmatprep.subr.mxu0 0.0
    %3250 = vmatpush2.msra.mxu0 0.0
    %3251 = vmatprep.subr.mxu0 0.0
    %3252 = vmatpush2.msra.mxu0 0.0
    %3253 = vmatprep.subr.mxu0 0.0
    %3254 = vmatpush2.msra.mxu0 0.0
    %3255 = vmatprep.subr.mxu0 0.0
    %3256 = vmatpush2.msra.mxu0 0.0
    %3257 = vmatprep.subr.mxu0 0.0
    %3258 = vmatpush2.msra.mxu0 0.0
    %3259 = vmatprep.subr.mxu0 0.0
    %3260 = vmatpush2.msra.mxu0 0.0
    %3261 = vmatprep.subr.mxu0 0.0
    %3262 = vmatpush2.msra.mxu0 0.0
    %3263 = vmatprep.subr.mxu0 0.0
    %3264 = vmatpush2.msra.mxu0 0.0
    %3265 = vmatprep.subr.mxu0 0.0
    %3266 = vmatpush2.msra.mxu0 0.0
    %3267 = vmatprep.subr.mxu0 0.0
    %3268 = vmatpush2.msra.mxu0 0.0
    %3269 = vmatprep.subr.mxu0 0.0
    %3270 = vmatpush2.msra.mxu0 0.0
    %3271 = vmatprep.subr.mxu0 0.0
    %3272 = vmatpush2.msra.mxu0 0.0
    %3273 = vmatprep.subr.mxu0 0.0
    %3274 = vmatpush2.msra.mxu0 0.0
    %3275 = vmatprep.subr.mxu0 0.0
    %3276 = vmatpush2.msra.mxu0 0.0
    %3277 = vmatprep.subr.mxu0 0.0
    %3278 = vmatpush2.msra.mxu0 0.0
    %3279 = vmatprep.subr.mxu0 0.0
    %3280 = vmatpush2.msra.mxu0 0.0
    %3281 = vmatprep.mubr.f32.mxu0 0.0
    %v3282 = vand.u32 %v3116, 4294901760
    %3283 = vmatmul.mubr.f32.gmra.mxu0 %v3282
    %v3284 = vpop.f32.mrf.mxu0
    %v3285 = vadd.f32 %v3194, %v3284
    %v3286 = vpop.f32.mrf.mxu0
    %3287 = vdwg.mxu0
    %3288 = vmatprep.subr.mxu0 0.0
    %3289 = vmatpush1.msra.mxu0 0.0
    %3290 = vmatprep.subr.mxu0 0.0
    %3291 = vmatpush1.msra.mxu0 0.0
    %3292 = vmatprep.subr.mxu0 0.0
    %3293 = vmatpush1.msra.mxu0 0.0
    %3294 = vmatprep.subr.mxu0 0.0
    %3295 = vmatpush1.msra.mxu0 0.0
    %3296 = vmatprep.subr.mxu0 0.0
    %3297 = vmatpush1.msra.mxu0 0.0
    %3298 = vmatprep.subr.mxu0 0.0
    %3299 = vmatpush1.msra.mxu0 0.0
    %3300 = vmatprep.subr.mxu0 0.0
    %3301 = vmatpush1.msra.mxu0 0.0
    %3302 = vmatprep.subr.mxu0 0.0
    %3303 = vmatpush1.msra.mxu0 0.0
    %3304 = vmatprep.subr.mxu0 0.0
    %3305 = vmatpush1.msra.mxu0 0.0
    %3306 = vmatprep.subr.mxu0 0.0
    %3307 = vmatpush1.msra.mxu0 0.0
    %3308 = vmatprep.subr.mxu0 0.0
    %3309 = vmatpush1.msra.mxu0 0.0
    %3310 = vmatprep.subr.mxu0 0.0
    %3311 = vmatpush1.msra.mxu0 0.0
    %3312 = vmatprep.subr.mxu0 0.0
    %v3313 = vand.u32 %v1034, 4294901760
    %v3314 = vsub.f32 %v1034, %v3313
    %3315 = vmatpush1.msra.mxu0 %v3314
    %3316 = vmatprep.subr.mxu0 0.0
    %v3317 = vand.u32 %v1033, 4294901760
    %v3318 = vsub.f32 %v1033, %v3317
    %3319 = vmatpush1.msra.mxu0 %v3318
    %3320 = vmatprep.subr.mxu0 0.0
    %v3321 = vand.u32 %v1032, 4294901760
    %v3322 = vsub.f32 %v1032, %v3321
    %3323 = vmatpush1.msra.mxu0 %v3322
    %3324 = vmatprep.subr.mxu0 0.0
    %v3325 = vand.u32 %v1031, 4294901760
    %v3326 = vsub.f32 %v1031, %v3325
    %3327 = vmatpush1.msra.mxu0 %v3326
    %3328 = vmatprep.subr.mxu0 0.0
    %3329 = vmatpush2.msra.mxu0 0.0
    %3330 = vmatprep.subr.mxu0 0.0
    %3331 = vmatpush2.msra.mxu0 0.0
    %3332 = vmatprep.subr.mxu0 0.0
    %3333 = vmatpush2.msra.mxu0 0.0
    %3334 = vmatprep.subr.mxu0 0.0
    %3335 = vmatpush2.msra.mxu0 0.0
    %3336 = vmatprep.subr.mxu0 0.0
    %3337 = vmatpush2.msra.mxu0 0.0
    %3338 = vmatprep.subr.mxu0 0.0
    %3339 = vmatpush2.msra.mxu0 0.0
    %3340 = vmatprep.subr.mxu0 0.0
    %3341 = vmatpush2.msra.mxu0 0.0
    %3342 = vmatprep.subr.mxu0 0.0
    %3343 = vmatpush2.msra.mxu0 0.0
    %3344 = vmatprep.subr.mxu0 0.0
    %3345 = vmatpush2.msra.mxu0 0.0
    %3346 = vmatprep.subr.mxu0 0.0
    %3347 = vmatpush2.msra.mxu0 0.0
    %3348 = vmatprep.subr.mxu0 0.0
    %3349 = vmatpush2.msra.mxu0 0.0
    %3350 = vmatprep.subr.mxu0 0.0
    %3351 = vmatpush2.msra.mxu0 0.0
    %3352 = vmatprep.subr.mxu0 0.0
    %3353 = vmatpush2.msra.mxu0 0.0
    %3354 = vmatprep.subr.mxu0 0.0
    %3355 = vmatpush2.msra.mxu0 0.0
    %3356 = vmatprep.subr.mxu0 0.0
    %3357 = vmatpush2.msra.mxu0 0.0
    %3358 = vmatprep.subr.mxu0 0.0
    %3359 = vmatpush2.msra.mxu0 0.0
    %3360 = vmatprep.mubr.f32.mxu0 0.0
    %v3361 = vand.u32 %v3116, 4294901760
    %v3362 = vsub.f32 %v3116, %v3361
    %3363 = vmatmul.mubr.f32.gmra.mxu0 %v3362
    %v3364 = vpop.f32.mrf.mxu0
    %v3365 = vadd.f32 %v3285, %v3364
    %v3366 = vpop.f32.mrf.mxu0
    %3367 = vdwg.mxu0
    %3368 = vmatprep.subr.mxu0 0.0
    %3369 = vmatpush1.msra.mxu0 0.0
    %3370 = vmatprep.subr.mxu0 0.0
    %3371 = vmatpush1.msra.mxu0 0.0
    %3372 = vmatprep.subr.mxu0 0.0
    %3373 = vmatpush1.msra.mxu0 0.0
    %3374 = vmatprep.subr.mxu0 0.0
    %3375 = vmatpush1.msra.mxu0 0.0
    %3376 = vmatprep.subr.mxu0 0.0
    %3377 = vmatpush1.msra.mxu0 0.0
    %3378 = vmatprep.subr.mxu0 0.0
    %3379 = vmatpush1.msra.mxu0 0.0
    %3380 = vmatprep.subr.mxu0 0.0
    %3381 = vmatpush1.msra.mxu0 0.0
    %3382 = vmatprep.subr.mxu0 0.0
    %3383 = vmatpush1.msra.mxu0 0.0
    %3384 = vmatprep.subr.mxu0 0.0
    %3385 = vmatpush1.msra.mxu0 0.0
    %3386 = vmatprep.subr.mxu0 0.0
    %3387 = vmatpush1.msra.mxu0 0.0
    %3388 = vmatprep.subr.mxu0 0.0
    %3389 = vmatpush1.msra.mxu0 0.0
    %3390 = vmatprep.subr.mxu0 0.0
    %3391 = vmatpush1.msra.mxu0 0.0
    %3392 = vmatprep.subr.mxu0 0.0
    %v3393 = vand.u32 %v1034, 4294901760
    %3394 = vmatpush1.msra.mxu0 %v3393
    %3395 = vmatprep.subr.mxu0 0.0
    %v3396 = vand.u32 %v1033, 4294901760
    %3397 = vmatpush1.msra.mxu0 %v3396
    %3398 = vmatprep.subr.mxu0 0.0
    %v3399 = vand.u32 %v1032, 4294901760
    %3400 = vmatpush1.msra.mxu0 %v3399
    %3401 = vmatprep.subr.mxu0 0.0
    %v3402 = vand.u32 %v1031, 4294901760
    %3403 = vmatpush1.msra.mxu0 %v3402
    %3404 = vmatprep.subr.mxu0 0.0
    %3405 = vmatpush2.msra.mxu0 0.0
    %3406 = vmatprep.subr.mxu0 0.0
    %3407 = vmatpush2.msra.mxu0 0.0
    %3408 = vmatprep.subr.mxu0 0.0
    %3409 = vmatpush2.msra.mxu0 0.0
    %3410 = vmatprep.subr.mxu0 0.0
    %3411 = vmatpush2.msra.mxu0 0.0
    %3412 = vmatprep.subr.mxu0 0.0
    %3413 = vmatpush2.msra.mxu0 0.0
    %3414 = vmatprep.subr.mxu0 0.0
    %3415 = vmatpush2.msra.mxu0 0.0
    %3416 = vmatprep.subr.mxu0 0.0
    %3417 = vmatpush2.msra.mxu0 0.0
    %3418 = vmatprep.subr.mxu0 0.0
    %3419 = vmatpush2.msra.mxu0 0.0
    %3420 = vmatprep.subr.mxu0 0.0
    %3421 = vmatpush2.msra.mxu0 0.0
    %3422 = vmatprep.subr.mxu0 0.0
    %3423 = vmatpush2.msra.mxu0 0.0
    %3424 = vmatprep.subr.mxu0 0.0
    %3425 = vmatpush2.msra.mxu0 0.0
    %3426 = vmatprep.subr.mxu0 0.0
    %3427 = vmatpush2.msra.mxu0 0.0
    %3428 = vmatprep.subr.mxu0 0.0
    %3429 = vmatpush2.msra.mxu0 0.0
    %3430 = vmatprep.subr.mxu0 0.0
    %3431 = vmatpush2.msra.mxu0 0.0
    %3432 = vmatprep.subr.mxu0 0.0
    %3433 = vmatpush2.msra.mxu0 0.0
    %3434 = vmatprep.subr.mxu0 0.0
    %3435 = vmatpush2.msra.mxu0 0.0
    %3436 = vmatprep.mubr.f32.mxu0 0.0
    %v3437 = vand.u32 %v3116, 4294901760
    %v3438 = vsub.f32 %v3116, %v3437
    %v3439 = vand.u32 %v3438, 4294901760
    %3440 = vmatmul.mubr.f32.gmra.mxu0 %v3439
    %v3441 = vpop.f32.mrf.mxu0
    %v3442 = vadd.f32 %v3365, %v3441
    %v3443 = vpop.f32.mrf.mxu0
    %3444 = vdwg.mxu0
    %3445 = vmatprep.subr.mxu0 0.0
    %3446 = vmatpush1.msra.mxu0 0.0
    %3447 = vmatprep.subr.mxu0 0.0
    %3448 = vmatpush1.msra.mxu0 0.0
    %3449 = vmatprep.subr.mxu0 0.0
    %3450 = vmatpush1.msra.mxu0 0.0
    %3451 = vmatprep.subr.mxu0 0.0
    %3452 = vmatpush1.msra.mxu0 0.0
    %3453 = vmatprep.subr.mxu0 0.0
    %3454 = vmatpush1.msra.mxu0 0.0
    %3455 = vmatprep.subr.mxu0 0.0
    %3456 = vmatpush1.msra.mxu0 0.0
    %3457 = vmatprep.subr.mxu0 0.0
    %3458 = vmatpush1.msra.mxu0 0.0
    %3459 = vmatprep.subr.mxu0 0.0
    %3460 = vmatpush1.msra.mxu0 0.0
    %3461 = vmatprep.subr.mxu0 0.0
    %3462 = vmatpush1.msra.mxu0 0.0
    %3463 = vmatprep.subr.mxu0 0.0
    %3464 = vmatpush1.msra.mxu0 0.0
    %3465 = vmatprep.subr.mxu0 0.0
    %3466 = vmatpush1.msra.mxu0 0.0
    %3467 = vmatprep.subr.mxu0 0.0
    %3468 = vmatpush1.msra.mxu0 0.0
    %3469 = vmatprep.subr.mxu0 0.0
    %v3470 = vand.u32 %v1034, 4294901760
    %v3471 = vsub.f32 %v1034, %v3470
    %v3472 = vand.u32 %v3471, 4294901760
    %3473 = vmatpush1.msra.mxu0 %v3472
    %3474 = vmatprep.subr.mxu0 0.0
    %v3475 = vand.u32 %v1033, 4294901760
    %v3476 = vsub.f32 %v1033, %v3475
    %v3477 = vand.u32 %v3476, 4294901760
    %3478 = vmatpush1.msra.mxu0 %v3477
    %3479 = vmatprep.subr.mxu0 0.0
    %v3480 = vand.u32 %v1032, 4294901760
    %v3481 = vsub.f32 %v1032, %v3480
    %v3482 = vand.u32 %v3481, 4294901760
    %3483 = vmatpush1.msra.mxu0 %v3482
    %3484 = vmatprep.subr.mxu0 0.0
    %v3485 = vand.u32 %v1031, 4294901760
    %v3486 = vsub.f32 %v1031, %v3485
    %v3487 = vand.u32 %v3486, 4294901760
    %3488 = vmatpush1.msra.mxu0 %v3487
    %3489 = vmatprep.subr.mxu0 0.0
    %3490 = vmatpush2.msra.mxu0 0.0
    %3491 = vmatprep.subr.mxu0 0.0
    %3492 = vmatpush2.msra.mxu0 0.0
    %3493 = vmatprep.subr.mxu0 0.0
    %3494 = vmatpush2.msra.mxu0 0.0
    %3495 = vmatprep.subr.mxu0 0.0
    %3496 = vmatpush2.msra.mxu0 0.0
    %3497 = vmatprep.subr.mxu0 0.0
    %3498 = vmatpush2.msra.mxu0 0.0
    %3499 = vmatprep.subr.mxu0 0.0
    %3500 = vmatpush2.msra.mxu0 0.0
    %3501 = vmatprep.subr.mxu0 0.0
    %3502 = vmatpush2.msra.mxu0 0.0
    %3503 = vmatprep.subr.mxu0 0.0
    %3504 = vmatpush2.msra.mxu0 0.0
    %3505 = vmatprep.subr.mxu0 0.0
    %3506 = vmatpush2.msra.mxu0 0.0
    %3507 = vmatprep.subr.mxu0 0.0
    %3508 = vmatpush2.msra.mxu0 0.0
    %3509 = vmatprep.subr.mxu0 0.0
    %3510 = vmatpush2.msra.mxu0 0.0
    %3511 = vmatprep.subr.mxu0 0.0
    %3512 = vmatpush2.msra.mxu0 0.0
    %3513 = vmatprep.subr.mxu0 0.0
    %3514 = vmatpush2.msra.mxu0 0.0
    %3515 = vmatprep.subr.mxu0 0.0
    %3516 = vmatpush2.msra.mxu0 0.0
    %3517 = vmatprep.subr.mxu0 0.0
    %3518 = vmatpush2.msra.mxu0 0.0
    %3519 = vmatprep.subr.mxu0 0.0
    %3520 = vmatpush2.msra.mxu0 0.0
    %3521 = vmatprep.mubr.f32.mxu0 0.0
    %v3522 = vand.u32 %v3116, 4294901760
    %3523 = vmatmul.mubr.f32.gmra.mxu0 %v3522
    %v3524 = vpop.f32.mrf.mxu0
    %v3525 = vadd.f32 %v3442, %v3524
    %v3526 = vpop.f32.mrf.mxu0
    %3527 = vdwg.mxu0
    %3528 = vmatprep.subr.mxu0 0.0
    %3529 = vmatpush1.msra.mxu0 0.0
    %3530 = vmatprep.subr.mxu0 0.0
    %3531 = vmatpush1.msra.mxu0 0.0
    %3532 = vmatprep.subr.mxu0 0.0
    %3533 = vmatpush1.msra.mxu0 0.0
    %3534 = vmatprep.subr.mxu0 0.0
    %3535 = vmatpush1.msra.mxu0 0.0
    %3536 = vmatprep.subr.mxu0 0.0
    %3537 = vmatpush1.msra.mxu0 0.0
    %3538 = vmatprep.subr.mxu0 0.0
    %3539 = vmatpush1.msra.mxu0 0.0
    %3540 = vmatprep.subr.mxu0 0.0
    %3541 = vmatpush1.msra.mxu0 0.0
    %3542 = vmatprep.subr.mxu0 0.0
    %3543 = vmatpush1.msra.mxu0 0.0
    %3544 = vmatprep.subr.mxu0 0.0
    %3545 = vmatpush1.msra.mxu0 0.0
    %3546 = vmatprep.subr.mxu0 0.0
    %3547 = vmatpush1.msra.mxu0 0.0
    %3548 = vmatprep.subr.mxu0 0.0
    %3549 = vmatpush1.msra.mxu0 0.0
    %3550 = vmatprep.subr.mxu0 0.0
    %3551 = vmatpush1.msra.mxu0 0.0
    %3552 = vmatprep.subr.mxu0 0.0
    %v3553 = vand.u32 %v1034, 4294901760
    %3554 = vmatpush1.msra.mxu0 %v3553
    %3555 = vmatprep.subr.mxu0 0.0
    %v3556 = vand.u32 %v1033, 4294901760
    %3557 = vmatpush1.msra.mxu0 %v3556
    %3558 = vmatprep.subr.mxu0 0.0
    %v3559 = vand.u32 %v1032, 4294901760
    %3560 = vmatpush1.msra.mxu0 %v3559
    %3561 = vmatprep.subr.mxu0 0.0
    %v3562 = vand.u32 %v1031, 4294901760
    %3563 = vmatpush1.msra.mxu0 %v3562
    %3564 = vmatprep.subr.mxu0 0.0
    %3565 = vmatpush2.msra.mxu0 0.0
    %3566 = vmatprep.subr.mxu0 0.0
    %3567 = vmatpush2.msra.mxu0 0.0
    %3568 = vmatprep.subr.mxu0 0.0
    %3569 = vmatpush2.msra.mxu0 0.0
    %3570 = vmatprep.subr.mxu0 0.0
    %3571 = vmatpush2.msra.mxu0 0.0
    %3572 = vmatprep.subr.mxu0 0.0
    %3573 = vmatpush2.msra.mxu0 0.0
    %3574 = vmatprep.subr.mxu0 0.0
    %3575 = vmatpush2.msra.mxu0 0.0
    %3576 = vmatprep.subr.mxu0 0.0
    %3577 = vmatpush2.msra.mxu0 0.0
    %3578 = vmatprep.subr.mxu0 0.0
    %3579 = vmatpush2.msra.mxu0 0.0
    %3580 = vmatprep.subr.mxu0 0.0
    %3581 = vmatpush2.msra.mxu0 0.0
    %3582 = vmatprep.subr.mxu0 0.0
    %3583 = vmatpush2.msra.mxu0 0.0
    %3584 = vmatprep.subr.mxu0 0.0
    %3585 = vmatpush2.msra.mxu0 0.0
    %3586 = vmatprep.subr.mxu0 0.0
    %3587 = vmatpush2.msra.mxu0 0.0
    %3588 = vmatprep.subr.mxu0 0.0
    %3589 = vmatpush2.msra.mxu0 0.0
    %3590 = vmatprep.subr.mxu0 0.0
    %3591 = vmatpush2.msra.mxu0 0.0
    %3592 = vmatprep.subr.mxu0 0.0
    %3593 = vmatpush2.msra.mxu0 0.0
    %3594 = vmatprep.subr.mxu0 0.0
    %3595 = vmatpush2.msra.mxu0 0.0
    %3596 = vmatprep.mubr.f32.mxu0 0.0
    %v3597 = vand.u32 %v3116, 4294901760
    %3598 = vmatmul.mubr.f32.gmra.mxu0 %v3597
    %v3599 = vpop.f32.mrf.mxu0
    %v3600 = vadd.f32 %v3525, %v3599
    %v3601 = vpop.f32.mrf.mxu0
    %3602 = vdwg.mxu0
    %v3603 = vadd.f32 %v3115, %v3600
    %s3604 = scalar_lea.vmem [#allocation3], 40
    %v3605 = vld [vmem:[%s3604] sm:$0xff]
    %3606 = vrot.lane.b32.xlu0 %v3101, 32
    %v3607 = vpop.permute.xlu0 %3606
    %v3608 = vsel %vm104, %v3607, 0
    %3610 = vmatprep.subr.mxu0 0.0
    %3611 = vmatpush1.msra.mxu0 0.0
    %3612 = vmatprep.subr.mxu0 0.0
    %3613 = vmatpush1.msra.mxu0 0.0
    %3614 = vmatprep.subr.mxu0 0.0
    %3615 = vmatpush1.msra.mxu0 0.0
    %3616 = vmatprep.subr.mxu0 0.0
    %3617 = vmatpush1.msra.mxu0 0.0
    %3618 = vmatprep.subr.mxu0 0.0
    %3619 = vmatpush1.msra.mxu0 0.0
    %3620 = vmatprep.subr.mxu0 0.0
    %3621 = vmatpush1.msra.mxu0 0.0
    %3622 = vmatprep.subr.mxu0 0.0
    %3623 = vmatpush1.msra.mxu0 0.0
    %3624 = vmatprep.subr.mxu0 0.0
    %3625 = vmatpush1.msra.mxu0 0.0
    %3626 = vmatprep.subr.mxu0 0.0
    %3627 = vmatpush1.msra.mxu0 0.0
    %3628 = vmatprep.subr.mxu0 0.0
    %3629 = vmatpush1.msra.mxu0 0.0
    %3630 = vmatprep.subr.mxu0 0.0
    %3631 = vmatpush1.msra.mxu0 0.0
    %3632 = vmatprep.subr.mxu0 0.0
    %3633 = vmatpush1.msra.mxu0 0.0
    %3634 = vmatprep.subr.mxu0 0.0
    %v3635 = vand.u32 %v1038, 4294901760
    %3636 = vmatpush1.msra.mxu0 %v3635
    %3637 = vmatprep.subr.mxu0 0.0
    %v3638 = vand.u32 %v1037, 4294901760
    %3639 = vmatpush1.msra.mxu0 %v3638
    %3640 = vmatprep.subr.mxu0 0.0
    %v3641 = vand.u32 %v1036, 4294901760
    %3642 = vmatpush1.msra.mxu0 %v3641
    %3643 = vmatprep.subr.mxu0 0.0
    %v3644 = vand.u32 %v1035, 4294901760
    %3645 = vmatpush1.msra.mxu0 %v3644
    %3646 = vmatprep.subr.mxu0 0.0
    %3647 = vmatpush2.msra.mxu0 0.0
    %3648 = vmatprep.subr.mxu0 0.0
    %3649 = vmatpush2.msra.mxu0 0.0
    %3650 = vmatprep.subr.mxu0 0.0
    %3651 = vmatpush2.msra.mxu0 0.0
    %3652 = vmatprep.subr.mxu0 0.0
    %3653 = vmatpush2.msra.mxu0 0.0
    %3654 = vmatprep.subr.mxu0 0.0
    %3655 = vmatpush2.msra.mxu0 0.0
    %3656 = vmatprep.subr.mxu0 0.0
    %3657 = vmatpush2.msra.mxu0 0.0
    %3658 = vmatprep.subr.mxu0 0.0
    %3659 = vmatpush2.msra.mxu0 0.0
    %3660 = vmatprep.subr.mxu0 0.0
    %3661 = vmatpush2.msra.mxu0 0.0
    %3662 = vmatprep.subr.mxu0 0.0
    %3663 = vmatpush2.msra.mxu0 0.0
    %3664 = vmatprep.subr.mxu0 0.0
    %3665 = vmatpush2.msra.mxu0 0.0
    %3666 = vmatprep.subr.mxu0 0.0
    %3667 = vmatpush2.msra.mxu0 0.0
    %3668 = vmatprep.subr.mxu0 0.0
    %3669 = vmatpush2.msra.mxu0 0.0
    %3670 = vmatprep.subr.mxu0 0.0
    %3671 = vmatpush2.msra.mxu0 0.0
    %3672 = vmatprep.subr.mxu0 0.0
    %3673 = vmatpush2.msra.mxu0 0.0
    %3674 = vmatprep.subr.mxu0 0.0
    %3675 = vmatpush2.msra.mxu0 0.0
    %3676 = vmatprep.subr.mxu0 0.0
    %3677 = vmatpush2.msra.mxu0 0.0
    %3678 = vmatprep.mubr.f32.mxu0 0.0
    %v3679 = vand.u32 %v3608, 4294901760
    %v3680 = vsub.f32 %v3608, %v3679
    %v3681 = vand.u32 %v3680, 4294901760
    %v3682 = vsub.f32 %v3680, %v3681
    %v3683 = vand.u32 %v3682, 4294901760
    %3684 = vmatmul.mubr.f32.gmra.mxu0 %v3683
    %v3685 = vpop.f32.mrf.mxu0
    %v3686 = vadd.f32 0.0, %v3685
    %v3687 = vpop.f32.mrf.mxu0
    %3688 = vdwg.mxu0
    %3689 = vmatprep.subr.mxu0 0.0
    %3690 = vmatpush1.msra.mxu0 0.0
    %3691 = vmatprep.subr.mxu0 0.0
    %3692 = vmatpush1.msra.mxu0 0.0
    %3693 = vmatprep.subr.mxu0 0.0
    %3694 = vmatpush1.msra.mxu0 0.0
    %3695 = vmatprep.subr.mxu0 0.0
    %3696 = vmatpush1.msra.mxu0 0.0
    %3697 = vmatprep.subr.mxu0 0.0
    %3698 = vmatpush1.msra.mxu0 0.0
    %3699 = vmatprep.subr.mxu0 0.0
    %3700 = vmatpush1.msra.mxu0 0.0
    %3701 = vmatprep.subr.mxu0 0.0
    %3702 = vmatpush1.msra.mxu0 0.0
    %3703 = vmatprep.subr.mxu0 0.0
    %3704 = vmatpush1.msra.mxu0 0.0
    %3705 = vmatprep.subr.mxu0 0.0
    %3706 = vmatpush1.msra.mxu0 0.0
    %3707 = vmatprep.subr.mxu0 0.0
    %3708 = vmatpush1.msra.mxu0 0.0
    %3709 = vmatprep.subr.mxu0 0.0
    %3710 = vmatpush1.msra.mxu0 0.0
    %3711 = vmatprep.subr.mxu0 0.0
    %3712 = vmatpush1.msra.mxu0 0.0
    %3713 = vmatprep.subr.mxu0 0.0
    %v3714 = vand.u32 %v1038, 4294901760
    %v3715 = vsub.f32 %v1038, %v3714
    %v3716 = vand.u32 %v3715, 4294901760
    %v3717 = vsub.f32 %v3715, %v3716
    %v3718 = vand.u32 %v3717, 4294901760
    %3719 = vmatpush1.msra.mxu0 %v3718
    %3720 = vmatprep.subr.mxu0 0.0
    %v3721 = vand.u32 %v1037, 4294901760
    %v3722 = vsub.f32 %v1037, %v3721
    %v3723 = vand.u32 %v3722, 4294901760
    %v3724 = vsub.f32 %v3722, %v3723
    %v3725 = vand.u32 %v3724, 4294901760
    %3726 = vmatpush1.msra.mxu0 %v3725
    %3727 = vmatprep.subr.mxu0 0.0
    %v3728 = vand.u32 %v1036, 4294901760
    %v3729 = vsub.f32 %v1036, %v3728
    %v3730 = vand.u32 %v3729, 4294901760
    %v3731 = vsub.f32 %v3729, %v3730
    %v3732 = vand.u32 %v3731, 4294901760
    %3733 = vmatpush1.msra.mxu0 %v3732
    %3734 = vmatprep.subr.mxu0 0.0
    %v3735 = vand.u32 %v1035, 4294901760
    %v3736 = vsub.f32 %v1035, %v3735
    %v3737 = vand.u32 %v3736, 4294901760
    %v3738 = vsub.f32 %v3736, %v3737
    %v3739 = vand.u32 %v3738, 4294901760
    %3740 = vmatpush1.msra.mxu0 %v3739
    %3741 = vmatprep.subr.mxu0 0.0
    %3742 = vmatpush2.msra.mxu0 0.0
    %3743 = vmatprep.subr.mxu0 0.0
    %3744 = vmatpush2.msra.mxu0 0.0
    %3745 = vmatprep.subr.mxu0 0.0
    %3746 = vmatpush2.msra.mxu0 0.0
    %3747 = vmatprep.subr.mxu0 0.0
    %3748 = vmatpush2.msra.mxu0 0.0
    %3749 = vmatprep.subr.mxu0 0.0
    %3750 = vmatpush2.msra.mxu0 0.0
    %3751 = vmatprep.subr.mxu0 0.0
    %3752 = vmatpush2.msra.mxu0 0.0
    %3753 = vmatprep.subr.mxu0 0.0
    %3754 = vmatpush2.msra.mxu0 0.0
    %3755 = vmatprep.subr.mxu0 0.0
    %3756 = vmatpush2.msra.mxu0 0.0
    %3757 = vmatprep.subr.mxu0 0.0
    %3758 = vmatpush2.msra.mxu0 0.0
    %3759 = vmatprep.subr.mxu0 0.0
    %3760 = vmatpush2.msra.mxu0 0.0
    %3761 = vmatprep.subr.mxu0 0.0
    %3762 = vmatpush2.msra.mxu0 0.0
    %3763 = vmatprep.subr.mxu0 0.0
    %3764 = vmatpush2.msra.mxu0 0.0
    %3765 = vmatprep.subr.mxu0 0.0
    %3766 = vmatpush2.msra.mxu0 0.0
    %3767 = vmatprep.subr.mxu0 0.0
    %3768 = vmatpush2.msra.mxu0 0.0
    %3769 = vmatprep.subr.mxu0 0.0
    %3770 = vmatpush2.msra.mxu0 0.0
    %3771 = vmatprep.subr.mxu0 0.0
    %3772 = vmatpush2.msra.mxu0 0.0
    %3773 = vmatprep.mubr.f32.mxu0 0.0
    %v3774 = vand.u32 %v3608, 4294901760
    %3775 = vmatmul.mubr.f32.gmra.mxu0 %v3774
    %v3776 = vpop.f32.mrf.mxu0
    %v3777 = vadd.f32 %v3686, %v3776
    %v3778 = vpop.f32.mrf.mxu0
    %3779 = vdwg.mxu0
    %3780 = vmatprep.subr.mxu0 0.0
    %3781 = vmatpush1.msra.mxu0 0.0
    %3782 = vmatprep.subr.mxu0 0.0
    %3783 = vmatpush1.msra.mxu0 0.0
    %3784 = vmatprep.subr.mxu0 0.0
    %3785 = vmatpush1.msra.mxu0 0.0
    %3786 = vmatprep.subr.mxu0 0.0
    %3787 = vmatpush1.msra.mxu0 0.0
    %3788 = vmatprep.subr.mxu0 0.0
    %3789 = vmatpush1.msra.mxu0 0.0
    %3790 = vmatprep.subr.mxu0 0.0
    %3791 = vmatpush1.msra.mxu0 0.0
    %3792 = vmatprep.subr.mxu0 0.0
    %3793 = vmatpush1.msra.mxu0 0.0
    %3794 = vmatprep.subr.mxu0 0.0
    %3795 = vmatpush1.msra.mxu0 0.0
    %3796 = vmatprep.subr.mxu0 0.0
    %3797 = vmatpush1.msra.mxu0 0.0
    %3798 = vmatprep.subr.mxu0 0.0
    %3799 = vmatpush1.msra.mxu0 0.0
    %3800 = vmatprep.subr.mxu0 0.0
    %3801 = vmatpush1.msra.mxu0 0.0
    %3802 = vmatprep.subr.mxu0 0.0
    %3803 = vmatpush1.msra.mxu0 0.0
    %3804 = vmatprep.subr.mxu0 0.0
    %v3805 = vand.u32 %v1038, 4294901760
    %v3806 = vsub.f32 %v1038, %v3805
    %3807 = vmatpush1.msra.mxu0 %v3806
    %3808 = vmatprep.subr.mxu0 0.0
    %v3809 = vand.u32 %v1037, 4294901760
    %v3810 = vsub.f32 %v1037, %v3809
    %3811 = vmatpush1.msra.mxu0 %v3810
    %3812 = vmatprep.subr.mxu0 0.0
    %v3813 = vand.u32 %v1036, 4294901760
    %v3814 = vsub.f32 %v1036, %v3813
    %3815 = vmatpush1.msra.mxu0 %v3814
    %3816 = vmatprep.subr.mxu0 0.0
    %v3817 = vand.u32 %v1035, 4294901760
    %v3818 = vsub.f32 %v1035, %v3817
    %3819 = vmatpush1.msra.mxu0 %v3818
    %3820 = vmatprep.subr.mxu0 0.0
    %3821 = vmatpush2.msra.mxu0 0.0
    %3822 = vmatprep.subr.mxu0 0.0
    %3823 = vmatpush2.msra.mxu0 0.0
    %3824 = vmatprep.subr.mxu0 0.0
    %3825 = vmatpush2.msra.mxu0 0.0
    %3826 = vmatprep.subr.mxu0 0.0
    %3827 = vmatpush2.msra.mxu0 0.0
    %3828 = vmatprep.subr.mxu0 0.0
    %3829 = vmatpush2.msra.mxu0 0.0
    %3830 = vmatprep.subr.mxu0 0.0
    %3831 = vmatpush2.msra.mxu0 0.0
    %3832 = vmatprep.subr.mxu0 0.0
    %3833 = vmatpush2.msra.mxu0 0.0
    %3834 = vmatprep.subr.mxu0 0.0
    %3835 = vmatpush2.msra.mxu0 0.0
    %3836 = vmatprep.subr.mxu0 0.0
    %3837 = vmatpush2.msra.mxu0 0.0
    %3838 = vmatprep.subr.mxu0 0.0
    %3839 = vmatpush2.msra.mxu0 0.0
    %3840 = vmatprep.subr.mxu0 0.0
    %3841 = vmatpush2.msra.mxu0 0.0
    %3842 = vmatprep.subr.mxu0 0.0
    %3843 = vmatpush2.msra.mxu0 0.0
    %3844 = vmatprep.subr.mxu0 0.0
    %3845 = vmatpush2.msra.mxu0 0.0
    %3846 = vmatprep.subr.mxu0 0.0
    %3847 = vmatpush2.msra.mxu0 0.0
    %3848 = vmatprep.subr.mxu0 0.0
    %3849 = vmatpush2.msra.mxu0 0.0
    %3850 = vmatprep.subr.mxu0 0.0
    %3851 = vmatpush2.msra.mxu0 0.0
    %3852 = vmatprep.mubr.f32.mxu0 0.0
    %v3853 = vand.u32 %v3608, 4294901760
    %v3854 = vsub.f32 %v3608, %v3853
    %3855 = vmatmul.mubr.f32.gmra.mxu0 %v3854
    %v3856 = vpop.f32.mrf.mxu0
    %v3857 = vadd.f32 %v3777, %v3856
    %v3858 = vpop.f32.mrf.mxu0
    %3859 = vdwg.mxu0
    %3860 = vmatprep.subr.mxu0 0.0
    %3861 = vmatpush1.msra.mxu0 0.0
    %3862 = vmatprep.subr.mxu0 0.0
    %3863 = vmatpush1.msra.mxu0 0.0
    %3864 = vmatprep.subr.mxu0 0.0
    %3865 = vmatpush1.msra.mxu0 0.0
    %3866 = vmatprep.subr.mxu0 0.0
    %3867 = vmatpush1.msra.mxu0 0.0
    %3868 = vmatprep.subr.mxu0 0.0
    %3869 = vmatpush1.msra.mxu0 0.0
    %3870 = vmatprep.subr.mxu0 0.0
    %3871 = vmatpush1.msra.mxu0 0.0
    %3872 = vmatprep.subr.mxu0 0.0
    %3873 = vmatpush1.msra.mxu0 0.0
    %3874 = vmatprep.subr.mxu0 0.0
    %3875 = vmatpush1.msra.mxu0 0.0
    %3876 = vmatprep.subr.mxu0 0.0
    %3877 = vmatpush1.msra.mxu0 0.0
    %3878 = vmatprep.subr.mxu0 0.0
    %3879 = vmatpush1.msra.mxu0 0.0
    %3880 = vmatprep.subr.mxu0 0.0
    %3881 = vmatpush1.msra.mxu0 0.0
    %3882 = vmatprep.subr.mxu0 0.0
    %3883 = vmatpush1.msra.mxu0 0.0
    %3884 = vmatprep.subr.mxu0 0.0
    %v3885 = vand.u32 %v1038, 4294901760
    %3886 = vmatpush1.msra.mxu0 %v3885
    %3887 = vmatprep.subr.mxu0 0.0
    %v3888 = vand.u32 %v1037, 4294901760
    %3889 = vmatpush1.msra.mxu0 %v3888
    %3890 = vmatprep.subr.mxu0 0.0
    %v3891 = vand.u32 %v1036, 4294901760
    %3892 = vmatpush1.msra.mxu0 %v3891
    %3893 = vmatprep.subr.mxu0 0.0
    %v3894 = vand.u32 %v1035, 4294901760
    %3895 = vmatpush1.msra.mxu0 %v3894
    %3896 = vmatprep.subr.mxu0 0.0
    %3897 = vmatpush2.msra.mxu0 0.0
    %3898 = vmatprep.subr.mxu0 0.0
    %3899 = vmatpush2.msra.mxu0 0.0
    %3900 = vmatprep.subr.mxu0 0.0
    %3901 = vmatpush2.msra.mxu0 0.0
    %3902 = vmatprep.subr.mxu0 0.0
    %3903 = vmatpush2.msra.mxu0 0.0
    %3904 = vmatprep.subr.mxu0 0.0
    %3905 = vmatpush2.msra.mxu0 0.0
    %3906 = vmatprep.subr.mxu0 0.0
    %3907 = vmatpush2.msra.mxu0 0.0
    %3908 = vmatprep.subr.mxu0 0.0
    %3909 = vmatpush2.msra.mxu0 0.0
    %3910 = vmatprep.subr.mxu0 0.0
    %3911 = vmatpush2.msra.mxu0 0.0
    %3912 = vmatprep.subr.mxu0 0.0
    %3913 = vmatpush2.msra.mxu0 0.0
    %3914 = vmatprep.subr.mxu0 0.0
    %3915 = vmatpush2.msra.mxu0 0.0
    %3916 = vmatprep.subr.mxu0 0.0
    %3917 = vmatpush2.msra.mxu0 0.0
    %3918 = vmatprep.subr.mxu0 0.0
    %3919 = vmatpush2.msra.mxu0 0.0
    %3920 = vmatprep.subr.mxu0 0.0
    %3921 = vmatpush2.msra.mxu0 0.0
    %3922 = vmatprep.subr.mxu0 0.0
    %3923 = vmatpush2.msra.mxu0 0.0
    %3924 = vmatprep.subr.mxu0 0.0
    %3925 = vmatpush2.msra.mxu0 0.0
    %3926 = vmatprep.subr.mxu0 0.0
    %3927 = vmatpush2.msra.mxu0 0.0
    %3928 = vmatprep.mubr.f32.mxu0 0.0
    %v3929 = vand.u32 %v3608, 4294901760
    %v3930 = vsub.f32 %v3608, %v3929
    %v3931 = vand.u32 %v3930, 4294901760
    %3932 = vmatmul.mubr.f32.gmra.mxu0 %v3931
    %v3933 = vpop.f32.mrf.mxu0
    %v3934 = vadd.f32 %v3857, %v3933
    %v3935 = vpop.f32.mrf.mxu0
    %3936 = vdwg.mxu0
    %3937 = vmatprep.subr.mxu0 0.0
    %3938 = vmatpush1.msra.mxu0 0.0
    %3939 = vmatprep.subr.mxu0 0.0
    %3940 = vmatpush1.msra.mxu0 0.0
    %3941 = vmatprep.subr.mxu0 0.0
    %3942 = vmatpush1.msra.mxu0 0.0
    %3943 = vmatprep.subr.mxu0 0.0
    %3944 = vmatpush1.msra.mxu0 0.0
    %3945 = vmatprep.subr.mxu0 0.0
    %3946 = vmatpush1.msra.mxu0 0.0
    %3947 = vmatprep.subr.mxu0 0.0
    %3948 = vmatpush1.msra.mxu0 0.0
    %3949 = vmatprep.subr.mxu0 0.0
    %3950 = vmatpush1.msra.mxu0 0.0
    %3951 = vmatprep.subr.mxu0 0.0
    %3952 = vmatpush1.msra.mxu0 0.0
    %3953 = vmatprep.subr.mxu0 0.0
    %3954 = vmatpush1.msra.mxu0 0.0
    %3955 = vmatprep.subr.mxu0 0.0
    %3956 = vmatpush1.msra.mxu0 0.0
    %3957 = vmatprep.subr.mxu0 0.0
    %3958 = vmatpush1.msra.mxu0 0.0
    %3959 = vmatprep.subr.mxu0 0.0
    %3960 = vmatpush1.msra.mxu0 0.0
    %3961 = vmatprep.subr.mxu0 0.0
    %v3962 = vand.u32 %v1038, 4294901760
    %v3963 = vsub.f32 %v1038, %v3962
    %v3964 = vand.u32 %v3963, 4294901760
    %3965 = vmatpush1.msra.mxu0 %v3964
    %3966 = vmatprep.subr.mxu0 0.0
    %v3967 = vand.u32 %v1037, 4294901760
    %v3968 = vsub.f32 %v1037, %v3967
    %v3969 = vand.u32 %v3968, 4294901760
    %3970 = vmatpush1.msra.mxu0 %v3969
    %3971 = vmatprep.subr.mxu0 0.0
    %v3972 = vand.u32 %v1036, 4294901760
    %v3973 = vsub.f32 %v1036, %v3972
    %v3974 = vand.u32 %v3973, 4294901760
    %3975 = vmatpush1.msra.mxu0 %v3974
    %3976 = vmatprep.subr.mxu0 0.0
    %v3977 = vand.u32 %v1035, 4294901760
    %v3978 = vsub.f32 %v1035, %v3977
    %v3979 = vand.u32 %v3978, 4294901760
    %3980 = vmatpush1.msra.mxu0 %v3979
    %3981 = vmatprep.subr.mxu0 0.0
    %3982 = vmatpush2.msra.mxu0 0.0
    %3983 = vmatprep.subr.mxu0 0.0
    %3984 = vmatpush2.msra.mxu0 0.0
    %3985 = vmatprep.subr.mxu0 0.0
    %3986 = vmatpush2.msra.mxu0 0.0
    %3987 = vmatprep.subr.mxu0 0.0
    %3988 = vmatpush2.msra.mxu0 0.0
    %3989 = vmatprep.subr.mxu0 0.0
    %3990 = vmatpush2.msra.mxu0 0.0
    %3991 = vmatprep.subr.mxu0 0.0
    %3992 = vmatpush2.msra.mxu0 0.0
    %3993 = vmatprep.subr.mxu0 0.0
    %3994 = vmatpush2.msra.mxu0 0.0
    %3995 = vmatprep.subr.mxu0 0.0
    %3996 = vmatpush2.msra.mxu0 0.0
    %3997 = vmatprep.subr.mxu0 0.0
    %3998 = vmatpush2.msra.mxu0 0.0
    %3999 = vmatprep.subr.mxu0 0.0
    %4000 = vmatpush2.msra.mxu0 0.0
    %4001 = vmatprep.subr.mxu0 0.0
    %4002 = vmatpush2.msra.mxu0 0.0
    %4003 = vmatprep.subr.mxu0 0.0
    %4004 = vmatpush2.msra.mxu0 0.0
    %4005 = vmatprep.subr.mxu0 0.0
    %4006 = vmatpush2.msra.mxu0 0.0
    %4007 = vmatprep.subr.mxu0 0.0
    %4008 = vmatpush2.msra.mxu0 0.0
    %4009 = vmatprep.subr.mxu0 0.0
    %4010 = vmatpush2.msra.mxu0 0.0
    %4011 = vmatprep.subr.mxu0 0.0
    %4012 = vmatpush2.msra.mxu0 0.0
    %4013 = vmatprep.mubr.f32.mxu0 0.0
    %v4014 = vand.u32 %v3608, 4294901760
    %4015 = vmatmul.mubr.f32.gmra.mxu0 %v4014
    %v4016 = vpop.f32.mrf.mxu0
    %v4017 = vadd.f32 %v3934, %v4016
    %v4018 = vpop.f32.mrf.mxu0
    %4019 = vdwg.mxu0
    %4020 = vmatprep.subr.mxu0 0.0
    %4021 = vmatpush1.msra.mxu0 0.0
    %4022 = vmatprep.subr.mxu0 0.0
    %4023 = vmatpush1.msra.mxu0 0.0
    %4024 = vmatprep.subr.mxu0 0.0
    %4025 = vmatpush1.msra.mxu0 0.0
    %4026 = vmatprep.subr.mxu0 0.0
    %4027 = vmatpush1.msra.mxu0 0.0
    %4028 = vmatprep.subr.mxu0 0.0
    %4029 = vmatpush1.msra.mxu0 0.0
    %4030 = vmatprep.subr.mxu0 0.0
    %4031 = vmatpush1.msra.mxu0 0.0
    %4032 = vmatprep.subr.mxu0 0.0
    %4033 = vmatpush1.msra.mxu0 0.0
    %4034 = vmatprep.subr.mxu0 0.0
    %4035 = vmatpush1.msra.mxu0 0.0
    %4036 = vmatprep.subr.mxu0 0.0
    %4037 = vmatpush1.msra.mxu0 0.0
    %4038 = vmatprep.subr.mxu0 0.0
    %4039 = vmatpush1.msra.mxu0 0.0
    %4040 = vmatprep.subr.mxu0 0.0
    %4041 = vmatpush1.msra.mxu0 0.0
    %4042 = vmatprep.subr.mxu0 0.0
    %4043 = vmatpush1.msra.mxu0 0.0
    %4044 = vmatprep.subr.mxu0 0.0
    %v4045 = vand.u32 %v1038, 4294901760
    %4046 = vmatpush1.msra.mxu0 %v4045
    %4047 = vmatprep.subr.mxu0 0.0
    %v4048 = vand.u32 %v1037, 4294901760
    %4049 = vmatpush1.msra.mxu0 %v4048
    %4050 = vmatprep.subr.mxu0 0.0
    %v4051 = vand.u32 %v1036, 4294901760
    %4052 = vmatpush1.msra.mxu0 %v4051
    %4053 = vmatprep.subr.mxu0 0.0
    %v4054 = vand.u32 %v1035, 4294901760
    %4055 = vmatpush1.msra.mxu0 %v4054
    %4056 = vmatprep.subr.mxu0 0.0
    %4057 = vmatpush2.msra.mxu0 0.0
    %4058 = vmatprep.subr.mxu0 0.0
    %4059 = vmatpush2.msra.mxu0 0.0
    %4060 = vmatprep.subr.mxu0 0.0
    %4061 = vmatpush2.msra.mxu0 0.0
    %4062 = vmatprep.subr.mxu0 0.0
    %4063 = vmatpush2.msra.mxu0 0.0
    %4064 = vmatprep.subr.mxu0 0.0
    %4065 = vmatpush2.msra.mxu0 0.0
    %4066 = vmatprep.subr.mxu0 0.0
    %4067 = vmatpush2.msra.mxu0 0.0
    %4068 = vmatprep.subr.mxu0 0.0
    %4069 = vmatpush2.msra.mxu0 0.0
    %4070 = vmatprep.subr.mxu0 0.0
    %4071 = vmatpush2.msra.mxu0 0.0
    %4072 = vmatprep.subr.mxu0 0.0
    %4073 = vmatpush2.msra.mxu0 0.0
    %4074 = vmatprep.subr.mxu0 0.0
    %4075 = vmatpush2.msra.mxu0 0.0
    %4076 = vmatprep.subr.mxu0 0.0
    %4077 = vmatpush2.msra.mxu0 0.0
    %4078 = vmatprep.subr.mxu0 0.0
    %4079 = vmatpush2.msra.mxu0 0.0
    %4080 = vmatprep.subr.mxu0 0.0
    %4081 = vmatpush2.msra.mxu0 0.0
    %4082 = vmatprep.subr.mxu0 0.0
    %4083 = vmatpush2.msra.mxu0 0.0
    %4084 = vmatprep.subr.mxu0 0.0
    %4085 = vmatpush2.msra.mxu0 0.0
    %4086 = vmatprep.subr.mxu0 0.0
    %4087 = vmatpush2.msra.mxu0 0.0
    %4088 = vmatprep.mubr.f32.mxu0 0.0
    %v4089 = vand.u32 %v3608, 4294901760
    %4090 = vmatmul.mubr.f32.gmra.mxu0 %v4089
    %v4091 = vpop.f32.mrf.mxu0
    %v4092 = vadd.f32 %v4017, %v4091
    %v4093 = vpop.f32.mrf.mxu0
    %4094 = vdwg.mxu0
    %v4095 = vadd.f32 %v3605, %v4092
    %v4096 = vmul.f32 %v3603, %v1044
    %v4097 = vtanh.pop %v4096
    %v4098 = vmul.f32 %v4097, %v1044
    %v4099 = vadd.f32 %v4098, %v1045
    %v4100 = vmul.f32 %v4099, %v3074
    %4102 = vrot.lane.b32.xlu0 %v4099, 64
    %v4103 = vpop.permute.xlu0 %4102
    %v4105 = vmul.f32 %v4099, %v4103
    %4107 = vrot.lane.b32.xlu0 %v4105, 32
    %v4108 = vpop.permute.xlu0 %4107
    %v4110 = vadd.f32 %v4100, %v4108
    %v4111 = vtanh.pop %v4110
    %4113 = vrot.lane.b32.xlu0 %v4111, 64
    %v4114 = vpop.permute.xlu0 %4113
    %v4116 = vmul.f32 %v4099, %v4114
    %v4117 = vmul.f32 %v4095, %v1044
    %v4118 = vtanh.pop %v4117
    %v4119 = vmul.f32 %v4118, %v1044
    %v4120 = vadd.f32 %v4119, %v1045
    %v4121 = vmul.f32 %v4120, %v3095
    %4123 = vrot.lane.b32.xlu0 %v4120, 64
    %v4124 = vpop.permute.xlu0 %4123
    %v4126 = vmul.f32 %v4120, %v4124
    %4128 = vrot.lane.b32.xlu0 %v4126, 32
    %v4129 = vpop.permute.xlu0 %4128
    %v4131 = vadd.f32 %v4121, %v4129
    %v4132 = vtanh.pop %v4131
    %4134 = vrot.lane.b32.xlu0 %v4132, 64
    %v4135 = vpop.permute.xlu0 %4134
    %v4137 = vmul.f32 %v4120, %v4135
    %4139 = vrot.lane.b32.xlu0 %v4116, 32
    %v4140 = vpop.permute.xlu0 %4139
    %s4142 = scalar_lea.vmem [#allocation12], 16
    %4143 = vst.msk [vmem:[%s4142] sm:$0xff] %vm104, %v4140
    %4145 = vrot.lane.b32.xlu0 %v4137, 64
    %v4146 = vpop.permute.xlu0 %4145
    %s4148 = scalar_lea.vmem [#allocation12], 40
    %4149 = vst.msk [vmem:[%s4148] sm:$0xff] %vm2076, %v4146
    %s4150 = scalar_lea.vmem [#allocation2], 24
    %v4151 = vld [vmem:[%s4150] sm:$0xff]
    %v4152 = vsel %vm104, %v4140, 0
    %4154 = vmatprep.subr.mxu0 0.0
    %4155 = vmatpush1.msra.mxu0 0.0
    %4156 = vmatprep.subr.mxu0 0.0
    %4157 = vmatpush1.msra.mxu0 0.0
    %4158 = vmatprep.subr.mxu0 0.0
    %4159 = vmatpush1.msra.mxu0 0.0
    %4160 = vmatprep.subr.mxu0 0.0
    %4161 = vmatpush1.msra.mxu0 0.0
    %4162 = vmatprep.subr.mxu0 0.0
    %4163 = vmatpush1.msra.mxu0 0.0
    %4164 = vmatprep.subr.mxu0 0.0
    %4165 = vmatpush1.msra.mxu0 0.0
    %4166 = vmatprep.subr.mxu0 0.0
    %4167 = vmatpush1.msra.mxu0 0.0
    %4168 = vmatprep.subr.mxu0 0.0
    %4169 = vmatpush1.msra.mxu0 0.0
    %4170 = vmatprep.subr.mxu0 0.0
    %4171 = vmatpush1.msra.mxu0 0.0
    %4172 = vmatprep.subr.mxu0 0.0
    %4173 = vmatpush1.msra.mxu0 0.0
    %4174 = vmatprep.subr.mxu0 0.0
    %4175 = vmatpush1.msra.mxu0 0.0
    %4176 = vmatprep.subr.mxu0 0.0
    %4177 = vmatpush1.msra.mxu0 0.0
    %4178 = vmatprep.subr.mxu0 0.0
    %v4179 = vand.u32 %v1034, 4294901760
    %4180 = vmatpush1.msra.mxu0 %v4179
    %4181 = vmatprep.subr.mxu0 0.0
    %v4182 = vand.u32 %v1033, 4294901760
    %4183 = vmatpush1.msra.mxu0 %v4182
    %4184 = vmatprep.subr.mxu0 0.0
    %v4185 = vand.u32 %v1032, 4294901760
    %4186 = vmatpush1.msra.mxu0 %v4185
    %4187 = vmatprep.subr.mxu0 0.0
    %v4188 = vand.u32 %v1031, 4294901760
    %4189 = vmatpush1.msra.mxu0 %v4188
    %4190 = vmatprep.subr.mxu0 0.0
    %4191 = vmatpush2.msra.mxu0 0.0
    %4192 = vmatprep.subr.mxu0 0.0
    %4193 = vmatpush2.msra.mxu0 0.0
    %4194 = vmatprep.subr.mxu0 0.0
    %4195 = vmatpush2.msra.mxu0 0.0
    %4196 = vmatprep.subr.mxu0 0.0
    %4197 = vmatpush2.msra.mxu0 0.0
    %4198 = vmatprep.subr.mxu0 0.0
    %4199 = vmatpush2.msra.mxu0 0.0
    %4200 = vmatprep.subr.mxu0 0.0
    %4201 = vmatpush2.msra.mxu0 0.0
    %4202 = vmatprep.subr.mxu0 0.0
    %4203 = vmatpush2.msra.mxu0 0.0
    %4204 = vmatprep.subr.mxu0 0.0
    %4205 = vmatpush2.msra.mxu0 0.0
    %4206 = vmatprep.subr.mxu0 0.0
    %4207 = vmatpush2.msra.mxu0 0.0
    %4208 = vmatprep.subr.mxu0 0.0
    %4209 = vmatpush2.msra.mxu0 0.0
    %4210 = vmatprep.subr.mxu0 0.0
    %4211 = vmatpush2.msra.mxu0 0.0
    %4212 = vmatprep.subr.mxu0 0.0
    %4213 = vmatpush2.msra.mxu0 0.0
    %4214 = vmatprep.subr.mxu0 0.0
    %4215 = vmatpush2.msra.mxu0 0.0
    %4216 = vmatprep.subr.mxu0 0.0
    %4217 = vmatpush2.msra.mxu0 0.0
    %4218 = vmatprep.subr.mxu0 0.0
    %4219 = vmatpush2.msra.mxu0 0.0
    %4220 = vmatprep.subr.mxu0 0.0
    %4221 = vmatpush2.msra.mxu0 0.0
    %4222 = vmatprep.mubr.f32.mxu0 0.0
    %v4223 = vand.u32 %v4152, 4294901760
    %v4224 = vsub.f32 %v4152, %v4223
    %v4225 = vand.u32 %v4224, 4294901760
    %v4226 = vsub.f32 %v4224, %v4225
    %v4227 = vand.u32 %v4226, 4294901760
    %4228 = vmatmul.mubr.f32.gmra.mxu0 %v4227
    %v4229 = vpop.f32.mrf.mxu0
    %v4230 = vadd.f32 0.0, %v4229
    %v4231 = vpop.f32.mrf.mxu0
    %4232 = vdwg.mxu0
    %4233 = vmatprep.subr.mxu0 0.0
    %4234 = vmatpush1.msra.mxu0 0.0
    %4235 = vmatprep.subr.mxu0 0.0
    %4236 = vmatpush1.msra.mxu0 0.0
    %4237 = vmatprep.subr.mxu0 0.0
    %4238 = vmatpush1.msra.mxu0 0.0
    %4239 = vmatprep.subr.mxu0 0.0
    %4240 = vmatpush1.msra.mxu0 0.0
    %4241 = vmatprep.subr.mxu0 0.0
    %4242 = vmatpush1.msra.mxu0 0.0
    %4243 = vmatprep.subr.mxu0 0.0
    %4244 = vmatpush1.msra.mxu0 0.0
    %4245 = vmatprep.subr.mxu0 0.0
    %4246 = vmatpush1.msra.mxu0 0.0
    %4247 = vmatprep.subr.mxu0 0.0
    %4248 = vmatpush1.msra.mxu0 0.0
    %4249 = vmatprep.subr.mxu0 0.0
    %4250 = vmatpush1.msra.mxu0 0.0
    %4251 = vmatprep.subr.mxu0 0.0
    %4252 = vmatpush1.msra.mxu0 0.0
    %4253 = vmatprep.subr.mxu0 0.0
    %4254 = vmatpush1.msra.mxu0 0.0
    %4255 = vmatprep.subr.mxu0 0.0
    %4256 = vmatpush1.msra.mxu0 0.0
    %4257 = vmatprep.subr.mxu0 0.0
    %v4258 = vand.u32 %v1034, 4294901760
    %v4259 = vsub.f32 %v1034, %v4258
    %v4260 = vand.u32 %v4259, 4294901760
    %v4261 = vsub.f32 %v4259, %v4260
    %v4262 = vand.u32 %v4261, 4294901760
    %4263 = vmatpush1.msra.mxu0 %v4262
    %4264 = vmatprep.subr.mxu0 0.0
    %v4265 = vand.u32 %v1033, 4294901760
    %v4266 = vsub.f32 %v1033, %v4265
    %v4267 = vand.u32 %v4266, 4294901760
    %v4268 = vsub.f32 %v4266, %v4267
    %v4269 = vand.u32 %v4268, 4294901760
    %4270 = vmatpush1.msra.mxu0 %v4269
    %4271 = vmatprep.subr.mxu0 0.0
    %v4272 = vand.u32 %v1032, 4294901760
    %v4273 = vsub.f32 %v1032, %v4272
    %v4274 = vand.u32 %v4273, 4294901760
    %v4275 = vsub.f32 %v4273, %v4274
    %v4276 = vand.u32 %v4275, 4294901760
    %4277 = vmatpush1.msra.mxu0 %v4276
    %4278 = vmatprep.subr.mxu0 0.0
    %v4279 = vand.u32 %v1031, 4294901760
    %v4280 = vsub.f32 %v1031, %v4279
    %v4281 = vand.u32 %v4280, 4294901760
    %v4282 = vsub.f32 %v4280, %v4281
    %v4283 = vand.u32 %v4282, 4294901760
    %4284 = vmatpush1.msra.mxu0 %v4283
    %4285 = vmatprep.subr.mxu0 0.0
    %4286 = vmatpush2.msra.mxu0 0.0
    %4287 = vmatprep.subr.mxu0 0.0
    %4288 = vmatpush2.msra.mxu0 0.0
    %4289 = vmatprep.subr.mxu0 0.0
    %4290 = vmatpush2.msra.mxu0 0.0
    %4291 = vmatprep.subr.mxu0 0.0
    %4292 = vmatpush2.msra.mxu0 0.0
    %4293 = vmatprep.subr.mxu0 0.0
    %4294 = vmatpush2.msra.mxu0 0.0
    %4295 = vmatprep.subr.mxu0 0.0
    %4296 = vmatpush2.msra.mxu0 0.0
    %4297 = vmatprep.subr.mxu0 0.0
    %4298 = vmatpush2.msra.mxu0 0.0
    %4299 = vmatprep.subr.mxu0 0.0
    %4300 = vmatpush2.msra.mxu0 0.0
    %4301 = vmatprep.subr.mxu0 0.0
    %4302 = vmatpush2.msra.mxu0 0.0
    %4303 = vmatprep.subr.mxu0 0.0
    %4304 = vmatpush2.msra.mxu0 0.0
    %4305 = vmatprep.subr.mxu0 0.0
    %4306 = vmatpush2.msra.mxu0 0.0
    %4307 = vmatprep.subr.mxu0 0.0
    %4308 = vmatpush2.msra.mxu0 0.0
    %4309 = vmatprep.subr.mxu0 0.0
    %4310 = vmatpush2.msra.mxu0 0.0
    %4311 = vmatprep.subr.mxu0 0.0
    %4312 = vmatpush2.msra.mxu0 0.0
    %4313 = vmatprep.subr.mxu0 0.0
    %4314 = vmatpush2.msra.mxu0 0.0
    %4315 = vmatprep.subr.mxu0 0.0
    %4316 = vmatpush2.msra.mxu0 0.0
    %4317 = vmatprep.mubr.f32.mxu0 0.0
    %v4318 = vand.u32 %v4152, 4294901760
    %4319 = vmatmul.mubr.f32.gmra.mxu0 %v4318
    %v4320 = vpop.f32.mrf.mxu0
    %v4321 = vadd.f32 %v4230, %v4320
    %v4322 = vpop.f32.mrf.mxu0
    %4323 = vdwg.mxu0
    %4324 = vmatprep.subr.mxu0 0.0
    %4325 = vmatpush1.msra.mxu0 0.0
    %4326 = vmatprep.subr.mxu0 0.0
    %4327 = vmatpush1.msra.mxu0 0.0
    %4328 = vmatprep.subr.mxu0 0.0
    %4329 = vmatpush1.msra.mxu0 0.0
    %4330 = vmatprep.subr.mxu0 0.0
    %4331 = vmatpush1.msra.mxu0 0.0
    %4332 = vmatprep.subr.mxu0 0.0
    %4333 = vmatpush1.msra.mxu0 0.0
    %4334 = vmatprep.subr.mxu0 0.0
    %4335 = vmatpush1.msra.mxu0 0.0
    %4336 = vmatprep.subr.mxu0 0.0
    %4337 = vmatpush1.msra.mxu0 0.0
    %4338 = vmatprep.subr.mxu0 0.0
    %4339 = vmatpush1.msra.mxu0 0.0
    %4340 = vmatprep.subr.mxu0 0.0
    %4341 = vmatpush1.msra.mxu0 0.0
    %4342 = vmatprep.subr.mxu0 0.0
    %4343 = vmatpush1.msra.mxu0 0.0
    %4344 = vmatprep.subr.mxu0 0.0
    %4345 = vmatpush1.msra.mxu0 0.0
    %4346 = vmatprep.subr.mxu0 0.0
    %4347 = vmatpush1.msra.mxu0 0.0
    %4348 = vmatprep.subr.mxu0 0.0
    %v4349 = vand.u32 %v1034, 4294901760
    %v4350 = vsub.f32 %v1034, %v4349
    %4351 = vmatpush1.msra.mxu0 %v4350
    %4352 = vmatprep.subr.mxu0 0.0
    %v4353 = vand.u32 %v1033, 4294901760
    %v4354 = vsub.f32 %v1033, %v4353
    %4355 = vmatpush1.msra.mxu0 %v4354
    %4356 = vmatprep.subr.mxu0 0.0
    %v4357 = vand.u32 %v1032, 4294901760
    %v4358 = vsub.f32 %v1032, %v4357
    %4359 = vmatpush1.msra.mxu0 %v4358
    %4360 = vmatprep.subr.mxu0 0.0
    %v4361 = vand.u32 %v1031, 4294901760
    %v4362 = vsub.f32 %v1031, %v4361
    %4363 = vmatpush1.msra.mxu0 %v4362
    %4364 = vmatprep.subr.mxu0 0.0
    %4365 = vmatpush2.msra.mxu0 0.0
    %4366 = vmatprep.subr.mxu0 0.0
    %4367 = vmatpush2.msra.mxu0 0.0
    %4368 = vmatprep.subr.mxu0 0.0
    %4369 = vmatpush2.msra.mxu0 0.0
    %4370 = vmatprep.subr.mxu0 0.0
    %4371 = vmatpush2.msra.mxu0 0.0
    %4372 = vmatprep.subr.mxu0 0.0
    %4373 = vmatpush2.msra.mxu0 0.0
    %4374 = vmatprep.subr.mxu0 0.0
    %4375 = vmatpush2.msra.mxu0 0.0
    %4376 = vmatprep.subr.mxu0 0.0
    %4377 = vmatpush2.msra.mxu0 0.0
    %4378 = vmatprep.subr.mxu0 0.0
    %4379 = vmatpush2.msra.mxu0 0.0
    %4380 = vmatprep.subr.mxu0 0.0
    %4381 = vmatpush2.msra.mxu0 0.0
    %4382 = vmatprep.subr.mxu0 0.0
    %4383 = vmatpush2.msra.mxu0 0.0
    %4384 = vmatprep.subr.mxu0 0.0
    %4385 = vmatpush2.msra.mxu0 0.0
    %4386 = vmatprep.subr.mxu0 0.0
    %4387 = vmatpush2.msra.mxu0 0.0
    %4388 = vmatprep.subr.mxu0 0.0
    %4389 = vmatpush2.msra.mxu0 0.0
    %4390 = vmatprep.subr.mxu0 0.0
    %4391 = vmatpush2.msra.mxu0 0.0
    %4392 = vmatprep.subr.mxu0 0.0
    %4393 = vmatpush2.msra.mxu0 0.0
    %4394 = vmatprep.subr.mxu0 0.0
    %4395 = vmatpush2.msra.mxu0 0.0
    %4396 = vmatprep.mubr.f32.mxu0 0.0
    %v4397 = vand.u32 %v4152, 4294901760
    %v4398 = vsub.f32 %v4152, %v4397
    %4399 = vmatmul.mubr.f32.gmra.mxu0 %v4398
    %v4400 = vpop.f32.mrf.mxu0
    %v4401 = vadd.f32 %v4321, %v4400
    %v4402 = vpop.f32.mrf.mxu0
    %4403 = vdwg.mxu0
    %4404 = vmatprep.subr.mxu0 0.0
    %4405 = vmatpush1.msra.mxu0 0.0
    %4406 = vmatprep.subr.mxu0 0.0
    %4407 = vmatpush1.msra.mxu0 0.0
    %4408 = vmatprep.subr.mxu0 0.0
    %4409 = vmatpush1.msra.mxu0 0.0
    %4410 = vmatprep.subr.mxu0 0.0
    %4411 = vmatpush1.msra.mxu0 0.0
    %4412 = vmatprep.subr.mxu0 0.0
    %4413 = vmatpush1.msra.mxu0 0.0
    %4414 = vmatprep.subr.mxu0 0.0
    %4415 = vmatpush1.msra.mxu0 0.0
    %4416 = vmatprep.subr.mxu0 0.0
    %4417 = vmatpush1.msra.mxu0 0.0
    %4418 = vmatprep.subr.mxu0 0.0
    %4419 = vmatpush1.msra.mxu0 0.0
    %4420 = vmatprep.subr.mxu0 0.0
    %4421 = vmatpush1.msra.mxu0 0.0
    %4422 = vmatprep.subr.mxu0 0.0
    %4423 = vmatpush1.msra.mxu0 0.0
    %4424 = vmatprep.subr.mxu0 0.0
    %4425 = vmatpush1.msra.mxu0 0.0
    %4426 = vmatprep.subr.mxu0 0.0
    %4427 = vmatpush1.msra.mxu0 0.0
    %4428 = vmatprep.subr.mxu0 0.0
    %v4429 = vand.u32 %v1034, 4294901760
    %4430 = vmatpush1.msra.mxu0 %v4429
    %4431 = vmatprep.subr.mxu0 0.0
    %v4432 = vand.u32 %v1033, 4294901760
    %4433 = vmatpush1.msra.mxu0 %v4432
    %4434 = vmatprep.subr.mxu0 0.0
    %v4435 = vand.u32 %v1032, 4294901760
    %4436 = vmatpush1.msra.mxu0 %v4435
    %4437 = vmatprep.subr.mxu0 0.0
    %v4438 = vand.u32 %v1031, 4294901760
    %4439 = vmatpush1.msra.mxu0 %v4438
    %4440 = vmatprep.subr.mxu0 0.0
    %4441 = vmatpush2.msra.mxu0 0.0
    %4442 = vmatprep.subr.mxu0 0.0
    %4443 = vmatpush2.msra.mxu0 0.0
    %4444 = vmatprep.subr.mxu0 0.0
    %4445 = vmatpush2.msra.mxu0 0.0
    %4446 = vmatprep.subr.mxu0 0.0
    %4447 = vmatpush2.msra.mxu0 0.0
    %4448 = vmatprep.subr.mxu0 0.0
    %4449 = vmatpush2.msra.mxu0 0.0
    %4450 = vmatprep.subr.mxu0 0.0
    %4451 = vmatpush2.msra.mxu0 0.0
    %4452 = vmatprep.subr.mxu0 0.0
    %4453 = vmatpush2.msra.mxu0 0.0
    %4454 = vmatprep.subr.mxu0 0.0
    %4455 = vmatpush2.msra.mxu0 0.0
    %4456 = vmatprep.subr.mxu0 0.0
    %4457 = vmatpush2.msra.mxu0 0.0
    %4458 = vmatprep.subr.mxu0 0.0
    %4459 = vmatpush2.msra.mxu0 0.0
    %4460 = vmatprep.subr.mxu0 0.0
    %4461 = vmatpush2.msra.mxu0 0.0
    %4462 = vmatprep.subr.mxu0 0.0
    %4463 = vmatpush2.msra.mxu0 0.0
    %4464 = vmatprep.subr.mxu0 0.0
    %4465 = vmatpush2.msra.mxu0 0.0
    %4466 = vmatprep.subr.mxu0 0.0
    %4467 = vmatpush2.msra.mxu0 0.0
    %4468 = vmatprep.subr.mxu0 0.0
    %4469 = vmatpush2.msra.mxu0 0.0
    %4470 = vmatprep.subr.mxu0 0.0
    %4471 = vmatpush2.msra.mxu0 0.0
    %4472 = vmatprep.mubr.f32.mxu0 0.0
    %v4473 = vand.u32 %v4152, 4294901760
    %v4474 = vsub.f32 %v4152, %v4473
    %v4475 = vand.u32 %v4474, 4294901760
    %4476 = vmatmul.mubr.f32.gmra.mxu0 %v4475
    %v4477 = vpop.f32.mrf.mxu0
    %v4478 = vadd.f32 %v4401, %v4477
    %v4479 = vpop.f32.mrf.mxu0
    %4480 = vdwg.mxu0
    %4481 = vmatprep.subr.mxu0 0.0
    %4482 = vmatpush1.msra.mxu0 0.0
    %4483 = vmatprep.subr.mxu0 0.0
    %4484 = vmatpush1.msra.mxu0 0.0
    %4485 = vmatprep.subr.mxu0 0.0
    %4486 = vmatpush1.msra.mxu0 0.0
    %4487 = vmatprep.subr.mxu0 0.0
    %4488 = vmatpush1.msra.mxu0 0.0
    %4489 = vmatprep.subr.mxu0 0.0
    %4490 = vmatpush1.msra.mxu0 0.0
    %4491 = vmatprep.subr.mxu0 0.0
    %4492 = vmatpush1.msra.mxu0 0.0
    %4493 = vmatprep.subr.mxu0 0.0
    %4494 = vmatpush1.msra.mxu0 0.0
    %4495 = vmatprep.subr.mxu0 0.0
    %4496 = vmatpush1.msra.mxu0 0.0
    %4497 = vmatprep.subr.mxu0 0.0
    %4498 = vmatpush1.msra.mxu0 0.0
    %4499 = vmatprep.subr.mxu0 0.0
    %4500 = vmatpush1.msra.mxu0 0.0
    %4501 = vmatprep.subr.mxu0 0.0
    %4502 = vmatpush1.msra.mxu0 0.0
    %4503 = vmatprep.subr.mxu0 0.0
    %4504 = vmatpush1.msra.mxu0 0.0
    %4505 = vmatprep.subr.mxu0 0.0
    %v4506 = vand.u32 %v1034, 4294901760
    %v4507 = vsub.f32 %v1034, %v4506
    %v4508 = vand.u32 %v4507, 4294901760
    %4509 = vmatpush1.msra.mxu0 %v4508
    %4510 = vmatprep.subr.mxu0 0.0
    %v4511 = vand.u32 %v1033, 4294901760
    %v4512 = vsub.f32 %v1033, %v4511
    %v4513 = vand.u32 %v4512, 4294901760
    %4514 = vmatpush1.msra.mxu0 %v4513
    %4515 = vmatprep.subr.mxu0 0.0
    %v4516 = vand.u32 %v1032, 4294901760
    %v4517 = vsub.f32 %v1032, %v4516
    %v4518 = vand.u32 %v4517, 4294901760
    %4519 = vmatpush1.msra.mxu0 %v4518
    %4520 = vmatprep.subr.mxu0 0.0
    %v4521 = vand.u32 %v1031, 4294901760
    %v4522 = vsub.f32 %v1031, %v4521
    %v4523 = vand.u32 %v4522, 4294901760
    %4524 = vmatpush1.msra.mxu0 %v4523
    %4525 = vmatprep.subr.mxu0 0.0
    %4526 = vmatpush2.msra.mxu0 0.0
    %4527 = vmatprep.subr.mxu0 0.0
    %4528 = vmatpush2.msra.mxu0 0.0
    %4529 = vmatprep.subr.mxu0 0.0
    %4530 = vmatpush2.msra.mxu0 0.0
    %4531 = vmatprep.subr.mxu0 0.0
    %4532 = vmatpush2.msra.mxu0 0.0
    %4533 = vmatprep.subr.mxu0 0.0
    %4534 = vmatpush2.msra.mxu0 0.0
    %4535 = vmatprep.subr.mxu0 0.0
    %4536 = vmatpush2.msra.mxu0 0.0
    %4537 = vmatprep.subr.mxu0 0.0
    %4538 = vmatpush2.msra.mxu0 0.0
    %4539 = vmatprep.subr.mxu0 0.0
    %4540 = vmatpush2.msra.mxu0 0.0
    %4541 = vmatprep.subr.mxu0 0.0
    %4542 = vmatpush2.msra.mxu0 0.0
    %4543 = vmatprep.subr.mxu0 0.0
    %4544 = vmatpush2.msra.mxu0 0.0
    %4545 = vmatprep.subr.mxu0 0.0
    %4546 = vmatpush2.msra.mxu0 0.0
    %4547 = vmatprep.subr.mxu0 0.0
    %4548 = vmatpush2.msra.mxu0 0.0
    %4549 = vmatprep.subr.mxu0 0.0
    %4550 = vmatpush2.msra.mxu0 0.0
    %4551 = vmatprep.subr.mxu0 0.0
    %4552 = vmatpush2.msra.mxu0 0.0
    %4553 = vmatprep.subr.mxu0 0.0
    %4554 = vmatpush2.msra.mxu0 0.0
    %4555 = vmatprep.subr.mxu0 0.0
    %4556 = vmatpush2.msra.mxu0 0.0
    %4557 = vmatprep.mubr.f32.mxu0 0.0
    %v4558 = vand.u32 %v4152, 4294901760
    %4559 = vmatmul.mubr.f32.gmra.mxu0 %v4558
    %v4560 = vpop.f32.mrf.mxu0
    %v4561 = vadd.f32 %v4478, %v4560
    %v4562 = vpop.f32.mrf.mxu0
    %4563 = vdwg.mxu0
    %4564 = vmatprep.subr.mxu0 0.0
    %4565 = vmatpush1.msra.mxu0 0.0
    %4566 = vmatprep.subr.mxu0 0.0
    %4567 = vmatpush1.msra.mxu0 0.0
    %4568 = vmatprep.subr.mxu0 0.0
    %4569 = vmatpush1.msra.mxu0 0.0
    %4570 = vmatprep.subr.mxu0 0.0
    %4571 = vmatpush1.msra.mxu0 0.0
    %4572 = vmatprep.subr.mxu0 0.0
    %4573 = vmatpush1.msra.mxu0 0.0
    %4574 = vmatprep.subr.mxu0 0.0
    %4575 = vmatpush1.msra.mxu0 0.0
    %4576 = vmatprep.subr.mxu0 0.0
    %4577 = vmatpush1.msra.mxu0 0.0
    %4578 = vmatprep.subr.mxu0 0.0
    %4579 = vmatpush1.msra.mxu0 0.0
    %4580 = vmatprep.subr.mxu0 0.0
    %4581 = vmatpush1.msra.mxu0 0.0
    %4582 = vmatprep.subr.mxu0 0.0
    %4583 = vmatpush1.msra.mxu0 0.0
    %4584 = vmatprep.subr.mxu0 0.0
    %4585 = vmatpush1.msra.mxu0 0.0
    %4586 = vmatprep.subr.mxu0 0.0
    %4587 = vmatpush1.msra.mxu0 0.0
    %4588 = vmatprep.subr.mxu0 0.0
    %v4589 = vand.u32 %v1034, 4294901760
    %4590 = vmatpush1.msra.mxu0 %v4589
    %4591 = vmatprep.subr.mxu0 0.0
    %v4592 = vand.u32 %v1033, 4294901760
    %4593 = vmatpush1.msra.mxu0 %v4592
    %4594 = vmatprep.subr.mxu0 0.0
    %v4595 = vand.u32 %v1032, 4294901760
    %4596 = vmatpush1.msra.mxu0 %v4595
    %4597 = vmatprep.subr.mxu0 0.0
    %v4598 = vand.u32 %v1031, 4294901760
    %4599 = vmatpush1.msra.mxu0 %v4598
    %4600 = vmatprep.subr.mxu0 0.0
    %4601 = vmatpush2.msra.mxu0 0.0
    %4602 = vmatprep.subr.mxu0 0.0
    %4603 = vmatpush2.msra.mxu0 0.0
    %4604 = vmatprep.subr.mxu0 0.0
    %4605 = vmatpush2.msra.mxu0 0.0
    %4606 = vmatprep.subr.mxu0 0.0
    %4607 = vmatpush2.msra.mxu0 0.0
    %4608 = vmatprep.subr.mxu0 0.0
    %4609 = vmatpush2.msra.mxu0 0.0
    %4610 = vmatprep.subr.mxu0 0.0
    %4611 = vmatpush2.msra.mxu0 0.0
    %4612 = vmatprep.subr.mxu0 0.0
    %4613 = vmatpush2.msra.mxu0 0.0
    %4614 = vmatprep.subr.mxu0 0.0
    %4615 = vmatpush2.msra.mxu0 0.0
    %4616 = vmatprep.subr.mxu0 0.0
    %4617 = vmatpush2.msra.mxu0 0.0
    %4618 = vmatprep.subr.mxu0 0.0
    %4619 = vmatpush2.msra.mxu0 0.0
    %4620 = vmatprep.subr.mxu0 0.0
    %4621 = vmatpush2.msra.mxu0 0.0
    %4622 = vmatprep.subr.mxu0 0.0
    %4623 = vmatpush2.msra.mxu0 0.0
    %4624 = vmatprep.subr.mxu0 0.0
    %4625 = vmatpush2.msra.mxu0 0.0
    %4626 = vmatprep.subr.mxu0 0.0
    %4627 = vmatpush2.msra.mxu0 0.0
    %4628 = vmatprep.subr.mxu0 0.0
    %4629 = vmatpush2.msra.mxu0 0.0
    %4630 = vmatprep.subr.mxu0 0.0
    %4631 = vmatpush2.msra.mxu0 0.0
    %4632 = vmatprep.mubr.f32.mxu0 0.0
    %v4633 = vand.u32 %v4152, 4294901760
    %4634 = vmatmul.mubr.f32.gmra.mxu0 %v4633
    %v4635 = vpop.f32.mrf.mxu0
    %v4636 = vadd.f32 %v4561, %v4635
    %v4637 = vpop.f32.mrf.mxu0
    %4638 = vdwg.mxu0
    %v4639 = vadd.f32 %v4151, %v4636
    %s4640 = scalar_lea.vmem [#allocation3], 32
    %v4641 = vld [vmem:[%s4640] sm:$0xff]
    %4642 = vrot.lane.b32.xlu0 %v4137, 32
    %v4643 = vpop.permute.xlu0 %4642
    %v4644 = vsel %vm104, %v4643, 0
    %4646 = vmatprep.subr.mxu0 0.0
    %4647 = vmatpush1.msra.mxu0 0.0
    %4648 = vmatprep.subr.mxu0 0.0
    %4649 = vmatpush1.msra.mxu0 0.0
    %4650 = vmatprep.subr.mxu0 0.0
    %4651 = vmatpush1.msra.mxu0 0.0
    %4652 = vmatprep.subr.mxu0 0.0
    %4653 = vmatpush1.msra.mxu0 0.0
    %4654 = vmatprep.subr.mxu0 0.0
    %4655 = vmatpush1.msra.mxu0 0.0
    %4656 = vmatprep.subr.mxu0 0.0
    %4657 = vmatpush1.msra.mxu0 0.0
    %4658 = vmatprep.subr.mxu0 0.0
    %4659 = vmatpush1.msra.mxu0 0.0
    %4660 = vmatprep.subr.mxu0 0.0
    %4661 = vmatpush1.msra.mxu0 0.0
    %4662 = vmatprep.subr.mxu0 0.0
    %4663 = vmatpush1.msra.mxu0 0.0
    %4664 = vmatprep.subr.mxu0 0.0
    %4665 = vmatpush1.msra.mxu0 0.0
    %4666 = vmatprep.subr.mxu0 0.0
    %4667 = vmatpush1.msra.mxu0 0.0
    %4668 = vmatprep.subr.mxu0 0.0
    %4669 = vmatpush1.msra.mxu0 0.0
    %4670 = vmatprep.subr.mxu0 0.0
    %v4671 = vand.u32 %v1038, 4294901760
    %4672 = vmatpush1.msra.mxu0 %v4671
    %4673 = vmatprep.subr.mxu0 0.0
    %v4674 = vand.u32 %v1037, 4294901760
    %4675 = vmatpush1.msra.mxu0 %v4674
    %4676 = vmatprep.subr.mxu0 0.0
    %v4677 = vand.u32 %v1036, 4294901760
    %4678 = vmatpush1.msra.mxu0 %v4677
    %4679 = vmatprep.subr.mxu0 0.0
    %v4680 = vand.u32 %v1035, 4294901760
    %4681 = vmatpush1.msra.mxu0 %v4680
    %4682 = vmatprep.subr.mxu0 0.0
    %4683 = vmatpush2.msra.mxu0 0.0
    %4684 = vmatprep.subr.mxu0 0.0
    %4685 = vmatpush2.msra.mxu0 0.0
    %4686 = vmatprep.subr.mxu0 0.0
    %4687 = vmatpush2.msra.mxu0 0.0
    %4688 = vmatprep.subr.mxu0 0.0
    %4689 = vmatpush2.msra.mxu0 0.0
    %4690 = vmatprep.subr.mxu0 0.0
    %4691 = vmatpush2.msra.mxu0 0.0
    %4692 = vmatprep.subr.mxu0 0.0
    %4693 = vmatpush2.msra.mxu0 0.0
    %4694 = vmatprep.subr.mxu0 0.0
    %4695 = vmatpush2.msra.mxu0 0.0
    %4696 = vmatprep.subr.mxu0 0.0
    %4697 = vmatpush2.msra.mxu0 0.0
    %4698 = vmatprep.subr.mxu0 0.0
    %4699 = vmatpush2.msra.mxu0 0.0
    %4700 = vmatprep.subr.mxu0 0.0
    %4701 = vmatpush2.msra.mxu0 0.0
    %4702 = vmatprep.subr.mxu0 0.0
    %4703 = vmatpush2.msra.mxu0 0.0
    %4704 = vmatprep.subr.mxu0 0.0
    %4705 = vmatpush2.msra.mxu0 0.0
    %4706 = vmatprep.subr.mxu0 0.0
    %4707 = vmatpush2.msra.mxu0 0.0
    %4708 = vmatprep.subr.mxu0 0.0
    %4709 = vmatpush2.msra.mxu0 0.0
    %4710 = vmatprep.subr.mxu0 0.0
    %4711 = vmatpush2.msra.mxu0 0.0
    %4712 = vmatprep.subr.mxu0 0.0
    %4713 = vmatpush2.msra.mxu0 0.0
    %4714 = vmatprep.mubr.f32.mxu0 0.0
    %v4715 = vand.u32 %v4644, 4294901760
    %v4716 = vsub.f32 %v4644, %v4715
    %v4717 = vand.u32 %v4716, 4294901760
    %v4718 = vsub.f32 %v4716, %v4717
    %v4719 = vand.u32 %v4718, 4294901760
    %4720 = vmatmul.mubr.f32.gmra.mxu0 %v4719
    %v4721 = vpop.f32.mrf.mxu0
    %v4722 = vadd.f32 0.0, %v4721
    %v4723 = vpop.f32.mrf.mxu0
    %4724 = vdwg.mxu0
    %4725 = vmatprep.subr.mxu0 0.0
    %4726 = vmatpush1.msra.mxu0 0.0
    %4727 = vmatprep.subr.mxu0 0.0
    %4728 = vmatpush1.msra.mxu0 0.0
    %4729 = vmatprep.subr.mxu0 0.0
    %4730 = vmatpush1.msra.mxu0 0.0
    %4731 = vmatprep.subr.mxu0 0.0
    %4732 = vmatpush1.msra.mxu0 0.0
    %4733 = vmatprep.subr.mxu0 0.0
    %4734 = vmatpush1.msra.mxu0 0.0
    %4735 = vmatprep.subr.mxu0 0.0
    %4736 = vmatpush1.msra.mxu0 0.0
    %4737 = vmatprep.subr.mxu0 0.0
    %4738 = vmatpush1.msra.mxu0 0.0
    %4739 = vmatprep.subr.mxu0 0.0
    %4740 = vmatpush1.msra.mxu0 0.0
    %4741 = vmatprep.subr.mxu0 0.0
    %4742 = vmatpush1.msra.mxu0 0.0
    %4743 = vmatprep.subr.mxu0 0.0
    %4744 = vmatpush1.msra.mxu0 0.0
    %4745 = vmatprep.subr.mxu0 0.0
    %4746 = vmatpush1.msra.mxu0 0.0
    %4747 = vmatprep.subr.mxu0 0.0
    %4748 = vmatpush1.msra.mxu0 0.0
    %4749 = vmatprep.subr.mxu0 0.0
    %v4750 = vand.u32 %v1038, 4294901760
    %v4751 = vsub.f32 %v1038, %v4750
    %v4752 = vand.u32 %v4751, 4294901760
    %v4753 = vsub.f32 %v4751, %v4752
    %v4754 = vand.u32 %v4753, 4294901760
    %4755 = vmatpush1.msra.mxu0 %v4754
    %4756 = vmatprep.subr.mxu0 0.0
    %v4757 = vand.u32 %v1037, 4294901760
    %v4758 = vsub.f32 %v1037, %v4757
    %v4759 = vand.u32 %v4758, 4294901760
    %v4760 = vsub.f32 %v4758, %v4759
    %v4761 = vand.u32 %v4760, 4294901760
    %4762 = vmatpush1.msra.mxu0 %v4761
    %4763 = vmatprep.subr.mxu0 0.0
    %v4764 = vand.u32 %v1036, 4294901760
    %v4765 = vsub.f32 %v1036, %v4764
    %v4766 = vand.u32 %v4765, 4294901760
    %v4767 = vsub.f32 %v4765, %v4766
    %v4768 = vand.u32 %v4767, 4294901760
    %4769 = vmatpush1.msra.mxu0 %v4768
    %4770 = vmatprep.subr.mxu0 0.0
    %v4771 = vand.u32 %v1035, 4294901760
    %v4772 = vsub.f32 %v1035, %v4771
    %v4773 = vand.u32 %v4772, 4294901760
    %v4774 = vsub.f32 %v4772, %v4773
    %v4775 = vand.u32 %v4774, 4294901760
    %4776 = vmatpush1.msra.mxu0 %v4775
    %4777 = vmatprep.subr.mxu0 0.0
    %4778 = vmatpush2.msra.mxu0 0.0
    %4779 = vmatprep.subr.mxu0 0.0
    %4780 = vmatpush2.msra.mxu0 0.0
    %4781 = vmatprep.subr.mxu0 0.0
    %4782 = vmatpush2.msra.mxu0 0.0
    %4783 = vmatprep.subr.mxu0 0.0
    %4784 = vmatpush2.msra.mxu0 0.0
    %4785 = vmatprep.subr.mxu0 0.0
    %4786 = vmatpush2.msra.mxu0 0.0
    %4787 = vmatprep.subr.mxu0 0.0
    %4788 = vmatpush2.msra.mxu0 0.0
    %4789 = vmatprep.subr.mxu0 0.0
    %4790 = vmatpush2.msra.mxu0 0.0
    %4791 = vmatprep.subr.mxu0 0.0
    %4792 = vmatpush2.msra.mxu0 0.0
    %4793 = vmatprep.subr.mxu0 0.0
    %4794 = vmatpush2.msra.mxu0 0.0
    %4795 = vmatprep.subr.mxu0 0.0
    %4796 = vmatpush2.msra.mxu0 0.0
    %4797 = vmatprep.subr.mxu0 0.0
    %4798 = vmatpush2.msra.mxu0 0.0
    %4799 = vmatprep.subr.mxu0 0.0
    %4800 = vmatpush2.msra.mxu0 0.0
    %4801 = vmatprep.subr.mxu0 0.0
    %4802 = vmatpush2.msra.mxu0 0.0
    %4803 = vmatprep.subr.mxu0 0.0
    %4804 = vmatpush2.msra.mxu0 0.0
    %4805 = vmatprep.subr.mxu0 0.0
    %4806 = vmatpush2.msra.mxu0 0.0
    %4807 = vmatprep.subr.mxu0 0.0
    %4808 = vmatpush2.msra.mxu0 0.0
    %4809 = vmatprep.mubr.f32.mxu0 0.0
    %v4810 = vand.u32 %v4644, 4294901760
    %4811 = vmatmul.mubr.f32.gmra.mxu0 %v4810
    %v4812 = vpop.f32.mrf.mxu0
    %v4813 = vadd.f32 %v4722, %v4812
    %v4814 = vpop.f32.mrf.mxu0
    %4815 = vdwg.mxu0
    %4816 = vmatprep.subr.mxu0 0.0
    %4817 = vmatpush1.msra.mxu0 0.0
    %4818 = vmatprep.subr.mxu0 0.0
    %4819 = vmatpush1.msra.mxu0 0.0
    %4820 = vmatprep.subr.mxu0 0.0
    %4821 = vmatpush1.msra.mxu0 0.0
    %4822 = vmatprep.subr.mxu0 0.0
    %4823 = vmatpush1.msra.mxu0 0.0
    %4824 = vmatprep.subr.mxu0 0.0
    %4825 = vmatpush1.msra.mxu0 0.0
    %4826 = vmatprep.subr.mxu0 0.0
    %4827 = vmatpush1.msra.mxu0 0.0
    %4828 = vmatprep.subr.mxu0 0.0
    %4829 = vmatpush1.msra.mxu0 0.0
    %4830 = vmatprep.subr.mxu0 0.0
    %4831 = vmatpush1.msra.mxu0 0.0
    %4832 = vmatprep.subr.mxu0 0.0
    %4833 = vmatpush1.msra.mxu0 0.0
    %4834 = vmatprep.subr.mxu0 0.0
    %4835 = vmatpush1.msra.mxu0 0.0
    %4836 = vmatprep.subr.mxu0 0.0
    %4837 = vmatpush1.msra.mxu0 0.0
    %4838 = vmatprep.subr.mxu0 0.0
    %4839 = vmatpush1.msra.mxu0 0.0
    %4840 = vmatprep.subr.mxu0 0.0
    %v4841 = vand.u32 %v1038, 4294901760
    %v4842 = vsub.f32 %v1038, %v4841
    %4843 = vmatpush1.msra.mxu0 %v4842
    %4844 = vmatprep.subr.mxu0 0.0
    %v4845 = vand.u32 %v1037, 4294901760
    %v4846 = vsub.f32 %v1037, %v4845
    %4847 = vmatpush1.msra.mxu0 %v4846
    %4848 = vmatprep.subr.mxu0 0.0
    %v4849 = vand.u32 %v1036, 4294901760
    %v4850 = vsub.f32 %v1036, %v4849
    %4851 = vmatpush1.msra.mxu0 %v4850
    %4852 = vmatprep.subr.mxu0 0.0
    %v4853 = vand.u32 %v1035, 4294901760
    %v4854 = vsub.f32 %v1035, %v4853
    %4855 = vmatpush1.msra.mxu0 %v4854
    %4856 = vmatprep.subr.mxu0 0.0
    %4857 = vmatpush2.msra.mxu0 0.0
    %4858 = vmatprep.subr.mxu0 0.0
    %4859 = vmatpush2.msra.mxu0 0.0
    %4860 = vmatprep.subr.mxu0 0.0
    %4861 = vmatpush2.msra.mxu0 0.0
    %4862 = vmatprep.subr.mxu0 0.0
    %4863 = vmatpush2.msra.mxu0 0.0
    %4864 = vmatprep.subr.mxu0 0.0
    %4865 = vmatpush2.msra.mxu0 0.0
    %4866 = vmatprep.subr.mxu0 0.0
    %4867 = vmatpush2.msra.mxu0 0.0
    %4868 = vmatprep.subr.mxu0 0.0
    %4869 = vmatpush2.msra.mxu0 0.0
    %4870 = vmatprep.subr.mxu0 0.0
    %4871 = vmatpush2.msra.mxu0 0.0
    %4872 = vmatprep.subr.mxu0 0.0
    %4873 = vmatpush2.msra.mxu0 0.0
    %4874 = vmatprep.subr.mxu0 0.0
    %4875 = vmatpush2.msra.mxu0 0.0
    %4876 = vmatprep.subr.mxu0 0.0
    %4877 = vmatpush2.msra.mxu0 0.0
    %4878 = vmatprep.subr.mxu0 0.0
    %4879 = vmatpush2.msra.mxu0 0.0
    %4880 = vmatprep.subr.mxu0 0.0
    %4881 = vmatpush2.msra.mxu0 0.0
    %4882 = vmatprep.subr.mxu0 0.0
    %4883 = vmatpush2.msra.mxu0 0.0
    %4884 = vmatprep.subr.mxu0 0.0
    %4885 = vmatpush2.msra.mxu0 0.0
    %4886 = vmatprep.subr.mxu0 0.0
    %4887 = vmatpush2.msra.mxu0 0.0
    %4888 = vmatprep.mubr.f32.mxu0 0.0
    %v4889 = vand.u32 %v4644, 4294901760
    %v4890 = vsub.f32 %v4644, %v4889
    %4891 = vmatmul.mubr.f32.gmra.mxu0 %v4890
    %v4892 = vpop.f32.mrf.mxu0
    %v4893 = vadd.f32 %v4813, %v4892
    %v4894 = vpop.f32.mrf.mxu0
    %4895 = vdwg.mxu0
    %4896 = vmatprep.subr.mxu0 0.0
    %4897 = vmatpush1.msra.mxu0 0.0
    %4898 = vmatprep.subr.mxu0 0.0
    %4899 = vmatpush1.msra.mxu0 0.0
    %4900 = vmatprep.subr.mxu0 0.0
    %4901 = vmatpush1.msra.mxu0 0.0
    %4902 = vmatprep.subr.mxu0 0.0
    %4903 = vmatpush1.msra.mxu0 0.0
    %4904 = vmatprep.subr.mxu0 0.0
    %4905 = vmatpush1.msra.mxu0 0.0
    %4906 = vmatprep.subr.mxu0 0.0
    %4907 = vmatpush1.msra.mxu0 0.0
    %4908 = vmatprep.subr.mxu0 0.0
    %4909 = vmatpush1.msra.mxu0 0.0
    %4910 = vmatprep.subr.mxu0 0.0
    %4911 = vmatpush1.msra.mxu0 0.0
    %4912 = vmatprep.subr.mxu0 0.0
    %4913 = vmatpush1.msra.mxu0 0.0
    %4914 = vmatprep.subr.mxu0 0.0
    %4915 = vmatpush1.msra.mxu0 0.0
    %4916 = vmatprep.subr.mxu0 0.0
    %4917 = vmatpush1.msra.mxu0 0.0
    %4918 = vmatprep.subr.mxu0 0.0
    %4919 = vmatpush1.msra.mxu0 0.0
    %4920 = vmatprep.subr.mxu0 0.0
    %v4921 = vand.u32 %v1038, 4294901760
    %4922 = vmatpush1.msra.mxu0 %v4921
    %4923 = vmatprep.subr.mxu0 0.0
    %v4924 = vand.u32 %v1037, 4294901760
    %4925 = vmatpush1.msra.mxu0 %v4924
    %4926 = vmatprep.subr.mxu0 0.0
    %v4927 = vand.u32 %v1036, 4294901760
    %4928 = vmatpush1.msra.mxu0 %v4927
    %4929 = vmatprep.subr.mxu0 0.0
    %v4930 = vand.u32 %v1035, 4294901760
    %4931 = vmatpush1.msra.mxu0 %v4930
    %4932 = vmatprep.subr.mxu0 0.0
    %4933 = vmatpush2.msra.mxu0 0.0
    %4934 = vmatprep.subr.mxu0 0.0
    %4935 = vmatpush2.msra.mxu0 0.0
    %4936 = vmatprep.subr.mxu0 0.0
    %4937 = vmatpush2.msra.mxu0 0.0
    %4938 = vmatprep.subr.mxu0 0.0
    %4939 = vmatpush2.msra.mxu0 0.0
    %4940 = vmatprep.subr.mxu0 0.0
    %4941 = vmatpush2.msra.mxu0 0.0
    %4942 = vmatprep.subr.mxu0 0.0
    %4943 = vmatpush2.msra.mxu0 0.0
    %4944 = vmatprep.subr.mxu0 0.0
    %4945 = vmatpush2.msra.mxu0 0.0
    %4946 = vmatprep.subr.mxu0 0.0
    %4947 = vmatpush2.msra.mxu0 0.0
    %4948 = vmatprep.subr.mxu0 0.0
    %4949 = vmatpush2.msra.mxu0 0.0
    %4950 = vmatprep.subr.mxu0 0.0
    %4951 = vmatpush2.msra.mxu0 0.0
    %4952 = vmatprep.subr.mxu0 0.0
    %4953 = vmatpush2.msra.mxu0 0.0
    %4954 = vmatprep.subr.mxu0 0.0
    %4955 = vmatpush2.msra.mxu0 0.0
    %4956 = vmatprep.subr.mxu0 0.0
    %4957 = vmatpush2.msra.mxu0 0.0
    %4958 = vmatprep.subr.mxu0 0.0
    %4959 = vmatpush2.msra.mxu0 0.0
    %4960 = vmatprep.subr.mxu0 0.0
    %4961 = vmatpush2.msra.mxu0 0.0
    %4962 = vmatprep.subr.mxu0 0.0
    %4963 = vmatpush2.msra.mxu0 0.0
    %4964 = vmatprep.mubr.f32.mxu0 0.0
    %v4965 = vand.u32 %v4644, 4294901760
    %v4966 = vsub.f32 %v4644, %v4965
    %v4967 = vand.u32 %v4966, 4294901760
    %4968 = vmatmul.mubr.f32.gmra.mxu0 %v4967
    %v4969 = vpop.f32.mrf.mxu0
    %v4970 = vadd.f32 %v4893, %v4969
    %v4971 = vpop.f32.mrf.mxu0
    %4972 = vdwg.mxu0
    %4973 = vmatprep.subr.mxu0 0.0
    %4974 = vmatpush1.msra.mxu0 0.0
    %4975 = vmatprep.subr.mxu0 0.0
    %4976 = vmatpush1.msra.mxu0 0.0
    %4977 = vmatprep.subr.mxu0 0.0
    %4978 = vmatpush1.msra.mxu0 0.0
    %4979 = vmatprep.subr.mxu0 0.0
    %4980 = vmatpush1.msra.mxu0 0.0
    %4981 = vmatprep.subr.mxu0 0.0
    %4982 = vmatpush1.msra.mxu0 0.0
    %4983 = vmatprep.subr.mxu0 0.0
    %4984 = vmatpush1.msra.mxu0 0.0
    %4985 = vmatprep.subr.mxu0 0.0
    %4986 = vmatpush1.msra.mxu0 0.0
    %4987 = vmatprep.subr.mxu0 0.0
    %4988 = vmatpush1.msra.mxu0 0.0
    %4989 = vmatprep.subr.mxu0 0.0
    %4990 = vmatpush1.msra.mxu0 0.0
    %4991 = vmatprep.subr.mxu0 0.0
    %4992 = vmatpush1.msra.mxu0 0.0
    %4993 = vmatprep.subr.mxu0 0.0
    %4994 = vmatpush1.msra.mxu0 0.0
    %4995 = vmatprep.subr.mxu0 0.0
    %4996 = vmatpush1.msra.mxu0 0.0
    %4997 = vmatprep.subr.mxu0 0.0
    %v4998 = vand.u32 %v1038, 4294901760
    %v4999 = vsub.f32 %v1038, %v4998
    %v5000 = vand.u32 %v4999, 4294901760
    %5001 = vmatpush1.msra.mxu0 %v5000
    %5002 = vmatprep.subr.mxu0 0.0
    %v5003 = vand.u32 %v1037, 4294901760
    %v5004 = vsub.f32 %v1037, %v5003
    %v5005 = vand.u32 %v5004, 4294901760
    %5006 = vmatpush1.msra.mxu0 %v5005
    %5007 = vmatprep.subr.mxu0 0.0
    %v5008 = vand.u32 %v1036, 4294901760
    %v5009 = vsub.f32 %v1036, %v5008
    %v5010 = vand.u32 %v5009, 4294901760
    %5011 = vmatpush1.msra.mxu0 %v5010
    %5012 = vmatprep.subr.mxu0 0.0
    %v5013 = vand.u32 %v1035, 4294901760
    %v5014 = vsub.f32 %v1035, %v5013
    %v5015 = vand.u32 %v5014, 4294901760
    %5016 = vmatpush1.msra.mxu0 %v5015
    %5017 = vmatprep.subr.mxu0 0.0
    %5018 = vmatpush2.msra.mxu0 0.0
    %5019 = vmatprep.subr.mxu0 0.0
    %5020 = vmatpush2.msra.mxu0 0.0
    %5021 = vmatprep.subr.mxu0 0.0
    %5022 = vmatpush2.msra.mxu0 0.0
    %5023 = vmatprep.subr.mxu0 0.0
    %5024 = vmatpush2.msra.mxu0 0.0
    %5025 = vmatprep.subr.mxu0 0.0
    %5026 = vmatpush2.msra.mxu0 0.0
    %5027 = vmatprep.subr.mxu0 0.0
    %5028 = vmatpush2.msra.mxu0 0.0
    %5029 = vmatprep.subr.mxu0 0.0
    %5030 = vmatpush2.msra.mxu0 0.0
    %5031 = vmatprep.subr.mxu0 0.0
    %5032 = vmatpush2.msra.mxu0 0.0
    %5033 = vmatprep.subr.mxu0 0.0
    %5034 = vmatpush2.msra.mxu0 0.0
    %5035 = vmatprep.subr.mxu0 0.0
    %5036 = vmatpush2.msra.mxu0 0.0
    %5037 = vmatprep.subr.mxu0 0.0
    %5038 = vmatpush2.msra.mxu0 0.0
    %5039 = vmatprep.subr.mxu0 0.0
    %5040 = vmatpush2.msra.mxu0 0.0
    %5041 = vmatprep.subr.mxu0 0.0
    %5042 = vmatpush2.msra.mxu0 0.0
    %5043 = vmatprep.subr.mxu0 0.0
    %5044 = vmatpush2.msra.mxu0 0.0
    %5045 = vmatprep.subr.mxu0 0.0
    %5046 = vmatpush2.msra.mxu0 0.0
    %5047 = vmatprep.subr.mxu0 0.0
    %5048 = vmatpush2.msra.mxu0 0.0
    %5049 = vmatprep.mubr.f32.mxu0 0.0
    %v5050 = vand.u32 %v4644, 4294901760
    %5051 = vmatmul.mubr.f32.gmra.mxu0 %v5050
    %v5052 = vpop.f32.mrf.mxu0
    %v5053 = vadd.f32 %v4970, %v5052
    %v5054 = vpop.f32.mrf.mxu0
    %5055 = vdwg.mxu0
    %5056 = vmatprep.subr.mxu0 0.0
    %5057 = vmatpush1.msra.mxu0 0.0
    %5058 = vmatprep.subr.mxu0 0.0
    %5059 = vmatpush1.msra.mxu0 0.0
    %5060 = vmatprep.subr.mxu0 0.0
    %5061 = vmatpush1.msra.mxu0 0.0
    %5062 = vmatprep.subr.mxu0 0.0
    %5063 = vmatpush1.msra.mxu0 0.0
    %5064 = vmatprep.subr.mxu0 0.0
    %5065 = vmatpush1.msra.mxu0 0.0
    %5066 = vmatprep.subr.mxu0 0.0
    %5067 = vmatpush1.msra.mxu0 0.0
    %5068 = vmatprep.subr.mxu0 0.0
    %5069 = vmatpush1.msra.mxu0 0.0
    %5070 = vmatprep.subr.mxu0 0.0
    %5071 = vmatpush1.msra.mxu0 0.0
    %5072 = vmatprep.subr.mxu0 0.0
    %5073 = vmatpush1.msra.mxu0 0.0
    %5074 = vmatprep.subr.mxu0 0.0
    %5075 = vmatpush1.msra.mxu0 0.0
    %5076 = vmatprep.subr.mxu0 0.0
    %5077 = vmatpush1.msra.mxu0 0.0
    %5078 = vmatprep.subr.mxu0 0.0
    %5079 = vmatpush1.msra.mxu0 0.0
    %5080 = vmatprep.subr.mxu0 0.0
    %v5081 = vand.u32 %v1038, 4294901760
    %5082 = vmatpush1.msra.mxu0 %v5081
    %5083 = vmatprep.subr.mxu0 0.0
    %v5084 = vand.u32 %v1037, 4294901760
    %5085 = vmatpush1.msra.mxu0 %v5084
    %5086 = vmatprep.subr.mxu0 0.0
    %v5087 = vand.u32 %v1036, 4294901760
    %5088 = vmatpush1.msra.mxu0 %v5087
    %5089 = vmatprep.subr.mxu0 0.0
    %v5090 = vand.u32 %v1035, 4294901760
    %5091 = vmatpush1.msra.mxu0 %v5090
    %5092 = vmatprep.subr.mxu0 0.0
    %5093 = vmatpush2.msra.mxu0 0.0
    %5094 = vmatprep.subr.mxu0 0.0
    %5095 = vmatpush2.msra.mxu0 0.0
    %5096 = vmatprep.subr.mxu0 0.0
    %5097 = vmatpush2.msra.mxu0 0.0
    %5098 = vmatprep.subr.mxu0 0.0
    %5099 = vmatpush2.msra.mxu0 0.0
    %5100 = vmatprep.subr.mxu0 0.0
    %5101 = vmatpush2.msra.mxu0 0.0
    %5102 = vmatprep.subr.mxu0 0.0
    %5103 = vmatpush2.msra.mxu0 0.0
    %5104 = vmatprep.subr.mxu0 0.0
    %5105 = vmatpush2.msra.mxu0 0.0
    %5106 = vmatprep.subr.mxu0 0.0
    %5107 = vmatpush2.msra.mxu0 0.0
    %5108 = vmatprep.subr.mxu0 0.0
    %5109 = vmatpush2.msra.mxu0 0.0
    %5110 = vmatprep.subr.mxu0 0.0
    %5111 = vmatpush2.msra.mxu0 0.0
    %5112 = vmatprep.subr.mxu0 0.0
    %5113 = vmatpush2.msra.mxu0 0.0
    %5114 = vmatprep.subr.mxu0 0.0
    %5115 = vmatpush2.msra.mxu0 0.0
    %5116 = vmatprep.subr.mxu0 0.0
    %5117 = vmatpush2.msra.mxu0 0.0
    %5118 = vmatprep.subr.mxu0 0.0
    %5119 = vmatpush2.msra.mxu0 0.0
    %5120 = vmatprep.subr.mxu0 0.0
    %5121 = vmatpush2.msra.mxu0 0.0
    %5122 = vmatprep.subr.mxu0 0.0
    %5123 = vmatpush2.msra.mxu0 0.0
    %5124 = vmatprep.mubr.f32.mxu0 0.0
    %v5125 = vand.u32 %v4644, 4294901760
    %5126 = vmatmul.mubr.f32.gmra.mxu0 %v5125
    %v5127 = vpop.f32.mrf.mxu0
    %v5128 = vadd.f32 %v5053, %v5127
    %v5129 = vpop.f32.mrf.mxu0
    %5130 = vdwg.mxu0
    %v5131 = vadd.f32 %v4641, %v5128
    %v5132 = vmul.f32 %v4639, %v1044
    %v5133 = vtanh.pop %v5132
    %v5134 = vmul.f32 %v5133, %v1044
    %v5135 = vadd.f32 %v5134, %v1045
    %v5136 = vmul.f32 %v5135, %v4110
    %5138 = vrot.lane.b32.xlu0 %v5135, 64
    %v5139 = vpop.permute.xlu0 %5138
    %v5141 = vmul.f32 %v5135, %v5139
    %5143 = vrot.lane.b32.xlu0 %v5141, 32
    %v5144 = vpop.permute.xlu0 %5143
    %v5146 = vadd.f32 %v5136, %v5144
    %v5147 = vtanh.pop %v5146
    %5149 = vrot.lane.b32.xlu0 %v5147, 64
    %v5150 = vpop.permute.xlu0 %5149
    %v5152 = vmul.f32 %v5135, %v5150
    %v5153 = vmul.f32 %v5131, %v1044
    %v5154 = vtanh.pop %v5153
    %v5155 = vmul.f32 %v5154, %v1044
    %v5156 = vadd.f32 %v5155, %v1045
    %v5157 = vmul.f32 %v5156, %v4131
    %5159 = vrot.lane.b32.xlu0 %v5156, 64
    %v5160 = vpop.permute.xlu0 %5159
    %v5162 = vmul.f32 %v5156, %v5160
    %5164 = vrot.lane.b32.xlu0 %v5162, 32
    %v5165 = vpop.permute.xlu0 %5164
    %v5167 = vadd.f32 %v5157, %v5165
    %v5168 = vtanh.pop %v5167
    %5170 = vrot.lane.b32.xlu0 %v5168, 64
    %v5171 = vpop.permute.xlu0 %5170
    %v5173 = vmul.f32 %v5156, %v5171
    %5175 = vrot.lane.b32.xlu0 %v5152, 32
    %v5176 = vpop.permute.xlu0 %5175
    %s5178 = scalar_lea.vmem [#allocation12], 24
    %5179 = vst.msk [vmem:[%s5178] sm:$0xff] %vm104, %v5176
    %5181 = vrot.lane.b32.xlu0 %v5173, 64
    %v5182 = vpop.permute.xlu0 %5181
    %s5184 = scalar_lea.vmem [#allocation12], 32
    %5185 = vst.msk [vmem:[%s5184] sm:$0xff] %vm2076, %v5182
    %s5186 = scalar_lea.vmem [#allocation2], 32
    %v5187 = vld [vmem:[%s5186] sm:$0xff]
    %v5188 = vsel %vm104, %v5176, 0
    %5190 = vmatprep.subr.mxu0 0.0
    %5191 = vmatpush1.msra.mxu0 0.0
    %5192 = vmatprep.subr.mxu0 0.0
    %5193 = vmatpush1.msra.mxu0 0.0
    %5194 = vmatprep.subr.mxu0 0.0
    %5195 = vmatpush1.msra.mxu0 0.0
    %5196 = vmatprep.subr.mxu0 0.0
    %5197 = vmatpush1.msra.mxu0 0.0
    %5198 = vmatprep.subr.mxu0 0.0
    %5199 = vmatpush1.msra.mxu0 0.0
    %5200 = vmatprep.subr.mxu0 0.0
    %5201 = vmatpush1.msra.mxu0 0.0
    %5202 = vmatprep.subr.mxu0 0.0
    %5203 = vmatpush1.msra.mxu0 0.0
    %5204 = vmatprep.subr.mxu0 0.0
    %5205 = vmatpush1.msra.mxu0 0.0
    %5206 = vmatprep.subr.mxu0 0.0
    %5207 = vmatpush1.msra.mxu0 0.0
    %5208 = vmatprep.subr.mxu0 0.0
    %5209 = vmatpush1.msra.mxu0 0.0
    %5210 = vmatprep.subr.mxu0 0.0
    %5211 = vmatpush1.msra.mxu0 0.0
    %5212 = vmatprep.subr.mxu0 0.0
    %5213 = vmatpush1.msra.mxu0 0.0
    %5214 = vmatprep.subr.mxu0 0.0
    %v5215 = vand.u32 %v1034, 4294901760
    %5216 = vmatpush1.msra.mxu0 %v5215
    %5217 = vmatprep.subr.mxu0 0.0
    %v5218 = vand.u32 %v1033, 4294901760
    %5219 = vmatpush1.msra.mxu0 %v5218
    %5220 = vmatprep.subr.mxu0 0.0
    %v5221 = vand.u32 %v1032, 4294901760
    %5222 = vmatpush1.msra.mxu0 %v5221
    %5223 = vmatprep.subr.mxu0 0.0
    %v5224 = vand.u32 %v1031, 4294901760
    %5225 = vmatpush1.msra.mxu0 %v5224
    %5226 = vmatprep.subr.mxu0 0.0
    %5227 = vmatpush2.msra.mxu0 0.0
    %5228 = vmatprep.subr.mxu0 0.0
    %5229 = vmatpush2.msra.mxu0 0.0
    %5230 = vmatprep.subr.mxu0 0.0
    %5231 = vmatpush2.msra.mxu0 0.0
    %5232 = vmatprep.subr.mxu0 0.0
    %5233 = vmatpush2.msra.mxu0 0.0
    %5234 = vmatprep.subr.mxu0 0.0
    %5235 = vmatpush2.msra.mxu0 0.0
    %5236 = vmatprep.subr.mxu0 0.0
    %5237 = vmatpush2.msra.mxu0 0.0
    %5238 = vmatprep.subr.mxu0 0.0
    %5239 = vmatpush2.msra.mxu0 0.0
    %5240 = vmatprep.subr.mxu0 0.0
    %5241 = vmatpush2.msra.mxu0 0.0
    %5242 = vmatprep.subr.mxu0 0.0
    %5243 = vmatpush2.msra.mxu0 0.0
    %5244 = vmatprep.subr.mxu0 0.0
    %5245 = vmatpush2.msra.mxu0 0.0
    %5246 = vmatprep.subr.mxu0 0.0
    %5247 = vmatpush2.msra.mxu0 0.0
    %5248 = vmatprep.subr.mxu0 0.0
    %5249 = vmatpush2.msra.mxu0 0.0
    %5250 = vmatprep.subr.mxu0 0.0
    %5251 = vmatpush2.msra.mxu0 0.0
    %5252 = vmatprep.subr.mxu0 0.0
    %5253 = vmatpush2.msra.mxu0 0.0
    %5254 = vmatprep.subr.mxu0 0.0
    %5255 = vmatpush2.msra.mxu0 0.0
    %5256 = vmatprep.subr.mxu0 0.0
    %5257 = vmatpush2.msra.mxu0 0.0
    %5258 = vmatprep.mubr.f32.mxu0 0.0
    %v5259 = vand.u32 %v5188, 4294901760
    %v5260 = vsub.f32 %v5188, %v5259
    %v5261 = vand.u32 %v5260, 4294901760
    %v5262 = vsub.f32 %v5260, %v5261
    %v5263 = vand.u32 %v5262, 4294901760
    %5264 = vmatmul.mubr.f32.gmra.mxu0 %v5263
    %v5265 = vpop.f32.mrf.mxu0
    %v5266 = vadd.f32 0.0, %v5265
    %v5267 = vpop.f32.mrf.mxu0
    %5268 = vdwg.mxu0
    %5269 = vmatprep.subr.mxu0 0.0
    %5270 = vmatpush1.msra.mxu0 0.0
    %5271 = vmatprep.subr.mxu0 0.0
    %5272 = vmatpush1.msra.mxu0 0.0
    %5273 = vmatprep.subr.mxu0 0.0
    %5274 = vmatpush1.msra.mxu0 0.0
    %5275 = vmatprep.subr.mxu0 0.0
    %5276 = vmatpush1.msra.mxu0 0.0
    %5277 = vmatprep.subr.mxu0 0.0
    %5278 = vmatpush1.msra.mxu0 0.0
    %5279 = vmatprep.subr.mxu0 0.0
    %5280 = vmatpush1.msra.mxu0 0.0
    %5281 = vmatprep.subr.mxu0 0.0
    %5282 = vmatpush1.msra.mxu0 0.0
    %5283 = vmatprep.subr.mxu0 0.0
    %5284 = vmatpush1.msra.mxu0 0.0
    %5285 = vmatprep.subr.mxu0 0.0
    %5286 = vmatpush1.msra.mxu0 0.0
    %5287 = vmatprep.subr.mxu0 0.0
    %5288 = vmatpush1.msra.mxu0 0.0
    %5289 = vmatprep.subr.mxu0 0.0
    %5290 = vmatpush1.msra.mxu0 0.0
    %5291 = vmatprep.subr.mxu0 0.0
    %5292 = vmatpush1.msra.mxu0 0.0
    %5293 = vmatprep.subr.mxu0 0.0
    %v5294 = vand.u32 %v1034, 4294901760
    %v5295 = vsub.f32 %v1034, %v5294
    %v5296 = vand.u32 %v5295, 4294901760
    %v5297 = vsub.f32 %v5295, %v5296
    %v5298 = vand.u32 %v5297, 4294901760
    %5299 = vmatpush1.msra.mxu0 %v5298
    %5300 = vmatprep.subr.mxu0 0.0
    %v5301 = vand.u32 %v1033, 4294901760
    %v5302 = vsub.f32 %v1033, %v5301
    %v5303 = vand.u32 %v5302, 4294901760
    %v5304 = vsub.f32 %v5302, %v5303
    %v5305 = vand.u32 %v5304, 4294901760
    %5306 = vmatpush1.msra.mxu0 %v5305
    %5307 = vmatprep.subr.mxu0 0.0
    %v5308 = vand.u32 %v1032, 4294901760
    %v5309 = vsub.f32 %v1032, %v5308
    %v5310 = vand.u32 %v5309, 4294901760
    %v5311 = vsub.f32 %v5309, %v5310
    %v5312 = vand.u32 %v5311, 4294901760
    %5313 = vmatpush1.msra.mxu0 %v5312
    %5314 = vmatprep.subr.mxu0 0.0
    %v5315 = vand.u32 %v1031, 4294901760
    %v5316 = vsub.f32 %v1031, %v5315
    %v5317 = vand.u32 %v5316, 4294901760
    %v5318 = vsub.f32 %v5316, %v5317
    %v5319 = vand.u32 %v5318, 4294901760
    %5320 = vmatpush1.msra.mxu0 %v5319
    %5321 = vmatprep.subr.mxu0 0.0
    %5322 = vmatpush2.msra.mxu0 0.0
    %5323 = vmatprep.subr.mxu0 0.0
    %5324 = vmatpush2.msra.mxu0 0.0
    %5325 = vmatprep.subr.mxu0 0.0
    %5326 = vmatpush2.msra.mxu0 0.0
    %5327 = vmatprep.subr.mxu0 0.0
    %5328 = vmatpush2.msra.mxu0 0.0
    %5329 = vmatprep.subr.mxu0 0.0
    %5330 = vmatpush2.msra.mxu0 0.0
    %5331 = vmatprep.subr.mxu0 0.0
    %5332 = vmatpush2.msra.mxu0 0.0
    %5333 = vmatprep.subr.mxu0 0.0
    %5334 = vmatpush2.msra.mxu0 0.0
    %5335 = vmatprep.subr.mxu0 0.0
    %5336 = vmatpush2.msra.mxu0 0.0
    %5337 = vmatprep.subr.mxu0 0.0
    %5338 = vmatpush2.msra.mxu0 0.0
    %5339 = vmatprep.subr.mxu0 0.0
    %5340 = vmatpush2.msra.mxu0 0.0
    %5341 = vmatprep.subr.mxu0 0.0
    %5342 = vmatpush2.msra.mxu0 0.0
    %5343 = vmatprep.subr.mxu0 0.0
    %5344 = vmatpush2.msra.mxu0 0.0
    %5345 = vmatprep.subr.mxu0 0.0
    %5346 = vmatpush2.msra.mxu0 0.0
    %5347 = vmatprep.subr.mxu0 0.0
    %5348 = vmatpush2.msra.mxu0 0.0
    %5349 = vmatprep.subr.mxu0 0.0
    %5350 = vmatpush2.msra.mxu0 0.0
    %5351 = vmatprep.subr.mxu0 0.0
    %5352 = vmatpush2.msra.mxu0 0.0
    %5353 = vmatprep.mubr.f32.mxu0 0.0
    %v5354 = vand.u32 %v5188, 4294901760
    %5355 = vmatmul.mubr.f32.gmra.mxu0 %v5354
    %v5356 = vpop.f32.mrf.mxu0
    %v5357 = vadd.f32 %v5266, %v5356
    %v5358 = vpop.f32.mrf.mxu0
    %5359 = vdwg.mxu0
    %5360 = vmatprep.subr.mxu0 0.0
    %5361 = vmatpush1.msra.mxu0 0.0
    %5362 = vmatprep.subr.mxu0 0.0
    %5363 = vmatpush1.msra.mxu0 0.0
    %5364 = vmatprep.subr.mxu0 0.0
    %5365 = vmatpush1.msra.mxu0 0.0
    %5366 = vmatprep.subr.mxu0 0.0
    %5367 = vmatpush1.msra.mxu0 0.0
    %5368 = vmatprep.subr.mxu0 0.0
    %5369 = vmatpush1.msra.mxu0 0.0
    %5370 = vmatprep.subr.mxu0 0.0
    %5371 = vmatpush1.msra.mxu0 0.0
    %5372 = vmatprep.subr.mxu0 0.0
    %5373 = vmatpush1.msra.mxu0 0.0
    %5374 = vmatprep.subr.mxu0 0.0
    %5375 = vmatpush1.msra.mxu0 0.0
    %5376 = vmatprep.subr.mxu0 0.0
    %5377 = vmatpush1.msra.mxu0 0.0
    %5378 = vmatprep.subr.mxu0 0.0
    %5379 = vmatpush1.msra.mxu0 0.0
    %5380 = vmatprep.subr.mxu0 0.0
    %5381 = vmatpush1.msra.mxu0 0.0
    %5382 = vmatprep.subr.mxu0 0.0
    %5383 = vmatpush1.msra.mxu0 0.0
    %5384 = vmatprep.subr.mxu0 0.0
    %v5385 = vand.u32 %v1034, 4294901760
    %v5386 = vsub.f32 %v1034, %v5385
    %5387 = vmatpush1.msra.mxu0 %v5386
    %5388 = vmatprep.subr.mxu0 0.0
    %v5389 = vand.u32 %v1033, 4294901760
    %v5390 = vsub.f32 %v1033, %v5389
    %5391 = vmatpush1.msra.mxu0 %v5390
    %5392 = vmatprep.subr.mxu0 0.0
    %v5393 = vand.u32 %v1032, 4294901760
    %v5394 = vsub.f32 %v1032, %v5393
    %5395 = vmatpush1.msra.mxu0 %v5394
    %5396 = vmatprep.subr.mxu0 0.0
    %v5397 = vand.u32 %v1031, 4294901760
    %v5398 = vsub.f32 %v1031, %v5397
    %5399 = vmatpush1.msra.mxu0 %v5398
    %5400 = vmatprep.subr.mxu0 0.0
    %5401 = vmatpush2.msra.mxu0 0.0
    %5402 = vmatprep.subr.mxu0 0.0
    %5403 = vmatpush2.msra.mxu0 0.0
    %5404 = vmatprep.subr.mxu0 0.0
    %5405 = vmatpush2.msra.mxu0 0.0
    %5406 = vmatprep.subr.mxu0 0.0
    %5407 = vmatpush2.msra.mxu0 0.0
    %5408 = vmatprep.subr.mxu0 0.0
    %5409 = vmatpush2.msra.mxu0 0.0
    %5410 = vmatprep.subr.mxu0 0.0
    %5411 = vmatpush2.msra.mxu0 0.0
    %5412 = vmatprep.subr.mxu0 0.0
    %5413 = vmatpush2.msra.mxu0 0.0
    %5414 = vmatprep.subr.mxu0 0.0
    %5415 = vmatpush2.msra.mxu0 0.0
    %5416 = vmatprep.subr.mxu0 0.0
    %5417 = vmatpush2.msra.mxu0 0.0
    %5418 = vmatprep.subr.mxu0 0.0
    %5419 = vmatpush2.msra.mxu0 0.0
    %5420 = vmatprep.subr.mxu0 0.0
    %5421 = vmatpush2.msra.mxu0 0.0
    %5422 = vmatprep.subr.mxu0 0.0
    %5423 = vmatpush2.msra.mxu0 0.0
    %5424 = vmatprep.subr.mxu0 0.0
    %5425 = vmatpush2.msra.mxu0 0.0
    %5426 = vmatprep.subr.mxu0 0.0
    %5427 = vmatpush2.msra.mxu0 0.0
    %5428 = vmatprep.subr.mxu0 0.0
    %5429 = vmatpush2.msra.mxu0 0.0
    %5430 = vmatprep.subr.mxu0 0.0
    %5431 = vmatpush2.msra.mxu0 0.0
    %5432 = vmatprep.mubr.f32.mxu0 0.0
    %v5433 = vand.u32 %v5188, 4294901760
    %v5434 = vsub.f32 %v5188, %v5433
    %5435 = vmatmul.mubr.f32.gmra.mxu0 %v5434
    %v5436 = vpop.f32.mrf.mxu0
    %v5437 = vadd.f32 %v5357, %v5436
    %v5438 = vpop.f32.mrf.mxu0
    %5439 = vdwg.mxu0
    %5440 = vmatprep.subr.mxu0 0.0
    %5441 = vmatpush1.msra.mxu0 0.0
    %5442 = vmatprep.subr.mxu0 0.0
    %5443 = vmatpush1.msra.mxu0 0.0
    %5444 = vmatprep.subr.mxu0 0.0
    %5445 = vmatpush1.msra.mxu0 0.0
    %5446 = vmatprep.subr.mxu0 0.0
    %5447 = vmatpush1.msra.mxu0 0.0
    %5448 = vmatprep.subr.mxu0 0.0
    %5449 = vmatpush1.msra.mxu0 0.0
    %5450 = vmatprep.subr.mxu0 0.0
    %5451 = vmatpush1.msra.mxu0 0.0
    %5452 = vmatprep.subr.mxu0 0.0
    %5453 = vmatpush1.msra.mxu0 0.0
    %5454 = vmatprep.subr.mxu0 0.0
    %5455 = vmatpush1.msra.mxu0 0.0
    %5456 = vmatprep.subr.mxu0 0.0
    %5457 = vmatpush1.msra.mxu0 0.0
    %5458 = vmatprep.subr.mxu0 0.0
    %5459 = vmatpush1.msra.mxu0 0.0
    %5460 = vmatprep.subr.mxu0 0.0
    %5461 = vmatpush1.msra.mxu0 0.0
    %5462 = vmatprep.subr.mxu0 0.0
    %5463 = vmatpush1.msra.mxu0 0.0
    %5464 = vmatprep.subr.mxu0 0.0
    %v5465 = vand.u32 %v1034, 4294901760
    %5466 = vmatpush1.msra.mxu0 %v5465
    %5467 = vmatprep.subr.mxu0 0.0
    %v5468 = vand.u32 %v1033, 4294901760
    %5469 = vmatpush1.msra.mxu0 %v5468
    %5470 = vmatprep.subr.mxu0 0.0
    %v5471 = vand.u32 %v1032, 4294901760
    %5472 = vmatpush1.msra.mxu0 %v5471
    %5473 = vmatprep.subr.mxu0 0.0
    %v5474 = vand.u32 %v1031, 4294901760
    %5475 = vmatpush1.msra.mxu0 %v5474
    %5476 = vmatprep.subr.mxu0 0.0
    %5477 = vmatpush2.msra.mxu0 0.0
    %5478 = vmatprep.subr.mxu0 0.0
    %5479 = vmatpush2.msra.mxu0 0.0
    %5480 = vmatprep.subr.mxu0 0.0
    %5481 = vmatpush2.msra.mxu0 0.0
    %5482 = vmatprep.subr.mxu0 0.0
    %5483 = vmatpush2.msra.mxu0 0.0
    %5484 = vmatprep.subr.mxu0 0.0
    %5485 = vmatpush2.msra.mxu0 0.0
    %5486 = vmatprep.subr.mxu0 0.0
    %5487 = vmatpush2.msra.mxu0 0.0
    %5488 = vmatprep.subr.mxu0 0.0
    %5489 = vmatpush2.msra.mxu0 0.0
    %5490 = vmatprep.subr.mxu0 0.0
    %5491 = vmatpush2.msra.mxu0 0.0
    %5492 = vmatprep.subr.mxu0 0.0
    %5493 = vmatpush2.msra.mxu0 0.0
    %5494 = vmatprep.subr.mxu0 0.0
    %5495 = vmatpush2.msra.mxu0 0.0
    %5496 = vmatprep.subr.mxu0 0.0
    %5497 = vmatpush2.msra.mxu0 0.0
    %5498 = vmatprep.subr.mxu0 0.0
    %5499 = vmatpush2.msra.mxu0 0.0
    %5500 = vmatprep.subr.mxu0 0.0
    %5501 = vmatpush2.msra.mxu0 0.0
    %5502 = vmatprep.subr.mxu0 0.0
    %5503 = vmatpush2.msra.mxu0 0.0
    %5504 = vmatprep.subr.mxu0 0.0
    %5505 = vmatpush2.msra.mxu0 0.0
    %5506 = vmatprep.subr.mxu0 0.0
    %5507 = vmatpush2.msra.mxu0 0.0
    %5508 = vmatprep.mubr.f32.mxu0 0.0
    %v5509 = vand.u32 %v5188, 4294901760
    %v5510 = vsub.f32 %v5188, %v5509
    %v5511 = vand.u32 %v5510, 4294901760
    %5512 = vmatmul.mubr.f32.gmra.mxu0 %v5511
    %v5513 = vpop.f32.mrf.mxu0
    %v5514 = vadd.f32 %v5437, %v5513
    %v5515 = vpop.f32.mrf.mxu0
    %5516 = vdwg.mxu0
    %5517 = vmatprep.subr.mxu0 0.0
    %5518 = vmatpush1.msra.mxu0 0.0
    %5519 = vmatprep.subr.mxu0 0.0
    %5520 = vmatpush1.msra.mxu0 0.0
    %5521 = vmatprep.subr.mxu0 0.0
    %5522 = vmatpush1.msra.mxu0 0.0
    %5523 = vmatprep.subr.mxu0 0.0
    %5524 = vmatpush1.msra.mxu0 0.0
    %5525 = vmatprep.subr.mxu0 0.0
    %5526 = vmatpush1.msra.mxu0 0.0
    %5527 = vmatprep.subr.mxu0 0.0
    %5528 = vmatpush1.msra.mxu0 0.0
    %5529 = vmatprep.subr.mxu0 0.0
    %5530 = vmatpush1.msra.mxu0 0.0
    %5531 = vmatprep.subr.mxu0 0.0
    %5532 = vmatpush1.msra.mxu0 0.0
    %5533 = vmatprep.subr.mxu0 0.0
    %5534 = vmatpush1.msra.mxu0 0.0
    %5535 = vmatprep.subr.mxu0 0.0
    %5536 = vmatpush1.msra.mxu0 0.0
    %5537 = vmatprep.subr.mxu0 0.0
    %5538 = vmatpush1.msra.mxu0 0.0
    %5539 = vmatprep.subr.mxu0 0.0
    %5540 = vmatpush1.msra.mxu0 0.0
    %5541 = vmatprep.subr.mxu0 0.0
    %v5542 = vand.u32 %v1034, 4294901760
    %v5543 = vsub.f32 %v1034, %v5542
    %v5544 = vand.u32 %v5543, 4294901760
    %5545 = vmatpush1.msra.mxu0 %v5544
    %5546 = vmatprep.subr.mxu0 0.0
    %v5547 = vand.u32 %v1033, 4294901760
    %v5548 = vsub.f32 %v1033, %v5547
    %v5549 = vand.u32 %v5548, 4294901760
    %5550 = vmatpush1.msra.mxu0 %v5549
    %5551 = vmatprep.subr.mxu0 0.0
    %v5552 = vand.u32 %v1032, 4294901760
    %v5553 = vsub.f32 %v1032, %v5552
    %v5554 = vand.u32 %v5553, 4294901760
    %5555 = vmatpush1.msra.mxu0 %v5554
    %5556 = vmatprep.subr.mxu0 0.0
    %v5557 = vand.u32 %v1031, 4294901760
    %v5558 = vsub.f32 %v1031, %v5557
    %v5559 = vand.u32 %v5558, 4294901760
    %5560 = vmatpush1.msra.mxu0 %v5559
    %5561 = vmatprep.subr.mxu0 0.0
    %5562 = vmatpush2.msra.mxu0 0.0
    %5563 = vmatprep.subr.mxu0 0.0
    %5564 = vmatpush2.msra.mxu0 0.0
    %5565 = vmatprep.subr.mxu0 0.0
    %5566 = vmatpush2.msra.mxu0 0.0
    %5567 = vmatprep.subr.mxu0 0.0
    %5568 = vmatpush2.msra.mxu0 0.0
    %5569 = vmatprep.subr.mxu0 0.0
    %5570 = vmatpush2.msra.mxu0 0.0
    %5571 = vmatprep.subr.mxu0 0.0
    %5572 = vmatpush2.msra.mxu0 0.0
    %5573 = vmatprep.subr.mxu0 0.0
    %5574 = vmatpush2.msra.mxu0 0.0
    %5575 = vmatprep.subr.mxu0 0.0
    %5576 = vmatpush2.msra.mxu0 0.0
    %5577 = vmatprep.subr.mxu0 0.0
    %5578 = vmatpush2.msra.mxu0 0.0
    %5579 = vmatprep.subr.mxu0 0.0
    %5580 = vmatpush2.msra.mxu0 0.0
    %5581 = vmatprep.subr.mxu0 0.0
    %5582 = vmatpush2.msra.mxu0 0.0
    %5583 = vmatprep.subr.mxu0 0.0
    %5584 = vmatpush2.msra.mxu0 0.0
    %5585 = vmatprep.subr.mxu0 0.0
    %5586 = vmatpush2.msra.mxu0 0.0
    %5587 = vmatprep.subr.mxu0 0.0
    %5588 = vmatpush2.msra.mxu0 0.0
    %5589 = vmatprep.subr.mxu0 0.0
    %5590 = vmatpush2.msra.mxu0 0.0
    %5591 = vmatprep.subr.mxu0 0.0
    %5592 = vmatpush2.msra.mxu0 0.0
    %5593 = vmatprep.mubr.f32.mxu0 0.0
    %v5594 = vand.u32 %v5188, 4294901760
    %5595 = vmatmul.mubr.f32.gmra.mxu0 %v5594
    %v5596 = vpop.f32.mrf.mxu0
    %v5597 = vadd.f32 %v5514, %v5596
    %v5598 = vpop.f32.mrf.mxu0
    %5599 = vdwg.mxu0
    %5600 = vmatprep.subr.mxu0 0.0
    %5601 = vmatpush1.msra.mxu0 0.0
    %5602 = vmatprep.subr.mxu0 0.0
    %5603 = vmatpush1.msra.mxu0 0.0
    %5604 = vmatprep.subr.mxu0 0.0
    %5605 = vmatpush1.msra.mxu0 0.0
    %5606 = vmatprep.subr.mxu0 0.0
    %5607 = vmatpush1.msra.mxu0 0.0
    %5608 = vmatprep.subr.mxu0 0.0
    %5609 = vmatpush1.msra.mxu0 0.0
    %5610 = vmatprep.subr.mxu0 0.0
    %5611 = vmatpush1.msra.mxu0 0.0
    %5612 = vmatprep.subr.mxu0 0.0
    %5613 = vmatpush1.msra.mxu0 0.0
    %5614 = vmatprep.subr.mxu0 0.0
    %5615 = vmatpush1.msra.mxu0 0.0
    %5616 = vmatprep.subr.mxu0 0.0
    %5617 = vmatpush1.msra.mxu0 0.0
    %5618 = vmatprep.subr.mxu0 0.0
    %5619 = vmatpush1.msra.mxu0 0.0
    %5620 = vmatprep.subr.mxu0 0.0
    %5621 = vmatpush1.msra.mxu0 0.0
    %5622 = vmatprep.subr.mxu0 0.0
    %5623 = vmatpush1.msra.mxu0 0.0
    %5624 = vmatprep.subr.mxu0 0.0
    %v5625 = vand.u32 %v1034, 4294901760
    %5626 = vmatpush1.msra.mxu0 %v5625
    %5627 = vmatprep.subr.mxu0 0.0
    %v5628 = vand.u32 %v1033, 4294901760
    %5629 = vmatpush1.msra.mxu0 %v5628
    %5630 = vmatprep.subr.mxu0 0.0
    %v5631 = vand.u32 %v1032, 4294901760
    %5632 = vmatpush1.msra.mxu0 %v5631
    %5633 = vmatprep.subr.mxu0 0.0
    %v5634 = vand.u32 %v1031, 4294901760
    %5635 = vmatpush1.msra.mxu0 %v5634
    %5636 = vmatprep.subr.mxu0 0.0
    %5637 = vmatpush2.msra.mxu0 0.0
    %5638 = vmatprep.subr.mxu0 0.0
    %5639 = vmatpush2.msra.mxu0 0.0
    %5640 = vmatprep.subr.mxu0 0.0
    %5641 = vmatpush2.msra.mxu0 0.0
    %5642 = vmatprep.subr.mxu0 0.0
    %5643 = vmatpush2.msra.mxu0 0.0
    %5644 = vmatprep.subr.mxu0 0.0
    %5645 = vmatpush2.msra.mxu0 0.0
    %5646 = vmatprep.subr.mxu0 0.0
    %5647 = vmatpush2.msra.mxu0 0.0
    %5648 = vmatprep.subr.mxu0 0.0
    %5649 = vmatpush2.msra.mxu0 0.0
    %5650 = vmatprep.subr.mxu0 0.0
    %5651 = vmatpush2.msra.mxu0 0.0
    %5652 = vmatprep.subr.mxu0 0.0
    %5653 = vmatpush2.msra.mxu0 0.0
    %5654 = vmatprep.subr.mxu0 0.0
    %5655 = vmatpush2.msra.mxu0 0.0
    %5656 = vmatprep.subr.mxu0 0.0
    %5657 = vmatpush2.msra.mxu0 0.0
    %5658 = vmatprep.subr.mxu0 0.0
    %5659 = vmatpush2.msra.mxu0 0.0
    %5660 = vmatprep.subr.mxu0 0.0
    %5661 = vmatpush2.msra.mxu0 0.0
    %5662 = vmatprep.subr.mxu0 0.0
    %5663 = vmatpush2.msra.mxu0 0.0
    %5664 = vmatprep.subr.mxu0 0.0
    %5665 = vmatpush2.msra.mxu0 0.0
    %5666 = vmatprep.subr.mxu0 0.0
    %5667 = vmatpush2.msra.mxu0 0.0
    %5668 = vmatprep.mubr.f32.mxu0 0.0
    %v5669 = vand.u32 %v5188, 4294901760
    %5670 = vmatmul.mubr.f32.gmra.mxu0 %v5669
    %v5671 = vpop.f32.mrf.mxu0
    %v5672 = vadd.f32 %v5597, %v5671
    %v5673 = vpop.f32.mrf.mxu0
    %5674 = vdwg.mxu0
    %v5675 = vadd.f32 %v5187, %v5672
    %s5676 = scalar_lea.vmem [#allocation3], 24
    %v5677 = vld [vmem:[%s5676] sm:$0xff]
    %5678 = vrot.lane.b32.xlu0 %v5173, 32
    %v5679 = vpop.permute.xlu0 %5678
    %v5680 = vsel %vm104, %v5679, 0
    %5682 = vmatprep.subr.mxu0 0.0
    %5683 = vmatpush1.msra.mxu0 0.0
    %5684 = vmatprep.subr.mxu0 0.0
    %5685 = vmatpush1.msra.mxu0 0.0
    %5686 = vmatprep.subr.mxu0 0.0
    %5687 = vmatpush1.msra.mxu0 0.0
    %5688 = vmatprep.subr.mxu0 0.0
    %5689 = vmatpush1.msra.mxu0 0.0
    %5690 = vmatprep.subr.mxu0 0.0
    %5691 = vmatpush1.msra.mxu0 0.0
    %5692 = vmatprep.subr.mxu0 0.0
    %5693 = vmatpush1.msra.mxu0 0.0
    %5694 = vmatprep.subr.mxu0 0.0
    %5695 = vmatpush1.msra.mxu0 0.0
    %5696 = vmatprep.subr.mxu0 0.0
    %5697 = vmatpush1.msra.mxu0 0.0
    %5698 = vmatprep.subr.mxu0 0.0
    %5699 = vmatpush1.msra.mxu0 0.0
    %5700 = vmatprep.subr.mxu0 0.0
    %5701 = vmatpush1.msra.mxu0 0.0
    %5702 = vmatprep.subr.mxu0 0.0
    %5703 = vmatpush1.msra.mxu0 0.0
    %5704 = vmatprep.subr.mxu0 0.0
    %5705 = vmatpush1.msra.mxu0 0.0
    %5706 = vmatprep.subr.mxu0 0.0
    %v5707 = vand.u32 %v1038, 4294901760
    %5708 = vmatpush1.msra.mxu0 %v5707
    %5709 = vmatprep.subr.mxu0 0.0
    %v5710 = vand.u32 %v1037, 4294901760
    %5711 = vmatpush1.msra.mxu0 %v5710
    %5712 = vmatprep.subr.mxu0 0.0
    %v5713 = vand.u32 %v1036, 4294901760
    %5714 = vmatpush1.msra.mxu0 %v5713
    %5715 = vmatprep.subr.mxu0 0.0
    %v5716 = vand.u32 %v1035, 4294901760
    %5717 = vmatpush1.msra.mxu0 %v5716
    %5718 = vmatprep.subr.mxu0 0.0
    %5719 = vmatpush2.msra.mxu0 0.0
    %5720 = vmatprep.subr.mxu0 0.0
    %5721 = vmatpush2.msra.mxu0 0.0
    %5722 = vmatprep.subr.mxu0 0.0
    %5723 = vmatpush2.msra.mxu0 0.0
    %5724 = vmatprep.subr.mxu0 0.0
    %5725 = vmatpush2.msra.mxu0 0.0
    %5726 = vmatprep.subr.mxu0 0.0
    %5727 = vmatpush2.msra.mxu0 0.0
    %5728 = vmatprep.subr.mxu0 0.0
    %5729 = vmatpush2.msra.mxu0 0.0
    %5730 = vmatprep.subr.mxu0 0.0
    %5731 = vmatpush2.msra.mxu0 0.0
    %5732 = vmatprep.subr.mxu0 0.0
    %5733 = vmatpush2.msra.mxu0 0.0
    %5734 = vmatprep.subr.mxu0 0.0
    %5735 = vmatpush2.msra.mxu0 0.0
    %5736 = vmatprep.subr.mxu0 0.0
    %5737 = vmatpush2.msra.mxu0 0.0
    %5738 = vmatprep.subr.mxu0 0.0
    %5739 = vmatpush2.msra.mxu0 0.0
    %5740 = vmatprep.subr.mxu0 0.0
    %5741 = vmatpush2.msra.mxu0 0.0
    %5742 = vmatprep.subr.mxu0 0.0
    %5743 = vmatpush2.msra.mxu0 0.0
    %5744 = vmatprep.subr.mxu0 0.0
    %5745 = vmatpush2.msra.mxu0 0.0
    %5746 = vmatprep.subr.mxu0 0.0
    %5747 = vmatpush2.msra.mxu0 0.0
    %5748 = vmatprep.subr.mxu0 0.0
    %5749 = vmatpush2.msra.mxu0 0.0
    %5750 = vmatprep.mubr.f32.mxu0 0.0
    %v5751 = vand.u32 %v5680, 4294901760
    %v5752 = vsub.f32 %v5680, %v5751
    %v5753 = vand.u32 %v5752, 4294901760
    %v5754 = vsub.f32 %v5752, %v5753
    %v5755 = vand.u32 %v5754, 4294901760
    %5756 = vmatmul.mubr.f32.gmra.mxu0 %v5755
    %v5757 = vpop.f32.mrf.mxu0
    %v5758 = vadd.f32 0.0, %v5757
    %v5759 = vpop.f32.mrf.mxu0
    %5760 = vdwg.mxu0
    %5761 = vmatprep.subr.mxu0 0.0
    %5762 = vmatpush1.msra.mxu0 0.0
    %5763 = vmatprep.subr.mxu0 0.0
    %5764 = vmatpush1.msra.mxu0 0.0
    %5765 = vmatprep.subr.mxu0 0.0
    %5766 = vmatpush1.msra.mxu0 0.0
    %5767 = vmatprep.subr.mxu0 0.0
    %5768 = vmatpush1.msra.mxu0 0.0
    %5769 = vmatprep.subr.mxu0 0.0
    %5770 = vmatpush1.msra.mxu0 0.0
    %5771 = vmatprep.subr.mxu0 0.0
    %5772 = vmatpush1.msra.mxu0 0.0
    %5773 = vmatprep.subr.mxu0 0.0
    %5774 = vmatpush1.msra.mxu0 0.0
    %5775 = vmatprep.subr.mxu0 0.0
    %5776 = vmatpush1.msra.mxu0 0.0
    %5777 = vmatprep.subr.mxu0 0.0
    %5778 = vmatpush1.msra.mxu0 0.0
    %5779 = vmatprep.subr.mxu0 0.0
    %5780 = vmatpush1.msra.mxu0 0.0
    %5781 = vmatprep.subr.mxu0 0.0
    %5782 = vmatpush1.msra.mxu0 0.0
    %5783 = vmatprep.subr.mxu0 0.0
    %5784 = vmatpush1.msra.mxu0 0.0
    %5785 = vmatprep.subr.mxu0 0.0
    %v5786 = vand.u32 %v1038, 4294901760
    %v5787 = vsub.f32 %v1038, %v5786
    %v5788 = vand.u32 %v5787, 4294901760
    %v5789 = vsub.f32 %v5787, %v5788
    %v5790 = vand.u32 %v5789, 4294901760
    %5791 = vmatpush1.msra.mxu0 %v5790
    %5792 = vmatprep.subr.mxu0 0.0
    %v5793 = vand.u32 %v1037, 4294901760
    %v5794 = vsub.f32 %v1037, %v5793
    %v5795 = vand.u32 %v5794, 4294901760
    %v5796 = vsub.f32 %v5794, %v5795
    %v5797 = vand.u32 %v5796, 4294901760
    %5798 = vmatpush1.msra.mxu0 %v5797
    %5799 = vmatprep.subr.mxu0 0.0
    %v5800 = vand.u32 %v1036, 4294901760
    %v5801 = vsub.f32 %v1036, %v5800
    %v5802 = vand.u32 %v5801, 4294901760
    %v5803 = vsub.f32 %v5801, %v5802
    %v5804 = vand.u32 %v5803, 4294901760
    %5805 = vmatpush1.msra.mxu0 %v5804
    %5806 = vmatprep.subr.mxu0 0.0
    %v5807 = vand.u32 %v1035, 4294901760
    %v5808 = vsub.f32 %v1035, %v5807
    %v5809 = vand.u32 %v5808, 4294901760
    %v5810 = vsub.f32 %v5808, %v5809
    %v5811 = vand.u32 %v5810, 4294901760
    %5812 = vmatpush1.msra.mxu0 %v5811
    %5813 = vmatprep.subr.mxu0 0.0
    %5814 = vmatpush2.msra.mxu0 0.0
    %5815 = vmatprep.subr.mxu0 0.0
    %5816 = vmatpush2.msra.mxu0 0.0
    %5817 = vmatprep.subr.mxu0 0.0
    %5818 = vmatpush2.msra.mxu0 0.0
    %5819 = vmatprep.subr.mxu0 0.0
    %5820 = vmatpush2.msra.mxu0 0.0
    %5821 = vmatprep.subr.mxu0 0.0
    %5822 = vmatpush2.msra.mxu0 0.0
    %5823 = vmatprep.subr.mxu0 0.0
    %5824 = vmatpush2.msra.mxu0 0.0
    %5825 = vmatprep.subr.mxu0 0.0
    %5826 = vmatpush2.msra.mxu0 0.0
    %5827 = vmatprep.subr.mxu0 0.0
    %5828 = vmatpush2.msra.mxu0 0.0
    %5829 = vmatprep.subr.mxu0 0.0
    %5830 = vmatpush2.msra.mxu0 0.0
    %5831 = vmatprep.subr.mxu0 0.0
    %5832 = vmatpush2.msra.mxu0 0.0
    %5833 = vmatprep.subr.mxu0 0.0
    %5834 = vmatpush2.msra.mxu0 0.0
    %5835 = vmatprep.subr.mxu0 0.0
    %5836 = vmatpush2.msra.mxu0 0.0
    %5837 = vmatprep.subr.mxu0 0.0
    %5838 = vmatpush2.msra.mxu0 0.0
    %5839 = vmatprep.subr.mxu0 0.0
    %5840 = vmatpush2.msra.mxu0 0.0
    %5841 = vmatprep.subr.mxu0 0.0
    %5842 = vmatpush2.msra.mxu0 0.0
    %5843 = vmatprep.subr.mxu0 0.0
    %5844 = vmatpush2.msra.mxu0 0.0
    %5845 = vmatprep.mubr.f32.mxu0 0.0
    %v5846 = vand.u32 %v5680, 4294901760
    %5847 = vmatmul.mubr.f32.gmra.mxu0 %v5846
    %v5848 = vpop.f32.mrf.mxu0
    %v5849 = vadd.f32 %v5758, %v5848
    %v5850 = vpop.f32.mrf.mxu0
    %5851 = vdwg.mxu0
    %5852 = vmatprep.subr.mxu0 0.0
    %5853 = vmatpush1.msra.mxu0 0.0
    %5854 = vmatprep.subr.mxu0 0.0
    %5855 = vmatpush1.msra.mxu0 0.0
    %5856 = vmatprep.subr.mxu0 0.0
    %5857 = vmatpush1.msra.mxu0 0.0
    %5858 = vmatprep.subr.mxu0 0.0
    %5859 = vmatpush1.msra.mxu0 0.0
    %5860 = vmatprep.subr.mxu0 0.0
    %5861 = vmatpush1.msra.mxu0 0.0
    %5862 = vmatprep.subr.mxu0 0.0
    %5863 = vmatpush1.msra.mxu0 0.0
    %5864 = vmatprep.subr.mxu0 0.0
    %5865 = vmatpush1.msra.mxu0 0.0
    %5866 = vmatprep.subr.mxu0 0.0
    %5867 = vmatpush1.msra.mxu0 0.0
    %5868 = vmatprep.subr.mxu0 0.0
    %5869 = vmatpush1.msra.mxu0 0.0
    %5870 = vmatprep.subr.mxu0 0.0
    %5871 = vmatpush1.msra.mxu0 0.0
    %5872 = vmatprep.subr.mxu0 0.0
    %5873 = vmatpush1.msra.mxu0 0.0
    %5874 = vmatprep.subr.mxu0 0.0
    %5875 = vmatpush1.msra.mxu0 0.0
    %5876 = vmatprep.subr.mxu0 0.0
    %v5877 = vand.u32 %v1038, 4294901760
    %v5878 = vsub.f32 %v1038, %v5877
    %5879 = vmatpush1.msra.mxu0 %v5878
    %5880 = vmatprep.subr.mxu0 0.0
    %v5881 = vand.u32 %v1037, 4294901760
    %v5882 = vsub.f32 %v1037, %v5881
    %5883 = vmatpush1.msra.mxu0 %v5882
    %5884 = vmatprep.subr.mxu0 0.0
    %v5885 = vand.u32 %v1036, 4294901760
    %v5886 = vsub.f32 %v1036, %v5885
    %5887 = vmatpush1.msra.mxu0 %v5886
    %5888 = vmatprep.subr.mxu0 0.0
    %v5889 = vand.u32 %v1035, 4294901760
    %v5890 = vsub.f32 %v1035, %v5889
    %5891 = vmatpush1.msra.mxu0 %v5890
    %5892 = vmatprep.subr.mxu0 0.0
    %5893 = vmatpush2.msra.mxu0 0.0
    %5894 = vmatprep.subr.mxu0 0.0
    %5895 = vmatpush2.msra.mxu0 0.0
    %5896 = vmatprep.subr.mxu0 0.0
    %5897 = vmatpush2.msra.mxu0 0.0
    %5898 = vmatprep.subr.mxu0 0.0
    %5899 = vmatpush2.msra.mxu0 0.0
    %5900 = vmatprep.subr.mxu0 0.0
    %5901 = vmatpush2.msra.mxu0 0.0
    %5902 = vmatprep.subr.mxu0 0.0
    %5903 = vmatpush2.msra.mxu0 0.0
    %5904 = vmatprep.subr.mxu0 0.0
    %5905 = vmatpush2.msra.mxu0 0.0
    %5906 = vmatprep.subr.mxu0 0.0
    %5907 = vmatpush2.msra.mxu0 0.0
    %5908 = vmatprep.subr.mxu0 0.0
    %5909 = vmatpush2.msra.mxu0 0.0
    %5910 = vmatprep.subr.mxu0 0.0
    %5911 = vmatpush2.msra.mxu0 0.0
    %5912 = vmatprep.subr.mxu0 0.0
    %5913 = vmatpush2.msra.mxu0 0.0
    %5914 = vmatprep.subr.mxu0 0.0
    %5915 = vmatpush2.msra.mxu0 0.0
    %5916 = vmatprep.subr.mxu0 0.0
    %5917 = vmatpush2.msra.mxu0 0.0
    %5918 = vmatprep.subr.mxu0 0.0
    %5919 = vmatpush2.msra.mxu0 0.0
    %5920 = vmatprep.subr.mxu0 0.0
    %5921 = vmatpush2.msra.mxu0 0.0
    %5922 = vmatprep.subr.mxu0 0.0
    %5923 = vmatpush2.msra.mxu0 0.0
    %5924 = vmatprep.mubr.f32.mxu0 0.0
    %v5925 = vand.u32 %v5680, 4294901760
    %v5926 = vsub.f32 %v5680, %v5925
    %5927 = vmatmul.mubr.f32.gmra.mxu0 %v5926
    %v5928 = vpop.f32.mrf.mxu0
    %v5929 = vadd.f32 %v5849, %v5928
    %v5930 = vpop.f32.mrf.mxu0
    %5931 = vdwg.mxu0
    %5932 = vmatprep.subr.mxu0 0.0
    %5933 = vmatpush1.msra.mxu0 0.0
    %5934 = vmatprep.subr.mxu0 0.0
    %5935 = vmatpush1.msra.mxu0 0.0
    %5936 = vmatprep.subr.mxu0 0.0
    %5937 = vmatpush1.msra.mxu0 0.0
    %5938 = vmatprep.subr.mxu0 0.0
    %5939 = vmatpush1.msra.mxu0 0.0
    %5940 = vmatprep.subr.mxu0 0.0
    %5941 = vmatpush1.msra.mxu0 0.0
    %5942 = vmatprep.subr.mxu0 0.0
    %5943 = vmatpush1.msra.mxu0 0.0
    %5944 = vmatprep.subr.mxu0 0.0
    %5945 = vmatpush1.msra.mxu0 0.0
    %5946 = vmatprep.subr.mxu0 0.0
    %5947 = vmatpush1.msra.mxu0 0.0
    %5948 = vmatprep.subr.mxu0 0.0
    %5949 = vmatpush1.msra.mxu0 0.0
    %5950 = vmatprep.subr.mxu0 0.0
    %5951 = vmatpush1.msra.mxu0 0.0
    %5952 = vmatprep.subr.mxu0 0.0
    %5953 = vmatpush1.msra.mxu0 0.0
    %5954 = vmatprep.subr.mxu0 0.0
    %5955 = vmatpush1.msra.mxu0 0.0
    %5956 = vmatprep.subr.mxu0 0.0
    %v5957 = vand.u32 %v1038, 4294901760
    %5958 = vmatpush1.msra.mxu0 %v5957
    %5959 = vmatprep.subr.mxu0 0.0
    %v5960 = vand.u32 %v1037, 4294901760
    %5961 = vmatpush1.msra.mxu0 %v5960
    %5962 = vmatprep.subr.mxu0 0.0
    %v5963 = vand.u32 %v1036, 4294901760
    %5964 = vmatpush1.msra.mxu0 %v5963
    %5965 = vmatprep.subr.mxu0 0.0
    %v5966 = vand.u32 %v1035, 4294901760
    %5967 = vmatpush1.msra.mxu0 %v5966
    %5968 = vmatprep.subr.mxu0 0.0
    %5969 = vmatpush2.msra.mxu0 0.0
    %5970 = vmatprep.subr.mxu0 0.0
    %5971 = vmatpush2.msra.mxu0 0.0
    %5972 = vmatprep.subr.mxu0 0.0
    %5973 = vmatpush2.msra.mxu0 0.0
    %5974 = vmatprep.subr.mxu0 0.0
    %5975 = vmatpush2.msra.mxu0 0.0
    %5976 = vmatprep.subr.mxu0 0.0
    %5977 = vmatpush2.msra.mxu0 0.0
    %5978 = vmatprep.subr.mxu0 0.0
    %5979 = vmatpush2.msra.mxu0 0.0
    %5980 = vmatprep.subr.mxu0 0.0
    %5981 = vmatpush2.msra.mxu0 0.0
    %5982 = vmatprep.subr.mxu0 0.0
    %5983 = vmatpush2.msra.mxu0 0.0
    %5984 = vmatprep.subr.mxu0 0.0
    %5985 = vmatpush2.msra.mxu0 0.0
    %5986 = vmatprep.subr.mxu0 0.0
    %5987 = vmatpush2.msra.mxu0 0.0
    %5988 = vmatprep.subr.mxu0 0.0
    %5989 = vmatpush2.msra.mxu0 0.0
    %5990 = vmatprep.subr.mxu0 0.0
    %5991 = vmatpush2.msra.mxu0 0.0
    %5992 = vmatprep.subr.mxu0 0.0
    %5993 = vmatpush2.msra.mxu0 0.0
    %5994 = vmatprep.subr.mxu0 0.0
    %5995 = vmatpush2.msra.mxu0 0.0
    %5996 = vmatprep.subr.mxu0 0.0
    %5997 = vmatpush2.msra.mxu0 0.0
    %5998 = vmatprep.subr.mxu0 0.0
    %5999 = vmatpush2.msra.mxu0 0.0
    %6000 = vmatprep.mubr.f32.mxu0 0.0
    %v6001 = vand.u32 %v5680, 4294901760
    %v6002 = vsub.f32 %v5680, %v6001
    %v6003 = vand.u32 %v6002, 4294901760
    %6004 = vmatmul.mubr.f32.gmra.mxu0 %v6003
    %v6005 = vpop.f32.mrf.mxu0
    %v6006 = vadd.f32 %v5929, %v6005
    %v6007 = vpop.f32.mrf.mxu0
    %6008 = vdwg.mxu0
    %6009 = vmatprep.subr.mxu0 0.0
    %6010 = vmatpush1.msra.mxu0 0.0
    %6011 = vmatprep.subr.mxu0 0.0
    %6012 = vmatpush1.msra.mxu0 0.0
    %6013 = vmatprep.subr.mxu0 0.0
    %6014 = vmatpush1.msra.mxu0 0.0
    %6015 = vmatprep.subr.mxu0 0.0
    %6016 = vmatpush1.msra.mxu0 0.0
    %6017 = vmatprep.subr.mxu0 0.0
    %6018 = vmatpush1.msra.mxu0 0.0
    %6019 = vmatprep.subr.mxu0 0.0
    %6020 = vmatpush1.msra.mxu0 0.0
    %6021 = vmatprep.subr.mxu0 0.0
    %6022 = vmatpush1.msra.mxu0 0.0
    %6023 = vmatprep.subr.mxu0 0.0
    %6024 = vmatpush1.msra.mxu0 0.0
    %6025 = vmatprep.subr.mxu0 0.0
    %6026 = vmatpush1.msra.mxu0 0.0
    %6027 = vmatprep.subr.mxu0 0.0
    %6028 = vmatpush1.msra.mxu0 0.0
    %6029 = vmatprep.subr.mxu0 0.0
    %6030 = vmatpush1.msra.mxu0 0.0
    %6031 = vmatprep.subr.mxu0 0.0
    %6032 = vmatpush1.msra.mxu0 0.0
    %6033 = vmatprep.subr.mxu0 0.0
    %v6034 = vand.u32 %v1038, 4294901760
    %v6035 = vsub.f32 %v1038, %v6034
    %v6036 = vand.u32 %v6035, 4294901760
    %6037 = vmatpush1.msra.mxu0 %v6036
    %6038 = vmatprep.subr.mxu0 0.0
    %v6039 = vand.u32 %v1037, 4294901760
    %v6040 = vsub.f32 %v1037, %v6039
    %v6041 = vand.u32 %v6040, 4294901760
    %6042 = vmatpush1.msra.mxu0 %v6041
    %6043 = vmatprep.subr.mxu0 0.0
    %v6044 = vand.u32 %v1036, 4294901760
    %v6045 = vsub.f32 %v1036, %v6044
    %v6046 = vand.u32 %v6045, 4294901760
    %6047 = vmatpush1.msra.mxu0 %v6046
    %6048 = vmatprep.subr.mxu0 0.0
    %v6049 = vand.u32 %v1035, 4294901760
    %v6050 = vsub.f32 %v1035, %v6049
    %v6051 = vand.u32 %v6050, 4294901760
    %6052 = vmatpush1.msra.mxu0 %v6051
    %6053 = vmatprep.subr.mxu0 0.0
    %6054 = vmatpush2.msra.mxu0 0.0
    %6055 = vmatprep.subr.mxu0 0.0
    %6056 = vmatpush2.msra.mxu0 0.0
    %6057 = vmatprep.subr.mxu0 0.0
    %6058 = vmatpush2.msra.mxu0 0.0
    %6059 = vmatprep.subr.mxu0 0.0
    %6060 = vmatpush2.msra.mxu0 0.0
    %6061 = vmatprep.subr.mxu0 0.0
    %6062 = vmatpush2.msra.mxu0 0.0
    %6063 = vmatprep.subr.mxu0 0.0
    %6064 = vmatpush2.msra.mxu0 0.0
    %6065 = vmatprep.subr.mxu0 0.0
    %6066 = vmatpush2.msra.mxu0 0.0
    %6067 = vmatprep.subr.mxu0 0.0
    %6068 = vmatpush2.msra.mxu0 0.0
    %6069 = vmatprep.subr.mxu0 0.0
    %6070 = vmatpush2.msra.mxu0 0.0
    %6071 = vmatprep.subr.mxu0 0.0
    %6072 = vmatpush2.msra.mxu0 0.0
    %6073 = vmatprep.subr.mxu0 0.0
    %6074 = vmatpush2.msra.mxu0 0.0
    %6075 = vmatprep.subr.mxu0 0.0
    %6076 = vmatpush2.msra.mxu0 0.0
    %6077 = vmatprep.subr.mxu0 0.0
    %6078 = vmatpush2.msra.mxu0 0.0
    %6079 = vmatprep.subr.mxu0 0.0
    %6080 = vmatpush2.msra.mxu0 0.0
    %6081 = vmatprep.subr.mxu0 0.0
    %6082 = vmatpush2.msra.mxu0 0.0
    %6083 = vmatprep.subr.mxu0 0.0
    %6084 = vmatpush2.msra.mxu0 0.0
    %6085 = vmatprep.mubr.f32.mxu0 0.0
    %v6086 = vand.u32 %v5680, 4294901760
    %6087 = vmatmul.mubr.f32.gmra.mxu0 %v6086
    %v6088 = vpop.f32.mrf.mxu0
    %v6089 = vadd.f32 %v6006, %v6088
    %v6090 = vpop.f32.mrf.mxu0
    %6091 = vdwg.mxu0
    %6092 = vmatprep.subr.mxu0 0.0
    %6093 = vmatpush1.msra.mxu0 0.0
    %6094 = vmatprep.subr.mxu0 0.0
    %6095 = vmatpush1.msra.mxu0 0.0
    %6096 = vmatprep.subr.mxu0 0.0
    %6097 = vmatpush1.msra.mxu0 0.0
    %6098 = vmatprep.subr.mxu0 0.0
    %6099 = vmatpush1.msra.mxu0 0.0
    %6100 = vmatprep.subr.mxu0 0.0
    %6101 = vmatpush1.msra.mxu0 0.0
    %6102 = vmatprep.subr.mxu0 0.0
    %6103 = vmatpush1.msra.mxu0 0.0
    %6104 = vmatprep.subr.mxu0 0.0
    %6105 = vmatpush1.msra.mxu0 0.0
    %6106 = vmatprep.subr.mxu0 0.0
    %6107 = vmatpush1.msra.mxu0 0.0
    %6108 = vmatprep.subr.mxu0 0.0
    %6109 = vmatpush1.msra.mxu0 0.0
    %6110 = vmatprep.subr.mxu0 0.0
    %6111 = vmatpush1.msra.mxu0 0.0
    %6112 = vmatprep.subr.mxu0 0.0
    %6113 = vmatpush1.msra.mxu0 0.0
    %6114 = vmatprep.subr.mxu0 0.0
    %6115 = vmatpush1.msra.mxu0 0.0
    %6116 = vmatprep.subr.mxu0 0.0
    %v6117 = vand.u32 %v1038, 4294901760
    %6118 = vmatpush1.msra.mxu0 %v6117
    %6119 = vmatprep.subr.mxu0 0.0
    %v6120 = vand.u32 %v1037, 4294901760
    %6121 = vmatpush1.msra.mxu0 %v6120
    %6122 = vmatprep.subr.mxu0 0.0
    %v6123 = vand.u32 %v1036, 4294901760
    %6124 = vmatpush1.msra.mxu0 %v6123
    %6125 = vmatprep.subr.mxu0 0.0
    %v6126 = vand.u32 %v1035, 4294901760
    %6127 = vmatpush1.msra.mxu0 %v6126
    %6128 = vmatprep.subr.mxu0 0.0
    %6129 = vmatpush2.msra.mxu0 0.0
    %6130 = vmatprep.subr.mxu0 0.0
    %6131 = vmatpush2.msra.mxu0 0.0
    %6132 = vmatprep.subr.mxu0 0.0
    %6133 = vmatpush2.msra.mxu0 0.0
    %6134 = vmatprep.subr.mxu0 0.0
    %6135 = vmatpush2.msra.mxu0 0.0
    %6136 = vmatprep.subr.mxu0 0.0
    %6137 = vmatpush2.msra.mxu0 0.0
    %6138 = vmatprep.subr.mxu0 0.0
    %6139 = vmatpush2.msra.mxu0 0.0
    %6140 = vmatprep.subr.mxu0 0.0
    %6141 = vmatpush2.msra.mxu0 0.0
    %6142 = vmatprep.subr.mxu0 0.0
    %6143 = vmatpush2.msra.mxu0 0.0
    %6144 = vmatprep.subr.mxu0 0.0
    %6145 = vmatpush2.msra.mxu0 0.0
    %6146 = vmatprep.subr.mxu0 0.0
    %6147 = vmatpush2.msra.mxu0 0.0
    %6148 = vmatprep.subr.mxu0 0.0
    %6149 = vmatpush2.msra.mxu0 0.0
    %6150 = vmatprep.subr.mxu0 0.0
    %6151 = vmatpush2.msra.mxu0 0.0
    %6152 = vmatprep.subr.mxu0 0.0
    %6153 = vmatpush2.msra.mxu0 0.0
    %6154 = vmatprep.subr.mxu0 0.0
    %6155 = vmatpush2.msra.mxu0 0.0
    %6156 = vmatprep.subr.mxu0 0.0
    %6157 = vmatpush2.msra.mxu0 0.0
    %6158 = vmatprep.subr.mxu0 0.0
    %6159 = vmatpush2.msra.mxu0 0.0
    %6160 = vmatprep.mubr.f32.mxu0 0.0
    %v6161 = vand.u32 %v5680, 4294901760
    %6162 = vmatmul.mubr.f32.gmra.mxu0 %v6161
    %v6163 = vpop.f32.mrf.mxu0
    %v6164 = vadd.f32 %v6089, %v6163
    %v6165 = vpop.f32.mrf.mxu0
    %6166 = vdwg.mxu0
    %v6167 = vadd.f32 %v5677, %v6164
    %v6168 = vmul.f32 %v5675, %v1044
    %v6169 = vtanh.pop %v6168
    %v6170 = vmul.f32 %v6169, %v1044
    %v6171 = vadd.f32 %v6170, %v1045
    %v6172 = vmul.f32 %v6171, %v5146
    %6174 = vrot.lane.b32.xlu0 %v6171, 64
    %v6175 = vpop.permute.xlu0 %6174
    %v6177 = vmul.f32 %v6171, %v6175
    %6179 = vrot.lane.b32.xlu0 %v6177, 32
    %v6180 = vpop.permute.xlu0 %6179
    %v6182 = vadd.f32 %v6172, %v6180
    %v6183 = vtanh.pop %v6182
    %6185 = vrot.lane.b32.xlu0 %v6183, 64
    %v6186 = vpop.permute.xlu0 %6185
    %v6188 = vmul.f32 %v6171, %v6186
    %v6189 = vmul.f32 %v6167, %v1044
    %v6190 = vtanh.pop %v6189
    %v6191 = vmul.f32 %v6190, %v1044
    %v6192 = vadd.f32 %v6191, %v1045
    %v6193 = vmul.f32 %v6192, %v5167
    %6195 = vrot.lane.b32.xlu0 %v6192, 64
    %v6196 = vpop.permute.xlu0 %6195
    %v6198 = vmul.f32 %v6192, %v6196
    %6200 = vrot.lane.b32.xlu0 %v6198, 32
    %v6201 = vpop.permute.xlu0 %6200
    %v6203 = vadd.f32 %v6193, %v6201
    %v6204 = vtanh.pop %v6203
    %6206 = vrot.lane.b32.xlu0 %v6204, 64
    %v6207 = vpop.permute.xlu0 %6206
    %v6209 = vmul.f32 %v6192, %v6207
    %6211 = vrot.lane.b32.xlu0 %v6188, 32
    %v6212 = vpop.permute.xlu0 %6211
    %6214 = vst.msk [vmem:[%s5184] sm:$0xff] %vm104, %v6212
    %6216 = vrot.lane.b32.xlu0 %v6209, 64
    %v6217 = vpop.permute.xlu0 %6216
    %6219 = vst.msk [vmem:[%s5178] sm:$0xff] %vm2076, %v6217
    %s6220 = scalar_lea.vmem [#allocation2], 40
    %v6221 = vld [vmem:[%s6220] sm:$0xff]
    %v6222 = vsel %vm104, %v6212, 0
    %6224 = vmatprep.subr.mxu0 0.0
    %6225 = vmatpush1.msra.mxu0 0.0
    %6226 = vmatprep.subr.mxu0 0.0
    %6227 = vmatpush1.msra.mxu0 0.0
    %6228 = vmatprep.subr.mxu0 0.0
    %6229 = vmatpush1.msra.mxu0 0.0
    %6230 = vmatprep.subr.mxu0 0.0
    %6231 = vmatpush1.msra.mxu0 0.0
    %6232 = vmatprep.subr.mxu0 0.0
    %6233 = vmatpush1.msra.mxu0 0.0
    %6234 = vmatprep.subr.mxu0 0.0
    %6235 = vmatpush1.msra.mxu0 0.0
    %6236 = vmatprep.subr.mxu0 0.0
    %6237 = vmatpush1.msra.mxu0 0.0
    %6238 = vmatprep.subr.mxu0 0.0
    %6239 = vmatpush1.msra.mxu0 0.0
    %6240 = vmatprep.subr.mxu0 0.0
    %6241 = vmatpush1.msra.mxu0 0.0
    %6242 = vmatprep.subr.mxu0 0.0
    %6243 = vmatpush1.msra.mxu0 0.0
    %6244 = vmatprep.subr.mxu0 0.0
    %6245 = vmatpush1.msra.mxu0 0.0
    %6246 = vmatprep.subr.mxu0 0.0
    %6247 = vmatpush1.msra.mxu0 0.0
    %6248 = vmatprep.subr.mxu0 0.0
    %v6249 = vand.u32 %v1034, 4294901760
    %6250 = vmatpush1.msra.mxu0 %v6249
    %6251 = vmatprep.subr.mxu0 0.0
    %v6252 = vand.u32 %v1033, 4294901760
    %6253 = vmatpush1.msra.mxu0 %v6252
    %6254 = vmatprep.subr.mxu0 0.0
    %v6255 = vand.u32 %v1032, 4294901760
    %6256 = vmatpush1.msra.mxu0 %v6255
    %6257 = vmatprep.subr.mxu0 0.0
    %v6258 = vand.u32 %v1031, 4294901760
    %6259 = vmatpush1.msra.mxu0 %v6258
    %6260 = vmatprep.subr.mxu0 0.0
    %6261 = vmatpush2.msra.mxu0 0.0
    %6262 = vmatprep.subr.mxu0 0.0
    %6263 = vmatpush2.msra.mxu0 0.0
    %6264 = vmatprep.subr.mxu0 0.0
    %6265 = vmatpush2.msra.mxu0 0.0
    %6266 = vmatprep.subr.mxu0 0.0
    %6267 = vmatpush2.msra.mxu0 0.0
    %6268 = vmatprep.subr.mxu0 0.0
    %6269 = vmatpush2.msra.mxu0 0.0
    %6270 = vmatprep.subr.mxu0 0.0
    %6271 = vmatpush2.msra.mxu0 0.0
    %6272 = vmatprep.subr.mxu0 0.0
    %6273 = vmatpush2.msra.mxu0 0.0
    %6274 = vmatprep.subr.mxu0 0.0
    %6275 = vmatpush2.msra.mxu0 0.0
    %6276 = vmatprep.subr.mxu0 0.0
    %6277 = vmatpush2.msra.mxu0 0.0
    %6278 = vmatprep.subr.mxu0 0.0
    %6279 = vmatpush2.msra.mxu0 0.0
    %6280 = vmatprep.subr.mxu0 0.0
    %6281 = vmatpush2.msra.mxu0 0.0
    %6282 = vmatprep.subr.mxu0 0.0
    %6283 = vmatpush2.msra.mxu0 0.0
    %6284 = vmatprep.subr.mxu0 0.0
    %6285 = vmatpush2.msra.mxu0 0.0
    %6286 = vmatprep.subr.mxu0 0.0
    %6287 = vmatpush2.msra.mxu0 0.0
    %6288 = vmatprep.subr.mxu0 0.0
    %6289 = vmatpush2.msra.mxu0 0.0
    %6290 = vmatprep.subr.mxu0 0.0
    %6291 = vmatpush2.msra.mxu0 0.0
    %6292 = vmatprep.mubr.f32.mxu0 0.0
    %v6293 = vand.u32 %v6222, 4294901760
    %v6294 = vsub.f32 %v6222, %v6293
    %v6295 = vand.u32 %v6294, 4294901760
    %v6296 = vsub.f32 %v6294, %v6295
    %v6297 = vand.u32 %v6296, 4294901760
    %6298 = vmatmul.mubr.f32.gmra.mxu0 %v6297
    %v6299 = vpop.f32.mrf.mxu0
    %v6300 = vadd.f32 0.0, %v6299
    %v6301 = vpop.f32.mrf.mxu0
    %6302 = vdwg.mxu0
    %6303 = vmatprep.subr.mxu0 0.0
    %6304 = vmatpush1.msra.mxu0 0.0
    %6305 = vmatprep.subr.mxu0 0.0
    %6306 = vmatpush1.msra.mxu0 0.0
    %6307 = vmatprep.subr.mxu0 0.0
    %6308 = vmatpush1.msra.mxu0 0.0
    %6309 = vmatprep.subr.mxu0 0.0
    %6310 = vmatpush1.msra.mxu0 0.0
    %6311 = vmatprep.subr.mxu0 0.0
    %6312 = vmatpush1.msra.mxu0 0.0
    %6313 = vmatprep.subr.mxu0 0.0
    %6314 = vmatpush1.msra.mxu0 0.0
    %6315 = vmatprep.subr.mxu0 0.0
    %6316 = vmatpush1.msra.mxu0 0.0
    %6317 = vmatprep.subr.mxu0 0.0
    %6318 = vmatpush1.msra.mxu0 0.0
    %6319 = vmatprep.subr.mxu0 0.0
    %6320 = vmatpush1.msra.mxu0 0.0
    %6321 = vmatprep.subr.mxu0 0.0
    %6322 = vmatpush1.msra.mxu0 0.0
    %6323 = vmatprep.subr.mxu0 0.0
    %6324 = vmatpush1.msra.mxu0 0.0
    %6325 = vmatprep.subr.mxu0 0.0
    %6326 = vmatpush1.msra.mxu0 0.0
    %6327 = vmatprep.subr.mxu0 0.0
    %v6328 = vand.u32 %v1034, 4294901760
    %v6329 = vsub.f32 %v1034, %v6328
    %v6330 = vand.u32 %v6329, 4294901760
    %v6331 = vsub.f32 %v6329, %v6330
    %v6332 = vand.u32 %v6331, 4294901760
    %6333 = vmatpush1.msra.mxu0 %v6332
    %6334 = vmatprep.subr.mxu0 0.0
    %v6335 = vand.u32 %v1033, 4294901760
    %v6336 = vsub.f32 %v1033, %v6335
    %v6337 = vand.u32 %v6336, 4294901760
    %v6338 = vsub.f32 %v6336, %v6337
    %v6339 = vand.u32 %v6338, 4294901760
    %6340 = vmatpush1.msra.mxu0 %v6339
    %6341 = vmatprep.subr.mxu0 0.0
    %v6342 = vand.u32 %v1032, 4294901760
    %v6343 = vsub.f32 %v1032, %v6342
    %v6344 = vand.u32 %v6343, 4294901760
    %v6345 = vsub.f32 %v6343, %v6344
    %v6346 = vand.u32 %v6345, 4294901760
    %6347 = vmatpush1.msra.mxu0 %v6346
    %6348 = vmatprep.subr.mxu0 0.0
    %v6349 = vand.u32 %v1031, 4294901760
    %v6350 = vsub.f32 %v1031, %v6349
    %v6351 = vand.u32 %v6350, 4294901760
    %v6352 = vsub.f32 %v6350, %v6351
    %v6353 = vand.u32 %v6352, 4294901760
    %6354 = vmatpush1.msra.mxu0 %v6353
    %6355 = vmatprep.subr.mxu0 0.0
    %6356 = vmatpush2.msra.mxu0 0.0
    %6357 = vmatprep.subr.mxu0 0.0
    %6358 = vmatpush2.msra.mxu0 0.0
    %6359 = vmatprep.subr.mxu0 0.0
    %6360 = vmatpush2.msra.mxu0 0.0
    %6361 = vmatprep.subr.mxu0 0.0
    %6362 = vmatpush2.msra.mxu0 0.0
    %6363 = vmatprep.subr.mxu0 0.0
    %6364 = vmatpush2.msra.mxu0 0.0
    %6365 = vmatprep.subr.mxu0 0.0
    %6366 = vmatpush2.msra.mxu0 0.0
    %6367 = vmatprep.subr.mxu0 0.0
    %6368 = vmatpush2.msra.mxu0 0.0
    %6369 = vmatprep.subr.mxu0 0.0
    %6370 = vmatpush2.msra.mxu0 0.0
    %6371 = vmatprep.subr.mxu0 0.0
    %6372 = vmatpush2.msra.mxu0 0.0
    %6373 = vmatprep.subr.mxu0 0.0
    %6374 = vmatpush2.msra.mxu0 0.0
    %6375 = vmatprep.subr.mxu0 0.0
    %6376 = vmatpush2.msra.mxu0 0.0
    %6377 = vmatprep.subr.mxu0 0.0
    %6378 = vmatpush2.msra.mxu0 0.0
    %6379 = vmatprep.subr.mxu0 0.0
    %6380 = vmatpush2.msra.mxu0 0.0
    %6381 = vmatprep.subr.mxu0 0.0
    %6382 = vmatpush2.msra.mxu0 0.0
    %6383 = vmatprep.subr.mxu0 0.0
    %6384 = vmatpush2.msra.mxu0 0.0
    %6385 = vmatprep.subr.mxu0 0.0
    %6386 = vmatpush2.msra.mxu0 0.0
    %6387 = vmatprep.mubr.f32.mxu0 0.0
    %v6388 = vand.u32 %v6222, 4294901760
    %6389 = vmatmul.mubr.f32.gmra.mxu0 %v6388
    %v6390 = vpop.f32.mrf.mxu0
    %v6391 = vadd.f32 %v6300, %v6390
    %v6392 = vpop.f32.mrf.mxu0
    %6393 = vdwg.mxu0
    %6394 = vmatprep.subr.mxu0 0.0
    %6395 = vmatpush1.msra.mxu0 0.0
    %6396 = vmatprep.subr.mxu0 0.0
    %6397 = vmatpush1.msra.mxu0 0.0
    %6398 = vmatprep.subr.mxu0 0.0
    %6399 = vmatpush1.msra.mxu0 0.0
    %6400 = vmatprep.subr.mxu0 0.0
    %6401 = vmatpush1.msra.mxu0 0.0
    %6402 = vmatprep.subr.mxu0 0.0
    %6403 = vmatpush1.msra.mxu0 0.0
    %6404 = vmatprep.subr.mxu0 0.0
    %6405 = vmatpush1.msra.mxu0 0.0
    %6406 = vmatprep.subr.mxu0 0.0
    %6407 = vmatpush1.msra.mxu0 0.0
    %6408 = vmatprep.subr.mxu0 0.0
    %6409 = vmatpush1.msra.mxu0 0.0
    %6410 = vmatprep.subr.mxu0 0.0
    %6411 = vmatpush1.msra.mxu0 0.0
    %6412 = vmatprep.subr.mxu0 0.0
    %6413 = vmatpush1.msra.mxu0 0.0
    %6414 = vmatprep.subr.mxu0 0.0
    %6415 = vmatpush1.msra.mxu0 0.0
    %6416 = vmatprep.subr.mxu0 0.0
    %6417 = vmatpush1.msra.mxu0 0.0
    %6418 = vmatprep.subr.mxu0 0.0
    %v6419 = vand.u32 %v1034, 4294901760
    %v6420 = vsub.f32 %v1034, %v6419
    %6421 = vmatpush1.msra.mxu0 %v6420
    %6422 = vmatprep.subr.mxu0 0.0
    %v6423 = vand.u32 %v1033, 4294901760
    %v6424 = vsub.f32 %v1033, %v6423
    %6425 = vmatpush1.msra.mxu0 %v6424
    %6426 = vmatprep.subr.mxu0 0.0
    %v6427 = vand.u32 %v1032, 4294901760
    %v6428 = vsub.f32 %v1032, %v6427
    %6429 = vmatpush1.msra.mxu0 %v6428
    %6430 = vmatprep.subr.mxu0 0.0
    %v6431 = vand.u32 %v1031, 4294901760
    %v6432 = vsub.f32 %v1031, %v6431
    %6433 = vmatpush1.msra.mxu0 %v6432
    %6434 = vmatprep.subr.mxu0 0.0
    %6435 = vmatpush2.msra.mxu0 0.0
    %6436 = vmatprep.subr.mxu0 0.0
    %6437 = vmatpush2.msra.mxu0 0.0
    %6438 = vmatprep.subr.mxu0 0.0
    %6439 = vmatpush2.msra.mxu0 0.0
    %6440 = vmatprep.subr.mxu0 0.0
    %6441 = vmatpush2.msra.mxu0 0.0
    %6442 = vmatprep.subr.mxu0 0.0
    %6443 = vmatpush2.msra.mxu0 0.0
    %6444 = vmatprep.subr.mxu0 0.0
    %6445 = vmatpush2.msra.mxu0 0.0
    %6446 = vmatprep.subr.mxu0 0.0
    %6447 = vmatpush2.msra.mxu0 0.0
    %6448 = vmatprep.subr.mxu0 0.0
    %6449 = vmatpush2.msra.mxu0 0.0
    %6450 = vmatprep.subr.mxu0 0.0
    %6451 = vmatpush2.msra.mxu0 0.0
    %6452 = vmatprep.subr.mxu0 0.0
    %6453 = vmatpush2.msra.mxu0 0.0
    %6454 = vmatprep.subr.mxu0 0.0
    %6455 = vmatpush2.msra.mxu0 0.0
    %6456 = vmatprep.subr.mxu0 0.0
    %6457 = vmatpush2.msra.mxu0 0.0
    %6458 = vmatprep.subr.mxu0 0.0
    %6459 = vmatpush2.msra.mxu0 0.0
    %6460 = vmatprep.subr.mxu0 0.0
    %6461 = vmatpush2.msra.mxu0 0.0
    %6462 = vmatprep.subr.mxu0 0.0
    %6463 = vmatpush2.msra.mxu0 0.0
    %6464 = vmatprep.subr.mxu0 0.0
    %6465 = vmatpush2.msra.mxu0 0.0
    %6466 = vmatprep.mubr.f32.mxu0 0.0
    %v6467 = vand.u32 %v6222, 4294901760
    %v6468 = vsub.f32 %v6222, %v6467
    %6469 = vmatmul.mubr.f32.gmra.mxu0 %v6468
    %v6470 = vpop.f32.mrf.mxu0
    %v6471 = vadd.f32 %v6391, %v6470
    %v6472 = vpop.f32.mrf.mxu0
    %6473 = vdwg.mxu0
    %6474 = vmatprep.subr.mxu0 0.0
    %6475 = vmatpush1.msra.mxu0 0.0
    %6476 = vmatprep.subr.mxu0 0.0
    %6477 = vmatpush1.msra.mxu0 0.0
    %6478 = vmatprep.subr.mxu0 0.0
    %6479 = vmatpush1.msra.mxu0 0.0
    %6480 = vmatprep.subr.mxu0 0.0
    %6481 = vmatpush1.msra.mxu0 0.0
    %6482 = vmatprep.subr.mxu0 0.0
    %6483 = vmatpush1.msra.mxu0 0.0
    %6484 = vmatprep.subr.mxu0 0.0
    %6485 = vmatpush1.msra.mxu0 0.0
    %6486 = vmatprep.subr.mxu0 0.0
    %6487 = vmatpush1.msra.mxu0 0.0
    %6488 = vmatprep.subr.mxu0 0.0
    %6489 = vmatpush1.msra.mxu0 0.0
    %6490 = vmatprep.subr.mxu0 0.0
    %6491 = vmatpush1.msra.mxu0 0.0
    %6492 = vmatprep.subr.mxu0 0.0
    %6493 = vmatpush1.msra.mxu0 0.0
    %6494 = vmatprep.subr.mxu0 0.0
    %6495 = vmatpush1.msra.mxu0 0.0
    %6496 = vmatprep.subr.mxu0 0.0
    %6497 = vmatpush1.msra.mxu0 0.0
    %6498 = vmatprep.subr.mxu0 0.0
    %v6499 = vand.u32 %v1034, 4294901760
    %6500 = vmatpush1.msra.mxu0 %v6499
    %6501 = vmatprep.subr.mxu0 0.0
    %v6502 = vand.u32 %v1033, 4294901760
    %6503 = vmatpush1.msra.mxu0 %v6502
    %6504 = vmatprep.subr.mxu0 0.0
    %v6505 = vand.u32 %v1032, 4294901760
    %6506 = vmatpush1.msra.mxu0 %v6505
    %6507 = vmatprep.subr.mxu0 0.0
    %v6508 = vand.u32 %v1031, 4294901760
    %6509 = vmatpush1.msra.mxu0 %v6508
    %6510 = vmatprep.subr.mxu0 0.0
    %6511 = vmatpush2.msra.mxu0 0.0
    %6512 = vmatprep.subr.mxu0 0.0
    %6513 = vmatpush2.msra.mxu0 0.0
    %6514 = vmatprep.subr.mxu0 0.0
    %6515 = vmatpush2.msra.mxu0 0.0
    %6516 = vmatprep.subr.mxu0 0.0
    %6517 = vmatpush2.msra.mxu0 0.0
    %6518 = vmatprep.subr.mxu0 0.0
    %6519 = vmatpush2.msra.mxu0 0.0
    %6520 = vmatprep.subr.mxu0 0.0
    %6521 = vmatpush2.msra.mxu0 0.0
    %6522 = vmatprep.subr.mxu0 0.0
    %6523 = vmatpush2.msra.mxu0 0.0
    %6524 = vmatprep.subr.mxu0 0.0
    %6525 = vmatpush2.msra.mxu0 0.0
    %6526 = vmatprep.subr.mxu0 0.0
    %6527 = vmatpush2.msra.mxu0 0.0
    %6528 = vmatprep.subr.mxu0 0.0
    %6529 = vmatpush2.msra.mxu0 0.0
    %6530 = vmatprep.subr.mxu0 0.0
    %6531 = vmatpush2.msra.mxu0 0.0
    %6532 = vmatprep.subr.mxu0 0.0
    %6533 = vmatpush2.msra.mxu0 0.0
    %6534 = vmatprep.subr.mxu0 0.0
    %6535 = vmatpush2.msra.mxu0 0.0
    %6536 = vmatprep.subr.mxu0 0.0
    %6537 = vmatpush2.msra.mxu0 0.0
    %6538 = vmatprep.subr.mxu0 0.0
    %6539 = vmatpush2.msra.mxu0 0.0
    %6540 = vmatprep.subr.mxu0 0.0
    %6541 = vmatpush2.msra.mxu0 0.0
    %6542 = vmatprep.mubr.f32.mxu0 0.0
    %v6543 = vand.u32 %v6222, 4294901760
    %v6544 = vsub.f32 %v6222, %v6543
    %v6545 = vand.u32 %v6544, 4294901760
    %6546 = vmatmul.mubr.f32.gmra.mxu0 %v6545
    %v6547 = vpop.f32.mrf.mxu0
    %v6548 = vadd.f32 %v6471, %v6547
    %v6549 = vpop.f32.mrf.mxu0
    %6550 = vdwg.mxu0
    %6551 = vmatprep.subr.mxu0 0.0
    %6552 = vmatpush1.msra.mxu0 0.0
    %6553 = vmatprep.subr.mxu0 0.0
    %6554 = vmatpush1.msra.mxu0 0.0
    %6555 = vmatprep.subr.mxu0 0.0
    %6556 = vmatpush1.msra.mxu0 0.0
    %6557 = vmatprep.subr.mxu0 0.0
    %6558 = vmatpush1.msra.mxu0 0.0
    %6559 = vmatprep.subr.mxu0 0.0
    %6560 = vmatpush1.msra.mxu0 0.0
    %6561 = vmatprep.subr.mxu0 0.0
    %6562 = vmatpush1.msra.mxu0 0.0
    %6563 = vmatprep.subr.mxu0 0.0
    %6564 = vmatpush1.msra.mxu0 0.0
    %6565 = vmatprep.subr.mxu0 0.0
    %6566 = vmatpush1.msra.mxu0 0.0
    %6567 = vmatprep.subr.mxu0 0.0
    %6568 = vmatpush1.msra.mxu0 0.0
    %6569 = vmatprep.subr.mxu0 0.0
    %6570 = vmatpush1.msra.mxu0 0.0
    %6571 = vmatprep.subr.mxu0 0.0
    %6572 = vmatpush1.msra.mxu0 0.0
    %6573 = vmatprep.subr.mxu0 0.0
    %6574 = vmatpush1.msra.mxu0 0.0
    %6575 = vmatprep.subr.mxu0 0.0
    %v6576 = vand.u32 %v1034, 4294901760
    %v6577 = vsub.f32 %v1034, %v6576
    %v6578 = vand.u32 %v6577, 4294901760
    %6579 = vmatpush1.msra.mxu0 %v6578
    %6580 = vmatprep.subr.mxu0 0.0
    %v6581 = vand.u32 %v1033, 4294901760
    %v6582 = vsub.f32 %v1033, %v6581
    %v6583 = vand.u32 %v6582, 4294901760
    %6584 = vmatpush1.msra.mxu0 %v6583
    %6585 = vmatprep.subr.mxu0 0.0
    %v6586 = vand.u32 %v1032, 4294901760
    %v6587 = vsub.f32 %v1032, %v6586
    %v6588 = vand.u32 %v6587, 4294901760
    %6589 = vmatpush1.msra.mxu0 %v6588
    %6590 = vmatprep.subr.mxu0 0.0
    %v6591 = vand.u32 %v1031, 4294901760
    %v6592 = vsub.f32 %v1031, %v6591
    %v6593 = vand.u32 %v6592, 4294901760
    %6594 = vmatpush1.msra.mxu0 %v6593
    %6595 = vmatprep.subr.mxu0 0.0
    %6596 = vmatpush2.msra.mxu0 0.0
    %6597 = vmatprep.subr.mxu0 0.0
    %6598 = vmatpush2.msra.mxu0 0.0
    %6599 = vmatprep.subr.mxu0 0.0
    %6600 = vmatpush2.msra.mxu0 0.0
    %6601 = vmatprep.subr.mxu0 0.0
    %6602 = vmatpush2.msra.mxu0 0.0
    %6603 = vmatprep.subr.mxu0 0.0
    %6604 = vmatpush2.msra.mxu0 0.0
    %6605 = vmatprep.subr.mxu0 0.0
    %6606 = vmatpush2.msra.mxu0 0.0
    %6607 = vmatprep.subr.mxu0 0.0
    %6608 = vmatpush2.msra.mxu0 0.0
    %6609 = vmatprep.subr.mxu0 0.0
    %6610 = vmatpush2.msra.mxu0 0.0
    %6611 = vmatprep.subr.mxu0 0.0
    %6612 = vmatpush2.msra.mxu0 0.0
    %6613 = vmatprep.subr.mxu0 0.0
    %6614 = vmatpush2.msra.mxu0 0.0
    %6615 = vmatprep.subr.mxu0 0.0
    %6616 = vmatpush2.msra.mxu0 0.0
    %6617 = vmatprep.subr.mxu0 0.0
    %6618 = vmatpush2.msra.mxu0 0.0
    %6619 = vmatprep.subr.mxu0 0.0
    %6620 = vmatpush2.msra.mxu0 0.0
    %6621 = vmatprep.subr.mxu0 0.0
    %6622 = vmatpush2.msra.mxu0 0.0
    %6623 = vmatprep.subr.mxu0 0.0
    %6624 = vmatpush2.msra.mxu0 0.0
    %6625 = vmatprep.subr.mxu0 0.0
    %6626 = vmatpush2.msra.mxu0 0.0
    %6627 = vmatprep.mubr.f32.mxu0 0.0
    %v6628 = vand.u32 %v6222, 4294901760
    %6629 = vmatmul.mubr.f32.gmra.mxu0 %v6628
    %v6630 = vpop.f32.mrf.mxu0
    %v6631 = vadd.f32 %v6548, %v6630
    %v6632 = vpop.f32.mrf.mxu0
    %6633 = vdwg.mxu0
    %6634 = vmatprep.subr.mxu0 0.0
    %6635 = vmatpush1.msra.mxu0 0.0
    %6636 = vmatprep.subr.mxu0 0.0
    %6637 = vmatpush1.msra.mxu0 0.0
    %6638 = vmatprep.subr.mxu0 0.0
    %6639 = vmatpush1.msra.mxu0 0.0
    %6640 = vmatprep.subr.mxu0 0.0
    %6641 = vmatpush1.msra.mxu0 0.0
    %6642 = vmatprep.subr.mxu0 0.0
    %6643 = vmatpush1.msra.mxu0 0.0
    %6644 = vmatprep.subr.mxu0 0.0
    %6645 = vmatpush1.msra.mxu0 0.0
    %6646 = vmatprep.subr.mxu0 0.0
    %6647 = vmatpush1.msra.mxu0 0.0
    %6648 = vmatprep.subr.mxu0 0.0
    %6649 = vmatpush1.msra.mxu0 0.0
    %6650 = vmatprep.subr.mxu0 0.0
    %6651 = vmatpush1.msra.mxu0 0.0
    %6652 = vmatprep.subr.mxu0 0.0
    %6653 = vmatpush1.msra.mxu0 0.0
    %6654 = vmatprep.subr.mxu0 0.0
    %6655 = vmatpush1.msra.mxu0 0.0
    %6656 = vmatprep.subr.mxu0 0.0
    %6657 = vmatpush1.msra.mxu0 0.0
    %6658 = vmatprep.subr.mxu0 0.0
    %v6659 = vand.u32 %v1034, 4294901760
    %6660 = vmatpush1.msra.mxu0 %v6659
    %6661 = vmatprep.subr.mxu0 0.0
    %v6662 = vand.u32 %v1033, 4294901760
    %6663 = vmatpush1.msra.mxu0 %v6662
    %6664 = vmatprep.subr.mxu0 0.0
    %v6665 = vand.u32 %v1032, 4294901760
    %6666 = vmatpush1.msra.mxu0 %v6665
    %6667 = vmatprep.subr.mxu0 0.0
    %v6668 = vand.u32 %v1031, 4294901760
    %6669 = vmatpush1.msra.mxu0 %v6668
    %6670 = vmatprep.subr.mxu0 0.0
    %6671 = vmatpush2.msra.mxu0 0.0
    %6672 = vmatprep.subr.mxu0 0.0
    %6673 = vmatpush2.msra.mxu0 0.0
    %6674 = vmatprep.subr.mxu0 0.0
    %6675 = vmatpush2.msra.mxu0 0.0
    %6676 = vmatprep.subr.mxu0 0.0
    %6677 = vmatpush2.msra.mxu0 0.0
    %6678 = vmatprep.subr.mxu0 0.0
    %6679 = vmatpush2.msra.mxu0 0.0
    %6680 = vmatprep.subr.mxu0 0.0
    %6681 = vmatpush2.msra.mxu0 0.0
    %6682 = vmatprep.subr.mxu0 0.0
    %6683 = vmatpush2.msra.mxu0 0.0
    %6684 = vmatprep.subr.mxu0 0.0
    %6685 = vmatpush2.msra.mxu0 0.0
    %6686 = vmatprep.subr.mxu0 0.0
    %6687 = vmatpush2.msra.mxu0 0.0
    %6688 = vmatprep.subr.mxu0 0.0
    %6689 = vmatpush2.msra.mxu0 0.0
    %6690 = vmatprep.subr.mxu0 0.0
    %6691 = vmatpush2.msra.mxu0 0.0
    %6692 = vmatprep.subr.mxu0 0.0
    %6693 = vmatpush2.msra.mxu0 0.0
    %6694 = vmatprep.subr.mxu0 0.0
    %6695 = vmatpush2.msra.mxu0 0.0
    %6696 = vmatprep.subr.mxu0 0.0
    %6697 = vmatpush2.msra.mxu0 0.0
    %6698 = vmatprep.subr.mxu0 0.0
    %6699 = vmatpush2.msra.mxu0 0.0
    %6700 = vmatprep.subr.mxu0 0.0
    %6701 = vmatpush2.msra.mxu0 0.0
    %6702 = vmatprep.mubr.f32.mxu0 0.0
    %v6703 = vand.u32 %v6222, 4294901760
    %6704 = vmatmul.mubr.f32.gmra.mxu0 %v6703
    %v6705 = vpop.f32.mrf.mxu0
    %v6706 = vadd.f32 %v6631, %v6705
    %v6707 = vpop.f32.mrf.mxu0
    %6708 = vdwg.mxu0
    %v6709 = vadd.f32 %v6221, %v6706
    %s6710 = scalar_lea.vmem [#allocation3], 16
    %v6711 = vld [vmem:[%s6710] sm:$0xff]
    %6712 = vrot.lane.b32.xlu0 %v6209, 32
    %v6713 = vpop.permute.xlu0 %6712
    %v6714 = vsel %vm104, %v6713, 0
    %6716 = vmatprep.subr.mxu0 0.0
    %6717 = vmatpush1.msra.mxu0 0.0
    %6718 = vmatprep.subr.mxu0 0.0
    %6719 = vmatpush1.msra.mxu0 0.0
    %6720 = vmatprep.subr.mxu0 0.0
    %6721 = vmatpush1.msra.mxu0 0.0
    %6722 = vmatprep.subr.mxu0 0.0
    %6723 = vmatpush1.msra.mxu0 0.0
    %6724 = vmatprep.subr.mxu0 0.0
    %6725 = vmatpush1.msra.mxu0 0.0
    %6726 = vmatprep.subr.mxu0 0.0
    %6727 = vmatpush1.msra.mxu0 0.0
    %6728 = vmatprep.subr.mxu0 0.0
    %6729 = vmatpush1.msra.mxu0 0.0
    %6730 = vmatprep.subr.mxu0 0.0
    %6731 = vmatpush1.msra.mxu0 0.0
    %6732 = vmatprep.subr.mxu0 0.0
    %6733 = vmatpush1.msra.mxu0 0.0
    %6734 = vmatprep.subr.mxu0 0.0
    %6735 = vmatpush1.msra.mxu0 0.0
    %6736 = vmatprep.subr.mxu0 0.0
    %6737 = vmatpush1.msra.mxu0 0.0
    %6738 = vmatprep.subr.mxu0 0.0
    %6739 = vmatpush1.msra.mxu0 0.0
    %6740 = vmatprep.subr.mxu0 0.0
    %v6741 = vand.u32 %v1038, 4294901760
    %6742 = vmatpush1.msra.mxu0 %v6741
    %6743 = vmatprep.subr.mxu0 0.0
    %v6744 = vand.u32 %v1037, 4294901760
    %6745 = vmatpush1.msra.mxu0 %v6744
    %6746 = vmatprep.subr.mxu0 0.0
    %v6747 = vand.u32 %v1036, 4294901760
    %6748 = vmatpush1.msra.mxu0 %v6747
    %6749 = vmatprep.subr.mxu0 0.0
    %v6750 = vand.u32 %v1035, 4294901760
    %6751 = vmatpush1.msra.mxu0 %v6750
    %6752 = vmatprep.subr.mxu0 0.0
    %6753 = vmatpush2.msra.mxu0 0.0
    %6754 = vmatprep.subr.mxu0 0.0
    %6755 = vmatpush2.msra.mxu0 0.0
    %6756 = vmatprep.subr.mxu0 0.0
    %6757 = vmatpush2.msra.mxu0 0.0
    %6758 = vmatprep.subr.mxu0 0.0
    %6759 = vmatpush2.msra.mxu0 0.0
    %6760 = vmatprep.subr.mxu0 0.0
    %6761 = vmatpush2.msra.mxu0 0.0
    %6762 = vmatprep.subr.mxu0 0.0
    %6763 = vmatpush2.msra.mxu0 0.0
    %6764 = vmatprep.subr.mxu0 0.0
    %6765 = vmatpush2.msra.mxu0 0.0
    %6766 = vmatprep.subr.mxu0 0.0
    %6767 = vmatpush2.msra.mxu0 0.0
    %6768 = vmatprep.subr.mxu0 0.0
    %6769 = vmatpush2.msra.mxu0 0.0
    %6770 = vmatprep.subr.mxu0 0.0
    %6771 = vmatpush2.msra.mxu0 0.0
    %6772 = vmatprep.subr.mxu0 0.0
    %6773 = vmatpush2.msra.mxu0 0.0
    %6774 = vmatprep.subr.mxu0 0.0
    %6775 = vmatpush2.msra.mxu0 0.0
    %6776 = vmatprep.subr.mxu0 0.0
    %6777 = vmatpush2.msra.mxu0 0.0
    %6778 = vmatprep.subr.mxu0 0.0
    %6779 = vmatpush2.msra.mxu0 0.0
    %6780 = vmatprep.subr.mxu0 0.0
    %6781 = vmatpush2.msra.mxu0 0.0
    %6782 = vmatprep.subr.mxu0 0.0
    %6783 = vmatpush2.msra.mxu0 0.0
    %6784 = vmatprep.mubr.f32.mxu0 0.0
    %v6785 = vand.u32 %v6714, 4294901760
    %v6786 = vsub.f32 %v6714, %v6785
    %v6787 = vand.u32 %v6786, 4294901760
    %v6788 = vsub.f32 %v6786, %v6787
    %v6789 = vand.u32 %v6788, 4294901760
    %6790 = vmatmul.mubr.f32.gmra.mxu0 %v6789
    %v6791 = vpop.f32.mrf.mxu0
    %v6792 = vadd.f32 0.0, %v6791
    %v6793 = vpop.f32.mrf.mxu0
    %6794 = vdwg.mxu0
    %6795 = vmatprep.subr.mxu0 0.0
    %6796 = vmatpush1.msra.mxu0 0.0
    %6797 = vmatprep.subr.mxu0 0.0
    %6798 = vmatpush1.msra.mxu0 0.0
    %6799 = vmatprep.subr.mxu0 0.0
    %6800 = vmatpush1.msra.mxu0 0.0
    %6801 = vmatprep.subr.mxu0 0.0
    %6802 = vmatpush1.msra.mxu0 0.0
    %6803 = vmatprep.subr.mxu0 0.0
    %6804 = vmatpush1.msra.mxu0 0.0
    %6805 = vmatprep.subr.mxu0 0.0
    %6806 = vmatpush1.msra.mxu0 0.0
    %6807 = vmatprep.subr.mxu0 0.0
    %6808 = vmatpush1.msra.mxu0 0.0
    %6809 = vmatprep.subr.mxu0 0.0
    %6810 = vmatpush1.msra.mxu0 0.0
    %6811 = vmatprep.subr.mxu0 0.0
    %6812 = vmatpush1.msra.mxu0 0.0
    %6813 = vmatprep.subr.mxu0 0.0
    %6814 = vmatpush1.msra.mxu0 0.0
    %6815 = vmatprep.subr.mxu0 0.0
    %6816 = vmatpush1.msra.mxu0 0.0
    %6817 = vmatprep.subr.mxu0 0.0
    %6818 = vmatpush1.msra.mxu0 0.0
    %6819 = vmatprep.subr.mxu0 0.0
    %v6820 = vand.u32 %v1038, 4294901760
    %v6821 = vsub.f32 %v1038, %v6820
    %v6822 = vand.u32 %v6821, 4294901760
    %v6823 = vsub.f32 %v6821, %v6822
    %v6824 = vand.u32 %v6823, 4294901760
    %6825 = vmatpush1.msra.mxu0 %v6824
    %6826 = vmatprep.subr.mxu0 0.0
    %v6827 = vand.u32 %v1037, 4294901760
    %v6828 = vsub.f32 %v1037, %v6827
    %v6829 = vand.u32 %v6828, 4294901760
    %v6830 = vsub.f32 %v6828, %v6829
    %v6831 = vand.u32 %v6830, 4294901760
    %6832 = vmatpush1.msra.mxu0 %v6831
    %6833 = vmatprep.subr.mxu0 0.0
    %v6834 = vand.u32 %v1036, 4294901760
    %v6835 = vsub.f32 %v1036, %v6834
    %v6836 = vand.u32 %v6835, 4294901760
    %v6837 = vsub.f32 %v6835, %v6836
    %v6838 = vand.u32 %v6837, 4294901760
    %6839 = vmatpush1.msra.mxu0 %v6838
    %6840 = vmatprep.subr.mxu0 0.0
    %v6841 = vand.u32 %v1035, 4294901760
    %v6842 = vsub.f32 %v1035, %v6841
    %v6843 = vand.u32 %v6842, 4294901760
    %v6844 = vsub.f32 %v6842, %v6843
    %v6845 = vand.u32 %v6844, 4294901760
    %6846 = vmatpush1.msra.mxu0 %v6845
    %6847 = vmatprep.subr.mxu0 0.0
    %6848 = vmatpush2.msra.mxu0 0.0
    %6849 = vmatprep.subr.mxu0 0.0
    %6850 = vmatpush2.msra.mxu0 0.0
    %6851 = vmatprep.subr.mxu0 0.0
    %6852 = vmatpush2.msra.mxu0 0.0
    %6853 = vmatprep.subr.mxu0 0.0
    %6854 = vmatpush2.msra.mxu0 0.0
    %6855 = vmatprep.subr.mxu0 0.0
    %6856 = vmatpush2.msra.mxu0 0.0
    %6857 = vmatprep.subr.mxu0 0.0
    %6858 = vmatpush2.msra.mxu0 0.0
    %6859 = vmatprep.subr.mxu0 0.0
    %6860 = vmatpush2.msra.mxu0 0.0
    %6861 = vmatprep.subr.mxu0 0.0
    %6862 = vmatpush2.msra.mxu0 0.0
    %6863 = vmatprep.subr.mxu0 0.0
    %6864 = vmatpush2.msra.mxu0 0.0
    %6865 = vmatprep.subr.mxu0 0.0
    %6866 = vmatpush2.msra.mxu0 0.0
    %6867 = vmatprep.subr.mxu0 0.0
    %6868 = vmatpush2.msra.mxu0 0.0
    %6869 = vmatprep.subr.mxu0 0.0
    %6870 = vmatpush2.msra.mxu0 0.0
    %6871 = vmatprep.subr.mxu0 0.0
    %6872 = vmatpush2.msra.mxu0 0.0
    %6873 = vmatprep.subr.mxu0 0.0
    %6874 = vmatpush2.msra.mxu0 0.0
    %6875 = vmatprep.subr.mxu0 0.0
    %6876 = vmatpush2.msra.mxu0 0.0
    %6877 = vmatprep.subr.mxu0 0.0
    %6878 = vmatpush2.msra.mxu0 0.0
    %6879 = vmatprep.mubr.f32.mxu0 0.0
    %v6880 = vand.u32 %v6714, 4294901760
    %6881 = vmatmul.mubr.f32.gmra.mxu0 %v6880
    %v6882 = vpop.f32.mrf.mxu0
    %v6883 = vadd.f32 %v6792, %v6882
    %v6884 = vpop.f32.mrf.mxu0
    %6885 = vdwg.mxu0
    %6886 = vmatprep.subr.mxu0 0.0
    %6887 = vmatpush1.msra.mxu0 0.0
    %6888 = vmatprep.subr.mxu0 0.0
    %6889 = vmatpush1.msra.mxu0 0.0
    %6890 = vmatprep.subr.mxu0 0.0
    %6891 = vmatpush1.msra.mxu0 0.0
    %6892 = vmatprep.subr.mxu0 0.0
    %6893 = vmatpush1.msra.mxu0 0.0
    %6894 = vmatprep.subr.mxu0 0.0
    %6895 = vmatpush1.msra.mxu0 0.0
    %6896 = vmatprep.subr.mxu0 0.0
    %6897 = vmatpush1.msra.mxu0 0.0
    %6898 = vmatprep.subr.mxu0 0.0
    %6899 = vmatpush1.msra.mxu0 0.0
    %6900 = vmatprep.subr.mxu0 0.0
    %6901 = vmatpush1.msra.mxu0 0.0
    %6902 = vmatprep.subr.mxu0 0.0
    %6903 = vmatpush1.msra.mxu0 0.0
    %6904 = vmatprep.subr.mxu0 0.0
    %6905 = vmatpush1.msra.mxu0 0.0
    %6906 = vmatprep.subr.mxu0 0.0
    %6907 = vmatpush1.msra.mxu0 0.0
    %6908 = vmatprep.subr.mxu0 0.0
    %6909 = vmatpush1.msra.mxu0 0.0
    %6910 = vmatprep.subr.mxu0 0.0
    %v6911 = vand.u32 %v1038, 4294901760
    %v6912 = vsub.f32 %v1038, %v6911
    %6913 = vmatpush1.msra.mxu0 %v6912
    %6914 = vmatprep.subr.mxu0 0.0
    %v6915 = vand.u32 %v1037, 4294901760
    %v6916 = vsub.f32 %v1037, %v6915
    %6917 = vmatpush1.msra.mxu0 %v6916
    %6918 = vmatprep.subr.mxu0 0.0
    %v6919 = vand.u32 %v1036, 4294901760
    %v6920 = vsub.f32 %v1036, %v6919
    %6921 = vmatpush1.msra.mxu0 %v6920
    %6922 = vmatprep.subr.mxu0 0.0
    %v6923 = vand.u32 %v1035, 4294901760
    %v6924 = vsub.f32 %v1035, %v6923
    %6925 = vmatpush1.msra.mxu0 %v6924
    %6926 = vmatprep.subr.mxu0 0.0
    %6927 = vmatpush2.msra.mxu0 0.0
    %6928 = vmatprep.subr.mxu0 0.0
    %6929 = vmatpush2.msra.mxu0 0.0
    %6930 = vmatprep.subr.mxu0 0.0
    %6931 = vmatpush2.msra.mxu0 0.0
    %6932 = vmatprep.subr.mxu0 0.0
    %6933 = vmatpush2.msra.mxu0 0.0
    %6934 = vmatprep.subr.mxu0 0.0
    %6935 = vmatpush2.msra.mxu0 0.0
    %6936 = vmatprep.subr.mxu0 0.0
    %6937 = vmatpush2.msra.mxu0 0.0
    %6938 = vmatprep.subr.mxu0 0.0
    %6939 = vmatpush2.msra.mxu0 0.0
    %6940 = vmatprep.subr.mxu0 0.0
    %6941 = vmatpush2.msra.mxu0 0.0
    %6942 = vmatprep.subr.mxu0 0.0
    %6943 = vmatpush2.msra.mxu0 0.0
    %6944 = vmatprep.subr.mxu0 0.0
    %6945 = vmatpush2.msra.mxu0 0.0
    %6946 = vmatprep.subr.mxu0 0.0
    %6947 = vmatpush2.msra.mxu0 0.0
    %6948 = vmatprep.subr.mxu0 0.0
    %6949 = vmatpush2.msra.mxu0 0.0
    %6950 = vmatprep.subr.mxu0 0.0
    %6951 = vmatpush2.msra.mxu0 0.0
    %6952 = vmatprep.subr.mxu0 0.0
    %6953 = vmatpush2.msra.mxu0 0.0
    %6954 = vmatprep.subr.mxu0 0.0
    %6955 = vmatpush2.msra.mxu0 0.0
    %6956 = vmatprep.subr.mxu0 0.0
    %6957 = vmatpush2.msra.mxu0 0.0
    %6958 = vmatprep.mubr.f32.mxu0 0.0
    %v6959 = vand.u32 %v6714, 4294901760
    %v6960 = vsub.f32 %v6714, %v6959
    %6961 = vmatmul.mubr.f32.gmra.mxu0 %v6960
    %v6962 = vpop.f32.mrf.mxu0
    %v6963 = vadd.f32 %v6883, %v6962
    %v6964 = vpop.f32.mrf.mxu0
    %6965 = vdwg.mxu0
    %6966 = vmatprep.subr.mxu0 0.0
    %6967 = vmatpush1.msra.mxu0 0.0
    %6968 = vmatprep.subr.mxu0 0.0
    %6969 = vmatpush1.msra.mxu0 0.0
    %6970 = vmatprep.subr.mxu0 0.0
    %6971 = vmatpush1.msra.mxu0 0.0
    %6972 = vmatprep.subr.mxu0 0.0
    %6973 = vmatpush1.msra.mxu0 0.0
    %6974 = vmatprep.subr.mxu0 0.0
    %6975 = vmatpush1.msra.mxu0 0.0
    %6976 = vmatprep.subr.mxu0 0.0
    %6977 = vmatpush1.msra.mxu0 0.0
    %6978 = vmatprep.subr.mxu0 0.0
    %6979 = vmatpush1.msra.mxu0 0.0
    %6980 = vmatprep.subr.mxu0 0.0
    %6981 = vmatpush1.msra.mxu0 0.0
    %6982 = vmatprep.subr.mxu0 0.0
    %6983 = vmatpush1.msra.mxu0 0.0
    %6984 = vmatprep.subr.mxu0 0.0
    %6985 = vmatpush1.msra.mxu0 0.0
    %6986 = vmatprep.subr.mxu0 0.0
    %6987 = vmatpush1.msra.mxu0 0.0
    %6988 = vmatprep.subr.mxu0 0.0
    %6989 = vmatpush1.msra.mxu0 0.0
    %6990 = vmatprep.subr.mxu0 0.0
    %v6991 = vand.u32 %v1038, 4294901760
    %6992 = vmatpush1.msra.mxu0 %v6991
    %6993 = vmatprep.subr.mxu0 0.0
    %v6994 = vand.u32 %v1037, 4294901760
    %6995 = vmatpush1.msra.mxu0 %v6994
    %6996 = vmatprep.subr.mxu0 0.0
    %v6997 = vand.u32 %v1036, 4294901760
    %6998 = vmatpush1.msra.mxu0 %v6997
    %6999 = vmatprep.subr.mxu0 0.0
    %v7000 = vand.u32 %v1035, 4294901760
    %7001 = vmatpush1.msra.mxu0 %v7000
    %7002 = vmatprep.subr.mxu0 0.0
    %7003 = vmatpush2.msra.mxu0 0.0
    %7004 = vmatprep.subr.mxu0 0.0
    %7005 = vmatpush2.msra.mxu0 0.0
    %7006 = vmatprep.subr.mxu0 0.0
    %7007 = vmatpush2.msra.mxu0 0.0
    %7008 = vmatprep.subr.mxu0 0.0
    %7009 = vmatpush2.msra.mxu0 0.0
    %7010 = vmatprep.subr.mxu0 0.0
    %7011 = vmatpush2.msra.mxu0 0.0
    %7012 = vmatprep.subr.mxu0 0.0
    %7013 = vmatpush2.msra.mxu0 0.0
    %7014 = vmatprep.subr.mxu0 0.0
    %7015 = vmatpush2.msra.mxu0 0.0
    %7016 = vmatprep.subr.mxu0 0.0
    %7017 = vmatpush2.msra.mxu0 0.0
    %7018 = vmatprep.subr.mxu0 0.0
    %7019 = vmatpush2.msra.mxu0 0.0
    %7020 = vmatprep.subr.mxu0 0.0
    %7021 = vmatpush2.msra.mxu0 0.0
    %7022 = vmatprep.subr.mxu0 0.0
    %7023 = vmatpush2.msra.mxu0 0.0
    %7024 = vmatprep.subr.mxu0 0.0
    %7025 = vmatpush2.msra.mxu0 0.0
    %7026 = vmatprep.subr.mxu0 0.0
    %7027 = vmatpush2.msra.mxu0 0.0
    %7028 = vmatprep.subr.mxu0 0.0
    %7029 = vmatpush2.msra.mxu0 0.0
    %7030 = vmatprep.subr.mxu0 0.0
    %7031 = vmatpush2.msra.mxu0 0.0
    %7032 = vmatprep.subr.mxu0 0.0
    %7033 = vmatpush2.msra.mxu0 0.0
    %7034 = vmatprep.mubr.f32.mxu0 0.0
    %v7035 = vand.u32 %v6714, 4294901760
    %v7036 = vsub.f32 %v6714, %v7035
    %v7037 = vand.u32 %v7036, 4294901760
    %7038 = vmatmul.mubr.f32.gmra.mxu0 %v7037
    %v7039 = vpop.f32.mrf.mxu0
    %v7040 = vadd.f32 %v6963, %v7039
    %v7041 = vpop.f32.mrf.mxu0
    %7042 = vdwg.mxu0
    %7043 = vmatprep.subr.mxu0 0.0
    %7044 = vmatpush1.msra.mxu0 0.0
    %7045 = vmatprep.subr.mxu0 0.0
    %7046 = vmatpush1.msra.mxu0 0.0
    %7047 = vmatprep.subr.mxu0 0.0
    %7048 = vmatpush1.msra.mxu0 0.0
    %7049 = vmatprep.subr.mxu0 0.0
    %7050 = vmatpush1.msra.mxu0 0.0
    %7051 = vmatprep.subr.mxu0 0.0
    %7052 = vmatpush1.msra.mxu0 0.0
    %7053 = vmatprep.subr.mxu0 0.0
    %7054 = vmatpush1.msra.mxu0 0.0
    %7055 = vmatprep.subr.mxu0 0.0
    %7056 = vmatpush1.msra.mxu0 0.0
    %7057 = vmatprep.subr.mxu0 0.0
    %7058 = vmatpush1.msra.mxu0 0.0
    %7059 = vmatprep.subr.mxu0 0.0
    %7060 = vmatpush1.msra.mxu0 0.0
    %7061 = vmatprep.subr.mxu0 0.0
    %7062 = vmatpush1.msra.mxu0 0.0
    %7063 = vmatprep.subr.mxu0 0.0
    %7064 = vmatpush1.msra.mxu0 0.0
    %7065 = vmatprep.subr.mxu0 0.0
    %7066 = vmatpush1.msra.mxu0 0.0
    %7067 = vmatprep.subr.mxu0 0.0
    %v7068 = vand.u32 %v1038, 4294901760
    %v7069 = vsub.f32 %v1038, %v7068
    %v7070 = vand.u32 %v7069, 4294901760
    %7071 = vmatpush1.msra.mxu0 %v7070
    %7072 = vmatprep.subr.mxu0 0.0
    %v7073 = vand.u32 %v1037, 4294901760
    %v7074 = vsub.f32 %v1037, %v7073
    %v7075 = vand.u32 %v7074, 4294901760
    %7076 = vmatpush1.msra.mxu0 %v7075
    %7077 = vmatprep.subr.mxu0 0.0
    %v7078 = vand.u32 %v1036, 4294901760
    %v7079 = vsub.f32 %v1036, %v7078
    %v7080 = vand.u32 %v7079, 4294901760
    %7081 = vmatpush1.msra.mxu0 %v7080
    %7082 = vmatprep.subr.mxu0 0.0
    %v7083 = vand.u32 %v1035, 4294901760
    %v7084 = vsub.f32 %v1035, %v7083
    %v7085 = vand.u32 %v7084, 4294901760
    %7086 = vmatpush1.msra.mxu0 %v7085
    %7087 = vmatprep.subr.mxu0 0.0
    %7088 = vmatpush2.msra.mxu0 0.0
    %7089 = vmatprep.subr.mxu0 0.0
    %7090 = vmatpush2.msra.mxu0 0.0
    %7091 = vmatprep.subr.mxu0 0.0
    %7092 = vmatpush2.msra.mxu0 0.0
    %7093 = vmatprep.subr.mxu0 0.0
    %7094 = vmatpush2.msra.mxu0 0.0
    %7095 = vmatprep.subr.mxu0 0.0
    %7096 = vmatpush2.msra.mxu0 0.0
    %7097 = vmatprep.subr.mxu0 0.0
    %7098 = vmatpush2.msra.mxu0 0.0
    %7099 = vmatprep.subr.mxu0 0.0
    %7100 = vmatpush2.msra.mxu0 0.0
    %7101 = vmatprep.subr.mxu0 0.0
    %7102 = vmatpush2.msra.mxu0 0.0
    %7103 = vmatprep.subr.mxu0 0.0
    %7104 = vmatpush2.msra.mxu0 0.0
    %7105 = vmatprep.subr.mxu0 0.0
    %7106 = vmatpush2.msra.mxu0 0.0
    %7107 = vmatprep.subr.mxu0 0.0
    %7108 = vmatpush2.msra.mxu0 0.0
    %7109 = vmatprep.subr.mxu0 0.0
    %7110 = vmatpush2.msra.mxu0 0.0
    %7111 = vmatprep.subr.mxu0 0.0
    %7112 = vmatpush2.msra.mxu0 0.0
    %7113 = vmatprep.subr.mxu0 0.0
    %7114 = vmatpush2.msra.mxu0 0.0
    %7115 = vmatprep.subr.mxu0 0.0
    %7116 = vmatpush2.msra.mxu0 0.0
    %7117 = vmatprep.subr.mxu0 0.0
    %7118 = vmatpush2.msra.mxu0 0.0
    %7119 = vmatprep.mubr.f32.mxu0 0.0
    %v7120 = vand.u32 %v6714, 4294901760
    %7121 = vmatmul.mubr.f32.gmra.mxu0 %v7120
    %v7122 = vpop.f32.mrf.mxu0
    %v7123 = vadd.f32 %v7040, %v7122
    %v7124 = vpop.f32.mrf.mxu0
    %7125 = vdwg.mxu0
    %7126 = vmatprep.subr.mxu0 0.0
    %7127 = vmatpush1.msra.mxu0 0.0
    %7128 = vmatprep.subr.mxu0 0.0
    %7129 = vmatpush1.msra.mxu0 0.0
    %7130 = vmatprep.subr.mxu0 0.0
    %7131 = vmatpush1.msra.mxu0 0.0
    %7132 = vmatprep.subr.mxu0 0.0
    %7133 = vmatpush1.msra.mxu0 0.0
    %7134 = vmatprep.subr.mxu0 0.0
    %7135 = vmatpush1.msra.mxu0 0.0
    %7136 = vmatprep.subr.mxu0 0.0
    %7137 = vmatpush1.msra.mxu0 0.0
    %7138 = vmatprep.subr.mxu0 0.0
    %7139 = vmatpush1.msra.mxu0 0.0
    %7140 = vmatprep.subr.mxu0 0.0
    %7141 = vmatpush1.msra.mxu0 0.0
    %7142 = vmatprep.subr.mxu0 0.0
    %7143 = vmatpush1.msra.mxu0 0.0
    %7144 = vmatprep.subr.mxu0 0.0
    %7145 = vmatpush1.msra.mxu0 0.0
    %7146 = vmatprep.subr.mxu0 0.0
    %7147 = vmatpush1.msra.mxu0 0.0
    %7148 = vmatprep.subr.mxu0 0.0
    %7149 = vmatpush1.msra.mxu0 0.0
    %7150 = vmatprep.subr.mxu0 0.0
    %v7151 = vand.u32 %v1038, 4294901760
    %7152 = vmatpush1.msra.mxu0 %v7151
    %7153 = vmatprep.subr.mxu0 0.0
    %v7154 = vand.u32 %v1037, 4294901760
    %7155 = vmatpush1.msra.mxu0 %v7154
    %7156 = vmatprep.subr.mxu0 0.0
    %v7157 = vand.u32 %v1036, 4294901760
    %7158 = vmatpush1.msra.mxu0 %v7157
    %7159 = vmatprep.subr.mxu0 0.0
    %v7160 = vand.u32 %v1035, 4294901760
    %7161 = vmatpush1.msra.mxu0 %v7160
    %7162 = vmatprep.subr.mxu0 0.0
    %7163 = vmatpush2.msra.mxu0 0.0
    %7164 = vmatprep.subr.mxu0 0.0
    %7165 = vmatpush2.msra.mxu0 0.0
    %7166 = vmatprep.subr.mxu0 0.0
    %7167 = vmatpush2.msra.mxu0 0.0
    %7168 = vmatprep.subr.mxu0 0.0
    %7169 = vmatpush2.msra.mxu0 0.0
    %7170 = vmatprep.subr.mxu0 0.0
    %7171 = vmatpush2.msra.mxu0 0.0
    %7172 = vmatprep.subr.mxu0 0.0
    %7173 = vmatpush2.msra.mxu0 0.0
    %7174 = vmatprep.subr.mxu0 0.0
    %7175 = vmatpush2.msra.mxu0 0.0
    %7176 = vmatprep.subr.mxu0 0.0
    %7177 = vmatpush2.msra.mxu0 0.0
    %7178 = vmatprep.subr.mxu0 0.0
    %7179 = vmatpush2.msra.mxu0 0.0
    %7180 = vmatprep.subr.mxu0 0.0
    %7181 = vmatpush2.msra.mxu0 0.0
    %7182 = vmatprep.subr.mxu0 0.0
    %7183 = vmatpush2.msra.mxu0 0.0
    %7184 = vmatprep.subr.mxu0 0.0
    %7185 = vmatpush2.msra.mxu0 0.0
    %7186 = vmatprep.subr.mxu0 0.0
    %7187 = vmatpush2.msra.mxu0 0.0
    %7188 = vmatprep.subr.mxu0 0.0
    %7189 = vmatpush2.msra.mxu0 0.0
    %7190 = vmatprep.subr.mxu0 0.0
    %7191 = vmatpush2.msra.mxu0 0.0
    %7192 = vmatprep.subr.mxu0 0.0
    %7193 = vmatpush2.msra.mxu0 0.0
    %7194 = vmatprep.mubr.f32.mxu0 0.0
    %v7195 = vand.u32 %v6714, 4294901760
    %7196 = vmatmul.mubr.f32.gmra.mxu0 %v7195
    %v7197 = vpop.f32.mrf.mxu0
    %v7198 = vadd.f32 %v7123, %v7197
    %v7199 = vpop.f32.mrf.mxu0
    %7200 = vdwg.mxu0
    %v7201 = vadd.f32 %v6711, %v7198
    %v7202 = vmul.f32 %v6709, %v1044
    %v7203 = vtanh.pop %v7202
    %v7204 = vmul.f32 %v7203, %v1044
    %v7205 = vadd.f32 %v7204, %v1045
    %v7206 = vmul.f32 %v7205, %v6182
    %7208 = vrot.lane.b32.xlu0 %v7205, 64
    %v7209 = vpop.permute.xlu0 %7208
    %v7211 = vmul.f32 %v7205, %v7209
    %7213 = vrot.lane.b32.xlu0 %v7211, 32
    %v7214 = vpop.permute.xlu0 %7213
    %v7216 = vadd.f32 %v7206, %v7214
    %v7217 = vtanh.pop %v7216
    %7219 = vrot.lane.b32.xlu0 %v7217, 64
    %v7220 = vpop.permute.xlu0 %7219
    %v7222 = vmul.f32 %v7205, %v7220
    %v7223 = vmul.f32 %v7201, %v1044
    %v7224 = vtanh.pop %v7223
    %v7225 = vmul.f32 %v7224, %v1044
    %v7226 = vadd.f32 %v7225, %v1045
    %v7227 = vmul.f32 %v7226, %v6203
    %7229 = vrot.lane.b32.xlu0 %v7226, 64
    %v7230 = vpop.permute.xlu0 %7229
    %v7232 = vmul.f32 %v7226, %v7230
    %7234 = vrot.lane.b32.xlu0 %v7232, 32
    %v7235 = vpop.permute.xlu0 %7234
    %v7237 = vadd.f32 %v7227, %v7235
    %v7238 = vtanh.pop %v7237
    %7240 = vrot.lane.b32.xlu0 %v7238, 64
    %v7241 = vpop.permute.xlu0 %7240
    %v7243 = vmul.f32 %v7226, %v7241
    %7245 = vrot.lane.b32.xlu0 %v7222, 32
    %v7246 = vpop.permute.xlu0 %7245
    %7248 = vst.msk [vmem:[%s4148] sm:$0xff] %vm104, %v7246
    %7250 = vrot.lane.b32.xlu0 %v7243, 64
    %v7251 = vpop.permute.xlu0 %7250
    %7253 = vst.msk [vmem:[%s4142] sm:$0xff] %vm2076, %v7251
    %s7254 = scalar_lea.vmem [#allocation2], 48
    %v7255 = vld [vmem:[%s7254] sm:$0xff]
    %v7256 = vsel %vm104, %v7246, 0
    %7258 = vmatprep.subr.mxu0 0.0
    %7259 = vmatpush1.msra.mxu0 0.0
    %7260 = vmatprep.subr.mxu0 0.0
    %7261 = vmatpush1.msra.mxu0 0.0
    %7262 = vmatprep.subr.mxu0 0.0
    %7263 = vmatpush1.msra.mxu0 0.0
    %7264 = vmatprep.subr.mxu0 0.0
    %7265 = vmatpush1.msra.mxu0 0.0
    %7266 = vmatprep.subr.mxu0 0.0
    %7267 = vmatpush1.msra.mxu0 0.0
    %7268 = vmatprep.subr.mxu0 0.0
    %7269 = vmatpush1.msra.mxu0 0.0
    %7270 = vmatprep.subr.mxu0 0.0
    %7271 = vmatpush1.msra.mxu0 0.0
    %7272 = vmatprep.subr.mxu0 0.0
    %7273 = vmatpush1.msra.mxu0 0.0
    %7274 = vmatprep.subr.mxu0 0.0
    %7275 = vmatpush1.msra.mxu0 0.0
    %7276 = vmatprep.subr.mxu0 0.0
    %7277 = vmatpush1.msra.mxu0 0.0
    %7278 = vmatprep.subr.mxu0 0.0
    %7279 = vmatpush1.msra.mxu0 0.0
    %7280 = vmatprep.subr.mxu0 0.0
    %7281 = vmatpush1.msra.mxu0 0.0
    %7282 = vmatprep.subr.mxu0 0.0
    %v7283 = vand.u32 %v1034, 4294901760
    %7284 = vmatpush1.msra.mxu0 %v7283
    %7285 = vmatprep.subr.mxu0 0.0
    %v7286 = vand.u32 %v1033, 4294901760
    %7287 = vmatpush1.msra.mxu0 %v7286
    %7288 = vmatprep.subr.mxu0 0.0
    %v7289 = vand.u32 %v1032, 4294901760
    %7290 = vmatpush1.msra.mxu0 %v7289
    %7291 = vmatprep.subr.mxu0 0.0
    %v7292 = vand.u32 %v1031, 4294901760
    %7293 = vmatpush1.msra.mxu0 %v7292
    %7294 = vmatprep.subr.mxu0 0.0
    %7295 = vmatpush2.msra.mxu0 0.0
    %7296 = vmatprep.subr.mxu0 0.0
    %7297 = vmatpush2.msra.mxu0 0.0
    %7298 = vmatprep.subr.mxu0 0.0
    %7299 = vmatpush2.msra.mxu0 0.0
    %7300 = vmatprep.subr.mxu0 0.0
    %7301 = vmatpush2.msra.mxu0 0.0
    %7302 = vmatprep.subr.mxu0 0.0
    %7303 = vmatpush2.msra.mxu0 0.0
    %7304 = vmatprep.subr.mxu0 0.0
    %7305 = vmatpush2.msra.mxu0 0.0
    %7306 = vmatprep.subr.mxu0 0.0
    %7307 = vmatpush2.msra.mxu0 0.0
    %7308 = vmatprep.subr.mxu0 0.0
    %7309 = vmatpush2.msra.mxu0 0.0
    %7310 = vmatprep.subr.mxu0 0.0
    %7311 = vmatpush2.msra.mxu0 0.0
    %7312 = vmatprep.subr.mxu0 0.0
    %7313 = vmatpush2.msra.mxu0 0.0
    %7314 = vmatprep.subr.mxu0 0.0
    %7315 = vmatpush2.msra.mxu0 0.0
    %7316 = vmatprep.subr.mxu0 0.0
    %7317 = vmatpush2.msra.mxu0 0.0
    %7318 = vmatprep.subr.mxu0 0.0
    %7319 = vmatpush2.msra.mxu0 0.0
    %7320 = vmatprep.subr.mxu0 0.0
    %7321 = vmatpush2.msra.mxu0 0.0
    %7322 = vmatprep.subr.mxu0 0.0
    %7323 = vmatpush2.msra.mxu0 0.0
    %7324 = vmatprep.subr.mxu0 0.0
    %7325 = vmatpush2.msra.mxu0 0.0
    %7326 = vmatprep.mubr.f32.mxu0 0.0
    %v7327 = vand.u32 %v7256, 4294901760
    %v7328 = vsub.f32 %v7256, %v7327
    %v7329 = vand.u32 %v7328, 4294901760
    %v7330 = vsub.f32 %v7328, %v7329
    %v7331 = vand.u32 %v7330, 4294901760
    %7332 = vmatmul.mubr.f32.gmra.mxu0 %v7331
    %v7333 = vpop.f32.mrf.mxu0
    %v7334 = vadd.f32 0.0, %v7333
    %v7335 = vpop.f32.mrf.mxu0
    %7336 = vdwg.mxu0
    %7337 = vmatprep.subr.mxu0 0.0
    %7338 = vmatpush1.msra.mxu0 0.0
    %7339 = vmatprep.subr.mxu0 0.0
    %7340 = vmatpush1.msra.mxu0 0.0
    %7341 = vmatprep.subr.mxu0 0.0
    %7342 = vmatpush1.msra.mxu0 0.0
    %7343 = vmatprep.subr.mxu0 0.0
    %7344 = vmatpush1.msra.mxu0 0.0
    %7345 = vmatprep.subr.mxu0 0.0
    %7346 = vmatpush1.msra.mxu0 0.0
    %7347 = vmatprep.subr.mxu0 0.0
    %7348 = vmatpush1.msra.mxu0 0.0
    %7349 = vmatprep.subr.mxu0 0.0
    %7350 = vmatpush1.msra.mxu0 0.0
    %7351 = vmatprep.subr.mxu0 0.0
    %7352 = vmatpush1.msra.mxu0 0.0
    %7353 = vmatprep.subr.mxu0 0.0
    %7354 = vmatpush1.msra.mxu0 0.0
    %7355 = vmatprep.subr.mxu0 0.0
    %7356 = vmatpush1.msra.mxu0 0.0
    %7357 = vmatprep.subr.mxu0 0.0
    %7358 = vmatpush1.msra.mxu0 0.0
    %7359 = vmatprep.subr.mxu0 0.0
    %7360 = vmatpush1.msra.mxu0 0.0
    %7361 = vmatprep.subr.mxu0 0.0
    %v7362 = vand.u32 %v1034, 4294901760
    %v7363 = vsub.f32 %v1034, %v7362
    %v7364 = vand.u32 %v7363, 4294901760
    %v7365 = vsub.f32 %v7363, %v7364
    %v7366 = vand.u32 %v7365, 4294901760
    %7367 = vmatpush1.msra.mxu0 %v7366
    %7368 = vmatprep.subr.mxu0 0.0
    %v7369 = vand.u32 %v1033, 4294901760
    %v7370 = vsub.f32 %v1033, %v7369
    %v7371 = vand.u32 %v7370, 4294901760
    %v7372 = vsub.f32 %v7370, %v7371
    %v7373 = vand.u32 %v7372, 4294901760
    %7374 = vmatpush1.msra.mxu0 %v7373
    %7375 = vmatprep.subr.mxu0 0.0
    %v7376 = vand.u32 %v1032, 4294901760
    %v7377 = vsub.f32 %v1032, %v7376
    %v7378 = vand.u32 %v7377, 4294901760
    %v7379 = vsub.f32 %v7377, %v7378
    %v7380 = vand.u32 %v7379, 4294901760
    %7381 = vmatpush1.msra.mxu0 %v7380
    %7382 = vmatprep.subr.mxu0 0.0
    %v7383 = vand.u32 %v1031, 4294901760
    %v7384 = vsub.f32 %v1031, %v7383
    %v7385 = vand.u32 %v7384, 4294901760
    %v7386 = vsub.f32 %v7384, %v7385
    %v7387 = vand.u32 %v7386, 4294901760
    %7388 = vmatpush1.msra.mxu0 %v7387
    %7389 = vmatprep.subr.mxu0 0.0
    %7390 = vmatpush2.msra.mxu0 0.0
    %7391 = vmatprep.subr.mxu0 0.0
    %7392 = vmatpush2.msra.mxu0 0.0
    %7393 = vmatprep.subr.mxu0 0.0
    %7394 = vmatpush2.msra.mxu0 0.0
    %7395 = vmatprep.subr.mxu0 0.0
    %7396 = vmatpush2.msra.mxu0 0.0
    %7397 = vmatprep.subr.mxu0 0.0
    %7398 = vmatpush2.msra.mxu0 0.0
    %7399 = vmatprep.subr.mxu0 0.0
    %7400 = vmatpush2.msra.mxu0 0.0
    %7401 = vmatprep.subr.mxu0 0.0
    %7402 = vmatpush2.msra.mxu0 0.0
    %7403 = vmatprep.subr.mxu0 0.0
    %7404 = vmatpush2.msra.mxu0 0.0
    %7405 = vmatprep.subr.mxu0 0.0
    %7406 = vmatpush2.msra.mxu0 0.0
    %7407 = vmatprep.subr.mxu0 0.0
    %7408 = vmatpush2.msra.mxu0 0.0
    %7409 = vmatprep.subr.mxu0 0.0
    %7410 = vmatpush2.msra.mxu0 0.0
    %7411 = vmatprep.subr.mxu0 0.0
    %7412 = vmatpush2.msra.mxu0 0.0
    %7413 = vmatprep.subr.mxu0 0.0
    %7414 = vmatpush2.msra.mxu0 0.0
    %7415 = vmatprep.subr.mxu0 0.0
    %7416 = vmatpush2.msra.mxu0 0.0
    %7417 = vmatprep.subr.mxu0 0.0
    %7418 = vmatpush2.msra.mxu0 0.0
    %7419 = vmatprep.subr.mxu0 0.0
    %7420 = vmatpush2.msra.mxu0 0.0
    %7421 = vmatprep.mubr.f32.mxu0 0.0
    %v7422 = vand.u32 %v7256, 4294901760
    %7423 = vmatmul.mubr.f32.gmra.mxu0 %v7422
    %v7424 = vpop.f32.mrf.mxu0
    %v7425 = vadd.f32 %v7334, %v7424
    %v7426 = vpop.f32.mrf.mxu0
    %7427 = vdwg.mxu0
    %7428 = vmatprep.subr.mxu0 0.0
    %7429 = vmatpush1.msra.mxu0 0.0
    %7430 = vmatprep.subr.mxu0 0.0
    %7431 = vmatpush1.msra.mxu0 0.0
    %7432 = vmatprep.subr.mxu0 0.0
    %7433 = vmatpush1.msra.mxu0 0.0
    %7434 = vmatprep.subr.mxu0 0.0
    %7435 = vmatpush1.msra.mxu0 0.0
    %7436 = vmatprep.subr.mxu0 0.0
    %7437 = vmatpush1.msra.mxu0 0.0
    %7438 = vmatprep.subr.mxu0 0.0
    %7439 = vmatpush1.msra.mxu0 0.0
    %7440 = vmatprep.subr.mxu0 0.0
    %7441 = vmatpush1.msra.mxu0 0.0
    %7442 = vmatprep.subr.mxu0 0.0
    %7443 = vmatpush1.msra.mxu0 0.0
    %7444 = vmatprep.subr.mxu0 0.0
    %7445 = vmatpush1.msra.mxu0 0.0
    %7446 = vmatprep.subr.mxu0 0.0
    %7447 = vmatpush1.msra.mxu0 0.0
    %7448 = vmatprep.subr.mxu0 0.0
    %7449 = vmatpush1.msra.mxu0 0.0
    %7450 = vmatprep.subr.mxu0 0.0
    %7451 = vmatpush1.msra.mxu0 0.0
    %7452 = vmatprep.subr.mxu0 0.0
    %v7453 = vand.u32 %v1034, 4294901760
    %v7454 = vsub.f32 %v1034, %v7453
    %7455 = vmatpush1.msra.mxu0 %v7454
    %7456 = vmatprep.subr.mxu0 0.0
    %v7457 = vand.u32 %v1033, 4294901760
    %v7458 = vsub.f32 %v1033, %v7457
    %7459 = vmatpush1.msra.mxu0 %v7458
    %7460 = vmatprep.subr.mxu0 0.0
    %v7461 = vand.u32 %v1032, 4294901760
    %v7462 = vsub.f32 %v1032, %v7461
    %7463 = vmatpush1.msra.mxu0 %v7462
    %7464 = vmatprep.subr.mxu0 0.0
    %v7465 = vand.u32 %v1031, 4294901760
    %v7466 = vsub.f32 %v1031, %v7465
    %7467 = vmatpush1.msra.mxu0 %v7466
    %7468 = vmatprep.subr.mxu0 0.0
    %7469 = vmatpush2.msra.mxu0 0.0
    %7470 = vmatprep.subr.mxu0 0.0
    %7471 = vmatpush2.msra.mxu0 0.0
    %7472 = vmatprep.subr.mxu0 0.0
    %7473 = vmatpush2.msra.mxu0 0.0
    %7474 = vmatprep.subr.mxu0 0.0
    %7475 = vmatpush2.msra.mxu0 0.0
    %7476 = vmatprep.subr.mxu0 0.0
    %7477 = vmatpush2.msra.mxu0 0.0
    %7478 = vmatprep.subr.mxu0 0.0
    %7479 = vmatpush2.msra.mxu0 0.0
    %7480 = vmatprep.subr.mxu0 0.0
    %7481 = vmatpush2.msra.mxu0 0.0
    %7482 = vmatprep.subr.mxu0 0.0
    %7483 = vmatpush2.msra.mxu0 0.0
    %7484 = vmatprep.subr.mxu0 0.0
    %7485 = vmatpush2.msra.mxu0 0.0
    %7486 = vmatprep.subr.mxu0 0.0
    %7487 = vmatpush2.msra.mxu0 0.0
    %7488 = vmatprep.subr.mxu0 0.0
    %7489 = vmatpush2.msra.mxu0 0.0
    %7490 = vmatprep.subr.mxu0 0.0
    %7491 = vmatpush2.msra.mxu0 0.0
    %7492 = vmatprep.subr.mxu0 0.0
    %7493 = vmatpush2.msra.mxu0 0.0
    %7494 = vmatprep.subr.mxu0 0.0
    %7495 = vmatpush2.msra.mxu0 0.0
    %7496 = vmatprep.subr.mxu0 0.0
    %7497 = vmatpush2.msra.mxu0 0.0
    %7498 = vmatprep.subr.mxu0 0.0
    %7499 = vmatpush2.msra.mxu0 0.0
    %7500 = vmatprep.mubr.f32.mxu0 0.0
    %v7501 = vand.u32 %v7256, 4294901760
    %v7502 = vsub.f32 %v7256, %v7501
    %7503 = vmatmul.mubr.f32.gmra.mxu0 %v7502
    %v7504 = vpop.f32.mrf.mxu0
    %v7505 = vadd.f32 %v7425, %v7504
    %v7506 = vpop.f32.mrf.mxu0
    %7507 = vdwg.mxu0
    %7508 = vmatprep.subr.mxu0 0.0
    %7509 = vmatpush1.msra.mxu0 0.0
    %7510 = vmatprep.subr.mxu0 0.0
    %7511 = vmatpush1.msra.mxu0 0.0
    %7512 = vmatprep.subr.mxu0 0.0
    %7513 = vmatpush1.msra.mxu0 0.0
    %7514 = vmatprep.subr.mxu0 0.0
    %7515 = vmatpush1.msra.mxu0 0.0
    %7516 = vmatprep.subr.mxu0 0.0
    %7517 = vmatpush1.msra.mxu0 0.0
    %7518 = vmatprep.subr.mxu0 0.0
    %7519 = vmatpush1.msra.mxu0 0.0
    %7520 = vmatprep.subr.mxu0 0.0
    %7521 = vmatpush1.msra.mxu0 0.0
    %7522 = vmatprep.subr.mxu0 0.0
    %7523 = vmatpush1.msra.mxu0 0.0
    %7524 = vmatprep.subr.mxu0 0.0
    %7525 = vmatpush1.msra.mxu0 0.0
    %7526 = vmatprep.subr.mxu0 0.0
    %7527 = vmatpush1.msra.mxu0 0.0
    %7528 = vmatprep.subr.mxu0 0.0
    %7529 = vmatpush1.msra.mxu0 0.0
    %7530 = vmatprep.subr.mxu0 0.0
    %7531 = vmatpush1.msra.mxu0 0.0
    %7532 = vmatprep.subr.mxu0 0.0
    %v7533 = vand.u32 %v1034, 4294901760
    %7534 = vmatpush1.msra.mxu0 %v7533
    %7535 = vmatprep.subr.mxu0 0.0
    %v7536 = vand.u32 %v1033, 4294901760
    %7537 = vmatpush1.msra.mxu0 %v7536
    %7538 = vmatprep.subr.mxu0 0.0
    %v7539 = vand.u32 %v1032, 4294901760
    %7540 = vmatpush1.msra.mxu0 %v7539
    %7541 = vmatprep.subr.mxu0 0.0
    %v7542 = vand.u32 %v1031, 4294901760
    %7543 = vmatpush1.msra.mxu0 %v7542
    %7544 = vmatprep.subr.mxu0 0.0
    %7545 = vmatpush2.msra.mxu0 0.0
    %7546 = vmatprep.subr.mxu0 0.0
    %7547 = vmatpush2.msra.mxu0 0.0
    %7548 = vmatprep.subr.mxu0 0.0
    %7549 = vmatpush2.msra.mxu0 0.0
    %7550 = vmatprep.subr.mxu0 0.0
    %7551 = vmatpush2.msra.mxu0 0.0
    %7552 = vmatprep.subr.mxu0 0.0
    %7553 = vmatpush2.msra.mxu0 0.0
    %7554 = vmatprep.subr.mxu0 0.0
    %7555 = vmatpush2.msra.mxu0 0.0
    %7556 = vmatprep.subr.mxu0 0.0
    %7557 = vmatpush2.msra.mxu0 0.0
    %7558 = vmatprep.subr.mxu0 0.0
    %7559 = vmatpush2.msra.mxu0 0.0
    %7560 = vmatprep.subr.mxu0 0.0
    %7561 = vmatpush2.msra.mxu0 0.0
    %7562 = vmatprep.subr.mxu0 0.0
    %7563 = vmatpush2.msra.mxu0 0.0
    %7564 = vmatprep.subr.mxu0 0.0
    %7565 = vmatpush2.msra.mxu0 0.0
    %7566 = vmatprep.subr.mxu0 0.0
    %7567 = vmatpush2.msra.mxu0 0.0
    %7568 = vmatprep.subr.mxu0 0.0
    %7569 = vmatpush2.msra.mxu0 0.0
    %7570 = vmatprep.subr.mxu0 0.0
    %7571 = vmatpush2.msra.mxu0 0.0
    %7572 = vmatprep.subr.mxu0 0.0
    %7573 = vmatpush2.msra.mxu0 0.0
    %7574 = vmatprep.subr.mxu0 0.0
    %7575 = vmatpush2.msra.mxu0 0.0
    %7576 = vmatprep.mubr.f32.mxu0 0.0
    %v7577 = vand.u32 %v7256, 4294901760
    %v7578 = vsub.f32 %v7256, %v7577
    %v7579 = vand.u32 %v7578, 4294901760
    %7580 = vmatmul.mubr.f32.gmra.mxu0 %v7579
    %v7581 = vpop.f32.mrf.mxu0
    %v7582 = vadd.f32 %v7505, %v7581
    %v7583 = vpop.f32.mrf.mxu0
    %7584 = vdwg.mxu0
    %7585 = vmatprep.subr.mxu0 0.0
    %7586 = vmatpush1.msra.mxu0 0.0
    %7587 = vmatprep.subr.mxu0 0.0
    %7588 = vmatpush1.msra.mxu0 0.0
    %7589 = vmatprep.subr.mxu0 0.0
    %7590 = vmatpush1.msra.mxu0 0.0
    %7591 = vmatprep.subr.mxu0 0.0
    %7592 = vmatpush1.msra.mxu0 0.0
    %7593 = vmatprep.subr.mxu0 0.0
    %7594 = vmatpush1.msra.mxu0 0.0
    %7595 = vmatprep.subr.mxu0 0.0
    %7596 = vmatpush1.msra.mxu0 0.0
    %7597 = vmatprep.subr.mxu0 0.0
    %7598 = vmatpush1.msra.mxu0 0.0
    %7599 = vmatprep.subr.mxu0 0.0
    %7600 = vmatpush1.msra.mxu0 0.0
    %7601 = vmatprep.subr.mxu0 0.0
    %7602 = vmatpush1.msra.mxu0 0.0
    %7603 = vmatprep.subr.mxu0 0.0
    %7604 = vmatpush1.msra.mxu0 0.0
    %7605 = vmatprep.subr.mxu0 0.0
    %7606 = vmatpush1.msra.mxu0 0.0
    %7607 = vmatprep.subr.mxu0 0.0
    %7608 = vmatpush1.msra.mxu0 0.0
    %7609 = vmatprep.subr.mxu0 0.0
    %v7610 = vand.u32 %v1034, 4294901760
    %v7611 = vsub.f32 %v1034, %v7610
    %v7612 = vand.u32 %v7611, 4294901760
    %7613 = vmatpush1.msra.mxu0 %v7612
    %7614 = vmatprep.subr.mxu0 0.0
    %v7615 = vand.u32 %v1033, 4294901760
    %v7616 = vsub.f32 %v1033, %v7615
    %v7617 = vand.u32 %v7616, 4294901760
    %7618 = vmatpush1.msra.mxu0 %v7617
    %7619 = vmatprep.subr.mxu0 0.0
    %v7620 = vand.u32 %v1032, 4294901760
    %v7621 = vsub.f32 %v1032, %v7620
    %v7622 = vand.u32 %v7621, 4294901760
    %7623 = vmatpush1.msra.mxu0 %v7622
    %7624 = vmatprep.subr.mxu0 0.0
    %v7625 = vand.u32 %v1031, 4294901760
    %v7626 = vsub.f32 %v1031, %v7625
    %v7627 = vand.u32 %v7626, 4294901760
    %7628 = vmatpush1.msra.mxu0 %v7627
    %7629 = vmatprep.subr.mxu0 0.0
    %7630 = vmatpush2.msra.mxu0 0.0
    %7631 = vmatprep.subr.mxu0 0.0
    %7632 = vmatpush2.msra.mxu0 0.0
    %7633 = vmatprep.subr.mxu0 0.0
    %7634 = vmatpush2.msra.mxu0 0.0
    %7635 = vmatprep.subr.mxu0 0.0
    %7636 = vmatpush2.msra.mxu0 0.0
    %7637 = vmatprep.subr.mxu0 0.0
    %7638 = vmatpush2.msra.mxu0 0.0
    %7639 = vmatprep.subr.mxu0 0.0
    %7640 = vmatpush2.msra.mxu0 0.0
    %7641 = vmatprep.subr.mxu0 0.0
    %7642 = vmatpush2.msra.mxu0 0.0
    %7643 = vmatprep.subr.mxu0 0.0
    %7644 = vmatpush2.msra.mxu0 0.0
    %7645 = vmatprep.subr.mxu0 0.0
    %7646 = vmatpush2.msra.mxu0 0.0
    %7647 = vmatprep.subr.mxu0 0.0
    %7648 = vmatpush2.msra.mxu0 0.0
    %7649 = vmatprep.subr.mxu0 0.0
    %7650 = vmatpush2.msra.mxu0 0.0
    %7651 = vmatprep.subr.mxu0 0.0
    %7652 = vmatpush2.msra.mxu0 0.0
    %7653 = vmatprep.subr.mxu0 0.0
    %7654 = vmatpush2.msra.mxu0 0.0
    %7655 = vmatprep.subr.mxu0 0.0
    %7656 = vmatpush2.msra.mxu0 0.0
    %7657 = vmatprep.subr.mxu0 0.0
    %7658 = vmatpush2.msra.mxu0 0.0
    %7659 = vmatprep.subr.mxu0 0.0
    %7660 = vmatpush2.msra.mxu0 0.0
    %7661 = vmatprep.mubr.f32.mxu0 0.0
    %v7662 = vand.u32 %v7256, 4294901760
    %7663 = vmatmul.mubr.f32.gmra.mxu0 %v7662
    %v7664 = vpop.f32.mrf.mxu0
    %v7665 = vadd.f32 %v7582, %v7664
    %v7666 = vpop.f32.mrf.mxu0
    %7667 = vdwg.mxu0
    %7668 = vmatprep.subr.mxu0 0.0
    %7669 = vmatpush1.msra.mxu0 0.0
    %7670 = vmatprep.subr.mxu0 0.0
    %7671 = vmatpush1.msra.mxu0 0.0
    %7672 = vmatprep.subr.mxu0 0.0
    %7673 = vmatpush1.msra.mxu0 0.0
    %7674 = vmatprep.subr.mxu0 0.0
    %7675 = vmatpush1.msra.mxu0 0.0
    %7676 = vmatprep.subr.mxu0 0.0
    %7677 = vmatpush1.msra.mxu0 0.0
    %7678 = vmatprep.subr.mxu0 0.0
    %7679 = vmatpush1.msra.mxu0 0.0
    %7680 = vmatprep.subr.mxu0 0.0
    %7681 = vmatpush1.msra.mxu0 0.0
    %7682 = vmatprep.subr.mxu0 0.0
    %7683 = vmatpush1.msra.mxu0 0.0
    %7684 = vmatprep.subr.mxu0 0.0
    %7685 = vmatpush1.msra.mxu0 0.0
    %7686 = vmatprep.subr.mxu0 0.0
    %7687 = vmatpush1.msra.mxu0 0.0
    %7688 = vmatprep.subr.mxu0 0.0
    %7689 = vmatpush1.msra.mxu0 0.0
    %7690 = vmatprep.subr.mxu0 0.0
    %7691 = vmatpush1.msra.mxu0 0.0
    %7692 = vmatprep.subr.mxu0 0.0
    %v7693 = vand.u32 %v1034, 4294901760
    %7694 = vmatpush1.msra.mxu0 %v7693
    %7695 = vmatprep.subr.mxu0 0.0
    %v7696 = vand.u32 %v1033, 4294901760
    %7697 = vmatpush1.msra.mxu0 %v7696
    %7698 = vmatprep.subr.mxu0 0.0
    %v7699 = vand.u32 %v1032, 4294901760
    %7700 = vmatpush1.msra.mxu0 %v7699
    %7701 = vmatprep.subr.mxu0 0.0
    %v7702 = vand.u32 %v1031, 4294901760
    %7703 = vmatpush1.msra.mxu0 %v7702
    %7704 = vmatprep.subr.mxu0 0.0
    %7705 = vmatpush2.msra.mxu0 0.0
    %7706 = vmatprep.subr.mxu0 0.0
    %7707 = vmatpush2.msra.mxu0 0.0
    %7708 = vmatprep.subr.mxu0 0.0
    %7709 = vmatpush2.msra.mxu0 0.0
    %7710 = vmatprep.subr.mxu0 0.0
    %7711 = vmatpush2.msra.mxu0 0.0
    %7712 = vmatprep.subr.mxu0 0.0
    %7713 = vmatpush2.msra.mxu0 0.0
    %7714 = vmatprep.subr.mxu0 0.0
    %7715 = vmatpush2.msra.mxu0 0.0
    %7716 = vmatprep.subr.mxu0 0.0
    %7717 = vmatpush2.msra.mxu0 0.0
    %7718 = vmatprep.subr.mxu0 0.0
    %7719 = vmatpush2.msra.mxu0 0.0
    %7720 = vmatprep.subr.mxu0 0.0
    %7721 = vmatpush2.msra.mxu0 0.0
    %7722 = vmatprep.subr.mxu0 0.0
    %7723 = vmatpush2.msra.mxu0 0.0
    %7724 = vmatprep.subr.mxu0 0.0
    %7725 = vmatpush2.msra.mxu0 0.0
    %7726 = vmatprep.subr.mxu0 0.0
    %7727 = vmatpush2.msra.mxu0 0.0
    %7728 = vmatprep.subr.mxu0 0.0
    %7729 = vmatpush2.msra.mxu0 0.0
    %7730 = vmatprep.subr.mxu0 0.0
    %7731 = vmatpush2.msra.mxu0 0.0
    %7732 = vmatprep.subr.mxu0 0.0
    %7733 = vmatpush2.msra.mxu0 0.0
    %7734 = vmatprep.subr.mxu0 0.0
    %7735 = vmatpush2.msra.mxu0 0.0
    %7736 = vmatprep.mubr.f32.mxu0 0.0
    %v7737 = vand.u32 %v7256, 4294901760
    %7738 = vmatmul.mubr.f32.gmra.mxu0 %v7737
    %v7739 = vpop.f32.mrf.mxu0
    %v7740 = vadd.f32 %v7665, %v7739
    %v7741 = vpop.f32.mrf.mxu0
    %7742 = vdwg.mxu0
    %v7743 = vadd.f32 %v7255, %v7740
    %s7744 = scalar_lea.vmem [#allocation3], 8
    %v7745 = vld [vmem:[%s7744] sm:$0xff]
    %7746 = vrot.lane.b32.xlu0 %v7243, 32
    %v7747 = vpop.permute.xlu0 %7746
    %v7748 = vsel %vm104, %v7747, 0
    %7750 = vmatprep.subr.mxu0 0.0
    %7751 = vmatpush1.msra.mxu0 0.0
    %7752 = vmatprep.subr.mxu0 0.0
    %7753 = vmatpush1.msra.mxu0 0.0
    %7754 = vmatprep.subr.mxu0 0.0
    %7755 = vmatpush1.msra.mxu0 0.0
    %7756 = vmatprep.subr.mxu0 0.0
    %7757 = vmatpush1.msra.mxu0 0.0
    %7758 = vmatprep.subr.mxu0 0.0
    %7759 = vmatpush1.msra.mxu0 0.0
    %7760 = vmatprep.subr.mxu0 0.0
    %7761 = vmatpush1.msra.mxu0 0.0
    %7762 = vmatprep.subr.mxu0 0.0
    %7763 = vmatpush1.msra.mxu0 0.0
    %7764 = vmatprep.subr.mxu0 0.0
    %7765 = vmatpush1.msra.mxu0 0.0
    %7766 = vmatprep.subr.mxu0 0.0
    %7767 = vmatpush1.msra.mxu0 0.0
    %7768 = vmatprep.subr.mxu0 0.0
    %7769 = vmatpush1.msra.mxu0 0.0
    %7770 = vmatprep.subr.mxu0 0.0
    %7771 = vmatpush1.msra.mxu0 0.0
    %7772 = vmatprep.subr.mxu0 0.0
    %7773 = vmatpush1.msra.mxu0 0.0
    %7774 = vmatprep.subr.mxu0 0.0
    %v7775 = vand.u32 %v1038, 4294901760
    %7776 = vmatpush1.msra.mxu0 %v7775
    %7777 = vmatprep.subr.mxu0 0.0
    %v7778 = vand.u32 %v1037, 4294901760
    %7779 = vmatpush1.msra.mxu0 %v7778
    %7780 = vmatprep.subr.mxu0 0.0
    %v7781 = vand.u32 %v1036, 4294901760
    %7782 = vmatpush1.msra.mxu0 %v7781
    %7783 = vmatprep.subr.mxu0 0.0
    %v7784 = vand.u32 %v1035, 4294901760
    %7785 = vmatpush1.msra.mxu0 %v7784
    %7786 = vmatprep.subr.mxu0 0.0
    %7787 = vmatpush2.msra.mxu0 0.0
    %7788 = vmatprep.subr.mxu0 0.0
    %7789 = vmatpush2.msra.mxu0 0.0
    %7790 = vmatprep.subr.mxu0 0.0
    %7791 = vmatpush2.msra.mxu0 0.0
    %7792 = vmatprep.subr.mxu0 0.0
    %7793 = vmatpush2.msra.mxu0 0.0
    %7794 = vmatprep.subr.mxu0 0.0
    %7795 = vmatpush2.msra.mxu0 0.0
    %7796 = vmatprep.subr.mxu0 0.0
    %7797 = vmatpush2.msra.mxu0 0.0
    %7798 = vmatprep.subr.mxu0 0.0
    %7799 = vmatpush2.msra.mxu0 0.0
    %7800 = vmatprep.subr.mxu0 0.0
    %7801 = vmatpush2.msra.mxu0 0.0
    %7802 = vmatprep.subr.mxu0 0.0
    %7803 = vmatpush2.msra.mxu0 0.0
    %7804 = vmatprep.subr.mxu0 0.0
    %7805 = vmatpush2.msra.mxu0 0.0
    %7806 = vmatprep.subr.mxu0 0.0
    %7807 = vmatpush2.msra.mxu0 0.0
    %7808 = vmatprep.subr.mxu0 0.0
    %7809 = vmatpush2.msra.mxu0 0.0
    %7810 = vmatprep.subr.mxu0 0.0
    %7811 = vmatpush2.msra.mxu0 0.0
    %7812 = vmatprep.subr.mxu0 0.0
    %7813 = vmatpush2.msra.mxu0 0.0
    %7814 = vmatprep.subr.mxu0 0.0
    %7815 = vmatpush2.msra.mxu0 0.0
    %7816 = vmatprep.subr.mxu0 0.0
    %7817 = vmatpush2.msra.mxu0 0.0
    %7818 = vmatprep.mubr.f32.mxu0 0.0
    %v7819 = vand.u32 %v7748, 4294901760
    %v7820 = vsub.f32 %v7748, %v7819
    %v7821 = vand.u32 %v7820, 4294901760
    %v7822 = vsub.f32 %v7820, %v7821
    %v7823 = vand.u32 %v7822, 4294901760
    %7824 = vmatmul.mubr.f32.gmra.mxu0 %v7823
    %v7825 = vpop.f32.mrf.mxu0
    %v7826 = vadd.f32 0.0, %v7825
    %v7827 = vpop.f32.mrf.mxu0
    %7828 = vdwg.mxu0
    %7829 = vmatprep.subr.mxu0 0.0
    %7830 = vmatpush1.msra.mxu0 0.0
    %7831 = vmatprep.subr.mxu0 0.0
    %7832 = vmatpush1.msra.mxu0 0.0
    %7833 = vmatprep.subr.mxu0 0.0
    %7834 = vmatpush1.msra.mxu0 0.0
    %7835 = vmatprep.subr.mxu0 0.0
    %7836 = vmatpush1.msra.mxu0 0.0
    %7837 = vmatprep.subr.mxu0 0.0
    %7838 = vmatpush1.msra.mxu0 0.0
    %7839 = vmatprep.subr.mxu0 0.0
    %7840 = vmatpush1.msra.mxu0 0.0
    %7841 = vmatprep.subr.mxu0 0.0
    %7842 = vmatpush1.msra.mxu0 0.0
    %7843 = vmatprep.subr.mxu0 0.0
    %7844 = vmatpush1.msra.mxu0 0.0
    %7845 = vmatprep.subr.mxu0 0.0
    %7846 = vmatpush1.msra.mxu0 0.0
    %7847 = vmatprep.subr.mxu0 0.0
    %7848 = vmatpush1.msra.mxu0 0.0
    %7849 = vmatprep.subr.mxu0 0.0
    %7850 = vmatpush1.msra.mxu0 0.0
    %7851 = vmatprep.subr.mxu0 0.0
    %7852 = vmatpush1.msra.mxu0 0.0
    %7853 = vmatprep.subr.mxu0 0.0
    %v7854 = vand.u32 %v1038, 4294901760
    %v7855 = vsub.f32 %v1038, %v7854
    %v7856 = vand.u32 %v7855, 4294901760
    %v7857 = vsub.f32 %v7855, %v7856
    %v7858 = vand.u32 %v7857, 4294901760
    %7859 = vmatpush1.msra.mxu0 %v7858
    %7860 = vmatprep.subr.mxu0 0.0
    %v7861 = vand.u32 %v1037, 4294901760
    %v7862 = vsub.f32 %v1037, %v7861
    %v7863 = vand.u32 %v7862, 4294901760
    %v7864 = vsub.f32 %v7862, %v7863
    %v7865 = vand.u32 %v7864, 4294901760
    %7866 = vmatpush1.msra.mxu0 %v7865
    %7867 = vmatprep.subr.mxu0 0.0
    %v7868 = vand.u32 %v1036, 4294901760
    %v7869 = vsub.f32 %v1036, %v7868
    %v7870 = vand.u32 %v7869, 4294901760
    %v7871 = vsub.f32 %v7869, %v7870
    %v7872 = vand.u32 %v7871, 4294901760
    %7873 = vmatpush1.msra.mxu0 %v7872
    %7874 = vmatprep.subr.mxu0 0.0
    %v7875 = vand.u32 %v1035, 4294901760
    %v7876 = vsub.f32 %v1035, %v7875
    %v7877 = vand.u32 %v7876, 4294901760
    %v7878 = vsub.f32 %v7876, %v7877
    %v7879 = vand.u32 %v7878, 4294901760
    %7880 = vmatpush1.msra.mxu0 %v7879
    %7881 = vmatprep.subr.mxu0 0.0
    %7882 = vmatpush2.msra.mxu0 0.0
    %7883 = vmatprep.subr.mxu0 0.0
    %7884 = vmatpush2.msra.mxu0 0.0
    %7885 = vmatprep.subr.mxu0 0.0
    %7886 = vmatpush2.msra.mxu0 0.0
    %7887 = vmatprep.subr.mxu0 0.0
    %7888 = vmatpush2.msra.mxu0 0.0
    %7889 = vmatprep.subr.mxu0 0.0
    %7890 = vmatpush2.msra.mxu0 0.0
    %7891 = vmatprep.subr.mxu0 0.0
    %7892 = vmatpush2.msra.mxu0 0.0
    %7893 = vmatprep.subr.mxu0 0.0
    %7894 = vmatpush2.msra.mxu0 0.0
    %7895 = vmatprep.subr.mxu0 0.0
    %7896 = vmatpush2.msra.mxu0 0.0
    %7897 = vmatprep.subr.mxu0 0.0
    %7898 = vmatpush2.msra.mxu0 0.0
    %7899 = vmatprep.subr.mxu0 0.0
    %7900 = vmatpush2.msra.mxu0 0.0
    %7901 = vmatprep.subr.mxu0 0.0
    %7902 = vmatpush2.msra.mxu0 0.0
    %7903 = vmatprep.subr.mxu0 0.0
    %7904 = vmatpush2.msra.mxu0 0.0
    %7905 = vmatprep.subr.mxu0 0.0
    %7906 = vmatpush2.msra.mxu0 0.0
    %7907 = vmatprep.subr.mxu0 0.0
    %7908 = vmatpush2.msra.mxu0 0.0
    %7909 = vmatprep.subr.mxu0 0.0
    %7910 = vmatpush2.msra.mxu0 0.0
    %7911 = vmatprep.subr.mxu0 0.0
    %7912 = vmatpush2.msra.mxu0 0.0
    %7913 = vmatprep.mubr.f32.mxu0 0.0
    %v7914 = vand.u32 %v7748, 4294901760
    %7915 = vmatmul.mubr.f32.gmra.mxu0 %v7914
    %v7916 = vpop.f32.mrf.mxu0
    %v7917 = vadd.f32 %v7826, %v7916
    %v7918 = vpop.f32.mrf.mxu0
    %7919 = vdwg.mxu0
    %7920 = vmatprep.subr.mxu0 0.0
    %7921 = vmatpush1.msra.mxu0 0.0
    %7922 = vmatprep.subr.mxu0 0.0
    %7923 = vmatpush1.msra.mxu0 0.0
    %7924 = vmatprep.subr.mxu0 0.0
    %7925 = vmatpush1.msra.mxu0 0.0
    %7926 = vmatprep.subr.mxu0 0.0
    %7927 = vmatpush1.msra.mxu0 0.0
    %7928 = vmatprep.subr.mxu0 0.0
    %7929 = vmatpush1.msra.mxu0 0.0
    %7930 = vmatprep.subr.mxu0 0.0
    %7931 = vmatpush1.msra.mxu0 0.0
    %7932 = vmatprep.subr.mxu0 0.0
    %7933 = vmatpush1.msra.mxu0 0.0
    %7934 = vmatprep.subr.mxu0 0.0
    %7935 = vmatpush1.msra.mxu0 0.0
    %7936 = vmatprep.subr.mxu0 0.0
    %7937 = vmatpush1.msra.mxu0 0.0
    %7938 = vmatprep.subr.mxu0 0.0
    %7939 = vmatpush1.msra.mxu0 0.0
    %7940 = vmatprep.subr.mxu0 0.0
    %7941 = vmatpush1.msra.mxu0 0.0
    %7942 = vmatprep.subr.mxu0 0.0
    %7943 = vmatpush1.msra.mxu0 0.0
    %7944 = vmatprep.subr.mxu0 0.0
    %v7945 = vand.u32 %v1038, 4294901760
    %v7946 = vsub.f32 %v1038, %v7945
    %7947 = vmatpush1.msra.mxu0 %v7946
    %7948 = vmatprep.subr.mxu0 0.0
    %v7949 = vand.u32 %v1037, 4294901760
    %v7950 = vsub.f32 %v1037, %v7949
    %7951 = vmatpush1.msra.mxu0 %v7950
    %7952 = vmatprep.subr.mxu0 0.0
    %v7953 = vand.u32 %v1036, 4294901760
    %v7954 = vsub.f32 %v1036, %v7953
    %7955 = vmatpush1.msra.mxu0 %v7954
    %7956 = vmatprep.subr.mxu0 0.0
    %v7957 = vand.u32 %v1035, 4294901760
    %v7958 = vsub.f32 %v1035, %v7957
    %7959 = vmatpush1.msra.mxu0 %v7958
    %7960 = vmatprep.subr.mxu0 0.0
    %7961 = vmatpush2.msra.mxu0 0.0
    %7962 = vmatprep.subr.mxu0 0.0
    %7963 = vmatpush2.msra.mxu0 0.0
    %7964 = vmatprep.subr.mxu0 0.0
    %7965 = vmatpush2.msra.mxu0 0.0
    %7966 = vmatprep.subr.mxu0 0.0
    %7967 = vmatpush2.msra.mxu0 0.0
    %7968 = vmatprep.subr.mxu0 0.0
    %7969 = vmatpush2.msra.mxu0 0.0
    %7970 = vmatprep.subr.mxu0 0.0
    %7971 = vmatpush2.msra.mxu0 0.0
    %7972 = vmatprep.subr.mxu0 0.0
    %7973 = vmatpush2.msra.mxu0 0.0
    %7974 = vmatprep.subr.mxu0 0.0
    %7975 = vmatpush2.msra.mxu0 0.0
    %7976 = vmatprep.subr.mxu0 0.0
    %7977 = vmatpush2.msra.mxu0 0.0
    %7978 = vmatprep.subr.mxu0 0.0
    %7979 = vmatpush2.msra.mxu0 0.0
    %7980 = vmatprep.subr.mxu0 0.0
    %7981 = vmatpush2.msra.mxu0 0.0
    %7982 = vmatprep.subr.mxu0 0.0
    %7983 = vmatpush2.msra.mxu0 0.0
    %7984 = vmatprep.subr.mxu0 0.0
    %7985 = vmatpush2.msra.mxu0 0.0
    %7986 = vmatprep.subr.mxu0 0.0
    %7987 = vmatpush2.msra.mxu0 0.0
    %7988 = vmatprep.subr.mxu0 0.0
    %7989 = vmatpush2.msra.mxu0 0.0
    %7990 = vmatprep.subr.mxu0 0.0
    %7991 = vmatpush2.msra.mxu0 0.0
    %7992 = vmatprep.mubr.f32.mxu0 0.0
    %v7993 = vand.u32 %v7748, 4294901760
    %v7994 = vsub.f32 %v7748, %v7993
    %7995 = vmatmul.mubr.f32.gmra.mxu0 %v7994
    %v7996 = vpop.f32.mrf.mxu0
    %v7997 = vadd.f32 %v7917, %v7996
    %v7998 = vpop.f32.mrf.mxu0
    %7999 = vdwg.mxu0
    %8000 = vmatprep.subr.mxu0 0.0
    %8001 = vmatpush1.msra.mxu0 0.0
    %8002 = vmatprep.subr.mxu0 0.0
    %8003 = vmatpush1.msra.mxu0 0.0
    %8004 = vmatprep.subr.mxu0 0.0
    %8005 = vmatpush1.msra.mxu0 0.0
    %8006 = vmatprep.subr.mxu0 0.0
    %8007 = vmatpush1.msra.mxu0 0.0
    %8008 = vmatprep.subr.mxu0 0.0
    %8009 = vmatpush1.msra.mxu0 0.0
    %8010 = vmatprep.subr.mxu0 0.0
    %8011 = vmatpush1.msra.mxu0 0.0
    %8012 = vmatprep.subr.mxu0 0.0
    %8013 = vmatpush1.msra.mxu0 0.0
    %8014 = vmatprep.subr.mxu0 0.0
    %8015 = vmatpush1.msra.mxu0 0.0
    %8016 = vmatprep.subr.mxu0 0.0
    %8017 = vmatpush1.msra.mxu0 0.0
    %8018 = vmatprep.subr.mxu0 0.0
    %8019 = vmatpush1.msra.mxu0 0.0
    %8020 = vmatprep.subr.mxu0 0.0
    %8021 = vmatpush1.msra.mxu0 0.0
    %8022 = vmatprep.subr.mxu0 0.0
    %8023 = vmatpush1.msra.mxu0 0.0
    %8024 = vmatprep.subr.mxu0 0.0
    %v8025 = vand.u32 %v1038, 4294901760
    %8026 = vmatpush1.msra.mxu0 %v8025
    %8027 = vmatprep.subr.mxu0 0.0
    %v8028 = vand.u32 %v1037, 4294901760
    %8029 = vmatpush1.msra.mxu0 %v8028
    %8030 = vmatprep.subr.mxu0 0.0
    %v8031 = vand.u32 %v1036, 4294901760
    %8032 = vmatpush1.msra.mxu0 %v8031
    %8033 = vmatprep.subr.mxu0 0.0
    %v8034 = vand.u32 %v1035, 4294901760
    %8035 = vmatpush1.msra.mxu0 %v8034
    %8036 = vmatprep.subr.mxu0 0.0
    %8037 = vmatpush2.msra.mxu0 0.0
    %8038 = vmatprep.subr.mxu0 0.0
    %8039 = vmatpush2.msra.mxu0 0.0
    %8040 = vmatprep.subr.mxu0 0.0
    %8041 = vmatpush2.msra.mxu0 0.0
    %8042 = vmatprep.subr.mxu0 0.0
    %8043 = vmatpush2.msra.mxu0 0.0
    %8044 = vmatprep.subr.mxu0 0.0
    %8045 = vmatpush2.msra.mxu0 0.0
    %8046 = vmatprep.subr.mxu0 0.0
    %8047 = vmatpush2.msra.mxu0 0.0
    %8048 = vmatprep.subr.mxu0 0.0
    %8049 = vmatpush2.msra.mxu0 0.0
    %8050 = vmatprep.subr.mxu0 0.0
    %8051 = vmatpush2.msra.mxu0 0.0
    %8052 = vmatprep.subr.mxu0 0.0
    %8053 = vmatpush2.msra.mxu0 0.0
    %8054 = vmatprep.subr.mxu0 0.0
    %8055 = vmatpush2.msra.mxu0 0.0
    %8056 = vmatprep.subr.mxu0 0.0
    %8057 = vmatpush2.msra.mxu0 0.0
    %8058 = vmatprep.subr.mxu0 0.0
    %8059 = vmatpush2.msra.mxu0 0.0
    %8060 = vmatprep.subr.mxu0 0.0
    %8061 = vmatpush2.msra.mxu0 0.0
    %8062 = vmatprep.subr.mxu0 0.0
    %8063 = vmatpush2.msra.mxu0 0.0
    %8064 = vmatprep.subr.mxu0 0.0
    %8065 = vmatpush2.msra.mxu0 0.0
    %8066 = vmatprep.subr.mxu0 0.0
    %8067 = vmatpush2.msra.mxu0 0.0
    %8068 = vmatprep.mubr.f32.mxu0 0.0
    %v8069 = vand.u32 %v7748, 4294901760
    %v8070 = vsub.f32 %v7748, %v8069
    %v8071 = vand.u32 %v8070, 4294901760
    %8072 = vmatmul.mubr.f32.gmra.mxu0 %v8071
    %v8073 = vpop.f32.mrf.mxu0
    %v8074 = vadd.f32 %v7997, %v8073
    %v8075 = vpop.f32.mrf.mxu0
    %8076 = vdwg.mxu0
    %8077 = vmatprep.subr.mxu0 0.0
    %8078 = vmatpush1.msra.mxu0 0.0
    %8079 = vmatprep.subr.mxu0 0.0
    %8080 = vmatpush1.msra.mxu0 0.0
    %8081 = vmatprep.subr.mxu0 0.0
    %8082 = vmatpush1.msra.mxu0 0.0
    %8083 = vmatprep.subr.mxu0 0.0
    %8084 = vmatpush1.msra.mxu0 0.0
    %8085 = vmatprep.subr.mxu0 0.0
    %8086 = vmatpush1.msra.mxu0 0.0
    %8087 = vmatprep.subr.mxu0 0.0
    %8088 = vmatpush1.msra.mxu0 0.0
    %8089 = vmatprep.subr.mxu0 0.0
    %8090 = vmatpush1.msra.mxu0 0.0
    %8091 = vmatprep.subr.mxu0 0.0
    %8092 = vmatpush1.msra.mxu0 0.0
    %8093 = vmatprep.subr.mxu0 0.0
    %8094 = vmatpush1.msra.mxu0 0.0
    %8095 = vmatprep.subr.mxu0 0.0
    %8096 = vmatpush1.msra.mxu0 0.0
    %8097 = vmatprep.subr.mxu0 0.0
    %8098 = vmatpush1.msra.mxu0 0.0
    %8099 = vmatprep.subr.mxu0 0.0
    %8100 = vmatpush1.msra.mxu0 0.0
    %8101 = vmatprep.subr.mxu0 0.0
    %v8102 = vand.u32 %v1038, 4294901760
    %v8103 = vsub.f32 %v1038, %v8102
    %v8104 = vand.u32 %v8103, 4294901760
    %8105 = vmatpush1.msra.mxu0 %v8104
    %8106 = vmatprep.subr.mxu0 0.0
    %v8107 = vand.u32 %v1037, 4294901760
    %v8108 = vsub.f32 %v1037, %v8107
    %v8109 = vand.u32 %v8108, 4294901760
    %8110 = vmatpush1.msra.mxu0 %v8109
    %8111 = vmatprep.subr.mxu0 0.0
    %v8112 = vand.u32 %v1036, 4294901760
    %v8113 = vsub.f32 %v1036, %v8112
    %v8114 = vand.u32 %v8113, 4294901760
    %8115 = vmatpush1.msra.mxu0 %v8114
    %8116 = vmatprep.subr.mxu0 0.0
    %v8117 = vand.u32 %v1035, 4294901760
    %v8118 = vsub.f32 %v1035, %v8117
    %v8119 = vand.u32 %v8118, 4294901760
    %8120 = vmatpush1.msra.mxu0 %v8119
    %8121 = vmatprep.subr.mxu0 0.0
    %8122 = vmatpush2.msra.mxu0 0.0
    %8123 = vmatprep.subr.mxu0 0.0
    %8124 = vmatpush2.msra.mxu0 0.0
    %8125 = vmatprep.subr.mxu0 0.0
    %8126 = vmatpush2.msra.mxu0 0.0
    %8127 = vmatprep.subr.mxu0 0.0
    %8128 = vmatpush2.msra.mxu0 0.0
    %8129 = vmatprep.subr.mxu0 0.0
    %8130 = vmatpush2.msra.mxu0 0.0
    %8131 = vmatprep.subr.mxu0 0.0
    %8132 = vmatpush2.msra.mxu0 0.0
    %8133 = vmatprep.subr.mxu0 0.0
    %8134 = vmatpush2.msra.mxu0 0.0
    %8135 = vmatprep.subr.mxu0 0.0
    %8136 = vmatpush2.msra.mxu0 0.0
    %8137 = vmatprep.subr.mxu0 0.0
    %8138 = vmatpush2.msra.mxu0 0.0
    %8139 = vmatprep.subr.mxu0 0.0
    %8140 = vmatpush2.msra.mxu0 0.0
    %8141 = vmatprep.subr.mxu0 0.0
    %8142 = vmatpush2.msra.mxu0 0.0
    %8143 = vmatprep.subr.mxu0 0.0
    %8144 = vmatpush2.msra.mxu0 0.0
    %8145 = vmatprep.subr.mxu0 0.0
    %8146 = vmatpush2.msra.mxu0 0.0
    %8147 = vmatprep.subr.mxu0 0.0
    %8148 = vmatpush2.msra.mxu0 0.0
    %8149 = vmatprep.subr.mxu0 0.0
    %8150 = vmatpush2.msra.mxu0 0.0
    %8151 = vmatprep.subr.mxu0 0.0
    %8152 = vmatpush2.msra.mxu0 0.0
    %8153 = vmatprep.mubr.f32.mxu0 0.0
    %v8154 = vand.u32 %v7748, 4294901760
    %8155 = vmatmul.mubr.f32.gmra.mxu0 %v8154
    %v8156 = vpop.f32.mrf.mxu0
    %v8157 = vadd.f32 %v8074, %v8156
    %v8158 = vpop.f32.mrf.mxu0
    %8159 = vdwg.mxu0
    %8160 = vmatprep.subr.mxu0 0.0
    %8161 = vmatpush1.msra.mxu0 0.0
    %8162 = vmatprep.subr.mxu0 0.0
    %8163 = vmatpush1.msra.mxu0 0.0
    %8164 = vmatprep.subr.mxu0 0.0
    %8165 = vmatpush1.msra.mxu0 0.0
    %8166 = vmatprep.subr.mxu0 0.0
    %8167 = vmatpush1.msra.mxu0 0.0
    %8168 = vmatprep.subr.mxu0 0.0
    %8169 = vmatpush1.msra.mxu0 0.0
    %8170 = vmatprep.subr.mxu0 0.0
    %8171 = vmatpush1.msra.mxu0 0.0
    %8172 = vmatprep.subr.mxu0 0.0
    %8173 = vmatpush1.msra.mxu0 0.0
    %8174 = vmatprep.subr.mxu0 0.0
    %8175 = vmatpush1.msra.mxu0 0.0
    %8176 = vmatprep.subr.mxu0 0.0
    %8177 = vmatpush1.msra.mxu0 0.0
    %8178 = vmatprep.subr.mxu0 0.0
    %8179 = vmatpush1.msra.mxu0 0.0
    %8180 = vmatprep.subr.mxu0 0.0
    %8181 = vmatpush1.msra.mxu0 0.0
    %8182 = vmatprep.subr.mxu0 0.0
    %8183 = vmatpush1.msra.mxu0 0.0
    %8184 = vmatprep.subr.mxu0 0.0
    %v8185 = vand.u32 %v1038, 4294901760
    %8186 = vmatpush1.msra.mxu0 %v8185
    %8187 = vmatprep.subr.mxu0 0.0
    %v8188 = vand.u32 %v1037, 4294901760
    %8189 = vmatpush1.msra.mxu0 %v8188
    %8190 = vmatprep.subr.mxu0 0.0
    %v8191 = vand.u32 %v1036, 4294901760
    %8192 = vmatpush1.msra.mxu0 %v8191
    %8193 = vmatprep.subr.mxu0 0.0
    %v8194 = vand.u32 %v1035, 4294901760
    %8195 = vmatpush1.msra.mxu0 %v8194
    %8196 = vmatprep.subr.mxu0 0.0
    %8197 = vmatpush2.msra.mxu0 0.0
    %8198 = vmatprep.subr.mxu0 0.0
    %8199 = vmatpush2.msra.mxu0 0.0
    %8200 = vmatprep.subr.mxu0 0.0
    %8201 = vmatpush2.msra.mxu0 0.0
    %8202 = vmatprep.subr.mxu0 0.0
    %8203 = vmatpush2.msra.mxu0 0.0
    %8204 = vmatprep.subr.mxu0 0.0
    %8205 = vmatpush2.msra.mxu0 0.0
    %8206 = vmatprep.subr.mxu0 0.0
    %8207 = vmatpush2.msra.mxu0 0.0
    %8208 = vmatprep.subr.mxu0 0.0
    %8209 = vmatpush2.msra.mxu0 0.0
    %8210 = vmatprep.subr.mxu0 0.0
    %8211 = vmatpush2.msra.mxu0 0.0
    %8212 = vmatprep.subr.mxu0 0.0
    %8213 = vmatpush2.msra.mxu0 0.0
    %8214 = vmatprep.subr.mxu0 0.0
    %8215 = vmatpush2.msra.mxu0 0.0
    %8216 = vmatprep.subr.mxu0 0.0
    %8217 = vmatpush2.msra.mxu0 0.0
    %8218 = vmatprep.subr.mxu0 0.0
    %8219 = vmatpush2.msra.mxu0 0.0
    %8220 = vmatprep.subr.mxu0 0.0
    %8221 = vmatpush2.msra.mxu0 0.0
    %8222 = vmatprep.subr.mxu0 0.0
    %8223 = vmatpush2.msra.mxu0 0.0
    %8224 = vmatprep.subr.mxu0 0.0
    %8225 = vmatpush2.msra.mxu0 0.0
    %8226 = vmatprep.subr.mxu0 0.0
    %8227 = vmatpush2.msra.mxu0 0.0
    %8228 = vmatprep.mubr.f32.mxu0 0.0
    %v8229 = vand.u32 %v7748, 4294901760
    %8230 = vmatmul.mubr.f32.gmra.mxu0 %v8229
    %v8231 = vpop.f32.mrf.mxu0
    %v8232 = vadd.f32 %v8157, %v8231
    %v8233 = vpop.f32.mrf.mxu0
    %8234 = vdwg.mxu0
    %v8235 = vadd.f32 %v7745, %v8232
    %v8236 = vmul.f32 %v7743, %v1044
    %v8237 = vtanh.pop %v8236
    %v8238 = vmul.f32 %v8237, %v1044
    %v8239 = vadd.f32 %v8238, %v1045
    %v8240 = vmul.f32 %v8239, %v7216
    %8242 = vrot.lane.b32.xlu0 %v8239, 64
    %v8243 = vpop.permute.xlu0 %8242
    %v8245 = vmul.f32 %v8239, %v8243
    %8247 = vrot.lane.b32.xlu0 %v8245, 32
    %v8248 = vpop.permute.xlu0 %8247
    %v8250 = vadd.f32 %v8240, %v8248
    %v8251 = vtanh.pop %v8250
    %8253 = vrot.lane.b32.xlu0 %v8251, 64
    %v8254 = vpop.permute.xlu0 %8253
    %v8256 = vmul.f32 %v8239, %v8254
    %v8257 = vmul.f32 %v8235, %v1044
    %v8258 = vtanh.pop %v8257
    %v8259 = vmul.f32 %v8258, %v1044
    %v8260 = vadd.f32 %v8259, %v1045
    %v8261 = vmul.f32 %v8260, %v7237
    %8263 = vrot.lane.b32.xlu0 %v8260, 64
    %v8264 = vpop.permute.xlu0 %8263
    %v8266 = vmul.f32 %v8260, %v8264
    %8268 = vrot.lane.b32.xlu0 %v8266, 32
    %v8269 = vpop.permute.xlu0 %8268
    %v8271 = vadd.f32 %v8261, %v8269
    %v8272 = vtanh.pop %v8271
    %8274 = vrot.lane.b32.xlu0 %v8272, 64
    %v8275 = vpop.permute.xlu0 %8274
    %v8277 = vmul.f32 %v8260, %v8275
    %8279 = vrot.lane.b32.xlu0 %v8256, 32
    %v8280 = vpop.permute.xlu0 %8279
    %8282 = vst.msk [vmem:[%s3112] sm:$0xff] %vm104, %v8280
    %8284 = vrot.lane.b32.xlu0 %v8277, 64
    %v8285 = vpop.permute.xlu0 %8284
    %8287 = vst.msk [vmem:[%s3106] sm:$0xff] %vm2076, %v8285
    %s8288 = scalar_lea.vmem [#allocation2], 56
    %v8289 = vld [vmem:[%s8288] sm:$0xff]
    %v8290 = vsel %vm104, %v8280, 0
    %8292 = vmatprep.subr.mxu0 0.0
    %8293 = vmatpush1.msra.mxu0 0.0
    %8294 = vmatprep.subr.mxu0 0.0
    %8295 = vmatpush1.msra.mxu0 0.0
    %8296 = vmatprep.subr.mxu0 0.0
    %8297 = vmatpush1.msra.mxu0 0.0
    %8298 = vmatprep.subr.mxu0 0.0
    %8299 = vmatpush1.msra.mxu0 0.0
    %8300 = vmatprep.subr.mxu0 0.0
    %8301 = vmatpush1.msra.mxu0 0.0
    %8302 = vmatprep.subr.mxu0 0.0
    %8303 = vmatpush1.msra.mxu0 0.0
    %8304 = vmatprep.subr.mxu0 0.0
    %8305 = vmatpush1.msra.mxu0 0.0
    %8306 = vmatprep.subr.mxu0 0.0
    %8307 = vmatpush1.msra.mxu0 0.0
    %8308 = vmatprep.subr.mxu0 0.0
    %8309 = vmatpush1.msra.mxu0 0.0
    %8310 = vmatprep.subr.mxu0 0.0
    %8311 = vmatpush1.msra.mxu0 0.0
    %8312 = vmatprep.subr.mxu0 0.0
    %8313 = vmatpush1.msra.mxu0 0.0
    %8314 = vmatprep.subr.mxu0 0.0
    %8315 = vmatpush1.msra.mxu0 0.0
    %8316 = vmatprep.subr.mxu0 0.0
    %v8317 = vand.u32 %v1034, 4294901760
    %8318 = vmatpush1.msra.mxu0 %v8317
    %8319 = vmatprep.subr.mxu0 0.0
    %v8320 = vand.u32 %v1033, 4294901760
    %8321 = vmatpush1.msra.mxu0 %v8320
    %8322 = vmatprep.subr.mxu0 0.0
    %v8323 = vand.u32 %v1032, 4294901760
    %8324 = vmatpush1.msra.mxu0 %v8323
    %8325 = vmatprep.subr.mxu0 0.0
    %v8326 = vand.u32 %v1031, 4294901760
    %8327 = vmatpush1.msra.mxu0 %v8326
    %8328 = vmatprep.subr.mxu0 0.0
    %8329 = vmatpush2.msra.mxu0 0.0
    %8330 = vmatprep.subr.mxu0 0.0
    %8331 = vmatpush2.msra.mxu0 0.0
    %8332 = vmatprep.subr.mxu0 0.0
    %8333 = vmatpush2.msra.mxu0 0.0
    %8334 = vmatprep.subr.mxu0 0.0
    %8335 = vmatpush2.msra.mxu0 0.0
    %8336 = vmatprep.subr.mxu0 0.0
    %8337 = vmatpush2.msra.mxu0 0.0
    %8338 = vmatprep.subr.mxu0 0.0
    %8339 = vmatpush2.msra.mxu0 0.0
    %8340 = vmatprep.subr.mxu0 0.0
    %8341 = vmatpush2.msra.mxu0 0.0
    %8342 = vmatprep.subr.mxu0 0.0
    %8343 = vmatpush2.msra.mxu0 0.0
    %8344 = vmatprep.subr.mxu0 0.0
    %8345 = vmatpush2.msra.mxu0 0.0
    %8346 = vmatprep.subr.mxu0 0.0
    %8347 = vmatpush2.msra.mxu0 0.0
    %8348 = vmatprep.subr.mxu0 0.0
    %8349 = vmatpush2.msra.mxu0 0.0
    %8350 = vmatprep.subr.mxu0 0.0
    %8351 = vmatpush2.msra.mxu0 0.0
    %8352 = vmatprep.subr.mxu0 0.0
    %8353 = vmatpush2.msra.mxu0 0.0
    %8354 = vmatprep.subr.mxu0 0.0
    %8355 = vmatpush2.msra.mxu0 0.0
    %8356 = vmatprep.subr.mxu0 0.0
    %8357 = vmatpush2.msra.mxu0 0.0
    %8358 = vmatprep.subr.mxu0 0.0
    %8359 = vmatpush2.msra.mxu0 0.0
    %8360 = vmatprep.mubr.f32.mxu0 0.0
    %v8361 = vand.u32 %v8290, 4294901760
    %v8362 = vsub.f32 %v8290, %v8361
    %v8363 = vand.u32 %v8362, 4294901760
    %v8364 = vsub.f32 %v8362, %v8363
    %v8365 = vand.u32 %v8364, 4294901760
    %8366 = vmatmul.mubr.f32.gmra.mxu0 %v8365
    %v8367 = vpop.f32.mrf.mxu0
    %v8368 = vadd.f32 0.0, %v8367
    %v8369 = vpop.f32.mrf.mxu0
    %8370 = vdwg.mxu0
    %8371 = vmatprep.subr.mxu0 0.0
    %8372 = vmatpush1.msra.mxu0 0.0
    %8373 = vmatprep.subr.mxu0 0.0
    %8374 = vmatpush1.msra.mxu0 0.0
    %8375 = vmatprep.subr.mxu0 0.0
    %8376 = vmatpush1.msra.mxu0 0.0
    %8377 = vmatprep.subr.mxu0 0.0
    %8378 = vmatpush1.msra.mxu0 0.0
    %8379 = vmatprep.subr.mxu0 0.0
    %8380 = vmatpush1.msra.mxu0 0.0
    %8381 = vmatprep.subr.mxu0 0.0
    %8382 = vmatpush1.msra.mxu0 0.0
    %8383 = vmatprep.subr.mxu0 0.0
    %8384 = vmatpush1.msra.mxu0 0.0
    %8385 = vmatprep.subr.mxu0 0.0
    %8386 = vmatpush1.msra.mxu0 0.0
    %8387 = vmatprep.subr.mxu0 0.0
    %8388 = vmatpush1.msra.mxu0 0.0
    %8389 = vmatprep.subr.mxu0 0.0
    %8390 = vmatpush1.msra.mxu0 0.0
    %8391 = vmatprep.subr.mxu0 0.0
    %8392 = vmatpush1.msra.mxu0 0.0
    %8393 = vmatprep.subr.mxu0 0.0
    %8394 = vmatpush1.msra.mxu0 0.0
    %8395 = vmatprep.subr.mxu0 0.0
    %v8396 = vand.u32 %v1034, 4294901760
    %v8397 = vsub.f32 %v1034, %v8396
    %v8398 = vand.u32 %v8397, 4294901760
    %v8399 = vsub.f32 %v8397, %v8398
    %v8400 = vand.u32 %v8399, 4294901760
    %8401 = vmatpush1.msra.mxu0 %v8400
    %8402 = vmatprep.subr.mxu0 0.0
    %v8403 = vand.u32 %v1033, 4294901760
    %v8404 = vsub.f32 %v1033, %v8403
    %v8405 = vand.u32 %v8404, 4294901760
    %v8406 = vsub.f32 %v8404, %v8405
    %v8407 = vand.u32 %v8406, 4294901760
    %8408 = vmatpush1.msra.mxu0 %v8407
    %8409 = vmatprep.subr.mxu0 0.0
    %v8410 = vand.u32 %v1032, 4294901760
    %v8411 = vsub.f32 %v1032, %v8410
    %v8412 = vand.u32 %v8411, 4294901760
    %v8413 = vsub.f32 %v8411, %v8412
    %v8414 = vand.u32 %v8413, 4294901760
    %8415 = vmatpush1.msra.mxu0 %v8414
    %8416 = vmatprep.subr.mxu0 0.0
    %v8417 = vand.u32 %v1031, 4294901760
    %v8418 = vsub.f32 %v1031, %v8417
    %v8419 = vand.u32 %v8418, 4294901760
    %v8420 = vsub.f32 %v8418, %v8419
    %v8421 = vand.u32 %v8420, 4294901760
    %8422 = vmatpush1.msra.mxu0 %v8421
    %8423 = vmatprep.subr.mxu0 0.0
    %8424 = vmatpush2.msra.mxu0 0.0
    %8425 = vmatprep.subr.mxu0 0.0
    %8426 = vmatpush2.msra.mxu0 0.0
    %8427 = vmatprep.subr.mxu0 0.0
    %8428 = vmatpush2.msra.mxu0 0.0
    %8429 = vmatprep.subr.mxu0 0.0
    %8430 = vmatpush2.msra.mxu0 0.0
    %8431 = vmatprep.subr.mxu0 0.0
    %8432 = vmatpush2.msra.mxu0 0.0
    %8433 = vmatprep.subr.mxu0 0.0
    %8434 = vmatpush2.msra.mxu0 0.0
    %8435 = vmatprep.subr.mxu0 0.0
    %8436 = vmatpush2.msra.mxu0 0.0
    %8437 = vmatprep.subr.mxu0 0.0
    %8438 = vmatpush2.msra.mxu0 0.0
    %8439 = vmatprep.subr.mxu0 0.0
    %8440 = vmatpush2.msra.mxu0 0.0
    %8441 = vmatprep.subr.mxu0 0.0
    %8442 = vmatpush2.msra.mxu0 0.0
    %8443 = vmatprep.subr.mxu0 0.0
    %8444 = vmatpush2.msra.mxu0 0.0
    %8445 = vmatprep.subr.mxu0 0.0
    %8446 = vmatpush2.msra.mxu0 0.0
    %8447 = vmatprep.subr.mxu0 0.0
    %8448 = vmatpush2.msra.mxu0 0.0
    %8449 = vmatprep.subr.mxu0 0.0
    %8450 = vmatpush2.msra.mxu0 0.0
    %8451 = vmatprep.subr.mxu0 0.0
    %8452 = vmatpush2.msra.mxu0 0.0
    %8453 = vmatprep.subr.mxu0 0.0
    %8454 = vmatpush2.msra.mxu0 0.0
    %8455 = vmatprep.mubr.f32.mxu0 0.0
    %v8456 = vand.u32 %v8290, 4294901760
    %8457 = vmatmul.mubr.f32.gmra.mxu0 %v8456
    %v8458 = vpop.f32.mrf.mxu0
    %v8459 = vadd.f32 %v8368, %v8458
    %v8460 = vpop.f32.mrf.mxu0
    %8461 = vdwg.mxu0
    %8462 = vmatprep.subr.mxu0 0.0
    %8463 = vmatpush1.msra.mxu0 0.0
    %8464 = vmatprep.subr.mxu0 0.0
    %8465 = vmatpush1.msra.mxu0 0.0
    %8466 = vmatprep.subr.mxu0 0.0
    %8467 = vmatpush1.msra.mxu0 0.0
    %8468 = vmatprep.subr.mxu0 0.0
    %8469 = vmatpush1.msra.mxu0 0.0
    %8470 = vmatprep.subr.mxu0 0.0
    %8471 = vmatpush1.msra.mxu0 0.0
    %8472 = vmatprep.subr.mxu0 0.0
    %8473 = vmatpush1.msra.mxu0 0.0
    %8474 = vmatprep.subr.mxu0 0.0
    %8475 = vmatpush1.msra.mxu0 0.0
    %8476 = vmatprep.subr.mxu0 0.0
    %8477 = vmatpush1.msra.mxu0 0.0
    %8478 = vmatprep.subr.mxu0 0.0
    %8479 = vmatpush1.msra.mxu0 0.0
    %8480 = vmatprep.subr.mxu0 0.0
    %8481 = vmatpush1.msra.mxu0 0.0
    %8482 = vmatprep.subr.mxu0 0.0
    %8483 = vmatpush1.msra.mxu0 0.0
    %8484 = vmatprep.subr.mxu0 0.0
    %8485 = vmatpush1.msra.mxu0 0.0
    %8486 = vmatprep.subr.mxu0 0.0
    %v8487 = vand.u32 %v1034, 4294901760
    %v8488 = vsub.f32 %v1034, %v8487
    %8489 = vmatpush1.msra.mxu0 %v8488
    %8490 = vmatprep.subr.mxu0 0.0
    %v8491 = vand.u32 %v1033, 4294901760
    %v8492 = vsub.f32 %v1033, %v8491
    %8493 = vmatpush1.msra.mxu0 %v8492
    %8494 = vmatprep.subr.mxu0 0.0
    %v8495 = vand.u32 %v1032, 4294901760
    %v8496 = vsub.f32 %v1032, %v8495
    %8497 = vmatpush1.msra.mxu0 %v8496
    %8498 = vmatprep.subr.mxu0 0.0
    %v8499 = vand.u32 %v1031, 4294901760
    %v8500 = vsub.f32 %v1031, %v8499
    %8501 = vmatpush1.msra.mxu0 %v8500
    %8502 = vmatprep.subr.mxu0 0.0
    %8503 = vmatpush2.msra.mxu0 0.0
    %8504 = vmatprep.subr.mxu0 0.0
    %8505 = vmatpush2.msra.mxu0 0.0
    %8506 = vmatprep.subr.mxu0 0.0
    %8507 = vmatpush2.msra.mxu0 0.0
    %8508 = vmatprep.subr.mxu0 0.0
    %8509 = vmatpush2.msra.mxu0 0.0
    %8510 = vmatprep.subr.mxu0 0.0
    %8511 = vmatpush2.msra.mxu0 0.0
    %8512 = vmatprep.subr.mxu0 0.0
    %8513 = vmatpush2.msra.mxu0 0.0
    %8514 = vmatprep.subr.mxu0 0.0
    %8515 = vmatpush2.msra.mxu0 0.0
    %8516 = vmatprep.subr.mxu0 0.0
    %8517 = vmatpush2.msra.mxu0 0.0
    %8518 = vmatprep.subr.mxu0 0.0
    %8519 = vmatpush2.msra.mxu0 0.0
    %8520 = vmatprep.subr.mxu0 0.0
    %8521 = vmatpush2.msra.mxu0 0.0
    %8522 = vmatprep.subr.mxu0 0.0
    %8523 = vmatpush2.msra.mxu0 0.0
    %8524 = vmatprep.subr.mxu0 0.0
    %8525 = vmatpush2.msra.mxu0 0.0
    %8526 = vmatprep.subr.mxu0 0.0
    %8527 = vmatpush2.msra.mxu0 0.0
    %8528 = vmatprep.subr.mxu0 0.0
    %8529 = vmatpush2.msra.mxu0 0.0
    %8530 = vmatprep.subr.mxu0 0.0
    %8531 = vmatpush2.msra.mxu0 0.0
    %8532 = vmatprep.subr.mxu0 0.0
    %8533 = vmatpush2.msra.mxu0 0.0
    %8534 = vmatprep.mubr.f32.mxu0 0.0
    %v8535 = vand.u32 %v8290, 4294901760
    %v8536 = vsub.f32 %v8290, %v8535
    %8537 = vmatmul.mubr.f32.gmra.mxu0 %v8536
    %v8538 = vpop.f32.mrf.mxu0
    %v8539 = vadd.f32 %v8459, %v8538
    %v8540 = vpop.f32.mrf.mxu0
    %8541 = vdwg.mxu0
    %8542 = vmatprep.subr.mxu0 0.0
    %8543 = vmatpush1.msra.mxu0 0.0
    %8544 = vmatprep.subr.mxu0 0.0
    %8545 = vmatpush1.msra.mxu0 0.0
    %8546 = vmatprep.subr.mxu0 0.0
    %8547 = vmatpush1.msra.mxu0 0.0
    %8548 = vmatprep.subr.mxu0 0.0
    %8549 = vmatpush1.msra.mxu0 0.0
    %8550 = vmatprep.subr.mxu0 0.0
    %8551 = vmatpush1.msra.mxu0 0.0
    %8552 = vmatprep.subr.mxu0 0.0
    %8553 = vmatpush1.msra.mxu0 0.0
    %8554 = vmatprep.subr.mxu0 0.0
    %8555 = vmatpush1.msra.mxu0 0.0
    %8556 = vmatprep.subr.mxu0 0.0
    %8557 = vmatpush1.msra.mxu0 0.0
    %8558 = vmatprep.subr.mxu0 0.0
    %8559 = vmatpush1.msra.mxu0 0.0
    %8560 = vmatprep.subr.mxu0 0.0
    %8561 = vmatpush1.msra.mxu0 0.0
    %8562 = vmatprep.subr.mxu0 0.0
    %8563 = vmatpush1.msra.mxu0 0.0
    %8564 = vmatprep.subr.mxu0 0.0
    %8565 = vmatpush1.msra.mxu0 0.0
    %8566 = vmatprep.subr.mxu0 0.0
    %v8567 = vand.u32 %v1034, 4294901760
    %8568 = vmatpush1.msra.mxu0 %v8567
    %8569 = vmatprep.subr.mxu0 0.0
    %v8570 = vand.u32 %v1033, 4294901760
    %8571 = vmatpush1.msra.mxu0 %v8570
    %8572 = vmatprep.subr.mxu0 0.0
    %v8573 = vand.u32 %v1032, 4294901760
    %8574 = vmatpush1.msra.mxu0 %v8573
    %8575 = vmatprep.subr.mxu0 0.0
    %v8576 = vand.u32 %v1031, 4294901760
    %8577 = vmatpush1.msra.mxu0 %v8576
    %8578 = vmatprep.subr.mxu0 0.0
    %8579 = vmatpush2.msra.mxu0 0.0
    %8580 = vmatprep.subr.mxu0 0.0
    %8581 = vmatpush2.msra.mxu0 0.0
    %8582 = vmatprep.subr.mxu0 0.0
    %8583 = vmatpush2.msra.mxu0 0.0
    %8584 = vmatprep.subr.mxu0 0.0
    %8585 = vmatpush2.msra.mxu0 0.0
    %8586 = vmatprep.subr.mxu0 0.0
    %8587 = vmatpush2.msra.mxu0 0.0
    %8588 = vmatprep.subr.mxu0 0.0
    %8589 = vmatpush2.msra.mxu0 0.0
    %8590 = vmatprep.subr.mxu0 0.0
    %8591 = vmatpush2.msra.mxu0 0.0
    %8592 = vmatprep.subr.mxu0 0.0
    %8593 = vmatpush2.msra.mxu0 0.0
    %8594 = vmatprep.subr.mxu0 0.0
    %8595 = vmatpush2.msra.mxu0 0.0
    %8596 = vmatprep.subr.mxu0 0.0
    %8597 = vmatpush2.msra.mxu0 0.0
    %8598 = vmatprep.subr.mxu0 0.0
    %8599 = vmatpush2.msra.mxu0 0.0
    %8600 = vmatprep.subr.mxu0 0.0
    %8601 = vmatpush2.msra.mxu0 0.0
    %8602 = vmatprep.subr.mxu0 0.0
    %8603 = vmatpush2.msra.mxu0 0.0
    %8604 = vmatprep.subr.mxu0 0.0
    %8605 = vmatpush2.msra.mxu0 0.0
    %8606 = vmatprep.subr.mxu0 0.0
    %8607 = vmatpush2.msra.mxu0 0.0
    %8608 = vmatprep.subr.mxu0 0.0
    %8609 = vmatpush2.msra.mxu0 0.0
    %8610 = vmatprep.mubr.f32.mxu0 0.0
    %v8611 = vand.u32 %v8290, 4294901760
    %v8612 = vsub.f32 %v8290, %v8611
    %v8613 = vand.u32 %v8612, 4294901760
    %8614 = vmatmul.mubr.f32.gmra.mxu0 %v8613
    %v8615 = vpop.f32.mrf.mxu0
    %v8616 = vadd.f32 %v8539, %v8615
    %v8617 = vpop.f32.mrf.mxu0
    %8618 = vdwg.mxu0
    %8619 = vmatprep.subr.mxu0 0.0
    %8620 = vmatpush1.msra.mxu0 0.0
    %8621 = vmatprep.subr.mxu0 0.0
    %8622 = vmatpush1.msra.mxu0 0.0
    %8623 = vmatprep.subr.mxu0 0.0
    %8624 = vmatpush1.msra.mxu0 0.0
    %8625 = vmatprep.subr.mxu0 0.0
    %8626 = vmatpush1.msra.mxu0 0.0
    %8627 = vmatprep.subr.mxu0 0.0
    %8628 = vmatpush1.msra.mxu0 0.0
    %8629 = vmatprep.subr.mxu0 0.0
    %8630 = vmatpush1.msra.mxu0 0.0
    %8631 = vmatprep.subr.mxu0 0.0
    %8632 = vmatpush1.msra.mxu0 0.0
    %8633 = vmatprep.subr.mxu0 0.0
    %8634 = vmatpush1.msra.mxu0 0.0
    %8635 = vmatprep.subr.mxu0 0.0
    %8636 = vmatpush1.msra.mxu0 0.0
    %8637 = vmatprep.subr.mxu0 0.0
    %8638 = vmatpush1.msra.mxu0 0.0
    %8639 = vmatprep.subr.mxu0 0.0
    %8640 = vmatpush1.msra.mxu0 0.0
    %8641 = vmatprep.subr.mxu0 0.0
    %8642 = vmatpush1.msra.mxu0 0.0
    %8643 = vmatprep.subr.mxu0 0.0
    %v8644 = vand.u32 %v1034, 4294901760
    %v8645 = vsub.f32 %v1034, %v8644
    %v8646 = vand.u32 %v8645, 4294901760
    %8647 = vmatpush1.msra.mxu0 %v8646
    %8648 = vmatprep.subr.mxu0 0.0
    %v8649 = vand.u32 %v1033, 4294901760
    %v8650 = vsub.f32 %v1033, %v8649
    %v8651 = vand.u32 %v8650, 4294901760
    %8652 = vmatpush1.msra.mxu0 %v8651
    %8653 = vmatprep.subr.mxu0 0.0
    %v8654 = vand.u32 %v1032, 4294901760
    %v8655 = vsub.f32 %v1032, %v8654
    %v8656 = vand.u32 %v8655, 4294901760
    %8657 = vmatpush1.msra.mxu0 %v8656
    %8658 = vmatprep.subr.mxu0 0.0
    %v8659 = vand.u32 %v1031, 4294901760
    %v8660 = vsub.f32 %v1031, %v8659
    %v8661 = vand.u32 %v8660, 4294901760
    %8662 = vmatpush1.msra.mxu0 %v8661
    %8663 = vmatprep.subr.mxu0 0.0
    %8664 = vmatpush2.msra.mxu0 0.0
    %8665 = vmatprep.subr.mxu0 0.0
    %8666 = vmatpush2.msra.mxu0 0.0
    %8667 = vmatprep.subr.mxu0 0.0
    %8668 = vmatpush2.msra.mxu0 0.0
    %8669 = vmatprep.subr.mxu0 0.0
    %8670 = vmatpush2.msra.mxu0 0.0
    %8671 = vmatprep.subr.mxu0 0.0
    %8672 = vmatpush2.msra.mxu0 0.0
    %8673 = vmatprep.subr.mxu0 0.0
    %8674 = vmatpush2.msra.mxu0 0.0
    %8675 = vmatprep.subr.mxu0 0.0
    %8676 = vmatpush2.msra.mxu0 0.0
    %8677 = vmatprep.subr.mxu0 0.0
    %8678 = vmatpush2.msra.mxu0 0.0
    %8679 = vmatprep.subr.mxu0 0.0
    %8680 = vmatpush2.msra.mxu0 0.0
    %8681 = vmatprep.subr.mxu0 0.0
    %8682 = vmatpush2.msra.mxu0 0.0
    %8683 = vmatprep.subr.mxu0 0.0
    %8684 = vmatpush2.msra.mxu0 0.0
    %8685 = vmatprep.subr.mxu0 0.0
    %8686 = vmatpush2.msra.mxu0 0.0
    %8687 = vmatprep.subr.mxu0 0.0
    %8688 = vmatpush2.msra.mxu0 0.0
    %8689 = vmatprep.subr.mxu0 0.0
    %8690 = vmatpush2.msra.mxu0 0.0
    %8691 = vmatprep.subr.mxu0 0.0
    %8692 = vmatpush2.msra.mxu0 0.0
    %8693 = vmatprep.subr.mxu0 0.0
    %8694 = vmatpush2.msra.mxu0 0.0
    %8695 = vmatprep.mubr.f32.mxu0 0.0
    %v8696 = vand.u32 %v8290, 4294901760
    %8697 = vmatmul.mubr.f32.gmra.mxu0 %v8696
    %v8698 = vpop.f32.mrf.mxu0
    %v8699 = vadd.f32 %v8616, %v8698
    %v8700 = vpop.f32.mrf.mxu0
    %8701 = vdwg.mxu0
    %8702 = vmatprep.subr.mxu0 0.0
    %8703 = vmatpush1.msra.mxu0 0.0
    %8704 = vmatprep.subr.mxu0 0.0
    %8705 = vmatpush1.msra.mxu0 0.0
    %8706 = vmatprep.subr.mxu0 0.0
    %8707 = vmatpush1.msra.mxu0 0.0
    %8708 = vmatprep.subr.mxu0 0.0
    %8709 = vmatpush1.msra.mxu0 0.0
    %8710 = vmatprep.subr.mxu0 0.0
    %8711 = vmatpush1.msra.mxu0 0.0
    %8712 = vmatprep.subr.mxu0 0.0
    %8713 = vmatpush1.msra.mxu0 0.0
    %8714 = vmatprep.subr.mxu0 0.0
    %8715 = vmatpush1.msra.mxu0 0.0
    %8716 = vmatprep.subr.mxu0 0.0
    %8717 = vmatpush1.msra.mxu0 0.0
    %8718 = vmatprep.subr.mxu0 0.0
    %8719 = vmatpush1.msra.mxu0 0.0
    %8720 = vmatprep.subr.mxu0 0.0
    %8721 = vmatpush1.msra.mxu0 0.0
    %8722 = vmatprep.subr.mxu0 0.0
    %8723 = vmatpush1.msra.mxu0 0.0
    %8724 = vmatprep.subr.mxu0 0.0
    %8725 = vmatpush1.msra.mxu0 0.0
    %8726 = vmatprep.subr.mxu0 0.0
    %v8727 = vand.u32 %v1034, 4294901760
    %8728 = vmatpush1.msra.mxu0 %v8727
    %8729 = vmatprep.subr.mxu0 0.0
    %v8730 = vand.u32 %v1033, 4294901760
    %8731 = vmatpush1.msra.mxu0 %v8730
    %8732 = vmatprep.subr.mxu0 0.0
    %v8733 = vand.u32 %v1032, 4294901760
    %8734 = vmatpush1.msra.mxu0 %v8733
    %8735 = vmatprep.subr.mxu0 0.0
    %v8736 = vand.u32 %v1031, 4294901760
    %8737 = vmatpush1.msra.mxu0 %v8736
    %8738 = vmatprep.subr.mxu0 0.0
    %8739 = vmatpush2.msra.mxu0 0.0
    %8740 = vmatprep.subr.mxu0 0.0
    %8741 = vmatpush2.msra.mxu0 0.0
    %8742 = vmatprep.subr.mxu0 0.0
    %8743 = vmatpush2.msra.mxu0 0.0
    %8744 = vmatprep.subr.mxu0 0.0
    %8745 = vmatpush2.msra.mxu0 0.0
    %8746 = vmatprep.subr.mxu0 0.0
    %8747 = vmatpush2.msra.mxu0 0.0
    %8748 = vmatprep.subr.mxu0 0.0
    %8749 = vmatpush2.msra.mxu0 0.0
    %8750 = vmatprep.subr.mxu0 0.0
    %8751 = vmatpush2.msra.mxu0 0.0
    %8752 = vmatprep.subr.mxu0 0.0
    %8753 = vmatpush2.msra.mxu0 0.0
    %8754 = vmatprep.subr.mxu0 0.0
    %8755 = vmatpush2.msra.mxu0 0.0
    %8756 = vmatprep.subr.mxu0 0.0
    %8757 = vmatpush2.msra.mxu0 0.0
    %8758 = vmatprep.subr.mxu0 0.0
    %8759 = vmatpush2.msra.mxu0 0.0
    %8760 = vmatprep.subr.mxu0 0.0
    %8761 = vmatpush2.msra.mxu0 0.0
    %8762 = vmatprep.subr.mxu0 0.0
    %8763 = vmatpush2.msra.mxu0 0.0
    %8764 = vmatprep.subr.mxu0 0.0
    %8765 = vmatpush2.msra.mxu0 0.0
    %8766 = vmatprep.subr.mxu0 0.0
    %8767 = vmatpush2.msra.mxu0 0.0
    %8768 = vmatprep.subr.mxu0 0.0
    %8769 = vmatpush2.msra.mxu0 0.0
    %8770 = vmatprep.mubr.f32.mxu0 0.0
    %v8771 = vand.u32 %v8290, 4294901760
    %8772 = vmatmul.mubr.f32.gmra.mxu0 %v8771
    %v8773 = vpop.f32.mrf.mxu0
    %v8774 = vadd.f32 %v8699, %v8773
    %v8775 = vpop.f32.mrf.mxu0
    %8776 = vdwg.mxu0
    %v8777 = vadd.f32 %v8289, %v8774
    %v8778 = vld [vmem:[#allocation3] sm:$0xff]
    %8779 = vrot.lane.b32.xlu0 %v8277, 32
    %v8780 = vpop.permute.xlu0 %8779
    %v8781 = vsel %vm104, %v8780, 0
    %8783 = vmatprep.subr.mxu0 0.0
    %8784 = vmatpush1.msra.mxu0 0.0
    %8785 = vmatprep.subr.mxu0 0.0
    %8786 = vmatpush1.msra.mxu0 0.0
    %8787 = vmatprep.subr.mxu0 0.0
    %8788 = vmatpush1.msra.mxu0 0.0
    %8789 = vmatprep.subr.mxu0 0.0
    %8790 = vmatpush1.msra.mxu0 0.0
    %8791 = vmatprep.subr.mxu0 0.0
    %8792 = vmatpush1.msra.mxu0 0.0
    %8793 = vmatprep.subr.mxu0 0.0
    %8794 = vmatpush1.msra.mxu0 0.0
    %8795 = vmatprep.subr.mxu0 0.0
    %8796 = vmatpush1.msra.mxu0 0.0
    %8797 = vmatprep.subr.mxu0 0.0
    %8798 = vmatpush1.msra.mxu0 0.0
    %8799 = vmatprep.subr.mxu0 0.0
    %8800 = vmatpush1.msra.mxu0 0.0
    %8801 = vmatprep.subr.mxu0 0.0
    %8802 = vmatpush1.msra.mxu0 0.0
    %8803 = vmatprep.subr.mxu0 0.0
    %8804 = vmatpush1.msra.mxu0 0.0
    %8805 = vmatprep.subr.mxu0 0.0
    %8806 = vmatpush1.msra.mxu0 0.0
    %8807 = vmatprep.subr.mxu0 0.0
    %v8808 = vand.u32 %v1038, 4294901760
    %8809 = vmatpush1.msra.mxu0 %v8808
    %8810 = vmatprep.subr.mxu0 0.0
    %v8811 = vand.u32 %v1037, 4294901760
    %8812 = vmatpush1.msra.mxu0 %v8811
    %8813 = vmatprep.subr.mxu0 0.0
    %v8814 = vand.u32 %v1036, 4294901760
    %8815 = vmatpush1.msra.mxu0 %v8814
    %8816 = vmatprep.subr.mxu0 0.0
    %v8817 = vand.u32 %v1035, 4294901760
    %8818 = vmatpush1.msra.mxu0 %v8817
    %8819 = vmatprep.subr.mxu0 0.0
    %8820 = vmatpush2.msra.mxu0 0.0
    %8821 = vmatprep.subr.mxu0 0.0
    %8822 = vmatpush2.msra.mxu0 0.0
    %8823 = vmatprep.subr.mxu0 0.0
    %8824 = vmatpush2.msra.mxu0 0.0
    %8825 = vmatprep.subr.mxu0 0.0
    %8826 = vmatpush2.msra.mxu0 0.0
    %8827 = vmatprep.subr.mxu0 0.0
    %8828 = vmatpush2.msra.mxu0 0.0
    %8829 = vmatprep.subr.mxu0 0.0
    %8830 = vmatpush2.msra.mxu0 0.0
    %8831 = vmatprep.subr.mxu0 0.0
    %8832 = vmatpush2.msra.mxu0 0.0
    %8833 = vmatprep.subr.mxu0 0.0
    %8834 = vmatpush2.msra.mxu0 0.0
    %8835 = vmatprep.subr.mxu0 0.0
    %8836 = vmatpush2.msra.mxu0 0.0
    %8837 = vmatprep.subr.mxu0 0.0
    %8838 = vmatpush2.msra.mxu0 0.0
    %8839 = vmatprep.subr.mxu0 0.0
    %8840 = vmatpush2.msra.mxu0 0.0
    %8841 = vmatprep.subr.mxu0 0.0
    %8842 = vmatpush2.msra.mxu0 0.0
    %8843 = vmatprep.subr.mxu0 0.0
    %8844 = vmatpush2.msra.mxu0 0.0
    %8845 = vmatprep.subr.mxu0 0.0
    %8846 = vmatpush2.msra.mxu0 0.0
    %8847 = vmatprep.subr.mxu0 0.0
    %8848 = vmatpush2.msra.mxu0 0.0
    %8849 = vmatprep.subr.mxu0 0.0
    %8850 = vmatpush2.msra.mxu0 0.0
    %8851 = vmatprep.mubr.f32.mxu0 0.0
    %v8852 = vand.u32 %v8781, 4294901760
    %v8853 = vsub.f32 %v8781, %v8852
    %v8854 = vand.u32 %v8853, 4294901760
    %v8855 = vsub.f32 %v8853, %v8854
    %v8856 = vand.u32 %v8855, 4294901760
    %8857 = vmatmul.mubr.f32.gmra.mxu0 %v8856
    %v8858 = vpop.f32.mrf.mxu0
    %v8859 = vadd.f32 0.0, %v8858
    %v8860 = vpop.f32.mrf.mxu0
    %8861 = vdwg.mxu0
    %8862 = vmatprep.subr.mxu0 0.0
    %8863 = vmatpush1.msra.mxu0 0.0
    %8864 = vmatprep.subr.mxu0 0.0
    %8865 = vmatpush1.msra.mxu0 0.0
    %8866 = vmatprep.subr.mxu0 0.0
    %8867 = vmatpush1.msra.mxu0 0.0
    %8868 = vmatprep.subr.mxu0 0.0
    %8869 = vmatpush1.msra.mxu0 0.0
    %8870 = vmatprep.subr.mxu0 0.0
    %8871 = vmatpush1.msra.mxu0 0.0
    %8872 = vmatprep.subr.mxu0 0.0
    %8873 = vmatpush1.msra.mxu0 0.0
    %8874 = vmatprep.subr.mxu0 0.0
    %8875 = vmatpush1.msra.mxu0 0.0
    %8876 = vmatprep.subr.mxu0 0.0
    %8877 = vmatpush1.msra.mxu0 0.0
    %8878 = vmatprep.subr.mxu0 0.0
    %8879 = vmatpush1.msra.mxu0 0.0
    %8880 = vmatprep.subr.mxu0 0.0
    %8881 = vmatpush1.msra.mxu0 0.0
    %8882 = vmatprep.subr.mxu0 0.0
    %8883 = vmatpush1.msra.mxu0 0.0
    %8884 = vmatprep.subr.mxu0 0.0
    %8885 = vmatpush1.msra.mxu0 0.0
    %8886 = vmatprep.subr.mxu0 0.0
    %v8887 = vand.u32 %v1038, 4294901760
    %v8888 = vsub.f32 %v1038, %v8887
    %v8889 = vand.u32 %v8888, 4294901760
    %v8890 = vsub.f32 %v8888, %v8889
    %v8891 = vand.u32 %v8890, 4294901760
    %8892 = vmatpush1.msra.mxu0 %v8891
    %8893 = vmatprep.subr.mxu0 0.0
    %v8894 = vand.u32 %v1037, 4294901760
    %v8895 = vsub.f32 %v1037, %v8894
    %v8896 = vand.u32 %v8895, 4294901760
    %v8897 = vsub.f32 %v8895, %v8896
    %v8898 = vand.u32 %v8897, 4294901760
    %8899 = vmatpush1.msra.mxu0 %v8898
    %8900 = vmatprep.subr.mxu0 0.0
    %v8901 = vand.u32 %v1036, 4294901760
    %v8902 = vsub.f32 %v1036, %v8901
    %v8903 = vand.u32 %v8902, 4294901760
    %v8904 = vsub.f32 %v8902, %v8903
    %v8905 = vand.u32 %v8904, 4294901760
    %8906 = vmatpush1.msra.mxu0 %v8905
    %8907 = vmatprep.subr.mxu0 0.0
    %v8908 = vand.u32 %v1035, 4294901760
    %v8909 = vsub.f32 %v1035, %v8908
    %v8910 = vand.u32 %v8909, 4294901760
    %v8911 = vsub.f32 %v8909, %v8910
    %v8912 = vand.u32 %v8911, 4294901760
    %8913 = vmatpush1.msra.mxu0 %v8912
    %8914 = vmatprep.subr.mxu0 0.0
    %8915 = vmatpush2.msra.mxu0 0.0
    %8916 = vmatprep.subr.mxu0 0.0
    %8917 = vmatpush2.msra.mxu0 0.0
    %8918 = vmatprep.subr.mxu0 0.0
    %8919 = vmatpush2.msra.mxu0 0.0
    %8920 = vmatprep.subr.mxu0 0.0
    %8921 = vmatpush2.msra.mxu0 0.0
    %8922 = vmatprep.subr.mxu0 0.0
    %8923 = vmatpush2.msra.mxu0 0.0
    %8924 = vmatprep.subr.mxu0 0.0
    %8925 = vmatpush2.msra.mxu0 0.0
    %8926 = vmatprep.subr.mxu0 0.0
    %8927 = vmatpush2.msra.mxu0 0.0
    %8928 = vmatprep.subr.mxu0 0.0
    %8929 = vmatpush2.msra.mxu0 0.0
    %8930 = vmatprep.subr.mxu0 0.0
    %8931 = vmatpush2.msra.mxu0 0.0
    %8932 = vmatprep.subr.mxu0 0.0
    %8933 = vmatpush2.msra.mxu0 0.0
    %8934 = vmatprep.subr.mxu0 0.0
    %8935 = vmatpush2.msra.mxu0 0.0
    %8936 = vmatprep.subr.mxu0 0.0
    %8937 = vmatpush2.msra.mxu0 0.0
    %8938 = vmatprep.subr.mxu0 0.0
    %8939 = vmatpush2.msra.mxu0 0.0
    %8940 = vmatprep.subr.mxu0 0.0
    %8941 = vmatpush2.msra.mxu0 0.0
    %8942 = vmatprep.subr.mxu0 0.0
    %8943 = vmatpush2.msra.mxu0 0.0
    %8944 = vmatprep.subr.mxu0 0.0
    %8945 = vmatpush2.msra.mxu0 0.0
    %8946 = vmatprep.mubr.f32.mxu0 0.0
    %v8947 = vand.u32 %v8781, 4294901760
    %8948 = vmatmul.mubr.f32.gmra.mxu0 %v8947
    %v8949 = vpop.f32.mrf.mxu0
    %v8950 = vadd.f32 %v8859, %v8949
    %v8951 = vpop.f32.mrf.mxu0
    %8952 = vdwg.mxu0
    %8953 = vmatprep.subr.mxu0 0.0
    %8954 = vmatpush1.msra.mxu0 0.0
    %8955 = vmatprep.subr.mxu0 0.0
    %8956 = vmatpush1.msra.mxu0 0.0
    %8957 = vmatprep.subr.mxu0 0.0
    %8958 = vmatpush1.msra.mxu0 0.0
    %8959 = vmatprep.subr.mxu0 0.0
    %8960 = vmatpush1.msra.mxu0 0.0
    %8961 = vmatprep.subr.mxu0 0.0
    %8962 = vmatpush1.msra.mxu0 0.0
    %8963 = vmatprep.subr.mxu0 0.0
    %8964 = vmatpush1.msra.mxu0 0.0
    %8965 = vmatprep.subr.mxu0 0.0
    %8966 = vmatpush1.msra.mxu0 0.0
    %8967 = vmatprep.subr.mxu0 0.0
    %8968 = vmatpush1.msra.mxu0 0.0
    %8969 = vmatprep.subr.mxu0 0.0
    %8970 = vmatpush1.msra.mxu0 0.0
    %8971 = vmatprep.subr.mxu0 0.0
    %8972 = vmatpush1.msra.mxu0 0.0
    %8973 = vmatprep.subr.mxu0 0.0
    %8974 = vmatpush1.msra.mxu0 0.0
    %8975 = vmatprep.subr.mxu0 0.0
    %8976 = vmatpush1.msra.mxu0 0.0
    %8977 = vmatprep.subr.mxu0 0.0
    %v8978 = vand.u32 %v1038, 4294901760
    %v8979 = vsub.f32 %v1038, %v8978
    %8980 = vmatpush1.msra.mxu0 %v8979
    %8981 = vmatprep.subr.mxu0 0.0
    %v8982 = vand.u32 %v1037, 4294901760
    %v8983 = vsub.f32 %v1037, %v8982
    %8984 = vmatpush1.msra.mxu0 %v8983
    %8985 = vmatprep.subr.mxu0 0.0
    %v8986 = vand.u32 %v1036, 4294901760
    %v8987 = vsub.f32 %v1036, %v8986
    %8988 = vmatpush1.msra.mxu0 %v8987
    %8989 = vmatprep.subr.mxu0 0.0
    %v8990 = vand.u32 %v1035, 4294901760
    %v8991 = vsub.f32 %v1035, %v8990
    %8992 = vmatpush1.msra.mxu0 %v8991
    %8993 = vmatprep.subr.mxu0 0.0
    %8994 = vmatpush2.msra.mxu0 0.0
    %8995 = vmatprep.subr.mxu0 0.0
    %8996 = vmatpush2.msra.mxu0 0.0
    %8997 = vmatprep.subr.mxu0 0.0
    %8998 = vmatpush2.msra.mxu0 0.0
    %8999 = vmatprep.subr.mxu0 0.0
    %9000 = vmatpush2.msra.mxu0 0.0
    %9001 = vmatprep.subr.mxu0 0.0
    %9002 = vmatpush2.msra.mxu0 0.0
    %9003 = vmatprep.subr.mxu0 0.0
    %9004 = vmatpush2.msra.mxu0 0.0
    %9005 = vmatprep.subr.mxu0 0.0
    %9006 = vmatpush2.msra.mxu0 0.0
    %9007 = vmatprep.subr.mxu0 0.0
    %9008 = vmatpush2.msra.mxu0 0.0
    %9009 = vmatprep.subr.mxu0 0.0
    %9010 = vmatpush2.msra.mxu0 0.0
    %9011 = vmatprep.subr.mxu0 0.0
    %9012 = vmatpush2.msra.mxu0 0.0
    %9013 = vmatprep.subr.mxu0 0.0
    %9014 = vmatpush2.msra.mxu0 0.0
    %9015 = vmatprep.subr.mxu0 0.0
    %9016 = vmatpush2.msra.mxu0 0.0
    %9017 = vmatprep.subr.mxu0 0.0
    %9018 = vmatpush2.msra.mxu0 0.0
    %9019 = vmatprep.subr.mxu0 0.0
    %9020 = vmatpush2.msra.mxu0 0.0
    %9021 = vmatprep.subr.mxu0 0.0
    %9022 = vmatpush2.msra.mxu0 0.0
    %9023 = vmatprep.subr.mxu0 0.0
    %9024 = vmatpush2.msra.mxu0 0.0
    %9025 = vmatprep.mubr.f32.mxu0 0.0
    %v9026 = vand.u32 %v8781, 4294901760
    %v9027 = vsub.f32 %v8781, %v9026
    %9028 = vmatmul.mubr.f32.gmra.mxu0 %v9027
    %v9029 = vpop.f32.mrf.mxu0
    %v9030 = vadd.f32 %v8950, %v9029
    %v9031 = vpop.f32.mrf.mxu0
    %9032 = vdwg.mxu0
    %9033 = vmatprep.subr.mxu0 0.0
    %9034 = vmatpush1.msra.mxu0 0.0
    %9035 = vmatprep.subr.mxu0 0.0
    %9036 = vmatpush1.msra.mxu0 0.0
    %9037 = vmatprep.subr.mxu0 0.0
    %9038 = vmatpush1.msra.mxu0 0.0
    %9039 = vmatprep.subr.mxu0 0.0
    %9040 = vmatpush1.msra.mxu0 0.0
    %9041 = vmatprep.subr.mxu0 0.0
    %9042 = vmatpush1.msra.mxu0 0.0
    %9043 = vmatprep.subr.mxu0 0.0
    %9044 = vmatpush1.msra.mxu0 0.0
    %9045 = vmatprep.subr.mxu0 0.0
    %9046 = vmatpush1.msra.mxu0 0.0
    %9047 = vmatprep.subr.mxu0 0.0
    %9048 = vmatpush1.msra.mxu0 0.0
    %9049 = vmatprep.subr.mxu0 0.0
    %9050 = vmatpush1.msra.mxu0 0.0
    %9051 = vmatprep.subr.mxu0 0.0
    %9052 = vmatpush1.msra.mxu0 0.0
    %9053 = vmatprep.subr.mxu0 0.0
    %9054 = vmatpush1.msra.mxu0 0.0
    %9055 = vmatprep.subr.mxu0 0.0
    %9056 = vmatpush1.msra.mxu0 0.0
    %9057 = vmatprep.subr.mxu0 0.0
    %v9058 = vand.u32 %v1038, 4294901760
    %9059 = vmatpush1.msra.mxu0 %v9058
    %9060 = vmatprep.subr.mxu0 0.0
    %v9061 = vand.u32 %v1037, 4294901760
    %9062 = vmatpush1.msra.mxu0 %v9061
    %9063 = vmatprep.subr.mxu0 0.0
    %v9064 = vand.u32 %v1036, 4294901760
    %9065 = vmatpush1.msra.mxu0 %v9064
    %9066 = vmatprep.subr.mxu0 0.0
    %v9067 = vand.u32 %v1035, 4294901760
    %9068 = vmatpush1.msra.mxu0 %v9067
    %9069 = vmatprep.subr.mxu0 0.0
    %9070 = vmatpush2.msra.mxu0 0.0
    %9071 = vmatprep.subr.mxu0 0.0
    %9072 = vmatpush2.msra.mxu0 0.0
    %9073 = vmatprep.subr.mxu0 0.0
    %9074 = vmatpush2.msra.mxu0 0.0
    %9075 = vmatprep.subr.mxu0 0.0
    %9076 = vmatpush2.msra.mxu0 0.0
    %9077 = vmatprep.subr.mxu0 0.0
    %9078 = vmatpush2.msra.mxu0 0.0
    %9079 = vmatprep.subr.mxu0 0.0
    %9080 = vmatpush2.msra.mxu0 0.0
    %9081 = vmatprep.subr.mxu0 0.0
    %9082 = vmatpush2.msra.mxu0 0.0
    %9083 = vmatprep.subr.mxu0 0.0
    %9084 = vmatpush2.msra.mxu0 0.0
    %9085 = vmatprep.subr.mxu0 0.0
    %9086 = vmatpush2.msra.mxu0 0.0
    %9087 = vmatprep.subr.mxu0 0.0
    %9088 = vmatpush2.msra.mxu0 0.0
    %9089 = vmatprep.subr.mxu0 0.0
    %9090 = vmatpush2.msra.mxu0 0.0
    %9091 = vmatprep.subr.mxu0 0.0
    %9092 = vmatpush2.msra.mxu0 0.0
    %9093 = vmatprep.subr.mxu0 0.0
    %9094 = vmatpush2.msra.mxu0 0.0
    %9095 = vmatprep.subr.mxu0 0.0
    %9096 = vmatpush2.msra.mxu0 0.0
    %9097 = vmatprep.subr.mxu0 0.0
    %9098 = vmatpush2.msra.mxu0 0.0
    %9099 = vmatprep.subr.mxu0 0.0
    %9100 = vmatpush2.msra.mxu0 0.0
    %9101 = vmatprep.mubr.f32.mxu0 0.0
    %v9102 = vand.u32 %v8781, 4294901760
    %v9103 = vsub.f32 %v8781, %v9102
    %v9104 = vand.u32 %v9103, 4294901760
    %9105 = vmatmul.mubr.f32.gmra.mxu0 %v9104
    %v9106 = vpop.f32.mrf.mxu0
    %v9107 = vadd.f32 %v9030, %v9106
    %v9108 = vpop.f32.mrf.mxu0
    %9109 = vdwg.mxu0
    %9110 = vmatprep.subr.mxu0 0.0
    %9111 = vmatpush1.msra.mxu0 0.0
    %9112 = vmatprep.subr.mxu0 0.0
    %9113 = vmatpush1.msra.mxu0 0.0
    %9114 = vmatprep.subr.mxu0 0.0
    %9115 = vmatpush1.msra.mxu0 0.0
    %9116 = vmatprep.subr.mxu0 0.0
    %9117 = vmatpush1.msra.mxu0 0.0
    %9118 = vmatprep.subr.mxu0 0.0
    %9119 = vmatpush1.msra.mxu0 0.0
    %9120 = vmatprep.subr.mxu0 0.0
    %9121 = vmatpush1.msra.mxu0 0.0
    %9122 = vmatprep.subr.mxu0 0.0
    %9123 = vmatpush1.msra.mxu0 0.0
    %9124 = vmatprep.subr.mxu0 0.0
    %9125 = vmatpush1.msra.mxu0 0.0
    %9126 = vmatprep.subr.mxu0 0.0
    %9127 = vmatpush1.msra.mxu0 0.0
    %9128 = vmatprep.subr.mxu0 0.0
    %9129 = vmatpush1.msra.mxu0 0.0
    %9130 = vmatprep.subr.mxu0 0.0
    %9131 = vmatpush1.msra.mxu0 0.0
    %9132 = vmatprep.subr.mxu0 0.0
    %9133 = vmatpush1.msra.mxu0 0.0
    %9134 = vmatprep.subr.mxu0 0.0
    %v9135 = vand.u32 %v1038, 4294901760
    %v9136 = vsub.f32 %v1038, %v9135
    %v9137 = vand.u32 %v9136, 4294901760
    %9138 = vmatpush1.msra.mxu0 %v9137
    %9139 = vmatprep.subr.mxu0 0.0
    %v9140 = vand.u32 %v1037, 4294901760
    %v9141 = vsub.f32 %v1037, %v9140
    %v9142 = vand.u32 %v9141, 4294901760
    %9143 = vmatpush1.msra.mxu0 %v9142
    %9144 = vmatprep.subr.mxu0 0.0
    %v9145 = vand.u32 %v1036, 4294901760
    %v9146 = vsub.f32 %v1036, %v9145
    %v9147 = vand.u32 %v9146, 4294901760
    %9148 = vmatpush1.msra.mxu0 %v9147
    %9149 = vmatprep.subr.mxu0 0.0
    %v9150 = vand.u32 %v1035, 4294901760
    %v9151 = vsub.f32 %v1035, %v9150
    %v9152 = vand.u32 %v9151, 4294901760
    %9153 = vmatpush1.msra.mxu0 %v9152
    %9154 = vmatprep.subr.mxu0 0.0
    %9155 = vmatpush2.msra.mxu0 0.0
    %9156 = vmatprep.subr.mxu0 0.0
    %9157 = vmatpush2.msra.mxu0 0.0
    %9158 = vmatprep.subr.mxu0 0.0
    %9159 = vmatpush2.msra.mxu0 0.0
    %9160 = vmatprep.subr.mxu0 0.0
    %9161 = vmatpush2.msra.mxu0 0.0
    %9162 = vmatprep.subr.mxu0 0.0
    %9163 = vmatpush2.msra.mxu0 0.0
    %9164 = vmatprep.subr.mxu0 0.0
    %9165 = vmatpush2.msra.mxu0 0.0
    %9166 = vmatprep.subr.mxu0 0.0
    %9167 = vmatpush2.msra.mxu0 0.0
    %9168 = vmatprep.subr.mxu0 0.0
    %9169 = vmatpush2.msra.mxu0 0.0
    %9170 = vmatprep.subr.mxu0 0.0
    %9171 = vmatpush2.msra.mxu0 0.0
    %9172 = vmatprep.subr.mxu0 0.0
    %9173 = vmatpush2.msra.mxu0 0.0
    %9174 = vmatprep.subr.mxu0 0.0
    %9175 = vmatpush2.msra.mxu0 0.0
    %9176 = vmatprep.subr.mxu0 0.0
    %9177 = vmatpush2.msra.mxu0 0.0
    %9178 = vmatprep.subr.mxu0 0.0
    %9179 = vmatpush2.msra.mxu0 0.0
    %9180 = vmatprep.subr.mxu0 0.0
    %9181 = vmatpush2.msra.mxu0 0.0
    %9182 = vmatprep.subr.mxu0 0.0
    %9183 = vmatpush2.msra.mxu0 0.0
    %9184 = vmatprep.subr.mxu0 0.0
    %9185 = vmatpush2.msra.mxu0 0.0
    %9186 = vmatprep.mubr.f32.mxu0 0.0
    %v9187 = vand.u32 %v8781, 4294901760
    %9188 = vmatmul.mubr.f32.gmra.mxu0 %v9187
    %v9189 = vpop.f32.mrf.mxu0
    %v9190 = vadd.f32 %v9107, %v9189
    %v9191 = vpop.f32.mrf.mxu0
    %9192 = vdwg.mxu0
    %9193 = vmatprep.subr.mxu0 0.0
    %9194 = vmatpush1.msra.mxu0 0.0
    %9195 = vmatprep.subr.mxu0 0.0
    %9196 = vmatpush1.msra.mxu0 0.0
    %9197 = vmatprep.subr.mxu0 0.0
    %9198 = vmatpush1.msra.mxu0 0.0
    %9199 = vmatprep.subr.mxu0 0.0
    %9200 = vmatpush1.msra.mxu0 0.0
    %9201 = vmatprep.subr.mxu0 0.0
    %9202 = vmatpush1.msra.mxu0 0.0
    %9203 = vmatprep.subr.mxu0 0.0
    %9204 = vmatpush1.msra.mxu0 0.0
    %9205 = vmatprep.subr.mxu0 0.0
    %9206 = vmatpush1.msra.mxu0 0.0
    %9207 = vmatprep.subr.mxu0 0.0
    %9208 = vmatpush1.msra.mxu0 0.0
    %9209 = vmatprep.subr.mxu0 0.0
    %9210 = vmatpush1.msra.mxu0 0.0
    %9211 = vmatprep.subr.mxu0 0.0
    %9212 = vmatpush1.msra.mxu0 0.0
    %9213 = vmatprep.subr.mxu0 0.0
    %9214 = vmatpush1.msra.mxu0 0.0
    %9215 = vmatprep.subr.mxu0 0.0
    %9216 = vmatpush1.msra.mxu0 0.0
    %9217 = vmatprep.subr.mxu0 0.0
    %v9218 = vand.u32 %v1038, 4294901760
    %9219 = vmatpush1.msra.mxu0 %v9218
    %9220 = vmatprep.subr.mxu0 0.0
    %v9221 = vand.u32 %v1037, 4294901760
    %9222 = vmatpush1.msra.mxu0 %v9221
    %9223 = vmatprep.subr.mxu0 0.0
    %v9224 = vand.u32 %v1036, 4294901760
    %9225 = vmatpush1.msra.mxu0 %v9224
    %9226 = vmatprep.subr.mxu0 0.0
    %v9227 = vand.u32 %v1035, 4294901760
    %9228 = vmatpush1.msra.mxu0 %v9227
    %9229 = vmatprep.subr.mxu0 0.0
    %9230 = vmatpush2.msra.mxu0 0.0
    %9231 = vmatprep.subr.mxu0 0.0
    %9232 = vmatpush2.msra.mxu0 0.0
    %9233 = vmatprep.subr.mxu0 0.0
    %9234 = vmatpush2.msra.mxu0 0.0
    %9235 = vmatprep.subr.mxu0 0.0
    %9236 = vmatpush2.msra.mxu0 0.0
    %9237 = vmatprep.subr.mxu0 0.0
    %9238 = vmatpush2.msra.mxu0 0.0
    %9239 = vmatprep.subr.mxu0 0.0
    %9240 = vmatpush2.msra.mxu0 0.0
    %9241 = vmatprep.subr.mxu0 0.0
    %9242 = vmatpush2.msra.mxu0 0.0
    %9243 = vmatprep.subr.mxu0 0.0
    %9244 = vmatpush2.msra.mxu0 0.0
    %9245 = vmatprep.subr.mxu0 0.0
    %9246 = vmatpush2.msra.mxu0 0.0
    %9247 = vmatprep.subr.mxu0 0.0
    %9248 = vmatpush2.msra.mxu0 0.0
    %9249 = vmatprep.subr.mxu0 0.0
    %9250 = vmatpush2.msra.mxu0 0.0
    %9251 = vmatprep.subr.mxu0 0.0
    %9252 = vmatpush2.msra.mxu0 0.0
    %9253 = vmatprep.subr.mxu0 0.0
    %9254 = vmatpush2.msra.mxu0 0.0
    %9255 = vmatprep.subr.mxu0 0.0
    %9256 = vmatpush2.msra.mxu0 0.0
    %9257 = vmatprep.subr.mxu0 0.0
    %9258 = vmatpush2.msra.mxu0 0.0
    %9259 = vmatprep.subr.mxu0 0.0
    %9260 = vmatpush2.msra.mxu0 0.0
    %9261 = vmatprep.mubr.f32.mxu0 0.0
    %v9262 = vand.u32 %v8781, 4294901760
    %9263 = vmatmul.mubr.f32.gmra.mxu0 %v9262
    %v9264 = vpop.f32.mrf.mxu0
    %v9265 = vadd.f32 %v9190, %v9264
    %v9266 = vpop.f32.mrf.mxu0
    %9267 = vdwg.mxu0
    %v9268 = vadd.f32 %v8778, %v9265
    %v9269 = vmul.f32 %v8777, %v1044
    %v9270 = vtanh.pop %v9269
    %v9271 = vmul.f32 %v9270, %v1044
    %v9272 = vadd.f32 %v9271, %v1045
    %v9273 = vmul.f32 %v9272, %v8250
    %9275 = vrot.lane.b32.xlu0 %v9272, 64
    %v9276 = vpop.permute.xlu0 %9275
    %v9278 = vmul.f32 %v9272, %v9276
    %9280 = vrot.lane.b32.xlu0 %v9278, 32
    %v9281 = vpop.permute.xlu0 %9280
    %v9283 = vadd.f32 %v9273, %v9281
    %v9284 = vtanh.pop %v9283
    %9286 = vrot.lane.b32.xlu0 %v9284, 64
    %v9287 = vpop.permute.xlu0 %9286
    %v9289 = vmul.f32 %v9272, %v9287
    %v9290 = vmul.f32 %v9268, %v1044
    %v9291 = vtanh.pop %v9290
    %v9292 = vmul.f32 %v9291, %v1044
    %v9293 = vadd.f32 %v9292, %v1045
    %v9294 = vmul.f32 %v9293, %v8271
    %9296 = vrot.lane.b32.xlu0 %v9293, 64
    %v9297 = vpop.permute.xlu0 %9296
    %v9299 = vmul.f32 %v9293, %v9297
    %9301 = vrot.lane.b32.xlu0 %v9299, 32
    %v9302 = vpop.permute.xlu0 %9301
    %v9304 = vadd.f32 %v9294, %v9302
    %v9305 = vtanh.pop %v9304
    %9307 = vrot.lane.b32.xlu0 %v9305, 64
    %v9308 = vpop.permute.xlu0 %9307
    %v9310 = vmul.f32 %v9293, %v9308
    %9312 = vrot.lane.b32.xlu0 %v9289, 32
    %v9313 = vpop.permute.xlu0 %9312
    %9315 = vst.msk [vmem:[%s2075] sm:$0xff] %vm104, %v9313
    %9317 = vrot.lane.b32.xlu0 %v9310, 64
    %v9318 = vpop.permute.xlu0 %9317
    %9320 = vst.msk [vmem:[#allocation12] sm:$0xff] %vm2076, %v9318
    // Predicated region
    $region38: #{tpu_custom_call.1} parent=1 // pred_check
      _
    $region39: #{tpu_custom_call.1} parent=1 // pred_check_branch
      %9322 = sbr.rel (0) target = $region41
    $region40: #{tpu_custom_call.1} parent=1 // pred_region
      %s9324 = ssub.s32 1024, 1024
      %9325 = vsyncadd [#allocation6], %s9324
      %s9326 = sshll.u32 [#allocation12], 4
      %s9327 = int_to_ptr.vmem [resolvable:$true] %s9326
      %9332 = dma.vmem_to_hbm [thread:$0]  %s9327, 1024, %s5, [#allocation6], 128, 128, 8
    $region41: #{tpu_custom_call.1} parent=1 // pred_fallthru
      _
    // Predicated region
    $region42: #{tpu_custom_call.1} parent=1 // pred_check
      _
    $region43: #{tpu_custom_call.1} parent=1 // pred_check_branch
      %9334 = sbr.rel (0) target = $region45
    $region44: #{tpu_custom_call.1} parent=1 // pred_region
      %9335 = dma.done [#allocation6], 1024
    $region45: #{tpu_custom_call.1} parent=1 // pred_fallthru
      _
    %9336 = vsyncpa [#allocation5], 1
    %9337 = vsyncpa [#allocation8], 1
    %9338 = vsyncpa [#allocation11], 1
    %9339 = vsyncpa [#allocation6], 1

</llo_original>
